<compile_context>
chip_gen: v7x
topology: tpu7x:2x2x1
jax: 0.10.0
libtpu: 0.0.40
codegen_flags: <defaults>
</compile_context>

<pallas_src>
import functools

import jax
import jax.numpy as jnp
from jax.experimental import pallas as pl
from jax.experimental.pallas import tpu as pltpu

LEAKY_SLOPE = 0.1                    # nn.LeakyReLU(0.1) in KPConv blocks

# VMEM budgeting: streaming budget is v7x-conservative (64 MiB physical / 32 MiB scoped
# default per TC); the explicit vmem_limit raises the scoped window on v5e (16 MiB default)
# and v6e (32 MiB) while staying under v7x physical VMEM.
_VMEM_STREAM_BUDGET = 24 << 20       # bytes for double-buffered streamed blocks + temps
_VMEM_LIMIT_BYTES = 48 << 20         # scoped VMEM limit handed to Mosaic
_TILE_CANDIDATES = (1024, 512, 256, 128, 64, 32, 16, 8)


# --------------------------------------------------------------------------
# Tiling / footprint helpers
# --------------------------------------------------------------------------

def _round_up(x, m):
    return (x + m - 1) // m * m


def _padded_block_bytes(shape, dtype):
    """VMEM footprint of one block including (sublane, lane) = (8*packing, 128) padding."""
    itemsize = jnp.dtype(dtype).itemsize
    sublane_mult = 8 * max(1, 4 // itemsize)      # f32: 8, bf16: 16
    dims = list(shape)
    if len(dims) >= 1:
        dims[-1] = _round_up(dims[-1], 128)
    if len(dims) >= 2:
        dims[-2] = _round_up(dims[-2], sublane_mult)
    total = 1
    for d in dims:
        total *= d
    return total * itemsize


def _choose_tile(n, streamed_bytes_fn, resident_bytes, budget=_VMEM_STREAM_BUDGET):
    """Largest point-axis tile whose padded, double-buffered footprint fits the budget,
    then halved (down to 8) until the grid has >=2 steps so both v7x TCs get work."""
    tile = 8
    for t in _TILE_CANDIDATES:
        if streamed_bytes_fn(t) + resident_bytes <= budget:
            tile = t
            break
    while tile > 8 and _round_up(n, tile) // tile < 2:
        tile //= 2
    return max(tile, 8)


def _pad_rows(a, n_pad, value=0.0):
    if n_pad == 0:
        return a
    widths = [(0, n_pad)] + [(0, 0)] * (a.ndim - 1)
    return jnp.pad(a, widths, constant_values=value)


# --------------------------------------------------------------------------
# Pallas kernels (hot paths: KPConv aggregation, unary / linear)
# --------------------------------------------------------------------------

def _kpconv_kernel(off_ref, feat_ref, kp_ref, w_ref, b_ref, o_ref, *,
                   kp_extent, num_kp, cin, activate):
    """KPConv core: per-kernel-point influence + per-k MXU accumulation.

    off_ref:  (3, TN, H)       f32 neighbor-offset coordinate planes (pad rows = 1e6)
    feat_ref: (TN, H, Cin)     bf16 gathered neighbor features (shadow rows are zero)
    kp_ref:   (3*K,)           f32 kernel-point coordinates in SMEM (scalar reads)
    w_ref:    (K*Cin, Cout)    bf16 flattened kernel weights (single-buffered)
    b_ref:    (1, Cout)        f32 bias (BatchNorm modeled as use_bn=False bias add)
    o_ref:    (TN, Cout)       bf16 output
    """
    ox = off_ref[0]                              # (TN, H) f32
    oy = off_ref[1]
    oz = off_ref[2]
    feats = feat_ref[...]                        # (TN, H, Cin) bf16, kept bf16 (VPU)
    inv_ext = 1.0 / kp_extent
    acc = jnp.zeros(o_ref.shape, jnp.float32)
    # K is a small static constant; per-k MXU accumulation keeps each iteration's
    # temporaries dead before the next one (the old (TN, K*Cin) staging scratch is gone).
    # For large K switch to lax.fori_loop(..., unroll=True) with pl.ds(k*cin, cin) slices.
    for k in range(num_kp):
        kx = kp_ref[3 * k + 0]                   # SMEM scalar reads, broadcast on the VPU
        ky = kp_ref[3 * k + 1]
        kz = kp_ref[3 * k + 2]
        dx = ox - kx
        dy = oy - ky
        dz = oz - kz
        sq = dx * dx + dy * dy + dz * dz         # (TN, H) f32, pure VPU
        # 'linear' influence, 'sum' aggregation (KPConv defaults); pad/shadow rows -> 0
        infl = jnp.maximum(1.0 - jnp.sqrt(sq) * inv_ext, 0.0)
        wk = infl.astype(feats.dtype)[:, :, None] * feats          # bf16 VPU multiply
        fk = jnp.sum(wk, axis=1, dtype=jnp.float32)                # f32 H-accumulate
        acc = acc + jnp.dot(fk.astype(jnp.bfloat16),
                            w_ref[k * cin:(k + 1) * cin, :],
                            preferred_element_type=jnp.float32)
    y = acc + b_ref[...]
    if activate:
        y = jnp.where(y >= 0.0, y, LEAKY_SLOPE * y)
    o_ref[...] = y.astype(o_ref.dtype)


def _unary_kernel(x_ref, w_ref, b_ref, o_ref, *, activate):
    """Unary block (no residual): x @ W + b, optional LeakyReLU(0.1)."""
    y = jnp.dot(x_ref[...], w_ref[...], preferred_element_type=jnp.float32) + b_ref[...]
    if activate:
        y = jnp.where(y >= 0.0, y, LEAKY_SLOPE * y)
    o_ref[...] = y.astype(o_ref.dtype)


def _unary_residual_kernel(x_ref, w_ref, b_ref, r_ref, o_ref, *, activate):
    """Unary block fused with shortcut add: x @ W + b + residual, optional LeakyReLU."""
    y = jnp.dot(x_ref[...], w_ref[...], preferred_element_type=jnp.float32)
    y = y + b_ref[...] + r_ref[...].astype(jnp.float32)
    if activate:
        y = jnp.where(y >= 0.0, y, LEAKY_SLOPE * y)
    o_ref[...] = y.astype(o_ref.dtype)


# --------------------------------------------------------------------------
# Ops (index gathers stay in XLA, compute in Pallas)
# --------------------------------------------------------------------------

def kpconv_op(q_pts, s_pts, neighb_inds, x, kp, bias, activate=True):
    """Rigid KPConv.  Offsets are coordinate planes, kernel points live in SMEM, weighted
    aggregation is per-kernel-point MXU accumulation; output is bf16."""
    nq = q_pts.shape[0]
    h = neighb_inds.shape[1]
    cin = x.shape[1]
    k = kp['weights'].shape[0]
    cout = kp['weights'].shape[2]

    # shadow support point far away + shadow zero-feature row (KPConv padding)
    s_pad = jnp.concatenate([s_pts, jnp.full((1, 3), 1e6, s_pts.dtype)], 0)
    off = (s_pad[neighb_inds] - q_pts[:, None, :]).astype(jnp.float32)   # (Nq, H, 3)
    off_planes = jnp.transpose(off, (2, 0, 1))                            # (3, Nq, H)
    x_pad = jnp.concatenate([x.astype(jnp.bfloat16),
                             jnp.zeros((1, cin), jnp.bfloat16)], 0)
    nf = x_pad[neighb_inds]                                               # (Nq, H, Cin) bf16
    # TODO(synk): this XLA gather still materializes (N, H, Cin) in HBM; an in-kernel
    #   gather (SMEM index prefetch + VMEM-resident supports / DMA gather) would remove
    #   the H-fold amplification but Mosaic's arbitrary-row gather support is too
    #   restrictive to do safely here.  bf16 halves the round-trip traffic instead.

    def streamed(t):
        per = (2 * _padded_block_bytes((3, t, h), jnp.float32)        # offset planes
               + 2 * _padded_block_bytes((t, h, cin), jnp.bfloat16)   # neighbor feats
               + 2 * _padded_block_bytes((t, cout), jnp.bfloat16))    # output
        tmp = (4 * _padded_block_bytes((t, h), jnp.float32)           # per-k distance temps
               + _padded_block_bytes((t, cout), jnp.float32)          # accumulator
               + _padded_block_bytes((t, cin), jnp.float32))          # fk
        return per + tmp

    resident = (_padded_block_bytes((k * cin, cout), jnp.bfloat16)    # weights (Buffered(1))
                + _padded_block_bytes((1, cout), jnp.float32))        # bias
    tile = _choose_tile(nq, streamed, resident)
    nt = _round_up(nq, tile)
    n_pad = nt - nq
    if n_pad:
        off_planes = jnp.pad(off_planes, ((0, 0), (0, n_pad), (0, 0)),
                             constant_values=1e6)                     # pad rows -> 0 influence
        nf = jnp.pad(nf, ((0, n_pad), (0, 0), (0, 0)))

    w_flat = kp['weights'].reshape(k * cin, cout).astype(jnp.bfloat16)
    kp_flat = kp['kernel_points'].reshape(-1).astype(jnp.float32)     # (3K,) -> SMEM scalars
    kernel = functools.partial(_kpconv_kernel, kp_extent=float(kp['extent']),
                               num_kp=k, cin=cin, activate=activate)
    out = pl.pallas_call(
        kernel,
        out_shape=jax.ShapeDtypeStruct((nt, cout), jnp.bfloat16),
        grid=(nt // tile,),
        in_specs=[
            pl.BlockSpec((3, tile, h), lambda i: (0, i, 0)),
            pl.BlockSpec((tile, h, cin), lambda i: (i, 0, 0)),
            pl.BlockSpec(memory_space=pltpu.MemorySpace.SMEM),
            pl.BlockSpec((k * cin, cout), lambda i: (0, 0), pipeline_mode=pl.Buffered(1)),
            pl.BlockSpec((1, cout), lambda i: (0, 0), pipeline_mode=pl.Buffered(1)),
        ],
        out_specs=pl.BlockSpec((tile, cout), lambda i: (i, 0)),
        compiler_params=pltpu.CompilerParams(
            dimension_semantics=("parallel",),
            vmem_limit_bytes=_VMEM_LIMIT_BYTES),
    )(off_planes, nf, kp_flat, w_flat, bias.reshape(1, cout).astype(jnp.float32))
    return out[:nq]


def unary_op(x, w, b, activate, residual=None):
    n, cin = x.shape
    cout = w.shape[1]

    def streamed(t):
        per = (2 * _padded_block_bytes((t, cin), jnp.bfloat16)
               + 2 * _padded_block_bytes((t, cout), jnp.bfloat16)
               + _padded_block_bytes((t, cout), jnp.float32))         # f32 accumulator
        if residual is not None:
            per += 2 * _padded_block_bytes((t, cout), jnp.bfloat16)
        return per

    resident = (_padded_block_bytes((cin, cout), jnp.bfloat16)
                + _padded_block_bytes((1, cout), jnp.float32))
    tile = _choose_tile(n, streamed, resident)
    nt = _round_up(n, tile)
    xp = _pad_rows(x.astype(jnp.bfloat16), nt - n)
    wb = w.astype(jnp.bfloat16)
    bb = b.reshape(1, cout).astype(jnp.float32)
    common = dict(
        out_shape=jax.ShapeDtypeStruct((nt, cout), jnp.bfloat16),
        grid=(nt // tile,),
        out_specs=pl.BlockSpec((tile, cout), lambda i: (i, 0)),
        compiler_params=pltpu.CompilerParams(
            dimension_semantics=("parallel",),
            vmem_limit_bytes=_VMEM_LIMIT_BYTES),
    )
    if residual is None:
        out = pl.pallas_call(
            functools.partial(_unary_kernel, activate=activate),
            in_specs=[pl.BlockSpec((tile, cin), lambda i: (i, 0)),
                      pl.BlockSpec((cin, cout), lambda i: (0, 0),
                                   pipeline_mode=pl.Buffered(1)),
                      pl.BlockSpec((1, cout), lambda i: (0, 0),
                                   pipeline_mode=pl.Buffered(1))],
            **common,
        )(xp, wb, bb)
    else:
        rp = _pad_rows(residual.astype(jnp.bfloat16), nt - n)
        out = pl.pallas_call(
            functools.partial(_unary_residual_kernel, activate=activate),
            in_specs=[pl.BlockSpec((tile, cin), lambda i: (i, 0)),
                      pl.BlockSpec((cin, cout), lambda i: (0, 0),
                                   pipeline_mode=pl.Buffered(1)),
                      pl.BlockSpec((1, cout), lambda i: (0, 0),
                                   pipeline_mode=pl.Buffered(1)),
                      pl.BlockSpec((tile, cout), lambda i: (i, 0))],
            **common,
        )(xp, wb, bb, rp)
    return out[:n]


def max_pool_op(x, inds):
    # KPConv max_pool: zero shadow row, gather, max over neighbors.  Left to XLA so the
    # gather fuses with the reduction (no (N, H, C) pallas-boundary HBM round trip).
    x_pad = jnp.concatenate([x, jnp.zeros((1, x.shape[1]), x.dtype)], 0)
    return jnp.max(x_pad[inds], axis=1)


def closest_pool_op(x, inds):
    # NearestUpsample: gather the feature of the closest coarse point (pure index gather).
    x_pad = jnp.concatenate([x, jnp.zeros((1, x.shape[1]), x.dtype)], 0)
    return x_pad[inds[:, 0]]


# --------------------------------------------------------------------------
# Parameter construction (mirrors KpconvEncoder / KpconvDecoder __init__)
# --------------------------------------------------------------------------

def _sample_kernel_points(key, num_kp, radius):
    # TODO(synk): real KPConv uses optimized kernel-point dispositions (load_kernels);
    # replaced with deterministic pseudo-random points in a ball of the conv radius.
    k1, k2 = jax.random.split(key)
    d = jax.random.normal(k1, (num_kp, 3), jnp.float32)
    d = d / (jnp.linalg.norm(d, axis=1, keepdims=True) + 1e-6)
    r = jax.random.uniform(k2, (num_kp, 1), jnp.float32) ** (1.0 / 3.0)
    pts = d * r * (radius * 0.66)
    return pts.at[0].set(0.0)   # center kernel point


def _init_linear(key, cin, cout):
    kw, kb = jax.random.split(key)
    return {'w': jax.random.normal(kw, (cin, cout), jnp.float32) / (cin ** 0.5),
            'b': jax.random.normal(kb, (cout,), jnp.float32) * 0.01}


def _init_kpconv(key, num_kp, radius, extent, cin, cout):
    kk, kw = jax.random.split(key)
    return {'kernel_points': _sample_kernel_points(kk, num_kp, radius),
            'weights': jax.random.normal(kw, (num_kp, cin, cout), jnp.float32)
                       / ((num_kp * cin) ** 0.5),
            'extent': extent}


def make_block(key, name, radius, in_dim, out_dim, layer, cfg):
    num_kp = cfg['num_kernel_points']
    extent = cfg['KP_extent'] * radius / cfg['conv_radius']
    blk = {'name': name, 'layer': layer}
    keys = jax.random.split(key, 6)
    if name == 'simple':
        blk['kpconv'] = _init_kpconv(keys[0], num_kp, radius, extent, in_dim, out_dim // 2)
        blk['conv_bias'] = jax.random.normal(keys[1], (out_dim // 2,), jnp.float32) * 0.01
    elif 'resnetb' in name:
        mid = out_dim // 4
        blk['strided'] = ('strided' in name) or ('pool' in name)
        blk['unary1'] = _init_linear(keys[0], in_dim, mid)
        blk['kpconv'] = _init_kpconv(keys[1], num_kp, radius, extent, mid, mid)
        blk['conv_bias'] = jax.random.normal(keys[2], (mid,), jnp.float32) * 0.01
        blk['unary2'] = _init_linear(keys[3], mid, out_dim)
        blk['shortcut'] = _init_linear(keys[4], in_dim, out_dim) if in_dim != out_dim else None
    elif name == 'nearest_upsample':
        pass
    elif name == 'last_unary':
        blk['w'] = jax.random.normal(keys[0], (in_dim, cfg['final_feats_dim']),
                                     jnp.float32) / (in_dim ** 0.5)
    elif name == 'unary':
        blk['unary'] = _init_linear(keys[0], in_dim, out_dim)
    else:
        raise NotImplementedError(f'block "{name}" not supported in this synthetic port')
    return blk


def build_feature_extractor(key, cfg):
    arch = cfg['kpconv_architecture']

    # ---- Encoder (mirrors KpconvEncoder.__init__) ----
    layer = 0
    r = cfg['first_subsampling_dl'] * cfg['conv_radius']
    in_dim = cfg['kpconv_in_dim']
    out_dim = cfg['first_features_dim']
    enc_blocks, enc_skips, enc_skip_dims = [], [], []
    for block_i, block in enumerate(arch):
        if any(t in block for t in ['pool', 'strided', 'upsample', 'global']):
            enc_skips.append(block_i)
            enc_skip_dims.append(in_dim)
        if 'upsample' in block:
            break
        key, sub = jax.random.split(key)
        enc_blocks.append(make_block(sub, block, r, in_dim, out_dim, layer, cfg))
        in_dim = out_dim // 2 if 'simple' in block else out_dim
        if 'pool' in block or 'strided' in block:
            layer += 1; r *= 2; out_dim *= 2

    # ---- Decoder (mirrors KpconvDecoder.__init__) ----
    layer = 0
    r = cfg['first_subsampling_dl'] * cfg['conv_radius']
    in_dim = cfg['kpconv_in_dim']
    out_dim = cfg['first_features_dim']
    dec_blocks, dec_concats, dec_skip_dims = [], [], []
    start_i = 0
    for block_i, block in enumerate(arch):
        if 'upsample' in block:
            start_i = block_i
            break
        if any(t in block for t in ['pool', 'strided', 'upsample', 'global']):
            dec_skip_dims.append(in_dim)
        in_dim = out_dim // 2 if 'simple' in block else out_dim
        if 'pool' in block or 'strided' in block:
            layer += 1; r *= 2; out_dim *= 2
    for block_i, block in enumerate(arch[start_i:]):
        if block_i > 0 and 'upsample' in arch[start_i + block_i - 1]:
            in_dim += dec_skip_dims[layer]
            dec_concats.append(block_i)
        key, sub = jax.random.split(key)
        dec_blocks.append(make_block(sub, block, r, in_dim, out_dim, layer, cfg))
        in_dim = out_dim
        if 'upsample' in block:
            layer -= 1; r *= 0.5; out_dim = out_dim // 2

    return {'enc_blocks': enc_blocks, 'enc_skips': enc_skips,
            'dec_blocks': dec_blocks, 'dec_concats': dec_concats}


# --------------------------------------------------------------------------
# Forward (mirrors KpconvEncoder.forward / KpconvDecoder.forward)
# --------------------------------------------------------------------------

def apply_block(p, x, batch):
    name, layer = p['name'], p['layer']
    if name == 'simple':
        q = batch['points'][layer]
        return kpconv_op(q, q, batch['neighbors'][layer], x,
                         p['kpconv'], p['conv_bias'], activate=True)
    if 'resnetb' in name:
        if p['strided']:
            q = batch['points'][layer + 1]
            s = batch['points'][layer]
            neighb = batch['pools'][layer]
        else:
            q = s = batch['points'][layer]
            neighb = batch['neighbors'][layer]
        x1 = unary_op(x, p['unary1']['w'], p['unary1']['b'], activate=True)
        x2 = kpconv_op(q, s, neighb, x1, p['kpconv'], p['conv_bias'], activate=True)
        sc = max_pool_op(x, neighb) if p['strided'] else x
        if p['shortcut'] is not None:
            sc = unary_op(sc, p['shortcut']['w'], p['shortcut']['b'], activate=False)
        # unary2 (no relu) + shortcut add + final LeakyReLU, fused in one kernel
        return unary_op(x2, p['unary2']['w'], p['unary2']['b'], activate=True, residual=sc)
    if name == 'nearest_upsample':
        return closest_pool_op(x, batch['upsamples'][layer - 1])
    if name == 'last_unary':
        zero_b = jnp.zeros((p['w'].shape[1],), jnp.float32)
        return unary_op(x, p['w'], zero_b, activate=False)
    if name == 'unary':
        return unary_op(x, p['unary']['w'], p['unary']['b'], activate=True)
    raise ValueError(name)


def kpconv_feature_extractor(params, batch):
    # encoder
    x = batch['features']
    skip_x = []
    for i, blk in enumerate(params['enc_blocks']):
        if i in params['enc_skips']:
            skip_x.append(x)
        x = apply_block(blk, x, batch)
    # decoder
    for i, blk in enumerate(params['dec_blocks']):
        if i in params['dec_concats']:
            x = jnp.concatenate([x, skip_x.pop()], axis=1)
        x = apply_block(blk, x, batch)
    # inter-layer activations are bf16; return f32 like the reference module
    return x.astype(jnp.float32)


# --------------------------------------------------------------------------
# Synthetic batch construction (KPConv precomputes these on CPU)
# --------------------------------------------------------------------------

def knn_indices(q, s, k):
    d = jnp.sum((q[:, None, :] - s[None, :, :]) ** 2, axis=-1)
    return jnp.argsort(d, axis=1)[:, :k].astype(jnp.int32)


if __name__ == "__main__":
    config = dict(
        voxel_size=0.05,
        first_subsampling_dl=0.05,
        conv_radius=2.5,
        kpconv_in_dim=8,
        first_features_dim=32,
        num_kernel_points=8,
        KP_extent=1.2,
        final_feats_dim=32,
        kpconv_architecture=['simple', 'resnetb_strided', 'resnetb',
                             'nearest_upsample', 'last_unary'],
    )

    key = jax.random.PRNGKey(0)
    k_pts, k_feat, k_par = jax.random.split(key, 3)

    n0, h = 64, 16                       # fine level: 64 points, 16 neighbors
    pts0 = jax.random.uniform(k_pts, (n0, 3), jnp.float32) * 0.4
    pts1 = pts0[::2]                     # coarse level (grid-subsample surrogate), 32 points

    batch = {
        'features': jax.random.normal(k_feat, (n0, config['kpconv_in_dim']), jnp.float32),
        'points': [pts0, pts1],
        'neighbors': [knn_indices(pts0, pts0, h), knn_indices(pts1, pts1, h)],
        'pools': [knn_indices(pts1, pts0, h)],
        'upsamples': [knn_indices(pts0, pts1, 1)],
    }

    params = build_feature_extractor(k_par, config)
    feats = kpconv_feature_extractor(params, batch)
    feats = jax.block_until_ready(feats)

    assert feats.shape == (n0, config['final_feats_dim']), feats.shape
    assert bool(jnp.all(jnp.isfinite(feats)))
    print("KERNEL_OK")
</pallas_src>

<mosaic_0001>
module attributes {stable_mosaic.version = 11 : i64} {
  func.func @_kpconv_kernel(%arg0: i32, %arg1: memref<3x32x16xf32, #tpu.memory_space<vmem>>, %arg2: memref<32x16x8xbf16, #tpu.memory_space<vmem>>, %arg3: memref<24xf32, #tpu.memory_space<smem>>, %arg4: memref<64x16xbf16, #tpu.memory_space<vmem>>, %arg5: memref<1x16xf32, #tpu.memory_space<vmem>>, %arg6: memref<32x16xbf16, #tpu.memory_space<vmem>>) attributes {dimension_semantics = [#tpu.dimension_semantics<parallel>], iteration_bounds = array<i64: 2>, scalar_prefetch = 0 : i64, scratch_operands = 0 : i64, tpu.core_type = #tpu.core_type<tc>, window_params = [{transform_indices = @transform_0, window_bounds = array<i64: 3, 32, 16>}, {transform_indices = @transform_1, window_bounds = array<i64: 32, 16, 8>}, {transform_indices = @transform_2, window_bounds = array<i64: 24>}, {pipeline_mode = #tpu.pipeline_mode<synchronous>, transform_indices = @transform_3, window_bounds = array<i64: 64, 16>}, {pipeline_mode = #tpu.pipeline_mode<synchronous>, transform_indices = @transform_4, window_bounds = array<i64: 1, 16>}, {transform_indices = @transform_5, window_bounds = array<i64: 32, 16>}]} {
    %c0 = arith.constant 0 : index
    %c0_0 = arith.constant 0 : index
    %c0_1 = arith.constant 0 : index
    %0 = vector.load %arg1[%c0, %c0_0, %c0_1] : memref<3x32x16xf32, #tpu.memory_space<vmem>>, vector<1x32x16xf32>
    %1 = vector.shape_cast %0 : vector<1x32x16xf32> to vector<32x16xf32>
    %c1 = arith.constant 1 : index
    %c0_2 = arith.constant 0 : index
    %c0_3 = arith.constant 0 : index
    %2 = vector.load %arg1[%c1, %c0_2, %c0_3] : memref<3x32x16xf32, #tpu.memory_space<vmem>>, vector<1x32x16xf32>
    %3 = vector.shape_cast %2 : vector<1x32x16xf32> to vector<32x16xf32>
    %c2 = arith.constant 2 : index
    %c0_4 = arith.constant 0 : index
    %c0_5 = arith.constant 0 : index
    %4 = vector.load %arg1[%c2, %c0_4, %c0_5] : memref<3x32x16xf32, #tpu.memory_space<vmem>>, vector<1x32x16xf32>
    %5 = vector.shape_cast %4 : vector<1x32x16xf32> to vector<32x16xf32>
    %c0_6 = arith.constant 0 : index
    %c0_7 = arith.constant 0 : index
    %c0_8 = arith.constant 0 : index
    %6 = vector.load %arg2[%c0_6, %c0_7, %c0_8] : memref<32x16x8xbf16, #tpu.memory_space<vmem>>, vector<32x16x8xbf16>
    %cst = arith.constant 0.000000e+00 : f32
    %7 = vector.broadcast %cst : f32 to vector<32x16xf32>
    %c0_9 = arith.constant 0 : index
    %8 = memref.load %arg3[%c0_9] : memref<24xf32, #tpu.memory_space<smem>>
    %c1_10 = arith.constant 1 : index
    %9 = memref.load %arg3[%c1_10] : memref<24xf32, #tpu.memory_space<smem>>
    %c2_11 = arith.constant 2 : index
    %10 = memref.load %arg3[%c2_11] : memref<24xf32, #tpu.memory_space<smem>>
    %11 = vector.broadcast %8 : f32 to vector<32x16xf32>
    %12 = arith.subf %1, %11 : vector<32x16xf32>
    %13 = vector.broadcast %9 : f32 to vector<32x16xf32>
    %14 = arith.subf %3, %13 : vector<32x16xf32>
    %15 = vector.broadcast %10 : f32 to vector<32x16xf32>
    %16 = arith.subf %5, %15 : vector<32x16xf32>
    %17 = arith.mulf %12, %12 : vector<32x16xf32>
    %18 = arith.mulf %14, %14 : vector<32x16xf32>
    %19 = arith.addf %17, %18 : vector<32x16xf32>
    %20 = arith.mulf %16, %16 : vector<32x16xf32>
    %21 = arith.addf %19, %20 : vector<32x16xf32>
    %22 = math.sqrt %21 : vector<32x16xf32>
    %cst_12 = arith.constant 16.666666 : f32
    %23 = vector.broadcast %cst_12 : f32 to vector<32x16xf32>
    %24 = arith.mulf %22, %23 : vector<32x16xf32>
    %cst_13 = arith.constant 1.000000e+00 : f32
    %25 = vector.broadcast %cst_13 : f32 to vector<32x16xf32>
    %26 = arith.subf %25, %24 : vector<32x16xf32>
    %cst_14 = arith.constant 0.000000e+00 : f32
    %27 = vector.broadcast %cst_14 : f32 to vector<32x16xf32>
    %28 = arith.maximumf %26, %27 : vector<32x16xf32>
    %29 = arith.truncf %28 : vector<32x16xf32> to vector<32x16xbf16>
    %30 = vector.shape_cast %29 : vector<32x16xbf16> to vector<32x16x1xbf16>
    %31 = vector.broadcast %30 : vector<32x16x1xbf16> to vector<32x16x8xbf16>
    %32 = arith.mulf %31, %6 : vector<32x16x8xbf16>
    %33 = arith.extf %32 : vector<32x16x8xbf16> to vector<32x16x8xf32>
    %cst_15 = arith.constant dense<0.000000e+00> : vector<32x8xf32>
    %34 = vector.multi_reduction <add>, %33, %cst_15 [1] : vector<32x16x8xf32> to vector<32x8xf32>
    %35 = arith.truncf %34 : vector<32x8xf32> to vector<32x8xbf16>
    %c0_16 = arith.constant 0 : index
    %c0_17 = arith.constant 0 : index
    %36 = vector.load %arg4[%c0_16, %c0_17] : memref<64x16xbf16, #tpu.memory_space<vmem>>, vector<8x16xbf16>
    %cst_18 = arith.constant dense<0.000000e+00> : vector<32x16xf32>
    %37 = tpu.matmul %35, %36, %cst_18 {dimension_numbers = #tpu.dot_dimension_numbers<[1], [0], [0], [1], [0, 0, 1, 1], [], []>} : vector<32x8xbf16>, vector<8x16xbf16>, vector<32x16xf32> -> vector<32x16xf32>
    %38 = arith.addf %7, %37 : vector<32x16xf32>
    %c3 = arith.constant 3 : index
    %39 = memref.load %arg3[%c3] : memref<24xf32, #tpu.memory_space<smem>>
    %c4 = arith.constant 4 : index
    %40 = memref.load %arg3[%c4] : memref<24xf32, #tpu.memory_space<smem>>
    %c5 = arith.constant 5 : index
    %41 = memref.load %arg3[%c5] : memref<24xf32, #tpu.memory_space<smem>>
    %42 = vector.broadcast %39 : f32 to vector<32x16xf32>
    %43 = arith.subf %1, %42 : vector<32x16xf32>
    %44 = vector.broadcast %40 : f32 to vector<32x16xf32>
    %45 = arith.subf %3, %44 : vector<32x16xf32>
    %46 = vector.broadcast %41 : f32 to vector<32x16xf32>
    %47 = arith.subf %5, %46 : vector<32x16xf32>
    %48 = arith.mulf %43, %43 : vector<32x16xf32>
    %49 = arith.mulf %45, %45 : vector<32x16xf32>
    %50 = arith.addf %48, %49 : vector<32x16xf32>
    %51 = arith.mulf %47, %47 : vector<32x16xf32>
    %52 = arith.addf %50, %51 : vector<32x16xf32>
    %53 = math.sqrt %52 : vector<32x16xf32>
    %cst_19 = arith.constant 16.666666 : f32
    %54 = vector.broadcast %cst_19 : f32 to vector<32x16xf32>
    %55 = arith.mulf %53, %54 : vector<32x16xf32>
    %cst_20 = arith.constant 1.000000e+00 : f32
    %56 = vector.broadcast %cst_20 : f32 to vector<32x16xf32>
    %57 = arith.subf %56, %55 : vector<32x16xf32>
    %cst_21 = arith.constant 0.000000e+00 : f32
    %58 = vector.broadcast %cst_21 : f32 to vector<32x16xf32>
    %59 = arith.maximumf %57, %58 : vector<32x16xf32>
    %60 = arith.truncf %59 : vector<32x16xf32> to vector<32x16xbf16>
    %61 = vector.shape_cast %60 : vector<32x16xbf16> to vector<32x16x1xbf16>
    %62 = vector.broadcast %61 : vector<32x16x1xbf16> to vector<32x16x8xbf16>
    %63 = arith.mulf %62, %6 : vector<32x16x8xbf16>
    %64 = arith.extf %63 : vector<32x16x8xbf16> to vector<32x16x8xf32>
    %cst_22 = arith.constant dense<0.000000e+00> : vector<32x8xf32>
    %65 = vector.multi_reduction <add>, %64, %cst_22 [1] : vector<32x16x8xf32> to vector<32x8xf32>
    %66 = arith.truncf %65 : vector<32x8xf32> to vector<32x8xbf16>
    %c8 = arith.constant 8 : index
    %c0_23 = arith.constant 0 : index
    %67 = vector.load %arg4[%c8, %c0_23] : memref<64x16xbf16, #tpu.memory_space<vmem>>, vector<8x16xbf16>
    %cst_24 = arith.constant dense<0.000000e+00> : vector<32x16xf32>
    %68 = tpu.matmul %66, %67, %cst_24 {dimension_numbers = #tpu.dot_dimension_numbers<[1], [0], [0], [1], [0, 0, 1, 1], [], []>} : vector<32x8xbf16>, vector<8x16xbf16>, vector<32x16xf32> -> vector<32x16xf32>
    %69 = arith.addf %38, %68 : vector<32x16xf32>
    %c6 = arith.constant 6 : index
    %70 = memref.load %arg3[%c6] : memref<24xf32, #tpu.memory_space<smem>>
    %c7 = arith.constant 7 : index
    %71 = memref.load %arg3[%c7] : memref<24xf32, #tpu.memory_space<smem>>
    %c8_25 = arith.constant 8 : index
    %72 = memref.load %arg3[%c8_25] : memref<24xf32, #tpu.memory_space<smem>>
    %73 = vector.broadcast %70 : f32 to vector<32x16xf32>
    %74 = arith.subf %1, %73 : vector<32x16xf32>
    %75 = vector.broadcast %71 : f32 to vector<32x16xf32>
    %76 = arith.subf %3, %75 : vector<32x16xf32>
    %77 = vector.broadcast %72 : f32 to vector<32x16xf32>
    %78 = arith.subf %5, %77 : vector<32x16xf32>
    %79 = arith.mulf %74, %74 : vector<32x16xf32>
    %80 = arith.mulf %76, %76 : vector<32x16xf32>
    %81 = arith.addf %79, %80 : vector<32x16xf32>
    %82 = arith.mulf %78, %78 : vector<32x16xf32>
    %83 = arith.addf %81, %82 : vector<32x16xf32>
    %84 = math.sqrt %83 : vector<32x16xf32>
    %cst_26 = arith.constant 16.666666 : f32
    %85 = vector.broadcast %cst_26 : f32 to vector<32x16xf32>
    %86 = arith.mulf %84, %85 : vector<32x16xf32>
    %cst_27 = arith.constant 1.000000e+00 : f32
    %87 = vector.broadcast %cst_27 : f32 to vector<32x16xf32>
    %88 = arith.subf %87, %86 : vector<32x16xf32>
    %cst_28 = arith.constant 0.000000e+00 : f32
    %89 = vector.broadcast %cst_28 : f32 to vector<32x16xf32>
    %90 = arith.maximumf %88, %89 : vector<32x16xf32>
    %91 = arith.truncf %90 : vector<32x16xf32> to vector<32x16xbf16>
    %92 = vector.shape_cast %91 : vector<32x16xbf16> to vector<32x16x1xbf16>
    %93 = vector.broadcast %92 : vector<32x16x1xbf16> to vector<32x16x8xbf16>
    %94 = arith.mulf %93, %6 : vector<32x16x8xbf16>
    %95 = arith.extf %94 : vector<32x16x8xbf16> to vector<32x16x8xf32>
    %cst_29 = arith.constant dense<0.000000e+00> : vector<32x8xf32>
    %96 = vector.multi_reduction <add>, %95, %cst_29 [1] : vector<32x16x8xf32> to vector<32x8xf32>
    %97 = arith.truncf %96 : vector<32x8xf32> to vector<32x8xbf16>
    %c16 = arith.constant 16 : index
    %c0_30 = arith.constant 0 : index
    %98 = vector.load %arg4[%c16, %c0_30] : memref<64x16xbf16, #tpu.memory_space<vmem>>, vector<8x16xbf16>
    %cst_31 = arith.constant dense<0.000000e+00> : vector<32x16xf32>
    %99 = tpu.matmul %97, %98, %cst_31 {dimension_numbers = #tpu.dot_dimension_numbers<[1], [0], [0], [1], [0, 0, 1, 1], [], []>} : vector<32x8xbf16>, vector<8x16xbf16>, vector<32x16xf32> -> vector<32x16xf32>
    %100 = arith.addf %69, %99 : vector<32x16xf32>
    %c9 = arith.constant 9 : index
    %101 = memref.load %arg3[%c9] : memref<24xf32, #tpu.memory_space<smem>>
    %c10 = arith.constant 10 : index
    %102 = memref.load %arg3[%c10] : memref<24xf32, #tpu.memory_space<smem>>
    %c11 = arith.constant 11 : index
    %103 = memref.load %arg3[%c11] : memref<24xf32, #tpu.memory_space<smem>>
    %104 = vector.broadcast %101 : f32 to vector<32x16xf32>
    %105 = arith.subf %1, %104 : vector<32x16xf32>
    %106 = vector.broadcast %102 : f32 to vector<32x16xf32>
    %107 = arith.subf %3, %106 : vector<32x16xf32>
    %108 = vector.broadcast %103 : f32 to vector<32x16xf32>
    %109 = arith.subf %5, %108 : vector<32x16xf32>
    %110 = arith.mulf %105, %105 : vector<32x16xf32>
    %111 = arith.mulf %107, %107 : vector<32x16xf32>
    %112 = arith.addf %110, %111 : vector<32x16xf32>
    %113 = arith.mulf %109, %109 : vector<32x16xf32>
    %114 = arith.addf %112, %113 : vector<32x16xf32>
    %115 = math.sqrt %114 : vector<32x16xf32>
    %cst_32 = arith.constant 16.666666 : f32
    %116 = vector.broadcast %cst_32 : f32 to vector<32x16xf32>
    %117 = arith.mulf %115, %116 : vector<32x16xf32>
    %cst_33 = arith.constant 1.000000e+00 : f32
    %118 = vector.broadcast %cst_33 : f32 to vector<32x16xf32>
    %119 = arith.subf %118, %117 : vector<32x16xf32>
    %cst_34 = arith.constant 0.000000e+00 : f32
    %120 = vector.broadcast %cst_34 : f32 to vector<32x16xf32>
    %121 = arith.maximumf %119, %120 : vector<32x16xf32>
    %122 = arith.truncf %121 : vector<32x16xf32> to vector<32x16xbf16>
    %123 = vector.shape_cast %122 : vector<32x16xbf16> to vector<32x16x1xbf16>
    %124 = vector.broadcast %123 : vector<32x16x1xbf16> to vector<32x16x8xbf16>
    %125 = arith.mulf %124, %6 : vector<32x16x8xbf16>
    %126 = arith.extf %125 : vector<32x16x8xbf16> to vector<32x16x8xf32>
    %cst_35 = arith.constant dense<0.000000e+00> : vector<32x8xf32>
    %127 = vector.multi_reduction <add>, %126, %cst_35 [1] : vector<32x16x8xf32> to vector<32x8xf32>
    %128 = arith.truncf %127 : vector<32x8xf32> to vector<32x8xbf16>
    %c24 = arith.constant 24 : index
    %c0_36 = arith.constant 0 : index
    %129 = vector.load %arg4[%c24, %c0_36] : memref<64x16xbf16, #tpu.memory_space<vmem>>, vector<8x16xbf16>
    %cst_37 = arith.constant dense<0.000000e+00> : vector<32x16xf32>
    %130 = tpu.matmul %128, %129, %cst_37 {dimension_numbers = #tpu.dot_dimension_numbers<[1], [0], [0], [1], [0, 0, 1, 1], [], []>} : vector<32x8xbf16>, vector<8x16xbf16>, vector<32x16xf32> -> vector<32x16xf32>
    %131 = arith.addf %100, %130 : vector<32x16xf32>
    %c12 = arith.constant 12 : index
    %132 = memref.load %arg3[%c12] : memref<24xf32, #tpu.memory_space<smem>>
    %c13 = arith.constant 13 : index
    %133 = memref.load %arg3[%c13] : memref<24xf32, #tpu.memory_space<smem>>
    %c14 = arith.constant 14 : index
    %134 = memref.load %arg3[%c14] : memref<24xf32, #tpu.memory_space<smem>>
    %135 = vector.broadcast %132 : f32 to vector<32x16xf32>
    %136 = arith.subf %1, %135 : vector<32x16xf32>
    %137 = vector.broadcast %133 : f32 to vector<32x16xf32>
    %138 = arith.subf %3, %137 : vector<32x16xf32>
    %139 = vector.broadcast %134 : f32 to vector<32x16xf32>
    %140 = arith.subf %5, %139 : vector<32x16xf32>
    %141 = arith.mulf %136, %136 : vector<32x16xf32>
    %142 = arith.mulf %138, %138 : vector<32x16xf32>
    %143 = arith.addf %141, %142 : vector<32x16xf32>
    %144 = arith.mulf %140, %140 : vector<32x16xf32>
    %145 = arith.addf %143, %144 : vector<32x16xf32>
    %146 = math.sqrt %145 : vector<32x16xf32>
    %cst_38 = arith.constant 16.666666 : f32
    %147 = vector.broadcast %cst_38 : f32 to vector<32x16xf32>
    %148 = arith.mulf %146, %147 : vector<32x16xf32>
    %cst_39 = arith.constant 1.000000e+00 : f32
    %149 = vector.broadcast %cst_39 : f32 to vector<32x16xf32>
    %150 = arith.subf %149, %148 : vector<32x16xf32>
    %cst_40 = arith.constant 0.000000e+00 : f32
    %151 = vector.broadcast %cst_40 : f32 to vector<32x16xf32>
    %152 = arith.maximumf %150, %151 : vector<32x16xf32>
    %153 = arith.truncf %152 : vector<32x16xf32> to vector<32x16xbf16>
    %154 = vector.shape_cast %153 : vector<32x16xbf16> to vector<32x16x1xbf16>
    %155 = vector.broadcast %154 : vector<32x16x1xbf16> to vector<32x16x8xbf16>
    %156 = arith.mulf %155, %6 : vector<32x16x8xbf16>
    %157 = arith.extf %156 : vector<32x16x8xbf16> to vector<32x16x8xf32>
    %cst_41 = arith.constant dense<0.000000e+00> : vector<32x8xf32>
    %158 = vector.multi_reduction <add>, %157, %cst_41 [1] : vector<32x16x8xf32> to vector<32x8xf32>
    %159 = arith.truncf %158 : vector<32x8xf32> to vector<32x8xbf16>
    %c32 = arith.constant 32 : index
    %c0_42 = arith.constant 0 : index
    %160 = vector.load %arg4[%c32, %c0_42] : memref<64x16xbf16, #tpu.memory_space<vmem>>, vector<8x16xbf16>
    %cst_43 = arith.constant dense<0.000000e+00> : vector<32x16xf32>
    %161 = tpu.matmul %159, %160, %cst_43 {dimension_numbers = #tpu.dot_dimension_numbers<[1], [0], [0], [1], [0, 0, 1, 1], [], []>} : vector<32x8xbf16>, vector<8x16xbf16>, vector<32x16xf32> -> vector<32x16xf32>
    %162 = arith.addf %131, %161 : vector<32x16xf32>
    %c15 = arith.constant 15 : index
    %163 = memref.load %arg3[%c15] : memref<24xf32, #tpu.memory_space<smem>>
    %c16_44 = arith.constant 16 : index
    %164 = memref.load %arg3[%c16_44] : memref<24xf32, #tpu.memory_space<smem>>
    %c17 = arith.constant 17 : index
    %165 = memref.load %arg3[%c17] : memref<24xf32, #tpu.memory_space<smem>>
    %166 = vector.broadcast %163 : f32 to vector<32x16xf32>
    %167 = arith.subf %1, %166 : vector<32x16xf32>
    %168 = vector.broadcast %164 : f32 to vector<32x16xf32>
    %169 = arith.subf %3, %168 : vector<32x16xf32>
    %170 = vector.broadcast %165 : f32 to vector<32x16xf32>
    %171 = arith.subf %5, %170 : vector<32x16xf32>
    %172 = arith.mulf %167, %167 : vector<32x16xf32>
    %173 = arith.mulf %169, %169 : vector<32x16xf32>
    %174 = arith.addf %172, %173 : vector<32x16xf32>
    %175 = arith.mulf %171, %171 : vector<32x16xf32>
    %176 = arith.addf %174, %175 : vector<32x16xf32>
    %177 = math.sqrt %176 : vector<32x16xf32>
    %cst_45 = arith.constant 16.666666 : f32
    %178 = vector.broadcast %cst_45 : f32 to vector<32x16xf32>
    %179 = arith.mulf %177, %178 : vector<32x16xf32>
    %cst_46 = arith.constant 1.000000e+00 : f32
    %180 = vector.broadcast %cst_46 : f32 to vector<32x16xf32>
    %181 = arith.subf %180, %179 : vector<32x16xf32>
    %cst_47 = arith.constant 0.000000e+00 : f32
    %182 = vector.broadcast %cst_47 : f32 to vector<32x16xf32>
    %183 = arith.maximumf %181, %182 : vector<32x16xf32>
    %184 = arith.truncf %183 : vector<32x16xf32> to vector<32x16xbf16>
    %185 = vector.shape_cast %184 : vector<32x16xbf16> to vector<32x16x1xbf16>
    %186 = vector.broadcast %185 : vector<32x16x1xbf16> to vector<32x16x8xbf16>
    %187 = arith.mulf %186, %6 : vector<32x16x8xbf16>
    %188 = arith.extf %187 : vector<32x16x8xbf16> to vector<32x16x8xf32>
    %cst_48 = arith.constant dense<0.000000e+00> : vector<32x8xf32>
    %189 = vector.multi_reduction <add>, %188, %cst_48 [1] : vector<32x16x8xf32> to vector<32x8xf32>
    %190 = arith.truncf %189 : vector<32x8xf32> to vector<32x8xbf16>
    %c40 = arith.constant 40 : index
    %c0_49 = arith.constant 0 : index
    %191 = vector.load %arg4[%c40, %c0_49] : memref<64x16xbf16, #tpu.memory_space<vmem>>, vector<8x16xbf16>
    %cst_50 = arith.constant dense<0.000000e+00> : vector<32x16xf32>
    %192 = tpu.matmul %190, %191, %cst_50 {dimension_numbers = #tpu.dot_dimension_numbers<[1], [0], [0], [1], [0, 0, 1, 1], [], []>} : vector<32x8xbf16>, vector<8x16xbf16>, vector<32x16xf32> -> vector<32x16xf32>
    %193 = arith.addf %162, %192 : vector<32x16xf32>
    %c18 = arith.constant 18 : index
    %194 = memref.load %arg3[%c18] : memref<24xf32, #tpu.memory_space<smem>>
    %c19 = arith.constant 19 : index
    %195 = memref.load %arg3[%c19] : memref<24xf32, #tpu.memory_space<smem>>
    %c20 = arith.constant 20 : index
    %196 = memref.load %arg3[%c20] : memref<24xf32, #tpu.memory_space<smem>>
    %197 = vector.broadcast %194 : f32 to vector<32x16xf32>
    %198 = arith.subf %1, %197 : vector<32x16xf32>
    %199 = vector.broadcast %195 : f32 to vector<32x16xf32>
    %200 = arith.subf %3, %199 : vector<32x16xf32>
    %201 = vector.broadcast %196 : f32 to vector<32x16xf32>
    %202 = arith.subf %5, %201 : vector<32x16xf32>
    %203 = arith.mulf %198, %198 : vector<32x16xf32>
    %204 = arith.mulf %200, %200 : vector<32x16xf32>
    %205 = arith.addf %203, %204 : vector<32x16xf32>
    %206 = arith.mulf %202, %202 : vector<32x16xf32>
    %207 = arith.addf %205, %206 : vector<32x16xf32>
    %208 = math.sqrt %207 : vector<32x16xf32>
    %cst_51 = arith.constant 16.666666 : f32
    %209 = vector.broadcast %cst_51 : f32 to vector<32x16xf32>
    %210 = arith.mulf %208, %209 : vector<32x16xf32>
    %cst_52 = arith.constant 1.000000e+00 : f32
    %211 = vector.broadcast %cst_52 : f32 to vector<32x16xf32>
    %212 = arith.subf %211, %210 : vector<32x16xf32>
    %cst_53 = arith.constant 0.000000e+00 : f32
    %213 = vector.broadcast %cst_53 : f32 to vector<32x16xf32>
    %214 = arith.maximumf %212, %213 : vector<32x16xf32>
    %215 = arith.truncf %214 : vector<32x16xf32> to vector<32x16xbf16>
    %216 = vector.shape_cast %215 : vector<32x16xbf16> to vector<32x16x1xbf16>
    %217 = vector.broadcast %216 : vector<32x16x1xbf16> to vector<32x16x8xbf16>
    %218 = arith.mulf %217, %6 : vector<32x16x8xbf16>
    %219 = arith.extf %218 : vector<32x16x8xbf16> to vector<32x16x8xf32>
    %cst_54 = arith.constant dense<0.000000e+00> : vector<32x8xf32>
    %220 = vector.multi_reduction <add>, %219, %cst_54 [1] : vector<32x16x8xf32> to vector<32x8xf32>
    %221 = arith.truncf %220 : vector<32x8xf32> to vector<32x8xbf16>
    %c48 = arith.constant 48 : index
    %c0_55 = arith.constant 0 : index
    %222 = vector.load %arg4[%c48, %c0_55] : memref<64x16xbf16, #tpu.memory_space<vmem>>, vector<8x16xbf16>
    %cst_56 = arith.constant dense<0.000000e+00> : vector<32x16xf32>
    %223 = tpu.matmul %221, %222, %cst_56 {dimension_numbers = #tpu.dot_dimension_numbers<[1], [0], [0], [1], [0, 0, 1, 1], [], []>} : vector<32x8xbf16>, vector<8x16xbf16>, vector<32x16xf32> -> vector<32x16xf32>
    %224 = arith.addf %193, %223 : vector<32x16xf32>
    %c21 = arith.constant 21 : index
    %225 = memref.load %arg3[%c21] : memref<24xf32, #tpu.memory_space<smem>>
    %c22 = arith.constant 22 : index
    %226 = memref.load %arg3[%c22] : memref<24xf32, #tpu.memory_space<smem>>
    %c23 = arith.constant 23 : index
    %227 = memref.load %arg3[%c23] : memref<24xf32, #tpu.memory_space<smem>>
    %228 = vector.broadcast %225 : f32 to vector<32x16xf32>
    %229 = arith.subf %1, %228 : vector<32x16xf32>
    %230 = vector.broadcast %226 : f32 to vector<32x16xf32>
    %231 = arith.subf %3, %230 : vector<32x16xf32>
    %232 = vector.broadcast %227 : f32 to vector<32x16xf32>
    %233 = arith.subf %5, %232 : vector<32x16xf32>
    %234 = arith.mulf %229, %229 : vector<32x16xf32>
    %235 = arith.mulf %231, %231 : vector<32x16xf32>
    %236 = arith.addf %234, %235 : vector<32x16xf32>
    %237 = arith.mulf %233, %233 : vector<32x16xf32>
    %238 = arith.addf %236, %237 : vector<32x16xf32>
    %239 = math.sqrt %238 : vector<32x16xf32>
    %cst_57 = arith.constant 16.666666 : f32
    %240 = vector.broadcast %cst_57 : f32 to vector<32x16xf32>
    %241 = arith.mulf %239, %240 : vector<32x16xf32>
    %cst_58 = arith.constant 1.000000e+00 : f32
    %242 = vector.broadcast %cst_58 : f32 to vector<32x16xf32>
    %243 = arith.subf %242, %241 : vector<32x16xf32>
    %cst_59 = arith.constant 0.000000e+00 : f32
    %244 = vector.broadcast %cst_59 : f32 to vector<32x16xf32>
    %245 = arith.maximumf %243, %244 : vector<32x16xf32>
    %246 = arith.truncf %245 : vector<32x16xf32> to vector<32x16xbf16>
    %247 = vector.shape_cast %246 : vector<32x16xbf16> to vector<32x16x1xbf16>
    %248 = vector.broadcast %247 : vector<32x16x1xbf16> to vector<32x16x8xbf16>
    %249 = arith.mulf %248, %6 : vector<32x16x8xbf16>
    %250 = arith.extf %249 : vector<32x16x8xbf16> to vector<32x16x8xf32>
    %cst_60 = arith.constant dense<0.000000e+00> : vector<32x8xf32>
    %251 = vector.multi_reduction <add>, %250, %cst_60 [1] : vector<32x16x8xf32> to vector<32x8xf32>
    %252 = arith.truncf %251 : vector<32x8xf32> to vector<32x8xbf16>
    %c56 = arith.constant 56 : index
    %c0_61 = arith.constant 0 : index
    %253 = vector.load %arg4[%c56, %c0_61] : memref<64x16xbf16, #tpu.memory_space<vmem>>, vector<8x16xbf16>
    %cst_62 = arith.constant dense<0.000000e+00> : vector<32x16xf32>
    %254 = tpu.matmul %252, %253, %cst_62 {dimension_numbers = #tpu.dot_dimension_numbers<[1], [0], [0], [1], [0, 0, 1, 1], [], []>} : vector<32x8xbf16>, vector<8x16xbf16>, vector<32x16xf32> -> vector<32x16xf32>
    %255 = arith.addf %224, %254 : vector<32x16xf32>
    %c0_63 = arith.constant 0 : index
    %c0_64 = arith.constant 0 : index
    %256 = vector.load %arg5[%c0_63, %c0_64] : memref<1x16xf32, #tpu.memory_space<vmem>>, vector<1x16xf32>
    %257 = vector.broadcast %256 : vector<1x16xf32> to vector<32x16xf32>
    %258 = arith.addf %255, %257 : vector<32x16xf32>
    %cst_65 = arith.constant 0.000000e+00 : f32
    %259 = vector.broadcast %cst_65 : f32 to vector<32x16xf32>
    %260 = arith.cmpf oge, %258, %259 : vector<32x16xf32>
    %cst_66 = arith.constant 1.000000e-01 : f32
    %261 = vector.broadcast %cst_66 : f32 to vector<32x16xf32>
    %262 = arith.mulf %261, %258 : vector<32x16xf32>
    %263 = arith.select %260, %258, %262 : vector<32x16xi1>, vector<32x16xf32>
    %264 = arith.truncf %263 : vector<32x16xf32> to vector<32x16xbf16>
    %c0_67 = arith.constant 0 : index
    %c0_68 = arith.constant 0 : index
    %265 = vector.load %arg6[%c0_67, %c0_68] : memref<32x16xbf16, #tpu.memory_space<vmem>>, vector<32x16xbf16>
    tpu.vector_store %arg6[%c0_67, %c0_68], %264 {strides = array<i32>} : memref<32x16xbf16, #tpu.memory_space<vmem>>, vector<32x16xbf16>,
    return
  }
  func.func @transform_0(%arg0: i32) -> (i32, i32, i32) {
    %c0_i32 = arith.constant 0 : i32
    %c0_i32_0 = arith.constant 0 : i32
    %c0_i32_1 = arith.constant 0 : i32
    return %c0_i32, %arg0, %c0_i32_0 : i32, i32, i32
  }
  func.func @transform_1(%arg0: i32) -> (i32, i32, i32) {
    %c0_i32 = arith.constant 0 : i32
    %c0_i32_0 = arith.constant 0 : i32
    %c0_i32_1 = arith.constant 0 : i32
    return %arg0, %c0_i32, %c0_i32_0 : i32, i32, i32
  }
  func.func @transform_2(%arg0: i32) -> i32 {
    %c0_i32 = arith.constant 0 : i32
    %c0_i32_0 = arith.constant 0 : i32
    return %c0_i32 : i32
  }
  func.func @transform_3(%arg0: i32) -> (i32, i32) {
    %c0_i32 = arith.constant 0 : i32
    %c0_i32_0 = arith.constant 0 : i32
    %c0_i32_1 = arith.constant 0 : i32
    return %c0_i32, %c0_i32_0 : i32, i32
  }
  func.func @transform_4(%arg0: i32) -> (i32, i32) {
    %c0_i32 = arith.constant 0 : i32
    %c0_i32_0 = arith.constant 0 : i32
    %c0_i32_1 = arith.constant 0 : i32
    return %c0_i32, %c0_i32_0 : i32, i32
  }
  func.func @transform_5(%arg0: i32) -> (i32, i32) {
    %c0_i32 = arith.constant 0 : i32
    %c0_i32_0 = arith.constant 0 : i32
    return %arg0, %c0_i32 : i32, i32
  }
}

</mosaic_0001>

<llo_original>
// kernel: tpu_custom_call.1
$region0: #{tpu_custom_call.1}
  #allocation0 [shape = 'u32[]', space=smem, size = 0x4, offset = 0x4, fixed_abs, tag = 'smem constant byte address 0x4 - core index']
  #allocation1 [shape = 'u32[144,128]{1,0:T(1,128)}', space=vmem, size = 0x12000, scoped, tag = 'internal scratch']
  %s0 = inlined_call_operand.vmem [shape: f32[3,64,16], index: 0, kind: input, shape index: {}]
  %s1 = inlined_call_operand.vmem [shape: bf16[64,16,8], index: 1, kind: input, shape index: {}]
  %s2 = inlined_call_operand.vmem [shape: f32[24], index: 2, kind: input, shape index: {}]
  %s3 = inlined_call_operand.vmem [shape: bf16[64,16], index: 3, kind: input, shape index: {}]
  %s4 = inlined_call_operand.vmem [shape: f32[1,16], index: 4, kind: input, shape index: {}]
  %s5 = inlined_call_operand.vmem [shape: bf16[64,16], index: 5, kind: output, shape index: {}]
  %s6 = sld [smem:[#allocation0]]
  $region95: #{tpu_custom_call.1} parent=0
    _
  %s8 = ssub.s32 1, %s6
  %s9 = scalar_select 0, %s8, %s6
  $region1: #{tpu_custom_call.1} parent=0
    #allocation2 [shape = 'u8[98304]{0}', space=vmem, size = 0x18000, scoped, tag = 'input window, operand 0']
    #allocation3 [shape = 'u8[512]{0}', space=smem, size = 0x200, scoped, tag = 'input window, operand 2, single buffered']
    #allocation4 [shape = 's32[2]{0}', space=sflag, size = 0x8, scoped, tag = 'scoped memory for tpu_custom_call.1']
    %10 = vsyncpa [#allocation4], 0
    loop: start=0, step=1, limit=4
    $region2: #{tpu_custom_call.1} parent=1 // loop_pre_header
      _
    $region3: #{tpu_custom_call.1} parent=1 // loop_header
      %s12 = sphi 0, %s16
      %p13 = scmp.ge.s32.totalorder %s12, 4
      %s22 = sphi 0, %s24
      %s25 = sphi 0, %s22
      %s26 = sphi 0, %s25
      %s42 = sphi 0, %s26
      %s48 = sphi 0, %s50
      %s51 = sphi 0, %s48
      %s52 = sphi 0, %s51
      %s68 = sphi 0, %s52
      %s72 = sphi 0, %s72
      %s74 = sphi 0, %s72
      %s75 = sphi 0, %s74
      %s89 = sphi 0, %s75
      %s93 = sphi 0, %s93
      %s95 = sphi 0, %s93
      %s96 = sphi 0, %s95
      %s110 = sphi 0, %s96
      %s114 = sphi 0, %s114
      %s116 = sphi 0, %s114
      %s117 = sphi 0, %s116
      %s131 = sphi 0, %s117
      %s137 = sphi 0, %s139
      %s140 = sphi 0, %s137
      %s141 = sphi 0, %s140
      %s157 = sphi 0, %s141
    $region4: #{tpu_custom_call.1} parent=1 // loop_header_branch
      %15 = sbr.rel (%p13) target = $region8
    $region5: #{tpu_custom_call.1} parent=1 // loop_body
      %s17 = ssub.s32 %s12, 1
      %s18 = ssub.s32 %s12, 2
      %s19 = sadd.s32 %s12, 1
      %s20 = ssub.s32 %s12, %s19
      %p21 = scmp.eq.s32.totalorder %s20, 0
      %s23 = sadd.s32 %s22, 1
      %s24 = scalar_select %p21, %s22, %s23
      %p27 = pneg %p21
      %p28 = scmp.eq.s32.totalorder %s12, 1
      %p29 = por %p27, %p28
      %p30 = scmp.ne.s32.totalorder %s22, %s25
      %p31 = scmp.eq.s32.totalorder %s12, 0
      %p32 = por %p30, %p31
      %p33 = scmp.ne.s32.totalorder %s22, %s25
      %p34 = scmp.eq.s32.totalorder %s17, 1
      %p35 = por %p33, %p34
      %p36 = scmp.ne.s32.totalorder %s25, %s26
      %p37 = scmp.eq.s32.totalorder %s17, 0
      %p38 = por %p36, %p37
      %p39 = scmp.ne.s32.totalorder %s25, %s26
      %p40 = scmp.eq.s32.totalorder %s18, 1
      %p41 = por %p39, %p40
      %p43 = scmp.ne.s32.totalorder %s26, %s42
      %p44 = scmp.eq.s32.totalorder %s18, 0
      %p45 = por %p43, %p44
      %s46 = ssub.s32 %s12, %s19
      %p47 = scmp.eq.s32.totalorder %s46, 0
      %s49 = sadd.s32 %s48, 1
      %s50 = scalar_select %p47, %s48, %s49
      %p53 = pneg %p47
      %p54 = scmp.eq.s32.totalorder %s12, 1
      %p55 = por %p53, %p54
      %p56 = scmp.ne.s32.totalorder %s48, %s51
      %p57 = scmp.eq.s32.totalorder %s12, 0
      %p58 = por %p56, %p57
      %p59 = scmp.ne.s32.totalorder %s48, %s51
      %p60 = scmp.eq.s32.totalorder %s17, 1
      %p61 = por %p59, %p60
      %p62 = scmp.ne.s32.totalorder %s51, %s52
      %p63 = scmp.eq.s32.totalorder %s17, 0
      %p64 = por %p62, %p63
      %p65 = scmp.ne.s32.totalorder %s51, %s52
      %p66 = scmp.eq.s32.totalorder %s18, 1
      %p67 = por %p65, %p66
      %p69 = scmp.ne.s32.totalorder %s52, %s68
      %p70 = scmp.eq.s32.totalorder %s18, 0
      %p71 = por %p69, %p70
      %s73 = sadd.s32 %s72, 1
      %p76 = scmp.eq.s32.totalorder %s12, 1
      %p77 = scmp.ne.s32.totalorder %s72, %s74
      %p78 = scmp.eq.s32.totalorder %s12, 0
      %p79 = por %p77, %p78
      %p80 = scmp.ne.s32.totalorder %s72, %s74
      %p81 = scmp.eq.s32.totalorder %s17, 1
      %p82 = por %p80, %p81
      %p83 = scmp.ne.s32.totalorder %s74, %s75
      %p84 = scmp.eq.s32.totalorder %s17, 0
      %p85 = por %p83, %p84
      %p86 = scmp.ne.s32.totalorder %s74, %s75
      %p87 = scmp.eq.s32.totalorder %s18, 1
      %p88 = por %p86, %p87
      %p90 = scmp.ne.s32.totalorder %s75, %s89
      %p91 = scmp.eq.s32.totalorder %s18, 0
      %p92 = por %p90, %p91
      %s94 = sadd.s32 %s93, 1
      %p97 = scmp.eq.s32.totalorder %s12, 1
      %p98 = scmp.ne.s32.totalorder %s93, %s95
      %p99 = scmp.eq.s32.totalorder %s12, 0
      %p100 = por %p98, %p99
      %p101 = scmp.ne.s32.totalorder %s93, %s95
      %p102 = scmp.eq.s32.totalorder %s17, 1
      %p103 = por %p101, %p102
      %p104 = scmp.ne.s32.totalorder %s95, %s96
      %p105 = scmp.eq.s32.totalorder %s17, 0
      %p106 = por %p104, %p105
      %p107 = scmp.ne.s32.totalorder %s95, %s96
      %p108 = scmp.eq.s32.totalorder %s18, 1
      %p109 = por %p107, %p108
      %p111 = scmp.ne.s32.totalorder %s96, %s110
      %p112 = scmp.eq.s32.totalorder %s18, 0
      %p113 = por %p111, %p112
      %s115 = sadd.s32 %s114, 1
      %p118 = scmp.eq.s32.totalorder %s12, 1
      %p119 = scmp.ne.s32.totalorder %s114, %s116
      %p120 = scmp.eq.s32.totalorder %s12, 0
      %p121 = por %p119, %p120
      %p122 = scmp.ne.s32.totalorder %s114, %s116
      %p123 = scmp.eq.s32.totalorder %s17, 1
      %p124 = por %p122, %p123
      %p125 = scmp.ne.s32.totalorder %s116, %s117
      %p126 = scmp.eq.s32.totalorder %s17, 0
      %p127 = por %p125, %p126
      %p128 = scmp.ne.s32.totalorder %s116, %s117
      %p129 = scmp.eq.s32.totalorder %s18, 1
      %p130 = por %p128, %p129
      %p132 = scmp.ne.s32.totalorder %s117, %s131
      %p133 = scmp.eq.s32.totalorder %s18, 0
      %p134 = por %p132, %p133
      %s135 = ssub.s32 %s12, %s19
      %p136 = scmp.eq.s32.totalorder %s135, 0
      %s138 = sadd.s32 %s137, 1
      %s139 = scalar_select %p136, %s137, %s138
      %p142 = pneg %p136
      %p143 = scmp.eq.s32.totalorder %s12, 1
      %p144 = por %p142, %p143
      %p145 = scmp.ne.s32.totalorder %s137, %s140
      %p146 = scmp.eq.s32.totalorder %s12, 0
      %p147 = por %p145, %p146
      %p148 = scmp.ne.s32.totalorder %s137, %s140
      %p149 = scmp.eq.s32.totalorder %s17, 1
      %p150 = por %p148, %p149
      %p151 = scmp.ne.s32.totalorder %s140, %s141
      %p152 = scmp.eq.s32.totalorder %s17, 0
      %p153 = por %p151, %p152
      %p154 = scmp.ne.s32.totalorder %s140, %s141
      %p155 = scmp.eq.s32.totalorder %s18, 1
      %p156 = por %p154, %p155
      %p158 = scmp.ne.s32.totalorder %s141, %s157
      %p159 = scmp.eq.s32.totalorder %s18, 0
      %p160 = por %p158, %p159
      %p161 = scmp.le.s32.totalorder 1, %s12
      %p162 = scmp.lt.s32.totalorder %s12, 3
      %p163 = pnand %p161, %p162
      %p164 = pneg %p163
      // Predicated region
      $region9: #{tpu_custom_call.1} parent=5 // pred_check
        _
      $region10: #{tpu_custom_call.1} parent=5 // pred_check_branch
        %166 = sbr.rel (%p163) target = $region12
      $region11: #{tpu_custom_call.1} parent=5 // pred_region
        %s167 = ssub.s32 %s12, 1
        // Predicated region
        $region13: #{tpu_custom_call.1} parent=11 // pred_check
          %p168 = pneg %p85
        $region14: #{tpu_custom_call.1} parent=11 // pred_check_branch
          %170 = sbr.rel (%p168) target = $region16
        $region15: #{tpu_custom_call.1} parent=11 // pred_region
          %s172 = ssub.s32 16, 16
          %173 = vsyncadd [#allocation4], %s172
          %s175 = sshll.u32 %s2, 4
          %s176 = int_to_ptr.vmem [resolvable:$true] %s175
          %178 = dma.vmem_to_smem %s176, 16, [#allocation3], [#allocation4]
        $region16: #{tpu_custom_call.1} parent=11 // pred_fallthru
          _
        // Predicated region
        $region17: #{tpu_custom_call.1} parent=11 // pred_check
          %p179 = pneg %p106
        $region18: #{tpu_custom_call.1} parent=11 // pred_check_branch
          %181 = sbr.rel (%p179) target = $region20
        $region19: #{tpu_custom_call.1} parent=11 // pred_region
          _
        $region20: #{tpu_custom_call.1} parent=11 // pred_fallthru
          _
        // Predicated region
        $region21: #{tpu_custom_call.1} parent=11 // pred_check
          %p182 = pneg %p127
        $region22: #{tpu_custom_call.1} parent=11 // pred_check_branch
          %184 = sbr.rel (%p182) target = $region24
        $region23: #{tpu_custom_call.1} parent=11 // pred_region
          _
        $region24: #{tpu_custom_call.1} parent=11 // pred_fallthru
          _
      $region12: #{tpu_custom_call.1} parent=5 // pred_fallthru
        _
      %p185 = scmp.lt.s32.totalorder %s12, 2
      // Predicated region
      $region25: #{tpu_custom_call.1} parent=5 // pred_check
        %p186 = pneg %p185
      $region26: #{tpu_custom_call.1} parent=5 // pred_check_branch
        %188 = sbr.rel (%p186) target = $region28
      $region27: #{tpu_custom_call.1} parent=5 // pred_region
        // Predicated region
        $region29: #{tpu_custom_call.1} parent=27 // pred_check
          %p189 = pneg %p32
        $region30: #{tpu_custom_call.1} parent=27 // pred_check_branch
          %191 = sbr.rel (%p189) target = $region32
        $region31: #{tpu_custom_call.1} parent=27 // pred_region
          %s192 = sand.u32 %s22, 1
          %s193 = sand.u32 %s22, 1
          %s194 = smul.addr %s193, 96
          %s195 = scalar_lea.vmem [#allocation2], %s194
          %s196 = smul.u32 4, %s12
          %s197 = smul.addr %s196, 8
          %s198 = scalar_lea.vmem %s0, %s197
          // Predicated region
          $region33: #{tpu_custom_call.1} parent=31 // pred_check
            _
          $region34: #{tpu_custom_call.1} parent=31 // pred_check_branch
            %200 = sbr.rel (0) target = $region36
          $region35: #{tpu_custom_call.1} parent=31 // pred_region
            // Predicated region
            $region37: #{tpu_custom_call.1} parent=35 // pred_check
              _
            $region38: #{tpu_custom_call.1} parent=35 // pred_check_branch
              %202 = sbr.rel (0) target = $region40
            $region39: #{tpu_custom_call.1} parent=35 // pred_region
              // Predicated region
              $region52: #{tpu_custom_call.1} parent=39 // pred_check
                _
              $region53: #{tpu_custom_call.1} parent=39 // pred_check_branch
                %239 = sbr.rel (0) target = $region55
              $region54: #{tpu_custom_call.1} parent=39 // pred_region
                loop: start=0, step=1, limit=1
                $region56: #{tpu_custom_call.1} parent=54 // loop_pre_header
                  _
                $region57: #{tpu_custom_call.1} parent=54 // loop_header
                  %s241 = sphi 0, %s245
                  %p242 = scmp.ge.s32.totalorder %s241, 1
                  %s246 = sphi %s198, %s198
                  %s247 = sphi %s195, %s195
                $region58: #{tpu_custom_call.1} parent=54 // loop_header_branch
                  %244 = sbr.rel (%p242) target = $region62
                $region59: #{tpu_custom_call.1} parent=54 // loop_body
                  %v248 = vld [vmem:[%s246] sm:$0xff]
                  %249 = vst [vmem:[%s247] sm:$0xff] %v248
                  %v250 = vld [vmem:[%s246 + $0x8] sm:$0xff]
                  %251 = vst [vmem:[%s247 + $0x8] sm:$0xff] %v250
                  %v252 = vld [vmem:[%s246 + $0x10] sm:$0xff]
                  %253 = vst [vmem:[%s247 + $0x10] sm:$0xff] %v252
                  %v254 = vld [vmem:[%s246 + $0x18] sm:$0xff]
                  %255 = vst [vmem:[%s247 + $0x18] sm:$0xff] %v254
                  %v256 = vld [vmem:[%s246 + $0x40] sm:$0xff]
                  %257 = vst [vmem:[%s247 + $0x20] sm:$0xff] %v256
                  %v258 = vld [vmem:[%s246 + $0x48] sm:$0xff]
                  %259 = vst [vmem:[%s247 + $0x28] sm:$0xff] %v258
                  %v260 = vld [vmem:[%s246 + $0x50] sm:$0xff]
                  %261 = vst [vmem:[%s247 + $0x30] sm:$0xff] %v260
                  %v262 = vld [vmem:[%s246 + $0x58] sm:$0xff]
                  %263 = vst [vmem:[%s247 + $0x38] sm:$0xff] %v262
                  %v264 = vld [vmem:[%s246 + $0x80] sm:$0xff]
                  %265 = vst [vmem:[%s247 + $0x40] sm:$0xff] %v264
                  %v266 = vld [vmem:[%s246 + $0x88] sm:$0xff]
                  %267 = vst [vmem:[%s247 + $0x48] sm:$0xff] %v266
                  %v268 = vld [vmem:[%s246 + $0x90] sm:$0xff]
                  %269 = vst [vmem:[%s247 + $0x50] sm:$0xff] %v268
                  %v270 = vld [vmem:[%s246 + $0x98] sm:$0xff]
                  %271 = vst [vmem:[%s247 + $0x58] sm:$0xff] %v270
                $region60: #{tpu_custom_call.1} parent=54 // loop_footer
                  %s245 = sadd.s32 1, %s241
                $region61: #{tpu_custom_call.1} parent=54 // loop_footer_branch
                  %240 = sbr.rel target = $region57
                $region62: #{tpu_custom_call.1} parent=54 // loop_exit
                  _
              $region55: #{tpu_custom_call.1} parent=39 // pred_fallthru
                _
              // Predicated region
              $region63: #{tpu_custom_call.1} parent=39 // pred_check
                _
              $region64: #{tpu_custom_call.1} parent=39 // pred_check_branch
                %273 = sbr.rel target = $region66
              $region65: #{tpu_custom_call.1} parent=39 // pred_region
                _
              $region66: #{tpu_custom_call.1} parent=39 // pred_fallthru
                _
            $region40: #{tpu_custom_call.1} parent=35 // pred_fallthru
              _
            // Predicated region
            $region41: #{tpu_custom_call.1} parent=35 // pred_check
              _
            $region42: #{tpu_custom_call.1} parent=35 // pred_check_branch
              %204 = sbr.rel target = $region44
            $region43: #{tpu_custom_call.1} parent=35 // pred_region
              loop: start=0, step=1, limit=1
              $region45: #{tpu_custom_call.1} parent=43 // loop_pre_header
                _
              $region46: #{tpu_custom_call.1} parent=43 // loop_header
                %s207 = sphi 0, %s211
                %p208 = scmp.ge.s32.totalorder %s207, 1
                %s212 = sphi %s198, %s198
                %s213 = sphi %s195, %s195
              $region47: #{tpu_custom_call.1} parent=43 // loop_header_branch
                %210 = sbr.rel (%p208) target = $region51
              $region48: #{tpu_custom_call.1} parent=43 // loop_body
                %v214 = vld [vmem:[%s212] sm:$0xff]
                %215 = vst [vmem:[%s213] sm:$0xff] %v214
                %v216 = vld [vmem:[%s212 + $0x8] sm:$0xff]
                %217 = vst [vmem:[%s213 + $0x8] sm:$0xff] %v216
                %v218 = vld [vmem:[%s212 + $0x10] sm:$0xff]
                %219 = vst [vmem:[%s213 + $0x10] sm:$0xff] %v218
                %v220 = vld [vmem:[%s212 + $0x18] sm:$0xff]
                %221 = vst [vmem:[%s213 + $0x18] sm:$0xff] %v220
                %v222 = vld [vmem:[%s212 + $0x40] sm:$0xff]
                %223 = vst [vmem:[%s213 + $0x20] sm:$0xff] %v222
                %v224 = vld [vmem:[%s212 + $0x48] sm:$0xff]
                %225 = vst [vmem:[%s213 + $0x28] sm:$0xff] %v224
                %v226 = vld [vmem:[%s212 + $0x50] sm:$0xff]
                %227 = vst [vmem:[%s213 + $0x30] sm:$0xff] %v226
                %v228 = vld [vmem:[%s212 + $0x58] sm:$0xff]
                %229 = vst [vmem:[%s213 + $0x38] sm:$0xff] %v228
                %v230 = vld [vmem:[%s212 + $0x80] sm:$0xff]
                %231 = vst [vmem:[%s213 + $0x40] sm:$0xff] %v230
                %v232 = vld [vmem:[%s212 + $0x88] sm:$0xff]
                %233 = vst [vmem:[%s213 + $0x48] sm:$0xff] %v232
                %v234 = vld [vmem:[%s212 + $0x90] sm:$0xff]
                %235 = vst [vmem:[%s213 + $0x50] sm:$0xff] %v234
                %v236 = vld [vmem:[%s212 + $0x98] sm:$0xff]
                %237 = vst [vmem:[%s213 + $0x58] sm:$0xff] %v236
              $region49: #{tpu_custom_call.1} parent=43 // loop_footer
                %s211 = sadd.s32 1, %s207
              $region50: #{tpu_custom_call.1} parent=43 // loop_footer_branch
                %206 = sbr.rel target = $region46
              $region51: #{tpu_custom_call.1} parent=43 // loop_exit
                _
            $region44: #{tpu_custom_call.1} parent=35 // pred_fallthru
              _
          $region36: #{tpu_custom_call.1} parent=31 // pred_fallthru
            _
          %274 = vnop
        $region32: #{tpu_custom_call.1} parent=27 // pred_fallthru
          _
        // Predicated region
        $region67: #{tpu_custom_call.1} parent=27 // pred_check
          %p275 = pneg %p58
        $region68: #{tpu_custom_call.1} parent=27 // pred_check_branch
          %277 = sbr.rel (%p275) target = $region70
        $region69: #{tpu_custom_call.1} parent=27 // pred_region
          %s278 = smul.u32 32, %s12
          %p279 = scmp.lt.s32.totalorder %s278, 63
          %s280 = scalar_select %p279, %s278, 63
          %s281 = smul.addr %s280, 2
          %s282 = smul.addr %s281, 4
          %s283 = scalar_lea.vmem %s1, %s282
          %s284 = smul.u32 32, %s12
        $region70: #{tpu_custom_call.1} parent=27 // pred_fallthru
          _
      $region28: #{tpu_custom_call.1} parent=5 // pred_fallthru
        _
      %p285 = scmp.le.s32.totalorder 1, %s12
      %p286 = scmp.lt.s32.totalorder %s12, 3
      %p287 = pnand %p285, %p286
      %p288 = pneg %p287
      // Predicated region
      $region71: #{tpu_custom_call.1} parent=5 // pred_check
        _
      $region72: #{tpu_custom_call.1} parent=5 // pred_check_branch
        %290 = sbr.rel (%p287) target = $region74
      $region73: #{tpu_custom_call.1} parent=5 // pred_region
        %s291 = ssub.s32 %s12, 1
        %s292 = sand.u32 %s25, 1
        %s293 = sand.u32 %s25, 1
        %s294 = smul.addr %s293, 96
        %s295 = scalar_lea.vmem [#allocation2], %s294
        // Predicated region
        $region75: #{tpu_custom_call.1} parent=73 // pred_check
          %p296 = pneg %p38
        $region76: #{tpu_custom_call.1} parent=73 // pred_check_branch
          %298 = sbr.rel (%p296) target = $region78
        $region77: #{tpu_custom_call.1} parent=73 // pred_region
          _
        $region78: #{tpu_custom_call.1} parent=73 // pred_fallthru
          _
        // Predicated region
        $region79: #{tpu_custom_call.1} parent=73 // pred_check
          %p299 = pneg %p85
        $region80: #{tpu_custom_call.1} parent=73 // pred_check_branch
          %301 = sbr.rel (%p299) target = $region82
        $region81: #{tpu_custom_call.1} parent=73 // pred_region
          %302 = dma.done [#allocation4], 16
        $region82: #{tpu_custom_call.1} parent=73 // pred_fallthru
          _
        %303 = sfence
        %s304 = sand.u32 %s25, 1
        %s305 = sand.u32 %s25, 1
        %s306 = smul.addr %s305, 96
        %s307 = scalar_lea.vmem [#allocation2], %s306
        %p308 = pneg %p38
        %p309 = pneg %p35
        %s310 = smul.u32 32, %s17
        %p311 = scmp.lt.s32.totalorder %s310, 63
        %s312 = scalar_select %p311, %s310, 63
        %s313 = smul.addr %s312, 2
        %s314 = smul.addr %s313, 4
        %s315 = scalar_lea.vmem %s1, %s314
        %p316 = pneg %p64
        %p317 = pneg %p61
        %p318 = pneg %p85
        %p319 = pneg %p82
        %p320 = pneg %p106
        %p321 = pneg %p103
        %p322 = pneg %p127
        %p323 = pneg %p124
        %p324 = pneg %p153
        %p325 = pneg %p150
        %s326 = smul.u32 4, %s17
        %p327 = scmp.lt.s32.totalorder %s326, 7
        %s328 = scalar_select %p327, %s326, 7
        %s329 = smul.addr %s328, 4
        %s330 = scalar_lea.vmem %s5, %s329
        %s331 = smul.u32 4, %s17
        %s332 = smul.u32 32, %s17
        %p333 = scmp.lt.s32.totalorder %s332, 63
        %s334 = scalar_select %p333, %s332, 63
        %s335 = smul.addr %s334, 2
        %s336 = smul.addr %s335, 4
        %s337 = scalar_lea.vmem %s1, %s336
        %s338 = smul.u32 32, %s17
        %s339 = smul.u32 4, %s17
        %p340 = scmp.lt.s32.totalorder %s339, 7
        %s341 = scalar_select %p340, %s339, 7
        %s342 = smul.addr %s341, 4
        %s343 = scalar_lea.vmem %s5, %s342
        %s344 = smul.u32 4, %s17
        %v346 = vld [vmem:[%s295] sm:$0xff]
        %v347 = vld [vmem:[%s295 + $0x8] sm:$0xff]
        %v348 = vld [vmem:[%s295 + $0x10] sm:$0xff]
        %v349 = vld [vmem:[%s295 + $0x18] sm:$0xff]
        %s350 = scalar_lea.vmem %s295, 32 [#allocation2]
        %v351 = vld [vmem:[%s350] sm:$0xff]
        %v352 = vld [vmem:[%s350 + $0x8] sm:$0xff]
        %v353 = vld [vmem:[%s350 + $0x10] sm:$0xff]
        %v354 = vld [vmem:[%s350 + $0x18] sm:$0xff]
        %s355 = scalar_lea.vmem %s295, 64 [#allocation2]
        %v356 = vld [vmem:[%s355] sm:$0xff]
        %v357 = vld [vmem:[%s355 + $0x8] sm:$0xff]
        %v358 = vld [vmem:[%s355 + $0x10] sm:$0xff]
        %v359 = vld [vmem:[%s355 + $0x18] sm:$0xff]
        %v360 = vld [vmem:[%s337] sm:$0xf]
        %v361 = vld [vmem:[%s337 + $0x4] sm:$0xf]
        %v362 = vld [vmem:[%s337 + $0x8] sm:$0xf]
        %v363 = vld [vmem:[%s337 + $0xc] sm:$0xf]
        %v364 = vld [vmem:[%s337 + $0x10] sm:$0xf]
        %v365 = vld [vmem:[%s337 + $0x14] sm:$0xf]
        %v366 = vld [vmem:[%s337 + $0x18] sm:$0xf]
        %v367 = vld [vmem:[%s337 + $0x1c] sm:$0xf]
        %v368 = vld [vmem:[%s337 + $0x20] sm:$0xf]
        %v369 = vld [vmem:[%s337 + $0x24] sm:$0xf]
        %v370 = vld [vmem:[%s337 + $0x28] sm:$0xf]
        %v371 = vld [vmem:[%s337 + $0x2c] sm:$0xf]
        %v372 = vld [vmem:[%s337 + $0x30] sm:$0xf]
        %v373 = vld [vmem:[%s337 + $0x34] sm:$0xf]
        %v374 = vld [vmem:[%s337 + $0x38] sm:$0xf]
        %v375 = vld [vmem:[%s337 + $0x3c] sm:$0xf]
        %v376 = vld [vmem:[%s337 + $0x40] sm:$0xf]
        %v377 = vld [vmem:[%s337 + $0x44] sm:$0xf]
        %v378 = vld [vmem:[%s337 + $0x48] sm:$0xf]
        %v379 = vld [vmem:[%s337 + $0x4c] sm:$0xf]
        %v380 = vld [vmem:[%s337 + $0x50] sm:$0xf]
        %v381 = vld [vmem:[%s337 + $0x54] sm:$0xf]
        %v382 = vld [vmem:[%s337 + $0x58] sm:$0xf]
        %v383 = vld [vmem:[%s337 + $0x5c] sm:$0xf]
        %v384 = vld [vmem:[%s337 + $0x60] sm:$0xf]
        %v385 = vld [vmem:[%s337 + $0x64] sm:$0xf]
        %v386 = vld [vmem:[%s337 + $0x68] sm:$0xf]
        %v387 = vld [vmem:[%s337 + $0x6c] sm:$0xf]
        %v388 = vld [vmem:[%s337 + $0x70] sm:$0xf]
        %v389 = vld [vmem:[%s337 + $0x74] sm:$0xf]
        %v390 = vld [vmem:[%s337 + $0x78] sm:$0xf]
        %v391 = vld [vmem:[%s337 + $0x7c] sm:$0xf]
        %v392 = vld [vmem:[%s337 + $0x80] sm:$0xf]
        %v393 = vld [vmem:[%s337 + $0x84] sm:$0xf]
        %v394 = vld [vmem:[%s337 + $0x88] sm:$0xf]
        %v395 = vld [vmem:[%s337 + $0x8c] sm:$0xf]
        %v396 = vld [vmem:[%s337 + $0x90] sm:$0xf]
        %v397 = vld [vmem:[%s337 + $0x94] sm:$0xf]
        %v398 = vld [vmem:[%s337 + $0x98] sm:$0xf]
        %v399 = vld [vmem:[%s337 + $0x9c] sm:$0xf]
        %v400 = vld [vmem:[%s337 + $0xa0] sm:$0xf]
        %v401 = vld [vmem:[%s337 + $0xa4] sm:$0xf]
        %v402 = vld [vmem:[%s337 + $0xa8] sm:$0xf]
        %v403 = vld [vmem:[%s337 + $0xac] sm:$0xf]
        %v404 = vld [vmem:[%s337 + $0xb0] sm:$0xf]
        %v405 = vld [vmem:[%s337 + $0xb4] sm:$0xf]
        %v406 = vld [vmem:[%s337 + $0xb8] sm:$0xf]
        %v407 = vld [vmem:[%s337 + $0xbc] sm:$0xf]
        %v408 = vld [vmem:[%s337 + $0xc0] sm:$0xf]
        %v409 = vld [vmem:[%s337 + $0xc4] sm:$0xf]
        %v410 = vld [vmem:[%s337 + $0xc8] sm:$0xf]
        %v411 = vld [vmem:[%s337 + $0xcc] sm:$0xf]
        %v412 = vld [vmem:[%s337 + $0xd0] sm:$0xf]
        %v413 = vld [vmem:[%s337 + $0xd4] sm:$0xf]
        %v414 = vld [vmem:[%s337 + $0xd8] sm:$0xf]
        %v415 = vld [vmem:[%s337 + $0xdc] sm:$0xf]
        %v416 = vld [vmem:[%s337 + $0xe0] sm:$0xf]
        %v417 = vld [vmem:[%s337 + $0xe4] sm:$0xf]
        %v418 = vld [vmem:[%s337 + $0xe8] sm:$0xf]
        %v419 = vld [vmem:[%s337 + $0xec] sm:$0xf]
        %v420 = vld [vmem:[%s337 + $0xf0] sm:$0xf]
        %v421 = vld [vmem:[%s337 + $0xf4] sm:$0xf]
        %v422 = vld [vmem:[%s337 + $0xf8] sm:$0xf]
        %v423 = vld [vmem:[%s337 + $0xfc] sm:$0xf]
        %s424 = sld [smem:[#allocation3]]
        %s425 = sld [smem:[#allocation3 + $0x1]]
        %s426 = sld [smem:[#allocation3 + $0x2]]
        %v427 = vstv %s424
        %v428 = vsub.f32 %v346, %v427
        %v429 = vsub.f32 %v347, %v427
        %v430 = vsub.f32 %v348, %v427
        %v431 = vsub.f32 %v349, %v427
        %v432 = vstv %s425
        %v433 = vsub.f32 %v351, %v432
        %v434 = vsub.f32 %v352, %v432
        %v435 = vsub.f32 %v353, %v432
        %v436 = vsub.f32 %v354, %v432
        %v437 = vstv %s426
        %v438 = vsub.f32 %v356, %v437
        %v439 = vsub.f32 %v357, %v437
        %v440 = vsub.f32 %v358, %v437
        %v441 = vsub.f32 %v359, %v437
        %v442 = vmul.f32 %v428, %v428
        %v443 = vmul.f32 %v429, %v429
        %v444 = vmul.f32 %v430, %v430
        %v445 = vmul.f32 %v431, %v431
        %v446 = vmul.f32 %v433, %v433
        %v447 = vmul.f32 %v434, %v434
        %v448 = vmul.f32 %v435, %v435
        %v449 = vmul.f32 %v436, %v436
        %v450 = vadd.f32 %v442, %v446
        %v451 = vadd.f32 %v443, %v447
        %v452 = vadd.f32 %v444, %v448
        %v453 = vadd.f32 %v445, %v449
        %v454 = vmul.f32 %v438, %v438
        %v455 = vmul.f32 %v439, %v439
        %v456 = vmul.f32 %v440, %v440
        %v457 = vmul.f32 %v441, %v441
        %v458 = vadd.f32 %v450, %v454
        %v459 = vadd.f32 %v451, %v455
        %v460 = vadd.f32 %v452, %v456
        %v461 = vadd.f32 %v453, %v457
        %v462 = vrsqrt.pop %v458
        %v463 = vmul.f32 %v458, %v462
        %vm464 = vcmp.eq.f32.partialorder %v458, inf
        %v465 = vsel %vm464, %v458, %v463
        %vm466 = vcmp.eq.f32.partialorder %v458, 0.0
        %v467 = vand.u32 %v458, 2147483648
        %v468 = vsel %vm466, %v467, %v465
        %v469 = vrsqrt.pop %v459
        %v470 = vmul.f32 %v459, %v469
        %vm471 = vcmp.eq.f32.partialorder %v459, inf
        %v472 = vsel %vm471, %v459, %v470
        %vm473 = vcmp.eq.f32.partialorder %v459, 0.0
        %v474 = vand.u32 %v459, 2147483648
        %v475 = vsel %vm473, %v474, %v472
        %v476 = vrsqrt.pop %v460
        %v477 = vmul.f32 %v460, %v476
        %vm478 = vcmp.eq.f32.partialorder %v460, inf
        %v479 = vsel %vm478, %v460, %v477
        %vm480 = vcmp.eq.f32.partialorder %v460, 0.0
        %v481 = vand.u32 %v460, 2147483648
        %v482 = vsel %vm480, %v481, %v479
        %v483 = vrsqrt.pop %v461
        %v484 = vmul.f32 %v461, %v483
        %vm485 = vcmp.eq.f32.partialorder %v461, inf
        %v486 = vsel %vm485, %v461, %v484
        %vm487 = vcmp.eq.f32.partialorder %v461, 0.0
        %v488 = vand.u32 %v461, 2147483648
        %v489 = vsel %vm487, %v488, %v486
        %v490 = vmul.f32 %v468, 16.666666
        %v491 = vmul.f32 %v475, 16.666666
        %v492 = vmul.f32 %v482, 16.666666
        %v493 = vmul.f32 %v489, 16.666666
        %v494 = vsub.f32 1.0, %v490
        %v495 = vsub.f32 1.0, %v491
        %v496 = vsub.f32 1.0, %v492
        %v497 = vsub.f32 1.0, %v493
        %v498 = vmax.f32 %v494, 0.0
        %v499 = vmax.f32 %v495, 0.0
        %v500 = vmax.f32 %v496, 0.0
        %v501 = vmax.f32 %v497, 0.0
        %v502 = vpack.c.bf16 %v499, %v498
        %v503 = vpack.c.bf16 %v501, %v500
        %v505 = vpack.i.b16 %v502, %v502
        %v507 = vlaneseq
        %v508 = vshrl.u32 %v507, 7
        %v509 = vsub.s32 0, %v508
        %v510 = vrot.slane %v505, %v509
        %512 = vbcast.lane.c.b16.xlu0 %v510, 256
        %v513 = vpop.permute.xlu0 %512
        %v514 = vshrl.u32 %v502, 16
        %v515 = vpack.i.b16 %v514, %v514
        %v517 = vlaneseq
        %v518 = vshrl.u32 %v517, 7
        %v519 = vsub.s32 0, %v518
        %v520 = vrot.slane %v515, %v519
        %522 = vbcast.lane.c.b16.xlu0 %v520, 256
        %v523 = vpop.permute.xlu0 %522
        %v524 = vlaneseq
        %v525 = vshrl.u32 %v524, 7
        %v526 = vsub.s32 1, %v525
        %v527 = vrot.slane %v505, %v526
        %529 = vbcast.lane.c.b16.xlu0 %v527, 256
        %v530 = vpop.permute.xlu0 %529
        %v531 = vlaneseq
        %v532 = vshrl.u32 %v531, 7
        %v533 = vsub.s32 1, %v532
        %v534 = vrot.slane %v515, %v533
        %536 = vbcast.lane.c.b16.xlu0 %v534, 256
        %v537 = vpop.permute.xlu0 %536
        %v538 = vlaneseq
        %v539 = vshrl.u32 %v538, 7
        %v540 = vsub.s32 2, %v539
        %v541 = vrot.slane %v505, %v540
        %543 = vbcast.lane.c.b16.xlu0 %v541, 256
        %v544 = vpop.permute.xlu0 %543
        %v545 = vlaneseq
        %v546 = vshrl.u32 %v545, 7
        %v547 = vsub.s32 2, %v546
        %v548 = vrot.slane %v515, %v547
        %550 = vbcast.lane.c.b16.xlu0 %v548, 256
        %v551 = vpop.permute.xlu0 %550
        %v552 = vlaneseq
        %v553 = vshrl.u32 %v552, 7
        %v554 = vsub.s32 3, %v553
        %v555 = vrot.slane %v505, %v554
        %557 = vbcast.lane.c.b16.xlu0 %v555, 256
        %v558 = vpop.permute.xlu0 %557
        %v559 = vlaneseq
        %v560 = vshrl.u32 %v559, 7
        %v561 = vsub.s32 3, %v560
        %v562 = vrot.slane %v515, %v561
        %564 = vbcast.lane.c.b16.xlu0 %v562, 256
        %v565 = vpop.permute.xlu0 %564
        %v566 = vlaneseq
        %v567 = vshrl.u32 %v566, 7
        %v568 = vsub.s32 4, %v567
        %v569 = vrot.slane %v505, %v568
        %571 = vbcast.lane.c.b16.xlu0 %v569, 256
        %v572 = vpop.permute.xlu0 %571
        %v573 = vlaneseq
        %v574 = vshrl.u32 %v573, 7
        %v575 = vsub.s32 4, %v574
        %v576 = vrot.slane %v515, %v575
        %578 = vbcast.lane.c.b16.xlu0 %v576, 256
        %v579 = vpop.permute.xlu0 %578
        %v580 = vlaneseq
        %v581 = vshrl.u32 %v580, 7
        %v582 = vsub.s32 5, %v581
        %v583 = vrot.slane %v505, %v582
        %585 = vbcast.lane.c.b16.xlu0 %v583, 256
        %v586 = vpop.permute.xlu0 %585
        %v587 = vlaneseq
        %v588 = vshrl.u32 %v587, 7
        %v589 = vsub.s32 5, %v588
        %v590 = vrot.slane %v515, %v589
        %592 = vbcast.lane.c.b16.xlu0 %v590, 256
        %v593 = vpop.permute.xlu0 %592
        %v594 = vlaneseq
        %v595 = vshrl.u32 %v594, 7
        %v596 = vsub.s32 6, %v595
        %v597 = vrot.slane %v505, %v596
        %599 = vbcast.lane.c.b16.xlu0 %v597, 256
        %v600 = vpop.permute.xlu0 %599
        %v601 = vlaneseq
        %v602 = vshrl.u32 %v601, 7
        %v603 = vsub.s32 6, %v602
        %v604 = vrot.slane %v515, %v603
        %606 = vbcast.lane.c.b16.xlu0 %v604, 256
        %v607 = vpop.permute.xlu0 %606
        %v608 = vlaneseq
        %v609 = vshrl.u32 %v608, 7
        %v610 = vsub.s32 7, %v609
        %v611 = vrot.slane %v505, %v610
        %613 = vbcast.lane.c.b16.xlu0 %v611, 256
        %v614 = vpop.permute.xlu0 %613
        %v615 = vlaneseq
        %v616 = vshrl.u32 %v615, 7
        %v617 = vsub.s32 7, %v616
        %v618 = vrot.slane %v515, %v617
        %620 = vbcast.lane.c.b16.xlu0 %v618, 256
        %v621 = vpop.permute.xlu0 %620
        %v623 = vpack.i.b16 %v503, %v503
        %v625 = vlaneseq
        %v626 = vshrl.u32 %v625, 7
        %v627 = vsub.s32 0, %v626
        %v628 = vrot.slane %v623, %v627
        %630 = vbcast.lane.c.b16.xlu0 %v628, 256
        %v631 = vpop.permute.xlu0 %630
        %v632 = vshrl.u32 %v503, 16
        %v633 = vpack.i.b16 %v632, %v632
        %v635 = vlaneseq
        %v636 = vshrl.u32 %v635, 7
        %v637 = vsub.s32 0, %v636
        %v638 = vrot.slane %v633, %v637
        %640 = vbcast.lane.c.b16.xlu0 %v638, 256
        %v641 = vpop.permute.xlu0 %640
        %v642 = vlaneseq
        %v643 = vshrl.u32 %v642, 7
        %v644 = vsub.s32 1, %v643
        %v645 = vrot.slane %v623, %v644
        %647 = vbcast.lane.c.b16.xlu0 %v645, 256
        %v648 = vpop.permute.xlu0 %647
        %v649 = vlaneseq
        %v650 = vshrl.u32 %v649, 7
        %v651 = vsub.s32 1, %v650
        %v652 = vrot.slane %v633, %v651
        %654 = vbcast.lane.c.b16.xlu0 %v652, 256
        %v655 = vpop.permute.xlu0 %654
        %v656 = vlaneseq
        %v657 = vshrl.u32 %v656, 7
        %v658 = vsub.s32 2, %v657
        %v659 = vrot.slane %v623, %v658
        %661 = vbcast.lane.c.b16.xlu0 %v659, 256
        %v662 = vpop.permute.xlu0 %661
        %v663 = vlaneseq
        %v664 = vshrl.u32 %v663, 7
        %v665 = vsub.s32 2, %v664
        %v666 = vrot.slane %v633, %v665
        %668 = vbcast.lane.c.b16.xlu0 %v666, 256
        %v669 = vpop.permute.xlu0 %668
        %v670 = vlaneseq
        %v671 = vshrl.u32 %v670, 7
        %v672 = vsub.s32 3, %v671
        %v673 = vrot.slane %v623, %v672
        %675 = vbcast.lane.c.b16.xlu0 %v673, 256
        %v676 = vpop.permute.xlu0 %675
        %v677 = vlaneseq
        %v678 = vshrl.u32 %v677, 7
        %v679 = vsub.s32 3, %v678
        %v680 = vrot.slane %v633, %v679
        %682 = vbcast.lane.c.b16.xlu0 %v680, 256
        %v683 = vpop.permute.xlu0 %682
        %v684 = vlaneseq
        %v685 = vshrl.u32 %v684, 7
        %v686 = vsub.s32 4, %v685
        %v687 = vrot.slane %v623, %v686
        %689 = vbcast.lane.c.b16.xlu0 %v687, 256
        %v690 = vpop.permute.xlu0 %689
        %v691 = vlaneseq
        %v692 = vshrl.u32 %v691, 7
        %v693 = vsub.s32 4, %v692
        %v694 = vrot.slane %v633, %v693
        %696 = vbcast.lane.c.b16.xlu0 %v694, 256
        %v697 = vpop.permute.xlu0 %696
        %v698 = vlaneseq
        %v699 = vshrl.u32 %v698, 7
        %v700 = vsub.s32 5, %v699
        %v701 = vrot.slane %v623, %v700
        %703 = vbcast.lane.c.b16.xlu0 %v701, 256
        %v704 = vpop.permute.xlu0 %703
        %v705 = vlaneseq
        %v706 = vshrl.u32 %v705, 7
        %v707 = vsub.s32 5, %v706
        %v708 = vrot.slane %v633, %v707
        %710 = vbcast.lane.c.b16.xlu0 %v708, 256
        %v711 = vpop.permute.xlu0 %710
        %v712 = vlaneseq
        %v713 = vshrl.u32 %v712, 7
        %v714 = vsub.s32 6, %v713
        %v715 = vrot.slane %v623, %v714
        %717 = vbcast.lane.c.b16.xlu0 %v715, 256
        %v718 = vpop.permute.xlu0 %717
        %v719 = vlaneseq
        %v720 = vshrl.u32 %v719, 7
        %v721 = vsub.s32 6, %v720
        %v722 = vrot.slane %v633, %v721
        %724 = vbcast.lane.c.b16.xlu0 %v722, 256
        %v725 = vpop.permute.xlu0 %724
        %v726 = vlaneseq
        %v727 = vshrl.u32 %v726, 7
        %v728 = vsub.s32 7, %v727
        %v729 = vrot.slane %v623, %v728
        %731 = vbcast.lane.c.b16.xlu0 %v729, 256
        %v732 = vpop.permute.xlu0 %731
        %v733 = vlaneseq
        %v734 = vshrl.u32 %v733, 7
        %v735 = vsub.s32 7, %v734
        %v736 = vrot.slane %v633, %v735
        %738 = vbcast.lane.c.b16.xlu0 %v736, 256
        %v739 = vpop.permute.xlu0 %738
        %v804 = vunpack.c.l.b16 %v360
        %v805 = vunpack.c.l.b16 %v361
        %v806 = vunpack.c.l.b16 %v362
        %v807 = vunpack.c.l.b16 %v363
        %v808 = vunpack.c.l.b16 %v364
        %v809 = vunpack.c.l.b16 %v365
        %v810 = vunpack.c.l.b16 %v366
        %v811 = vunpack.c.l.b16 %v367
        %v812 = vunpack.c.l.b16 %v368
        %v813 = vunpack.c.l.b16 %v369
        %v814 = vunpack.c.l.b16 %v370
        %v815 = vunpack.c.l.b16 %v371
        %v816 = vunpack.c.l.b16 %v372
        %v817 = vunpack.c.l.b16 %v373
        %v818 = vunpack.c.l.b16 %v374
        %v819 = vunpack.c.l.b16 %v375
        %v820 = vunpack.c.l.b16 %v376
        %v821 = vunpack.c.l.b16 %v377
        %v822 = vunpack.c.l.b16 %v378
        %v823 = vunpack.c.l.b16 %v379
        %v824 = vunpack.c.l.b16 %v380
        %v825 = vunpack.c.l.b16 %v381
        %v826 = vunpack.c.l.b16 %v382
        %v827 = vunpack.c.l.b16 %v383
        %v828 = vunpack.c.l.b16 %v384
        %v829 = vunpack.c.l.b16 %v385
        %v830 = vunpack.c.l.b16 %v386
        %v831 = vunpack.c.l.b16 %v387
        %v832 = vunpack.c.l.b16 %v388
        %v833 = vunpack.c.l.b16 %v389
        %v834 = vunpack.c.l.b16 %v390
        %v835 = vunpack.c.l.b16 %v391
        %v836 = vunpack.c.l.b16 %v392
        %v837 = vunpack.c.l.b16 %v393
        %v838 = vunpack.c.l.b16 %v394
        %v839 = vunpack.c.l.b16 %v395
        %v840 = vunpack.c.l.b16 %v396
        %v841 = vunpack.c.l.b16 %v397
        %v842 = vunpack.c.l.b16 %v398
        %v843 = vunpack.c.l.b16 %v399
        %v844 = vunpack.c.l.b16 %v400
        %v845 = vunpack.c.l.b16 %v401
        %v846 = vunpack.c.l.b16 %v402
        %v847 = vunpack.c.l.b16 %v403
        %v848 = vunpack.c.l.b16 %v404
        %v849 = vunpack.c.l.b16 %v405
        %v850 = vunpack.c.l.b16 %v406
        %v851 = vunpack.c.l.b16 %v407
        %v852 = vunpack.c.l.b16 %v408
        %v853 = vunpack.c.l.b16 %v409
        %v854 = vunpack.c.l.b16 %v410
        %v855 = vunpack.c.l.b16 %v411
        %v856 = vunpack.c.l.b16 %v412
        %v857 = vunpack.c.l.b16 %v413
        %v858 = vunpack.c.l.b16 %v414
        %v859 = vunpack.c.l.b16 %v415
        %v860 = vunpack.c.l.b16 %v416
        %v861 = vunpack.c.l.b16 %v417
        %v862 = vunpack.c.l.b16 %v418
        %v863 = vunpack.c.l.b16 %v419
        %v864 = vunpack.c.l.b16 %v420
        %v865 = vunpack.c.l.b16 %v421
        %v866 = vunpack.c.l.b16 %v422
        %v867 = vunpack.c.l.b16 %v423
        %v868 = vpack.c.b16 %v805, %v804
        %v869 = vpack.c.b16 %v807, %v806
        %v870 = vpack.c.b16 %v809, %v808
        %v871 = vpack.c.b16 %v811, %v810
        %v872 = vpack.c.b16 %v813, %v812
        %v873 = vpack.c.b16 %v815, %v814
        %v874 = vpack.c.b16 %v817, %v816
        %v875 = vpack.c.b16 %v819, %v818
        %v876 = vpack.c.b16 %v821, %v820
        %v877 = vpack.c.b16 %v823, %v822
        %v878 = vpack.c.b16 %v825, %v824
        %v879 = vpack.c.b16 %v827, %v826
        %v880 = vpack.c.b16 %v829, %v828
        %v881 = vpack.c.b16 %v831, %v830
        %v882 = vpack.c.b16 %v833, %v832
        %v883 = vpack.c.b16 %v835, %v834
        %v884 = vpack.c.b16 %v837, %v836
        %v885 = vpack.c.b16 %v839, %v838
        %v886 = vpack.c.b16 %v841, %v840
        %v887 = vpack.c.b16 %v843, %v842
        %v888 = vpack.c.b16 %v845, %v844
        %v889 = vpack.c.b16 %v847, %v846
        %v890 = vpack.c.b16 %v849, %v848
        %v891 = vpack.c.b16 %v851, %v850
        %v892 = vpack.c.b16 %v853, %v852
        %v893 = vpack.c.b16 %v855, %v854
        %v894 = vpack.c.b16 %v857, %v856
        %v895 = vpack.c.b16 %v859, %v858
        %v896 = vpack.c.b16 %v861, %v860
        %v897 = vpack.c.b16 %v863, %v862
        %v898 = vpack.c.b16 %v865, %v864
        %v899 = vpack.c.b16 %v867, %v866
        %v932 = vmul.bf16 %v513, %v868
        %v933 = vmul.bf16 %v523, %v869
        %v934 = vmul.bf16 %v530, %v870
        %v935 = vmul.bf16 %v537, %v871
        %v936 = vmul.bf16 %v544, %v872
        %v937 = vmul.bf16 %v551, %v873
        %v938 = vmul.bf16 %v558, %v874
        %v939 = vmul.bf16 %v565, %v875
        %v940 = vmul.bf16 %v572, %v876
        %v941 = vmul.bf16 %v579, %v877
        %v942 = vmul.bf16 %v586, %v878
        %v943 = vmul.bf16 %v593, %v879
        %v944 = vmul.bf16 %v600, %v880
        %v945 = vmul.bf16 %v607, %v881
        %v946 = vmul.bf16 %v614, %v882
        %v947 = vmul.bf16 %v621, %v883
        %v948 = vmul.bf16 %v631, %v884
        %v949 = vmul.bf16 %v641, %v885
        %v950 = vmul.bf16 %v648, %v886
        %v951 = vmul.bf16 %v655, %v887
        %v952 = vmul.bf16 %v662, %v888
        %v953 = vmul.bf16 %v669, %v889
        %v954 = vmul.bf16 %v676, %v890
        %v955 = vmul.bf16 %v683, %v891
        %v956 = vmul.bf16 %v690, %v892
        %v957 = vmul.bf16 %v697, %v893
        %v958 = vmul.bf16 %v704, %v894
        %v959 = vmul.bf16 %v711, %v895
        %v960 = vmul.bf16 %v718, %v896
        %v961 = vmul.bf16 %v725, %v897
        %v962 = vmul.bf16 %v732, %v898
        %v963 = vmul.bf16 %v739, %v899
        %v964 = vunpack.c.l.bf16 %v932
        %v965 = vunpack.c.h.bf16 %v932
        %v966 = vunpack.c.l.bf16 %v933
        %v967 = vunpack.c.h.bf16 %v933
        %v968 = vunpack.c.l.bf16 %v934
        %v969 = vunpack.c.h.bf16 %v934
        %v970 = vunpack.c.l.bf16 %v935
        %v971 = vunpack.c.h.bf16 %v935
        %v972 = vunpack.c.l.bf16 %v936
        %v973 = vunpack.c.h.bf16 %v936
        %v974 = vunpack.c.l.bf16 %v937
        %v975 = vunpack.c.h.bf16 %v937
        %v976 = vunpack.c.l.bf16 %v938
        %v977 = vunpack.c.h.bf16 %v938
        %v978 = vunpack.c.l.bf16 %v939
        %v979 = vunpack.c.h.bf16 %v939
        %v980 = vunpack.c.l.bf16 %v940
        %v981 = vunpack.c.h.bf16 %v940
        %v982 = vunpack.c.l.bf16 %v941
        %v983 = vunpack.c.h.bf16 %v941
        %v984 = vunpack.c.l.bf16 %v942
        %v985 = vunpack.c.h.bf16 %v942
        %v986 = vunpack.c.l.bf16 %v943
        %v987 = vunpack.c.h.bf16 %v943
        %v988 = vunpack.c.l.bf16 %v944
        %v989 = vunpack.c.h.bf16 %v944
        %v990 = vunpack.c.l.bf16 %v945
        %v991 = vunpack.c.h.bf16 %v945
        %v992 = vunpack.c.l.bf16 %v946
        %v993 = vunpack.c.h.bf16 %v946
        %v994 = vunpack.c.l.bf16 %v947
        %v995 = vunpack.c.h.bf16 %v947
        %v996 = vunpack.c.l.bf16 %v948
        %v997 = vunpack.c.h.bf16 %v948
        %v998 = vunpack.c.l.bf16 %v949
        %v999 = vunpack.c.h.bf16 %v949
        %v1000 = vunpack.c.l.bf16 %v950
        %v1001 = vunpack.c.h.bf16 %v950
        %v1002 = vunpack.c.l.bf16 %v951
        %v1003 = vunpack.c.h.bf16 %v951
        %v1004 = vunpack.c.l.bf16 %v952
        %v1005 = vunpack.c.h.bf16 %v952
        %v1006 = vunpack.c.l.bf16 %v953
        %v1007 = vunpack.c.h.bf16 %v953
        %v1008 = vunpack.c.l.bf16 %v954
        %v1009 = vunpack.c.h.bf16 %v954
        %v1010 = vunpack.c.l.bf16 %v955
        %v1011 = vunpack.c.h.bf16 %v955
        %v1012 = vunpack.c.l.bf16 %v956
        %v1013 = vunpack.c.h.bf16 %v956
        %v1014 = vunpack.c.l.bf16 %v957
        %v1015 = vunpack.c.h.bf16 %v957
        %v1016 = vunpack.c.l.bf16 %v958
        %v1017 = vunpack.c.h.bf16 %v958
        %v1018 = vunpack.c.l.bf16 %v959
        %v1019 = vunpack.c.h.bf16 %v959
        %v1020 = vunpack.c.l.bf16 %v960
        %v1021 = vunpack.c.h.bf16 %v960
        %v1022 = vunpack.c.l.bf16 %v961
        %v1023 = vunpack.c.h.bf16 %v961
        %v1024 = vunpack.c.l.bf16 %v962
        %v1025 = vunpack.c.h.bf16 %v962
        %v1026 = vunpack.c.l.bf16 %v963
        %v1027 = vunpack.c.h.bf16 %v963
        %vm1028 = vcmask 64512
        %v1029 = vsel %vm1028, %v964, 0.0
        %v1030 = vsel %vm1028, %v965, 0.0
        %v1031 = vadd.f32 %v1029, %v1030
        %v1032 = vrot.slane %v1031, 4
        %v1033 = vadd.f32 %v1031, %v1032
        %v1034 = vrot.slane %v1033, 2
        %v1035 = vadd.f32 %v1033, %v1034
        %v1036 = vrot.slane %v1035, 1
        %v1037 = vadd.f32 %v1035, %v1036
        %v1038 = vsel %vm1028, %v966, 0.0
        %v1039 = vsel %vm1028, %v967, 0.0
        %v1040 = vadd.f32 %v1038, %v1039
        %v1041 = vrot.slane %v1040, 4
        %v1042 = vadd.f32 %v1040, %v1041
        %v1043 = vrot.slane %v1042, 2
        %v1044 = vadd.f32 %v1042, %v1043
        %v1045 = vrot.slane %v1044, 1
        %v1046 = vadd.f32 %v1044, %v1045
        %v1047 = vsel %vm1028, %v968, 0.0
        %v1048 = vsel %vm1028, %v969, 0.0
        %v1049 = vadd.f32 %v1047, %v1048
        %v1050 = vrot.slane %v1049, 4
        %v1051 = vadd.f32 %v1049, %v1050
        %v1052 = vrot.slane %v1051, 2
        %v1053 = vadd.f32 %v1051, %v1052
        %v1054 = vrot.slane %v1053, 1
        %v1055 = vadd.f32 %v1053, %v1054
        %v1056 = vsel %vm1028, %v970, 0.0
        %v1057 = vsel %vm1028, %v971, 0.0
        %v1058 = vadd.f32 %v1056, %v1057
        %v1059 = vrot.slane %v1058, 4
        %v1060 = vadd.f32 %v1058, %v1059
        %v1061 = vrot.slane %v1060, 2
        %v1062 = vadd.f32 %v1060, %v1061
        %v1063 = vrot.slane %v1062, 1
        %v1064 = vadd.f32 %v1062, %v1063
        %v1065 = vsel %vm1028, %v972, 0.0
        %v1066 = vsel %vm1028, %v973, 0.0
        %v1067 = vadd.f32 %v1065, %v1066
        %v1068 = vrot.slane %v1067, 4
        %v1069 = vadd.f32 %v1067, %v1068
        %v1070 = vrot.slane %v1069, 2
        %v1071 = vadd.f32 %v1069, %v1070
        %v1072 = vrot.slane %v1071, 1
        %v1073 = vadd.f32 %v1071, %v1072
        %v1074 = vsel %vm1028, %v974, 0.0
        %v1075 = vsel %vm1028, %v975, 0.0
        %v1076 = vadd.f32 %v1074, %v1075
        %v1077 = vrot.slane %v1076, 4
        %v1078 = vadd.f32 %v1076, %v1077
        %v1079 = vrot.slane %v1078, 2
        %v1080 = vadd.f32 %v1078, %v1079
        %v1081 = vrot.slane %v1080, 1
        %v1082 = vadd.f32 %v1080, %v1081
        %v1083 = vsel %vm1028, %v976, 0.0
        %v1084 = vsel %vm1028, %v977, 0.0
        %v1085 = vadd.f32 %v1083, %v1084
        %v1086 = vrot.slane %v1085, 4
        %v1087 = vadd.f32 %v1085, %v1086
        %v1088 = vrot.slane %v1087, 2
        %v1089 = vadd.f32 %v1087, %v1088
        %v1090 = vrot.slane %v1089, 1
        %v1091 = vadd.f32 %v1089, %v1090
        %v1092 = vsel %vm1028, %v978, 0.0
        %v1093 = vsel %vm1028, %v979, 0.0
        %v1094 = vadd.f32 %v1092, %v1093
        %v1095 = vrot.slane %v1094, 4
        %v1096 = vadd.f32 %v1094, %v1095
        %v1097 = vrot.slane %v1096, 2
        %v1098 = vadd.f32 %v1096, %v1097
        %v1099 = vrot.slane %v1098, 1
        %v1100 = vadd.f32 %v1098, %v1099
        %v1101 = vsel %vm1028, %v980, 0.0
        %v1102 = vsel %vm1028, %v981, 0.0
        %v1103 = vadd.f32 %v1101, %v1102
        %v1104 = vrot.slane %v1103, 4
        %v1105 = vadd.f32 %v1103, %v1104
        %v1106 = vrot.slane %v1105, 2
        %v1107 = vadd.f32 %v1105, %v1106
        %v1108 = vrot.slane %v1107, 1
        %v1109 = vadd.f32 %v1107, %v1108
        %v1110 = vsel %vm1028, %v982, 0.0
        %v1111 = vsel %vm1028, %v983, 0.0
        %v1112 = vadd.f32 %v1110, %v1111
        %v1113 = vrot.slane %v1112, 4
        %v1114 = vadd.f32 %v1112, %v1113
        %v1115 = vrot.slane %v1114, 2
        %v1116 = vadd.f32 %v1114, %v1115
        %v1117 = vrot.slane %v1116, 1
        %v1118 = vadd.f32 %v1116, %v1117
        %v1119 = vsel %vm1028, %v984, 0.0
        %v1120 = vsel %vm1028, %v985, 0.0
        %v1121 = vadd.f32 %v1119, %v1120
        %v1122 = vrot.slane %v1121, 4
        %v1123 = vadd.f32 %v1121, %v1122
        %v1124 = vrot.slane %v1123, 2
        %v1125 = vadd.f32 %v1123, %v1124
        %v1126 = vrot.slane %v1125, 1
        %v1127 = vadd.f32 %v1125, %v1126
        %v1128 = vsel %vm1028, %v986, 0.0
        %v1129 = vsel %vm1028, %v987, 0.0
        %v1130 = vadd.f32 %v1128, %v1129
        %v1131 = vrot.slane %v1130, 4
        %v1132 = vadd.f32 %v1130, %v1131
        %v1133 = vrot.slane %v1132, 2
        %v1134 = vadd.f32 %v1132, %v1133
        %v1135 = vrot.slane %v1134, 1
        %v1136 = vadd.f32 %v1134, %v1135
        %v1137 = vsel %vm1028, %v988, 0.0
        %v1138 = vsel %vm1028, %v989, 0.0
        %v1139 = vadd.f32 %v1137, %v1138
        %v1140 = vrot.slane %v1139, 4
        %v1141 = vadd.f32 %v1139, %v1140
        %v1142 = vrot.slane %v1141, 2
        %v1143 = vadd.f32 %v1141, %v1142
        %v1144 = vrot.slane %v1143, 1
        %v1145 = vadd.f32 %v1143, %v1144
        %v1146 = vsel %vm1028, %v990, 0.0
        %v1147 = vsel %vm1028, %v991, 0.0
        %v1148 = vadd.f32 %v1146, %v1147
        %v1149 = vrot.slane %v1148, 4
        %v1150 = vadd.f32 %v1148, %v1149
        %v1151 = vrot.slane %v1150, 2
        %v1152 = vadd.f32 %v1150, %v1151
        %v1153 = vrot.slane %v1152, 1
        %v1154 = vadd.f32 %v1152, %v1153
        %v1155 = vsel %vm1028, %v992, 0.0
        %v1156 = vsel %vm1028, %v993, 0.0
        %v1157 = vadd.f32 %v1155, %v1156
        %v1158 = vrot.slane %v1157, 4
        %v1159 = vadd.f32 %v1157, %v1158
        %v1160 = vrot.slane %v1159, 2
        %v1161 = vadd.f32 %v1159, %v1160
        %v1162 = vrot.slane %v1161, 1
        %v1163 = vadd.f32 %v1161, %v1162
        %v1164 = vsel %vm1028, %v994, 0.0
        %v1165 = vsel %vm1028, %v995, 0.0
        %v1166 = vadd.f32 %v1164, %v1165
        %v1167 = vrot.slane %v1166, 4
        %v1168 = vadd.f32 %v1166, %v1167
        %v1169 = vrot.slane %v1168, 2
        %v1170 = vadd.f32 %v1168, %v1169
        %v1171 = vrot.slane %v1170, 1
        %v1172 = vadd.f32 %v1170, %v1171
        %v1173 = vsel %vm1028, %v996, 0.0
        %v1174 = vsel %vm1028, %v997, 0.0
        %v1175 = vadd.f32 %v1173, %v1174
        %v1176 = vrot.slane %v1175, 4
        %v1177 = vadd.f32 %v1175, %v1176
        %v1178 = vrot.slane %v1177, 2
        %v1179 = vadd.f32 %v1177, %v1178
        %v1180 = vrot.slane %v1179, 1
        %v1181 = vadd.f32 %v1179, %v1180
        %v1182 = vsel %vm1028, %v998, 0.0
        %v1183 = vsel %vm1028, %v999, 0.0
        %v1184 = vadd.f32 %v1182, %v1183
        %v1185 = vrot.slane %v1184, 4
        %v1186 = vadd.f32 %v1184, %v1185
        %v1187 = vrot.slane %v1186, 2
        %v1188 = vadd.f32 %v1186, %v1187
        %v1189 = vrot.slane %v1188, 1
        %v1190 = vadd.f32 %v1188, %v1189
        %v1191 = vsel %vm1028, %v1000, 0.0
        %v1192 = vsel %vm1028, %v1001, 0.0
        %v1193 = vadd.f32 %v1191, %v1192
        %v1194 = vrot.slane %v1193, 4
        %v1195 = vadd.f32 %v1193, %v1194
        %v1196 = vrot.slane %v1195, 2
        %v1197 = vadd.f32 %v1195, %v1196
        %v1198 = vrot.slane %v1197, 1
        %v1199 = vadd.f32 %v1197, %v1198
        %v1200 = vsel %vm1028, %v1002, 0.0
        %v1201 = vsel %vm1028, %v1003, 0.0
        %v1202 = vadd.f32 %v1200, %v1201
        %v1203 = vrot.slane %v1202, 4
        %v1204 = vadd.f32 %v1202, %v1203
        %v1205 = vrot.slane %v1204, 2
        %v1206 = vadd.f32 %v1204, %v1205
        %v1207 = vrot.slane %v1206, 1
        %v1208 = vadd.f32 %v1206, %v1207
        %v1209 = vsel %vm1028, %v1004, 0.0
        %v1210 = vsel %vm1028, %v1005, 0.0
        %v1211 = vadd.f32 %v1209, %v1210
        %v1212 = vrot.slane %v1211, 4
        %v1213 = vadd.f32 %v1211, %v1212
        %v1214 = vrot.slane %v1213, 2
        %v1215 = vadd.f32 %v1213, %v1214
        %v1216 = vrot.slane %v1215, 1
        %v1217 = vadd.f32 %v1215, %v1216
        %v1218 = vsel %vm1028, %v1006, 0.0
        %v1219 = vsel %vm1028, %v1007, 0.0
        %v1220 = vadd.f32 %v1218, %v1219
        %v1221 = vrot.slane %v1220, 4
        %v1222 = vadd.f32 %v1220, %v1221
        %v1223 = vrot.slane %v1222, 2
        %v1224 = vadd.f32 %v1222, %v1223
        %v1225 = vrot.slane %v1224, 1
        %v1226 = vadd.f32 %v1224, %v1225
        %v1227 = vsel %vm1028, %v1008, 0.0
        %v1228 = vsel %vm1028, %v1009, 0.0
        %v1229 = vadd.f32 %v1227, %v1228
        %v1230 = vrot.slane %v1229, 4
        %v1231 = vadd.f32 %v1229, %v1230
        %v1232 = vrot.slane %v1231, 2
        %v1233 = vadd.f32 %v1231, %v1232
        %v1234 = vrot.slane %v1233, 1
        %v1235 = vadd.f32 %v1233, %v1234
        %v1236 = vsel %vm1028, %v1010, 0.0
        %v1237 = vsel %vm1028, %v1011, 0.0
        %v1238 = vadd.f32 %v1236, %v1237
        %v1239 = vrot.slane %v1238, 4
        %v1240 = vadd.f32 %v1238, %v1239
        %v1241 = vrot.slane %v1240, 2
        %v1242 = vadd.f32 %v1240, %v1241
        %v1243 = vrot.slane %v1242, 1
        %v1244 = vadd.f32 %v1242, %v1243
        %v1245 = vsel %vm1028, %v1012, 0.0
        %v1246 = vsel %vm1028, %v1013, 0.0
        %v1247 = vadd.f32 %v1245, %v1246
        %v1248 = vrot.slane %v1247, 4
        %v1249 = vadd.f32 %v1247, %v1248
        %v1250 = vrot.slane %v1249, 2
        %v1251 = vadd.f32 %v1249, %v1250
        %v1252 = vrot.slane %v1251, 1
        %v1253 = vadd.f32 %v1251, %v1252
        %v1254 = vsel %vm1028, %v1014, 0.0
        %v1255 = vsel %vm1028, %v1015, 0.0
        %v1256 = vadd.f32 %v1254, %v1255
        %v1257 = vrot.slane %v1256, 4
        %v1258 = vadd.f32 %v1256, %v1257
        %v1259 = vrot.slane %v1258, 2
        %v1260 = vadd.f32 %v1258, %v1259
        %v1261 = vrot.slane %v1260, 1
        %v1262 = vadd.f32 %v1260, %v1261
        %v1263 = vsel %vm1028, %v1016, 0.0
        %v1264 = vsel %vm1028, %v1017, 0.0
        %v1265 = vadd.f32 %v1263, %v1264
        %v1266 = vrot.slane %v1265, 4
        %v1267 = vadd.f32 %v1265, %v1266
        %v1268 = vrot.slane %v1267, 2
        %v1269 = vadd.f32 %v1267, %v1268
        %v1270 = vrot.slane %v1269, 1
        %v1271 = vadd.f32 %v1269, %v1270
        %v1272 = vsel %vm1028, %v1018, 0.0
        %v1273 = vsel %vm1028, %v1019, 0.0
        %v1274 = vadd.f32 %v1272, %v1273
        %v1275 = vrot.slane %v1274, 4
        %v1276 = vadd.f32 %v1274, %v1275
        %v1277 = vrot.slane %v1276, 2
        %v1278 = vadd.f32 %v1276, %v1277
        %v1279 = vrot.slane %v1278, 1
        %v1280 = vadd.f32 %v1278, %v1279
        %v1281 = vsel %vm1028, %v1020, 0.0
        %v1282 = vsel %vm1028, %v1021, 0.0
        %v1283 = vadd.f32 %v1281, %v1282
        %v1284 = vrot.slane %v1283, 4
        %v1285 = vadd.f32 %v1283, %v1284
        %v1286 = vrot.slane %v1285, 2
        %v1287 = vadd.f32 %v1285, %v1286
        %v1288 = vrot.slane %v1287, 1
        %v1289 = vadd.f32 %v1287, %v1288
        %v1290 = vsel %vm1028, %v1022, 0.0
        %v1291 = vsel %vm1028, %v1023, 0.0
        %v1292 = vadd.f32 %v1290, %v1291
        %v1293 = vrot.slane %v1292, 4
        %v1294 = vadd.f32 %v1292, %v1293
        %v1295 = vrot.slane %v1294, 2
        %v1296 = vadd.f32 %v1294, %v1295
        %v1297 = vrot.slane %v1296, 1
        %v1298 = vadd.f32 %v1296, %v1297
        %v1299 = vsel %vm1028, %v1024, 0.0
        %v1300 = vsel %vm1028, %v1025, 0.0
        %v1301 = vadd.f32 %v1299, %v1300
        %v1302 = vrot.slane %v1301, 4
        %v1303 = vadd.f32 %v1301, %v1302
        %v1304 = vrot.slane %v1303, 2
        %v1305 = vadd.f32 %v1303, %v1304
        %v1306 = vrot.slane %v1305, 1
        %v1307 = vadd.f32 %v1305, %v1306
        %v1308 = vsel %vm1028, %v1026, 0.0
        %v1309 = vsel %vm1028, %v1027, 0.0
        %v1310 = vadd.f32 %v1308, %v1309
        %v1311 = vrot.slane %v1310, 4
        %v1312 = vadd.f32 %v1310, %v1311
        %v1313 = vrot.slane %v1312, 2
        %v1314 = vadd.f32 %v1312, %v1313
        %v1315 = vrot.slane %v1314, 1
        %v1316 = vadd.f32 %v1314, %v1315
        %v1317 = vpack.c.bf16 %v1037, %v1037
        %v1318 = vpack.c.bf16 %v1046, %v1046
        %v1319 = vpack.c.bf16 %v1055, %v1055
        %v1320 = vpack.c.bf16 %v1064, %v1064
        %v1321 = vpack.c.bf16 %v1073, %v1073
        %v1322 = vpack.c.bf16 %v1082, %v1082
        %v1323 = vpack.c.bf16 %v1091, %v1091
        %v1324 = vpack.c.bf16 %v1100, %v1100
        %v1325 = vpack.c.bf16 %v1109, %v1109
        %v1326 = vpack.c.bf16 %v1118, %v1118
        %v1327 = vpack.c.bf16 %v1127, %v1127
        %v1328 = vpack.c.bf16 %v1136, %v1136
        %v1329 = vpack.c.bf16 %v1145, %v1145
        %v1330 = vpack.c.bf16 %v1154, %v1154
        %v1331 = vpack.c.bf16 %v1163, %v1163
        %v1332 = vpack.c.bf16 %v1172, %v1172
        %v1333 = vpack.c.bf16 %v1181, %v1181
        %v1334 = vpack.c.bf16 %v1190, %v1190
        %v1335 = vpack.c.bf16 %v1199, %v1199
        %v1336 = vpack.c.bf16 %v1208, %v1208
        %v1337 = vpack.c.bf16 %v1217, %v1217
        %v1338 = vpack.c.bf16 %v1226, %v1226
        %v1339 = vpack.c.bf16 %v1235, %v1235
        %v1340 = vpack.c.bf16 %v1244, %v1244
        %v1341 = vpack.c.bf16 %v1253, %v1253
        %v1342 = vpack.c.bf16 %v1262, %v1262
        %v1343 = vpack.c.bf16 %v1271, %v1271
        %v1344 = vpack.c.bf16 %v1280, %v1280
        %v1345 = vpack.c.bf16 %v1289, %v1289
        %v1346 = vpack.c.bf16 %v1298, %v1298
        %v1347 = vpack.c.bf16 %v1307, %v1307
        %v1348 = vpack.c.bf16 %v1316, %v1316
        %v1349 = vld [vmem:[%s3] sm:$0xf]
        %s1350 = sld [smem:[#allocation3 + $0x3]]
        %s1351 = sld [smem:[#allocation3 + $0x4]]
        %s1352 = sld [smem:[#allocation3 + $0x5]]
        %v1353 = vstv %s1350
        %v1354 = vsub.f32 %v346, %v1353
        %v1355 = vsub.f32 %v347, %v1353
        %v1356 = vsub.f32 %v348, %v1353
        %v1357 = vsub.f32 %v349, %v1353
        %v1358 = vstv %s1351
        %v1359 = vsub.f32 %v351, %v1358
        %v1360 = vsub.f32 %v352, %v1358
        %v1361 = vsub.f32 %v353, %v1358
        %v1362 = vsub.f32 %v354, %v1358
        %v1363 = vstv %s1352
        %v1364 = vsub.f32 %v356, %v1363
        %v1365 = vsub.f32 %v357, %v1363
        %v1366 = vsub.f32 %v358, %v1363
        %v1367 = vsub.f32 %v359, %v1363
        %v1368 = vmul.f32 %v1354, %v1354
        %v1369 = vmul.f32 %v1355, %v1355
        %v1370 = vmul.f32 %v1356, %v1356
        %v1371 = vmul.f32 %v1357, %v1357
        %v1372 = vmul.f32 %v1359, %v1359
        %v1373 = vmul.f32 %v1360, %v1360
        %v1374 = vmul.f32 %v1361, %v1361
        %v1375 = vmul.f32 %v1362, %v1362
        %v1376 = vadd.f32 %v1368, %v1372
        %v1377 = vadd.f32 %v1369, %v1373
        %v1378 = vadd.f32 %v1370, %v1374
        %v1379 = vadd.f32 %v1371, %v1375
        %v1380 = vmul.f32 %v1364, %v1364
        %v1381 = vmul.f32 %v1365, %v1365
        %v1382 = vmul.f32 %v1366, %v1366
        %v1383 = vmul.f32 %v1367, %v1367
        %v1384 = vadd.f32 %v1376, %v1380
        %v1385 = vadd.f32 %v1377, %v1381
        %v1386 = vadd.f32 %v1378, %v1382
        %v1387 = vadd.f32 %v1379, %v1383
        %v1388 = vrsqrt.pop %v1384
        %v1389 = vmul.f32 %v1384, %v1388
        %vm1390 = vcmp.eq.f32.partialorder %v1384, inf
        %v1391 = vsel %vm1390, %v1384, %v1389
        %vm1392 = vcmp.eq.f32.partialorder %v1384, 0.0
        %v1393 = vand.u32 %v1384, 2147483648
        %v1394 = vsel %vm1392, %v1393, %v1391
        %v1395 = vrsqrt.pop %v1385
        %v1396 = vmul.f32 %v1385, %v1395
        %vm1397 = vcmp.eq.f32.partialorder %v1385, inf
        %v1398 = vsel %vm1397, %v1385, %v1396
        %vm1399 = vcmp.eq.f32.partialorder %v1385, 0.0
        %v1400 = vand.u32 %v1385, 2147483648
        %v1401 = vsel %vm1399, %v1400, %v1398
        %v1402 = vrsqrt.pop %v1386
        %v1403 = vmul.f32 %v1386, %v1402
        %vm1404 = vcmp.eq.f32.partialorder %v1386, inf
        %v1405 = vsel %vm1404, %v1386, %v1403
        %vm1406 = vcmp.eq.f32.partialorder %v1386, 0.0
        %v1407 = vand.u32 %v1386, 2147483648
        %v1408 = vsel %vm1406, %v1407, %v1405
        %v1409 = vrsqrt.pop %v1387
        %v1410 = vmul.f32 %v1387, %v1409
        %vm1411 = vcmp.eq.f32.partialorder %v1387, inf
        %v1412 = vsel %vm1411, %v1387, %v1410
        %vm1413 = vcmp.eq.f32.partialorder %v1387, 0.0
        %v1414 = vand.u32 %v1387, 2147483648
        %v1415 = vsel %vm1413, %v1414, %v1412
        %v1416 = vmul.f32 %v1394, 16.666666
        %v1417 = vmul.f32 %v1401, 16.666666
        %v1418 = vmul.f32 %v1408, 16.666666
        %v1419 = vmul.f32 %v1415, 16.666666
        %v1420 = vsub.f32 1.0, %v1416
        %v1421 = vsub.f32 1.0, %v1417
        %v1422 = vsub.f32 1.0, %v1418
        %v1423 = vsub.f32 1.0, %v1419
        %v1424 = vmax.f32 %v1420, 0.0
        %v1425 = vmax.f32 %v1421, 0.0
        %v1426 = vmax.f32 %v1422, 0.0
        %v1427 = vmax.f32 %v1423, 0.0
        %v1428 = vpack.c.bf16 %v1425, %v1424
        %v1429 = vpack.c.bf16 %v1427, %v1426
        %v1431 = vpack.i.b16 %v1428, %v1428
        %v1433 = vlaneseq
        %v1434 = vshrl.u32 %v1433, 7
        %v1435 = vsub.s32 0, %v1434
        %v1436 = vrot.slane %v1431, %v1435
        %1438 = vbcast.lane.c.b16.xlu0 %v1436, 256
        %v1439 = vpop.permute.xlu0 %1438
        %v1440 = vshrl.u32 %v1428, 16
        %v1441 = vpack.i.b16 %v1440, %v1440
        %v1443 = vlaneseq
        %v1444 = vshrl.u32 %v1443, 7
        %v1445 = vsub.s32 0, %v1444
        %v1446 = vrot.slane %v1441, %v1445
        %1448 = vbcast.lane.c.b16.xlu0 %v1446, 256
        %v1449 = vpop.permute.xlu0 %1448
        %v1450 = vlaneseq
        %v1451 = vshrl.u32 %v1450, 7
        %v1452 = vsub.s32 1, %v1451
        %v1453 = vrot.slane %v1431, %v1452
        %1455 = vbcast.lane.c.b16.xlu0 %v1453, 256
        %v1456 = vpop.permute.xlu0 %1455
        %v1457 = vlaneseq
        %v1458 = vshrl.u32 %v1457, 7
        %v1459 = vsub.s32 1, %v1458
        %v1460 = vrot.slane %v1441, %v1459
        %1462 = vbcast.lane.c.b16.xlu0 %v1460, 256
        %v1463 = vpop.permute.xlu0 %1462
        %v1464 = vlaneseq
        %v1465 = vshrl.u32 %v1464, 7
        %v1466 = vsub.s32 2, %v1465
        %v1467 = vrot.slane %v1431, %v1466
        %1469 = vbcast.lane.c.b16.xlu0 %v1467, 256
        %v1470 = vpop.permute.xlu0 %1469
        %v1471 = vlaneseq
        %v1472 = vshrl.u32 %v1471, 7
        %v1473 = vsub.s32 2, %v1472
        %v1474 = vrot.slane %v1441, %v1473
        %1476 = vbcast.lane.c.b16.xlu0 %v1474, 256
        %v1477 = vpop.permute.xlu0 %1476
        %v1478 = vlaneseq
        %v1479 = vshrl.u32 %v1478, 7
        %v1480 = vsub.s32 3, %v1479
        %v1481 = vrot.slane %v1431, %v1480
        %1483 = vbcast.lane.c.b16.xlu0 %v1481, 256
        %v1484 = vpop.permute.xlu0 %1483
        %v1485 = vlaneseq
        %v1486 = vshrl.u32 %v1485, 7
        %v1487 = vsub.s32 3, %v1486
        %v1488 = vrot.slane %v1441, %v1487
        %1490 = vbcast.lane.c.b16.xlu0 %v1488, 256
        %v1491 = vpop.permute.xlu0 %1490
        %v1492 = vlaneseq
        %v1493 = vshrl.u32 %v1492, 7
        %v1494 = vsub.s32 4, %v1493
        %v1495 = vrot.slane %v1431, %v1494
        %1497 = vbcast.lane.c.b16.xlu0 %v1495, 256
        %v1498 = vpop.permute.xlu0 %1497
        %v1499 = vlaneseq
        %v1500 = vshrl.u32 %v1499, 7
        %v1501 = vsub.s32 4, %v1500
        %v1502 = vrot.slane %v1441, %v1501
        %1504 = vbcast.lane.c.b16.xlu0 %v1502, 256
        %v1505 = vpop.permute.xlu0 %1504
        %v1506 = vlaneseq
        %v1507 = vshrl.u32 %v1506, 7
        %v1508 = vsub.s32 5, %v1507
        %v1509 = vrot.slane %v1431, %v1508
        %1511 = vbcast.lane.c.b16.xlu0 %v1509, 256
        %v1512 = vpop.permute.xlu0 %1511
        %v1513 = vlaneseq
        %v1514 = vshrl.u32 %v1513, 7
        %v1515 = vsub.s32 5, %v1514
        %v1516 = vrot.slane %v1441, %v1515
        %1518 = vbcast.lane.c.b16.xlu0 %v1516, 256
        %v1519 = vpop.permute.xlu0 %1518
        %v1520 = vlaneseq
        %v1521 = vshrl.u32 %v1520, 7
        %v1522 = vsub.s32 6, %v1521
        %v1523 = vrot.slane %v1431, %v1522
        %1525 = vbcast.lane.c.b16.xlu0 %v1523, 256
        %v1526 = vpop.permute.xlu0 %1525
        %v1527 = vlaneseq
        %v1528 = vshrl.u32 %v1527, 7
        %v1529 = vsub.s32 6, %v1528
        %v1530 = vrot.slane %v1441, %v1529
        %1532 = vbcast.lane.c.b16.xlu0 %v1530, 256
        %v1533 = vpop.permute.xlu0 %1532
        %v1534 = vlaneseq
        %v1535 = vshrl.u32 %v1534, 7
        %v1536 = vsub.s32 7, %v1535
        %v1537 = vrot.slane %v1431, %v1536
        %1539 = vbcast.lane.c.b16.xlu0 %v1537, 256
        %v1540 = vpop.permute.xlu0 %1539
        %v1541 = vlaneseq
        %v1542 = vshrl.u32 %v1541, 7
        %v1543 = vsub.s32 7, %v1542
        %v1544 = vrot.slane %v1441, %v1543
        %1546 = vbcast.lane.c.b16.xlu0 %v1544, 256
        %v1547 = vpop.permute.xlu0 %1546
        %v1549 = vpack.i.b16 %v1429, %v1429
        %v1551 = vlaneseq
        %v1552 = vshrl.u32 %v1551, 7
        %v1553 = vsub.s32 0, %v1552
        %v1554 = vrot.slane %v1549, %v1553
        %1556 = vbcast.lane.c.b16.xlu0 %v1554, 256
        %v1557 = vpop.permute.xlu0 %1556
        %v1558 = vshrl.u32 %v1429, 16
        %v1559 = vpack.i.b16 %v1558, %v1558
        %v1561 = vlaneseq
        %v1562 = vshrl.u32 %v1561, 7
        %v1563 = vsub.s32 0, %v1562
        %v1564 = vrot.slane %v1559, %v1563
        %1566 = vbcast.lane.c.b16.xlu0 %v1564, 256
        %v1567 = vpop.permute.xlu0 %1566
        %v1568 = vlaneseq
        %v1569 = vshrl.u32 %v1568, 7
        %v1570 = vsub.s32 1, %v1569
        %v1571 = vrot.slane %v1549, %v1570
        %1573 = vbcast.lane.c.b16.xlu0 %v1571, 256
        %v1574 = vpop.permute.xlu0 %1573
        %v1575 = vlaneseq
        %v1576 = vshrl.u32 %v1575, 7
        %v1577 = vsub.s32 1, %v1576
        %v1578 = vrot.slane %v1559, %v1577
        %1580 = vbcast.lane.c.b16.xlu0 %v1578, 256
        %v1581 = vpop.permute.xlu0 %1580
        %v1582 = vlaneseq
        %v1583 = vshrl.u32 %v1582, 7
        %v1584 = vsub.s32 2, %v1583
        %v1585 = vrot.slane %v1549, %v1584
        %1587 = vbcast.lane.c.b16.xlu0 %v1585, 256
        %v1588 = vpop.permute.xlu0 %1587
        %v1589 = vlaneseq
        %v1590 = vshrl.u32 %v1589, 7
        %v1591 = vsub.s32 2, %v1590
        %v1592 = vrot.slane %v1559, %v1591
        %1594 = vbcast.lane.c.b16.xlu0 %v1592, 256
        %v1595 = vpop.permute.xlu0 %1594
        %v1596 = vlaneseq
        %v1597 = vshrl.u32 %v1596, 7
        %v1598 = vsub.s32 3, %v1597
        %v1599 = vrot.slane %v1549, %v1598
        %1601 = vbcast.lane.c.b16.xlu0 %v1599, 256
        %v1602 = vpop.permute.xlu0 %1601
        %v1603 = vlaneseq
        %v1604 = vshrl.u32 %v1603, 7
        %v1605 = vsub.s32 3, %v1604
        %v1606 = vrot.slane %v1559, %v1605
        %1608 = vbcast.lane.c.b16.xlu0 %v1606, 256
        %v1609 = vpop.permute.xlu0 %1608
        %v1610 = vlaneseq
        %v1611 = vshrl.u32 %v1610, 7
        %v1612 = vsub.s32 4, %v1611
        %v1613 = vrot.slane %v1549, %v1612
        %1615 = vbcast.lane.c.b16.xlu0 %v1613, 256
        %v1616 = vpop.permute.xlu0 %1615
        %v1617 = vlaneseq
        %v1618 = vshrl.u32 %v1617, 7
        %v1619 = vsub.s32 4, %v1618
        %v1620 = vrot.slane %v1559, %v1619
        %1622 = vbcast.lane.c.b16.xlu0 %v1620, 256
        %v1623 = vpop.permute.xlu0 %1622
        %v1624 = vlaneseq
        %v1625 = vshrl.u32 %v1624, 7
        %v1626 = vsub.s32 5, %v1625
        %v1627 = vrot.slane %v1549, %v1626
        %1629 = vbcast.lane.c.b16.xlu0 %v1627, 256
        %v1630 = vpop.permute.xlu0 %1629
        %v1631 = vlaneseq
        %v1632 = vshrl.u32 %v1631, 7
        %v1633 = vsub.s32 5, %v1632
        %v1634 = vrot.slane %v1559, %v1633
        %1636 = vbcast.lane.c.b16.xlu0 %v1634, 256
        %v1637 = vpop.permute.xlu0 %1636
        %v1638 = vlaneseq
        %v1639 = vshrl.u32 %v1638, 7
        %v1640 = vsub.s32 6, %v1639
        %v1641 = vrot.slane %v1549, %v1640
        %1643 = vbcast.lane.c.b16.xlu0 %v1641, 256
        %v1644 = vpop.permute.xlu0 %1643
        %v1645 = vlaneseq
        %v1646 = vshrl.u32 %v1645, 7
        %v1647 = vsub.s32 6, %v1646
        %v1648 = vrot.slane %v1559, %v1647
        %1650 = vbcast.lane.c.b16.xlu0 %v1648, 256
        %v1651 = vpop.permute.xlu0 %1650
        %v1652 = vlaneseq
        %v1653 = vshrl.u32 %v1652, 7
        %v1654 = vsub.s32 7, %v1653
        %v1655 = vrot.slane %v1549, %v1654
        %1657 = vbcast.lane.c.b16.xlu0 %v1655, 256
        %v1658 = vpop.permute.xlu0 %1657
        %v1659 = vlaneseq
        %v1660 = vshrl.u32 %v1659, 7
        %v1661 = vsub.s32 7, %v1660
        %v1662 = vrot.slane %v1559, %v1661
        %1664 = vbcast.lane.c.b16.xlu0 %v1662, 256
        %v1665 = vpop.permute.xlu0 %1664
        %v1666 = vmul.bf16 %v1439, %v868
        %v1667 = vmul.bf16 %v1449, %v869
        %v1668 = vmul.bf16 %v1456, %v870
        %v1669 = vmul.bf16 %v1463, %v871
        %v1670 = vmul.bf16 %v1470, %v872
        %v1671 = vmul.bf16 %v1477, %v873
        %v1672 = vmul.bf16 %v1484, %v874
        %v1673 = vmul.bf16 %v1491, %v875
        %v1674 = vmul.bf16 %v1498, %v876
        %v1675 = vmul.bf16 %v1505, %v877
        %v1676 = vmul.bf16 %v1512, %v878
        %v1677 = vmul.bf16 %v1519, %v879
        %v1678 = vmul.bf16 %v1526, %v880
        %v1679 = vmul.bf16 %v1533, %v881
        %v1680 = vmul.bf16 %v1540, %v882
        %v1681 = vmul.bf16 %v1547, %v883
        %v1682 = vmul.bf16 %v1557, %v884
        %v1683 = vmul.bf16 %v1567, %v885
        %v1684 = vmul.bf16 %v1574, %v886
        %v1685 = vmul.bf16 %v1581, %v887
        %v1686 = vmul.bf16 %v1588, %v888
        %v1687 = vmul.bf16 %v1595, %v889
        %v1688 = vmul.bf16 %v1602, %v890
        %v1689 = vmul.bf16 %v1609, %v891
        %v1690 = vmul.bf16 %v1616, %v892
        %v1691 = vmul.bf16 %v1623, %v893
        %v1692 = vmul.bf16 %v1630, %v894
        %v1693 = vmul.bf16 %v1637, %v895
        %v1694 = vmul.bf16 %v1644, %v896
        %v1695 = vmul.bf16 %v1651, %v897
        %v1696 = vmul.bf16 %v1658, %v898
        %v1697 = vmul.bf16 %v1665, %v899
        %v1698 = vunpack.c.l.bf16 %v1666
        %v1699 = vunpack.c.h.bf16 %v1666
        %v1700 = vunpack.c.l.bf16 %v1667
        %v1701 = vunpack.c.h.bf16 %v1667
        %v1702 = vunpack.c.l.bf16 %v1668
        %v1703 = vunpack.c.h.bf16 %v1668
        %v1704 = vunpack.c.l.bf16 %v1669
        %v1705 = vunpack.c.h.bf16 %v1669
        %v1706 = vunpack.c.l.bf16 %v1670
        %v1707 = vunpack.c.h.bf16 %v1670
        %v1708 = vunpack.c.l.bf16 %v1671
        %v1709 = vunpack.c.h.bf16 %v1671
        %v1710 = vunpack.c.l.bf16 %v1672
        %v1711 = vunpack.c.h.bf16 %v1672
        %v1712 = vunpack.c.l.bf16 %v1673
        %v1713 = vunpack.c.h.bf16 %v1673
        %v1714 = vunpack.c.l.bf16 %v1674
        %v1715 = vunpack.c.h.bf16 %v1674
        %v1716 = vunpack.c.l.bf16 %v1675
        %v1717 = vunpack.c.h.bf16 %v1675
        %v1718 = vunpack.c.l.bf16 %v1676
        %v1719 = vunpack.c.h.bf16 %v1676
        %v1720 = vunpack.c.l.bf16 %v1677
        %v1721 = vunpack.c.h.bf16 %v1677
        %v1722 = vunpack.c.l.bf16 %v1678
        %v1723 = vunpack.c.h.bf16 %v1678
        %v1724 = vunpack.c.l.bf16 %v1679
        %v1725 = vunpack.c.h.bf16 %v1679
        %v1726 = vunpack.c.l.bf16 %v1680
        %v1727 = vunpack.c.h.bf16 %v1680
        %v1728 = vunpack.c.l.bf16 %v1681
        %v1729 = vunpack.c.h.bf16 %v1681
        %v1730 = vunpack.c.l.bf16 %v1682
        %v1731 = vunpack.c.h.bf16 %v1682
        %v1732 = vunpack.c.l.bf16 %v1683
        %v1733 = vunpack.c.h.bf16 %v1683
        %v1734 = vunpack.c.l.bf16 %v1684
        %v1735 = vunpack.c.h.bf16 %v1684
        %v1736 = vunpack.c.l.bf16 %v1685
        %v1737 = vunpack.c.h.bf16 %v1685
        %v1738 = vunpack.c.l.bf16 %v1686
        %v1739 = vunpack.c.h.bf16 %v1686
        %v1740 = vunpack.c.l.bf16 %v1687
        %v1741 = vunpack.c.h.bf16 %v1687
        %v1742 = vunpack.c.l.bf16 %v1688
        %v1743 = vunpack.c.h.bf16 %v1688
        %v1744 = vunpack.c.l.bf16 %v1689
        %v1745 = vunpack.c.h.bf16 %v1689
        %v1746 = vunpack.c.l.bf16 %v1690
        %v1747 = vunpack.c.h.bf16 %v1690
        %v1748 = vunpack.c.l.bf16 %v1691
        %v1749 = vunpack.c.h.bf16 %v1691
        %v1750 = vunpack.c.l.bf16 %v1692
        %v1751 = vunpack.c.h.bf16 %v1692
        %v1752 = vunpack.c.l.bf16 %v1693
        %v1753 = vunpack.c.h.bf16 %v1693
        %v1754 = vunpack.c.l.bf16 %v1694
        %v1755 = vunpack.c.h.bf16 %v1694
        %v1756 = vunpack.c.l.bf16 %v1695
        %v1757 = vunpack.c.h.bf16 %v1695
        %v1758 = vunpack.c.l.bf16 %v1696
        %v1759 = vunpack.c.h.bf16 %v1696
        %v1760 = vunpack.c.l.bf16 %v1697
        %v1761 = vunpack.c.h.bf16 %v1697
        %v1762 = vsel %vm1028, %v1698, 0.0
        %v1763 = vsel %vm1028, %v1699, 0.0
        %v1764 = vadd.f32 %v1762, %v1763
        %v1765 = vrot.slane %v1764, 4
        %v1766 = vadd.f32 %v1764, %v1765
        %v1767 = vrot.slane %v1766, 2
        %v1768 = vadd.f32 %v1766, %v1767
        %v1769 = vrot.slane %v1768, 1
        %v1770 = vadd.f32 %v1768, %v1769
        %v1771 = vsel %vm1028, %v1700, 0.0
        %v1772 = vsel %vm1028, %v1701, 0.0
        %v1773 = vadd.f32 %v1771, %v1772
        %v1774 = vrot.slane %v1773, 4
        %v1775 = vadd.f32 %v1773, %v1774
        %v1776 = vrot.slane %v1775, 2
        %v1777 = vadd.f32 %v1775, %v1776
        %v1778 = vrot.slane %v1777, 1
        %v1779 = vadd.f32 %v1777, %v1778
        %v1780 = vsel %vm1028, %v1702, 0.0
        %v1781 = vsel %vm1028, %v1703, 0.0
        %v1782 = vadd.f32 %v1780, %v1781
        %v1783 = vrot.slane %v1782, 4
        %v1784 = vadd.f32 %v1782, %v1783
        %v1785 = vrot.slane %v1784, 2
        %v1786 = vadd.f32 %v1784, %v1785
        %v1787 = vrot.slane %v1786, 1
        %v1788 = vadd.f32 %v1786, %v1787
        %v1789 = vsel %vm1028, %v1704, 0.0
        %v1790 = vsel %vm1028, %v1705, 0.0
        %v1791 = vadd.f32 %v1789, %v1790
        %v1792 = vrot.slane %v1791, 4
        %v1793 = vadd.f32 %v1791, %v1792
        %v1794 = vrot.slane %v1793, 2
        %v1795 = vadd.f32 %v1793, %v1794
        %v1796 = vrot.slane %v1795, 1
        %v1797 = vadd.f32 %v1795, %v1796
        %v1798 = vsel %vm1028, %v1706, 0.0
        %v1799 = vsel %vm1028, %v1707, 0.0
        %v1800 = vadd.f32 %v1798, %v1799
        %v1801 = vrot.slane %v1800, 4
        %v1802 = vadd.f32 %v1800, %v1801
        %v1803 = vrot.slane %v1802, 2
        %v1804 = vadd.f32 %v1802, %v1803
        %v1805 = vrot.slane %v1804, 1
        %v1806 = vadd.f32 %v1804, %v1805
        %v1807 = vsel %vm1028, %v1708, 0.0
        %v1808 = vsel %vm1028, %v1709, 0.0
        %v1809 = vadd.f32 %v1807, %v1808
        %v1810 = vrot.slane %v1809, 4
        %v1811 = vadd.f32 %v1809, %v1810
        %v1812 = vrot.slane %v1811, 2
        %v1813 = vadd.f32 %v1811, %v1812
        %v1814 = vrot.slane %v1813, 1
        %v1815 = vadd.f32 %v1813, %v1814
        %v1816 = vsel %vm1028, %v1710, 0.0
        %v1817 = vsel %vm1028, %v1711, 0.0
        %v1818 = vadd.f32 %v1816, %v1817
        %v1819 = vrot.slane %v1818, 4
        %v1820 = vadd.f32 %v1818, %v1819
        %v1821 = vrot.slane %v1820, 2
        %v1822 = vadd.f32 %v1820, %v1821
        %v1823 = vrot.slane %v1822, 1
        %v1824 = vadd.f32 %v1822, %v1823
        %v1825 = vsel %vm1028, %v1712, 0.0
        %v1826 = vsel %vm1028, %v1713, 0.0
        %v1827 = vadd.f32 %v1825, %v1826
        %v1828 = vrot.slane %v1827, 4
        %v1829 = vadd.f32 %v1827, %v1828
        %v1830 = vrot.slane %v1829, 2
        %v1831 = vadd.f32 %v1829, %v1830
        %v1832 = vrot.slane %v1831, 1
        %v1833 = vadd.f32 %v1831, %v1832
        %v1834 = vsel %vm1028, %v1714, 0.0
        %v1835 = vsel %vm1028, %v1715, 0.0
        %v1836 = vadd.f32 %v1834, %v1835
        %v1837 = vrot.slane %v1836, 4
        %v1838 = vadd.f32 %v1836, %v1837
        %v1839 = vrot.slane %v1838, 2
        %v1840 = vadd.f32 %v1838, %v1839
        %v1841 = vrot.slane %v1840, 1
        %v1842 = vadd.f32 %v1840, %v1841
        %v1843 = vsel %vm1028, %v1716, 0.0
        %v1844 = vsel %vm1028, %v1717, 0.0
        %v1845 = vadd.f32 %v1843, %v1844
        %v1846 = vrot.slane %v1845, 4
        %v1847 = vadd.f32 %v1845, %v1846
        %v1848 = vrot.slane %v1847, 2
        %v1849 = vadd.f32 %v1847, %v1848
        %v1850 = vrot.slane %v1849, 1
        %v1851 = vadd.f32 %v1849, %v1850
        %v1852 = vsel %vm1028, %v1718, 0.0
        %v1853 = vsel %vm1028, %v1719, 0.0
        %v1854 = vadd.f32 %v1852, %v1853
        %v1855 = vrot.slane %v1854, 4
        %v1856 = vadd.f32 %v1854, %v1855
        %v1857 = vrot.slane %v1856, 2
        %v1858 = vadd.f32 %v1856, %v1857
        %v1859 = vrot.slane %v1858, 1
        %v1860 = vadd.f32 %v1858, %v1859
        %v1861 = vsel %vm1028, %v1720, 0.0
        %v1862 = vsel %vm1028, %v1721, 0.0
        %v1863 = vadd.f32 %v1861, %v1862
        %v1864 = vrot.slane %v1863, 4
        %v1865 = vadd.f32 %v1863, %v1864
        %v1866 = vrot.slane %v1865, 2
        %v1867 = vadd.f32 %v1865, %v1866
        %v1868 = vrot.slane %v1867, 1
        %v1869 = vadd.f32 %v1867, %v1868
        %v1870 = vsel %vm1028, %v1722, 0.0
        %v1871 = vsel %vm1028, %v1723, 0.0
        %v1872 = vadd.f32 %v1870, %v1871
        %v1873 = vrot.slane %v1872, 4
        %v1874 = vadd.f32 %v1872, %v1873
        %v1875 = vrot.slane %v1874, 2
        %v1876 = vadd.f32 %v1874, %v1875
        %v1877 = vrot.slane %v1876, 1
        %v1878 = vadd.f32 %v1876, %v1877
        %v1879 = vsel %vm1028, %v1724, 0.0
        %v1880 = vsel %vm1028, %v1725, 0.0
        %v1881 = vadd.f32 %v1879, %v1880
        %v1882 = vrot.slane %v1881, 4
        %v1883 = vadd.f32 %v1881, %v1882
        %v1884 = vrot.slane %v1883, 2
        %v1885 = vadd.f32 %v1883, %v1884
        %v1886 = vrot.slane %v1885, 1
        %v1887 = vadd.f32 %v1885, %v1886
        %v1888 = vsel %vm1028, %v1726, 0.0
        %v1889 = vsel %vm1028, %v1727, 0.0
        %v1890 = vadd.f32 %v1888, %v1889
        %v1891 = vrot.slane %v1890, 4
        %v1892 = vadd.f32 %v1890, %v1891
        %v1893 = vrot.slane %v1892, 2
        %v1894 = vadd.f32 %v1892, %v1893
        %v1895 = vrot.slane %v1894, 1
        %v1896 = vadd.f32 %v1894, %v1895
        %v1897 = vsel %vm1028, %v1728, 0.0
        %v1898 = vsel %vm1028, %v1729, 0.0
        %v1899 = vadd.f32 %v1897, %v1898
        %v1900 = vrot.slane %v1899, 4
        %v1901 = vadd.f32 %v1899, %v1900
        %v1902 = vrot.slane %v1901, 2
        %v1903 = vadd.f32 %v1901, %v1902
        %v1904 = vrot.slane %v1903, 1
        %v1905 = vadd.f32 %v1903, %v1904
        %v1906 = vsel %vm1028, %v1730, 0.0
        %v1907 = vsel %vm1028, %v1731, 0.0
        %v1908 = vadd.f32 %v1906, %v1907
        %v1909 = vrot.slane %v1908, 4
        %v1910 = vadd.f32 %v1908, %v1909
        %v1911 = vrot.slane %v1910, 2
        %v1912 = vadd.f32 %v1910, %v1911
        %v1913 = vrot.slane %v1912, 1
        %v1914 = vadd.f32 %v1912, %v1913
        %v1915 = vsel %vm1028, %v1732, 0.0
        %v1916 = vsel %vm1028, %v1733, 0.0
        %v1917 = vadd.f32 %v1915, %v1916
        %v1918 = vrot.slane %v1917, 4
        %v1919 = vadd.f32 %v1917, %v1918
        %v1920 = vrot.slane %v1919, 2
        %v1921 = vadd.f32 %v1919, %v1920
        %v1922 = vrot.slane %v1921, 1
        %v1923 = vadd.f32 %v1921, %v1922
        %v1924 = vsel %vm1028, %v1734, 0.0
        %v1925 = vsel %vm1028, %v1735, 0.0
        %v1926 = vadd.f32 %v1924, %v1925
        %v1927 = vrot.slane %v1926, 4
        %v1928 = vadd.f32 %v1926, %v1927
        %v1929 = vrot.slane %v1928, 2
        %v1930 = vadd.f32 %v1928, %v1929
        %v1931 = vrot.slane %v1930, 1
        %v1932 = vadd.f32 %v1930, %v1931
        %v1933 = vsel %vm1028, %v1736, 0.0
        %v1934 = vsel %vm1028, %v1737, 0.0
        %v1935 = vadd.f32 %v1933, %v1934
        %v1936 = vrot.slane %v1935, 4
        %v1937 = vadd.f32 %v1935, %v1936
        %v1938 = vrot.slane %v1937, 2
        %v1939 = vadd.f32 %v1937, %v1938
        %v1940 = vrot.slane %v1939, 1
        %v1941 = vadd.f32 %v1939, %v1940
        %v1942 = vsel %vm1028, %v1738, 0.0
        %v1943 = vsel %vm1028, %v1739, 0.0
        %v1944 = vadd.f32 %v1942, %v1943
        %v1945 = vrot.slane %v1944, 4
        %v1946 = vadd.f32 %v1944, %v1945
        %v1947 = vrot.slane %v1946, 2
        %v1948 = vadd.f32 %v1946, %v1947
        %v1949 = vrot.slane %v1948, 1
        %v1950 = vadd.f32 %v1948, %v1949
        %v1951 = vsel %vm1028, %v1740, 0.0
        %v1952 = vsel %vm1028, %v1741, 0.0
        %v1953 = vadd.f32 %v1951, %v1952
        %v1954 = vrot.slane %v1953, 4
        %v1955 = vadd.f32 %v1953, %v1954
        %v1956 = vrot.slane %v1955, 2
        %v1957 = vadd.f32 %v1955, %v1956
        %v1958 = vrot.slane %v1957, 1
        %v1959 = vadd.f32 %v1957, %v1958
        %v1960 = vsel %vm1028, %v1742, 0.0
        %v1961 = vsel %vm1028, %v1743, 0.0
        %v1962 = vadd.f32 %v1960, %v1961
        %v1963 = vrot.slane %v1962, 4
        %v1964 = vadd.f32 %v1962, %v1963
        %v1965 = vrot.slane %v1964, 2
        %v1966 = vadd.f32 %v1964, %v1965
        %v1967 = vrot.slane %v1966, 1
        %v1968 = vadd.f32 %v1966, %v1967
        %v1969 = vsel %vm1028, %v1744, 0.0
        %v1970 = vsel %vm1028, %v1745, 0.0
        %v1971 = vadd.f32 %v1969, %v1970
        %v1972 = vrot.slane %v1971, 4
        %v1973 = vadd.f32 %v1971, %v1972
        %v1974 = vrot.slane %v1973, 2
        %v1975 = vadd.f32 %v1973, %v1974
        %v1976 = vrot.slane %v1975, 1
        %v1977 = vadd.f32 %v1975, %v1976
        %v1978 = vsel %vm1028, %v1746, 0.0
        %v1979 = vsel %vm1028, %v1747, 0.0
        %v1980 = vadd.f32 %v1978, %v1979
        %v1981 = vrot.slane %v1980, 4
        %v1982 = vadd.f32 %v1980, %v1981
        %v1983 = vrot.slane %v1982, 2
        %v1984 = vadd.f32 %v1982, %v1983
        %v1985 = vrot.slane %v1984, 1
        %v1986 = vadd.f32 %v1984, %v1985
        %v1987 = vsel %vm1028, %v1748, 0.0
        %v1988 = vsel %vm1028, %v1749, 0.0
        %v1989 = vadd.f32 %v1987, %v1988
        %v1990 = vrot.slane %v1989, 4
        %v1991 = vadd.f32 %v1989, %v1990
        %v1992 = vrot.slane %v1991, 2
        %v1993 = vadd.f32 %v1991, %v1992
        %v1994 = vrot.slane %v1993, 1
        %v1995 = vadd.f32 %v1993, %v1994
        %v1996 = vsel %vm1028, %v1750, 0.0
        %v1997 = vsel %vm1028, %v1751, 0.0
        %v1998 = vadd.f32 %v1996, %v1997
        %v1999 = vrot.slane %v1998, 4
        %v2000 = vadd.f32 %v1998, %v1999
        %v2001 = vrot.slane %v2000, 2
        %v2002 = vadd.f32 %v2000, %v2001
        %v2003 = vrot.slane %v2002, 1
        %v2004 = vadd.f32 %v2002, %v2003
        %v2005 = vsel %vm1028, %v1752, 0.0
        %v2006 = vsel %vm1028, %v1753, 0.0
        %v2007 = vadd.f32 %v2005, %v2006
        %v2008 = vrot.slane %v2007, 4
        %v2009 = vadd.f32 %v2007, %v2008
        %v2010 = vrot.slane %v2009, 2
        %v2011 = vadd.f32 %v2009, %v2010
        %v2012 = vrot.slane %v2011, 1
        %v2013 = vadd.f32 %v2011, %v2012
        %v2014 = vsel %vm1028, %v1754, 0.0
        %v2015 = vsel %vm1028, %v1755, 0.0
        %v2016 = vadd.f32 %v2014, %v2015
        %v2017 = vrot.slane %v2016, 4
        %v2018 = vadd.f32 %v2016, %v2017
        %v2019 = vrot.slane %v2018, 2
        %v2020 = vadd.f32 %v2018, %v2019
        %v2021 = vrot.slane %v2020, 1
        %v2022 = vadd.f32 %v2020, %v2021
        %v2023 = vsel %vm1028, %v1756, 0.0
        %v2024 = vsel %vm1028, %v1757, 0.0
        %v2025 = vadd.f32 %v2023, %v2024
        %v2026 = vrot.slane %v2025, 4
        %v2027 = vadd.f32 %v2025, %v2026
        %v2028 = vrot.slane %v2027, 2
        %v2029 = vadd.f32 %v2027, %v2028
        %v2030 = vrot.slane %v2029, 1
        %v2031 = vadd.f32 %v2029, %v2030
        %v2032 = vsel %vm1028, %v1758, 0.0
        %v2033 = vsel %vm1028, %v1759, 0.0
        %v2034 = vadd.f32 %v2032, %v2033
        %v2035 = vrot.slane %v2034, 4
        %v2036 = vadd.f32 %v2034, %v2035
        %v2037 = vrot.slane %v2036, 2
        %v2038 = vadd.f32 %v2036, %v2037
        %v2039 = vrot.slane %v2038, 1
        %v2040 = vadd.f32 %v2038, %v2039
        %v2041 = vsel %vm1028, %v1760, 0.0
        %v2042 = vsel %vm1028, %v1761, 0.0
        %v2043 = vadd.f32 %v2041, %v2042
        %v2044 = vrot.slane %v2043, 4
        %v2045 = vadd.f32 %v2043, %v2044
        %v2046 = vrot.slane %v2045, 2
        %v2047 = vadd.f32 %v2045, %v2046
        %v2048 = vrot.slane %v2047, 1
        %v2049 = vadd.f32 %v2047, %v2048
        %v2050 = vpack.c.bf16 %v1770, %v1770
        %v2051 = vpack.c.bf16 %v1779, %v1779
        %v2052 = vpack.c.bf16 %v1788, %v1788
        %v2053 = vpack.c.bf16 %v1797, %v1797
        %v2054 = vpack.c.bf16 %v1806, %v1806
        %v2055 = vpack.c.bf16 %v1815, %v1815
        %v2056 = vpack.c.bf16 %v1824, %v1824
        %v2057 = vpack.c.bf16 %v1833, %v1833
        %v2058 = vpack.c.bf16 %v1842, %v1842
        %v2059 = vpack.c.bf16 %v1851, %v1851
        %v2060 = vpack.c.bf16 %v1860, %v1860
        %v2061 = vpack.c.bf16 %v1869, %v1869
        %v2062 = vpack.c.bf16 %v1878, %v1878
        %v2063 = vpack.c.bf16 %v1887, %v1887
        %v2064 = vpack.c.bf16 %v1896, %v1896
        %v2065 = vpack.c.bf16 %v1905, %v1905
        %v2066 = vpack.c.bf16 %v1914, %v1914
        %v2067 = vpack.c.bf16 %v1923, %v1923
        %v2068 = vpack.c.bf16 %v1932, %v1932
        %v2069 = vpack.c.bf16 %v1941, %v1941
        %v2070 = vpack.c.bf16 %v1950, %v1950
        %v2071 = vpack.c.bf16 %v1959, %v1959
        %v2072 = vpack.c.bf16 %v1968, %v1968
        %v2073 = vpack.c.bf16 %v1977, %v1977
        %v2074 = vpack.c.bf16 %v1986, %v1986
        %v2075 = vpack.c.bf16 %v1995, %v1995
        %v2076 = vpack.c.bf16 %v2004, %v2004
        %v2077 = vpack.c.bf16 %v2013, %v2013
        %v2078 = vpack.c.bf16 %v2022, %v2022
        %v2079 = vpack.c.bf16 %v2031, %v2031
        %v2080 = vpack.c.bf16 %v2040, %v2040
        %v2081 = vpack.c.bf16 %v2049, %v2049
        %v2082 = vld [vmem:[%s3 + $0x4] sm:$0xf]
        %v2115 = vunpack.c.l.b16 %v2050
        %v2116 = vunpack.c.l.b16 %v2051
        %v2117 = vunpack.c.l.b16 %v2052
        %v2118 = vunpack.c.l.b16 %v2053
        %v2119 = vunpack.c.l.b16 %v2054
        %v2120 = vunpack.c.l.b16 %v2055
        %v2121 = vunpack.c.l.b16 %v2056
        %v2122 = vunpack.c.l.b16 %v2057
        %v2123 = vunpack.c.l.b16 %v2058
        %v2124 = vunpack.c.l.b16 %v2059
        %v2125 = vunpack.c.l.b16 %v2060
        %v2126 = vunpack.c.l.b16 %v2061
        %v2127 = vunpack.c.l.b16 %v2062
        %v2128 = vunpack.c.l.b16 %v2063
        %v2129 = vunpack.c.l.b16 %v2064
        %v2130 = vunpack.c.l.b16 %v2065
        %v2131 = vunpack.c.l.b16 %v2066
        %v2132 = vunpack.c.l.b16 %v2067
        %v2133 = vunpack.c.l.b16 %v2068
        %v2134 = vunpack.c.l.b16 %v2069
        %v2135 = vunpack.c.l.b16 %v2070
        %v2136 = vunpack.c.l.b16 %v2071
        %v2137 = vunpack.c.l.b16 %v2072
        %v2138 = vunpack.c.l.b16 %v2073
        %v2139 = vunpack.c.l.b16 %v2074
        %v2140 = vunpack.c.l.b16 %v2075
        %v2141 = vunpack.c.l.b16 %v2076
        %v2142 = vunpack.c.l.b16 %v2077
        %v2143 = vunpack.c.l.b16 %v2078
        %v2144 = vunpack.c.l.b16 %v2079
        %v2145 = vunpack.c.l.b16 %v2080
        %v2146 = vunpack.c.l.b16 %v2081
        %vm2147 = vcmask 1041409
        %v2148 = vsel %vm2147, %v2116, %v2115
        %vm2149 = vcmask 1042434
        %v2150 = vsel %vm2149, %v2117, %v2148
        %vm2151 = vcmask 1043459
        %v2152 = vsel %vm2151, %v2118, %v2150
        %vm2153 = vcmask 1044484
        %v2154 = vsel %vm2153, %v2119, %v2152
        %vm2155 = vcmask 1045509
        %v2156 = vsel %vm2155, %v2120, %v2154
        %vm2157 = vcmask 1046534
        %v2158 = vsel %vm2157, %v2121, %v2156
        %vm2159 = vcmask 1047559
        %v2160 = vsel %vm2159, %v2122, %v2158
        %v2161 = vsel %vm2147, %v2124, %v2123
        %v2162 = vsel %vm2149, %v2125, %v2161
        %v2163 = vsel %vm2151, %v2126, %v2162
        %v2164 = vsel %vm2153, %v2127, %v2163
        %v2165 = vsel %vm2155, %v2128, %v2164
        %v2166 = vsel %vm2157, %v2129, %v2165
        %v2167 = vsel %vm2159, %v2130, %v2166
        %v2168 = vsel %vm2147, %v2132, %v2131
        %v2169 = vsel %vm2149, %v2133, %v2168
        %v2170 = vsel %vm2151, %v2134, %v2169
        %v2171 = vsel %vm2153, %v2135, %v2170
        %v2172 = vsel %vm2155, %v2136, %v2171
        %v2173 = vsel %vm2157, %v2137, %v2172
        %v2174 = vsel %vm2159, %v2138, %v2173
        %v2175 = vsel %vm2147, %v2140, %v2139
        %v2176 = vsel %vm2149, %v2141, %v2175
        %v2177 = vsel %vm2151, %v2142, %v2176
        %v2178 = vsel %vm2153, %v2143, %v2177
        %v2179 = vsel %vm2155, %v2144, %v2178
        %v2180 = vsel %vm2157, %v2145, %v2179
        %v2181 = vsel %vm2159, %v2146, %v2180
        %v2182 = vpack.c.b16 %v2167, %v2160
        %v2183 = vpack.c.b16 %v2181, %v2174
        %v2185 = vsel %vm1028, %v2182, 0
        %v2188 = vsel %vm1028, %v2183, 0
        %vm2190 = vcmask 1043456
        %v2192 = vsel %vm2190, %v2082, 0
        %2194 = vmatprep.subr.bf16.mxu0 0
        %2195 = vmatpush1.bf16.msra.mxu0 %v2192
        %2196 = vmatprep.subr.bf16.mxu0 0
        %2197 = vmatpush1.bf16.msra.mxu0 0
        %2198 = vmatprep.subr.bf16.mxu0 0
        %2199 = vmatpush1.bf16.msra.mxu0 0
        %2200 = vmatprep.subr.bf16.mxu0 0
        %2201 = vmatpush1.bf16.msra.mxu0 0
        %2202 = vmatprep.subr.bf16.mxu0 0
        %2203 = vmatpush1.bf16.msra.mxu0 0
        %2204 = vmatprep.subr.bf16.mxu0 0
        %2205 = vmatpush1.bf16.msra.mxu0 0
        %2206 = vmatprep.subr.bf16.mxu0 0
        %2207 = vmatpush1.bf16.msra.mxu0 0
        %2208 = vmatprep.subr.bf16.mxu0 0
        %2209 = vmatpush1.bf16.msra.mxu0 0
        %2210 = vmatprep.subr.bf16.mxu0 0
        %2211 = vmatpush1.bf16.msra.mxu0 0
        %2212 = vmatprep.subr.bf16.mxu0 0
        %2213 = vmatpush1.bf16.msra.mxu0 0
        %2214 = vmatprep.subr.bf16.mxu0 0
        %2215 = vmatpush1.bf16.msra.mxu0 0
        %2216 = vmatprep.subr.bf16.mxu0 0
        %2217 = vmatpush1.bf16.msra.mxu0 0
        %2218 = vmatprep.subr.bf16.mxu0 0
        %2219 = vmatpush1.bf16.msra.mxu0 0
        %2220 = vmatprep.subr.bf16.mxu0 0
        %2221 = vmatpush1.bf16.msra.mxu0 0
        %2222 = vmatprep.subr.bf16.mxu0 0
        %2223 = vmatpush1.bf16.msra.mxu0 0
        %2224 = vmatprep.subr.bf16.mxu0 0
        %2225 = vmatpush1.bf16.msra.mxu0 0
        %2226 = vmatprep.mubr.bf16.mxu0 0
        %2227 = vmatmul.mubr.bf16.gmra.mrb[0].mxu0 %v2185
        %v2228 = vpop.f32.mrb[0].mxu0
        %v2229 = vadd.f32 0.0, %v2228
        %v2230 = vpop.f32.mrb[0].mxu0
        %v2231 = vpop.f32.mrb[0].mxu0
        %v2232 = vadd.f32 0.0, %v2231
        %v2233 = vpop.f32.mrb[0].mxu0
        %2234 = vmatprep.mubr.bf16.mxu0 0
        %2235 = vmatmul.mubr.bf16.gmra.mrb[0].mxu0 %v2188
        %v2236 = vpop.f32.mrb[0].mxu0
        %v2237 = vadd.f32 0.0, %v2236
        %v2238 = vpop.f32.mrb[0].mxu0
        %v2239 = vpop.f32.mrb[0].mxu0
        %v2240 = vadd.f32 0.0, %v2239
        %v2241 = vpop.f32.mrb[0].mxu0
        %2242 = vdwg.mxu0
        %v2275 = vunpack.c.l.b16 %v1317
        %v2276 = vunpack.c.l.b16 %v1318
        %v2277 = vunpack.c.l.b16 %v1319
        %v2278 = vunpack.c.l.b16 %v1320
        %v2279 = vunpack.c.l.b16 %v1321
        %v2280 = vunpack.c.l.b16 %v1322
        %v2281 = vunpack.c.l.b16 %v1323
        %v2282 = vunpack.c.l.b16 %v1324
        %v2283 = vunpack.c.l.b16 %v1325
        %v2284 = vunpack.c.l.b16 %v1326
        %v2285 = vunpack.c.l.b16 %v1327
        %v2286 = vunpack.c.l.b16 %v1328
        %v2287 = vunpack.c.l.b16 %v1329
        %v2288 = vunpack.c.l.b16 %v1330
        %v2289 = vunpack.c.l.b16 %v1331
        %v2290 = vunpack.c.l.b16 %v1332
        %v2291 = vunpack.c.l.b16 %v1333
        %v2292 = vunpack.c.l.b16 %v1334
        %v2293 = vunpack.c.l.b16 %v1335
        %v2294 = vunpack.c.l.b16 %v1336
        %v2295 = vunpack.c.l.b16 %v1337
        %v2296 = vunpack.c.l.b16 %v1338
        %v2297 = vunpack.c.l.b16 %v1339
        %v2298 = vunpack.c.l.b16 %v1340
        %v2299 = vunpack.c.l.b16 %v1341
        %v2300 = vunpack.c.l.b16 %v1342
        %v2301 = vunpack.c.l.b16 %v1343
        %v2302 = vunpack.c.l.b16 %v1344
        %v2303 = vunpack.c.l.b16 %v1345
        %v2304 = vunpack.c.l.b16 %v1346
        %v2305 = vunpack.c.l.b16 %v1347
        %v2306 = vunpack.c.l.b16 %v1348
        %v2307 = vsel %vm2147, %v2276, %v2275
        %v2308 = vsel %vm2149, %v2277, %v2307
        %v2309 = vsel %vm2151, %v2278, %v2308
        %v2310 = vsel %vm2153, %v2279, %v2309
        %v2311 = vsel %vm2155, %v2280, %v2310
        %v2312 = vsel %vm2157, %v2281, %v2311
        %v2313 = vsel %vm2159, %v2282, %v2312
        %v2314 = vsel %vm2147, %v2284, %v2283
        %v2315 = vsel %vm2149, %v2285, %v2314
        %v2316 = vsel %vm2151, %v2286, %v2315
        %v2317 = vsel %vm2153, %v2287, %v2316
        %v2318 = vsel %vm2155, %v2288, %v2317
        %v2319 = vsel %vm2157, %v2289, %v2318
        %v2320 = vsel %vm2159, %v2290, %v2319
        %v2321 = vsel %vm2147, %v2292, %v2291
        %v2322 = vsel %vm2149, %v2293, %v2321
        %v2323 = vsel %vm2151, %v2294, %v2322
        %v2324 = vsel %vm2153, %v2295, %v2323
        %v2325 = vsel %vm2155, %v2296, %v2324
        %v2326 = vsel %vm2157, %v2297, %v2325
        %v2327 = vsel %vm2159, %v2298, %v2326
        %v2328 = vsel %vm2147, %v2300, %v2299
        %v2329 = vsel %vm2149, %v2301, %v2328
        %v2330 = vsel %vm2151, %v2302, %v2329
        %v2331 = vsel %vm2153, %v2303, %v2330
        %v2332 = vsel %vm2155, %v2304, %v2331
        %v2333 = vsel %vm2157, %v2305, %v2332
        %v2334 = vsel %vm2159, %v2306, %v2333
        %v2335 = vpack.c.b16 %v2320, %v2313
        %v2336 = vpack.c.b16 %v2334, %v2327
        %v2338 = vsel %vm1028, %v2335, 0
        %v2341 = vsel %vm1028, %v2336, 0
        %v2344 = vsel %vm2190, %v1349, 0
        %2346 = vmatprep.subr.bf16.mxu0 0
        %2347 = vmatpush1.bf16.msra.mxu0 %v2344
        %2348 = vmatprep.subr.bf16.mxu0 0
        %2349 = vmatpush1.bf16.msra.mxu0 0
        %2350 = vmatprep.subr.bf16.mxu0 0
        %2351 = vmatpush1.bf16.msra.mxu0 0
        %2352 = vmatprep.subr.bf16.mxu0 0
        %2353 = vmatpush1.bf16.msra.mxu0 0
        %2354 = vmatprep.subr.bf16.mxu0 0
        %2355 = vmatpush1.bf16.msra.mxu0 0
        %2356 = vmatprep.subr.bf16.mxu0 0
        %2357 = vmatpush1.bf16.msra.mxu0 0
        %2358 = vmatprep.subr.bf16.mxu0 0
        %2359 = vmatpush1.bf16.msra.mxu0 0
        %2360 = vmatprep.subr.bf16.mxu0 0
        %2361 = vmatpush1.bf16.msra.mxu0 0
        %2362 = vmatprep.subr.bf16.mxu0 0
        %2363 = vmatpush1.bf16.msra.mxu0 0
        %2364 = vmatprep.subr.bf16.mxu0 0
        %2365 = vmatpush1.bf16.msra.mxu0 0
        %2366 = vmatprep.subr.bf16.mxu0 0
        %2367 = vmatpush1.bf16.msra.mxu0 0
        %2368 = vmatprep.subr.bf16.mxu0 0
        %2369 = vmatpush1.bf16.msra.mxu0 0
        %2370 = vmatprep.subr.bf16.mxu0 0
        %2371 = vmatpush1.bf16.msra.mxu0 0
        %2372 = vmatprep.subr.bf16.mxu0 0
        %2373 = vmatpush1.bf16.msra.mxu0 0
        %2374 = vmatprep.subr.bf16.mxu0 0
        %2375 = vmatpush1.bf16.msra.mxu0 0
        %2376 = vmatprep.subr.bf16.mxu0 0
        %2377 = vmatpush1.bf16.msra.mxu0 0
        %2378 = vmatprep.mubr.bf16.mxu0 0
        %2379 = vmatmul.mubr.bf16.gmra.mrb[0].mxu0 %v2338
        %v2380 = vpop.f32.mrb[0].mxu0
        %v2381 = vadd.f32 %v2229, %v2380
        %v2382 = vpop.f32.mrb[0].mxu0
        %v2383 = vpop.f32.mrb[0].mxu0
        %v2384 = vadd.f32 %v2232, %v2383
        %v2385 = vpop.f32.mrb[0].mxu0
        %2386 = vmatprep.mubr.bf16.mxu0 0
        %2387 = vmatmul.mubr.bf16.gmra.mrb[0].mxu0 %v2341
        %v2388 = vpop.f32.mrb[0].mxu0
        %v2389 = vadd.f32 %v2237, %v2388
        %v2390 = vpop.f32.mrb[0].mxu0
        %v2391 = vpop.f32.mrb[0].mxu0
        %v2392 = vadd.f32 %v2240, %v2391
        %v2393 = vpop.f32.mrb[0].mxu0
        %2394 = vdwg.mxu0
        %s2395 = sld [smem:[#allocation3 + $0x6]]
        %s2396 = sld [smem:[#allocation3 + $0x7]]
        %s2397 = sld [smem:[#allocation3 + $0x8]]
        %v2398 = vstv %s2395
        %v2399 = vsub.f32 %v346, %v2398
        %v2400 = vsub.f32 %v347, %v2398
        %v2401 = vsub.f32 %v348, %v2398
        %v2402 = vsub.f32 %v349, %v2398
        %v2403 = vstv %s2396
        %v2404 = vsub.f32 %v351, %v2403
        %v2405 = vsub.f32 %v352, %v2403
        %v2406 = vsub.f32 %v353, %v2403
        %v2407 = vsub.f32 %v354, %v2403
        %v2408 = vstv %s2397
        %v2409 = vsub.f32 %v356, %v2408
        %v2410 = vsub.f32 %v357, %v2408
        %v2411 = vsub.f32 %v358, %v2408
        %v2412 = vsub.f32 %v359, %v2408
        %v2413 = vmul.f32 %v2399, %v2399
        %v2414 = vmul.f32 %v2400, %v2400
        %v2415 = vmul.f32 %v2401, %v2401
        %v2416 = vmul.f32 %v2402, %v2402
        %v2417 = vmul.f32 %v2404, %v2404
        %v2418 = vmul.f32 %v2405, %v2405
        %v2419 = vmul.f32 %v2406, %v2406
        %v2420 = vmul.f32 %v2407, %v2407
        %v2421 = vadd.f32 %v2413, %v2417
        %v2422 = vadd.f32 %v2414, %v2418
        %v2423 = vadd.f32 %v2415, %v2419
        %v2424 = vadd.f32 %v2416, %v2420
        %v2425 = vmul.f32 %v2409, %v2409
        %v2426 = vmul.f32 %v2410, %v2410
        %v2427 = vmul.f32 %v2411, %v2411
        %v2428 = vmul.f32 %v2412, %v2412
        %v2429 = vadd.f32 %v2421, %v2425
        %v2430 = vadd.f32 %v2422, %v2426
        %v2431 = vadd.f32 %v2423, %v2427
        %v2432 = vadd.f32 %v2424, %v2428
        %v2433 = vrsqrt.pop %v2429
        %v2434 = vmul.f32 %v2429, %v2433
        %vm2435 = vcmp.eq.f32.partialorder %v2429, inf
        %v2436 = vsel %vm2435, %v2429, %v2434
        %vm2437 = vcmp.eq.f32.partialorder %v2429, 0.0
        %v2438 = vand.u32 %v2429, 2147483648
        %v2439 = vsel %vm2437, %v2438, %v2436
        %v2440 = vrsqrt.pop %v2430
        %v2441 = vmul.f32 %v2430, %v2440
        %vm2442 = vcmp.eq.f32.partialorder %v2430, inf
        %v2443 = vsel %vm2442, %v2430, %v2441
        %vm2444 = vcmp.eq.f32.partialorder %v2430, 0.0
        %v2445 = vand.u32 %v2430, 2147483648
        %v2446 = vsel %vm2444, %v2445, %v2443
        %v2447 = vrsqrt.pop %v2431
        %v2448 = vmul.f32 %v2431, %v2447
        %vm2449 = vcmp.eq.f32.partialorder %v2431, inf
        %v2450 = vsel %vm2449, %v2431, %v2448
        %vm2451 = vcmp.eq.f32.partialorder %v2431, 0.0
        %v2452 = vand.u32 %v2431, 2147483648
        %v2453 = vsel %vm2451, %v2452, %v2450
        %v2454 = vrsqrt.pop %v2432
        %v2455 = vmul.f32 %v2432, %v2454
        %vm2456 = vcmp.eq.f32.partialorder %v2432, inf
        %v2457 = vsel %vm2456, %v2432, %v2455
        %vm2458 = vcmp.eq.f32.partialorder %v2432, 0.0
        %v2459 = vand.u32 %v2432, 2147483648
        %v2460 = vsel %vm2458, %v2459, %v2457
        %v2461 = vmul.f32 %v2439, 16.666666
        %v2462 = vmul.f32 %v2446, 16.666666
        %v2463 = vmul.f32 %v2453, 16.666666
        %v2464 = vmul.f32 %v2460, 16.666666
        %v2465 = vsub.f32 1.0, %v2461
        %v2466 = vsub.f32 1.0, %v2462
        %v2467 = vsub.f32 1.0, %v2463
        %v2468 = vsub.f32 1.0, %v2464
        %v2469 = vmax.f32 %v2465, 0.0
        %v2470 = vmax.f32 %v2466, 0.0
        %v2471 = vmax.f32 %v2467, 0.0
        %v2472 = vmax.f32 %v2468, 0.0
        %v2473 = vpack.c.bf16 %v2470, %v2469
        %v2474 = vpack.c.bf16 %v2472, %v2471
        %v2476 = vpack.i.b16 %v2473, %v2473
        %v2478 = vlaneseq
        %v2479 = vshrl.u32 %v2478, 7
        %v2480 = vsub.s32 0, %v2479
        %v2481 = vrot.slane %v2476, %v2480
        %2483 = vbcast.lane.c.b16.xlu0 %v2481, 256
        %v2484 = vpop.permute.xlu0 %2483
        %v2485 = vshrl.u32 %v2473, 16
        %v2486 = vpack.i.b16 %v2485, %v2485
        %v2488 = vlaneseq
        %v2489 = vshrl.u32 %v2488, 7
        %v2490 = vsub.s32 0, %v2489
        %v2491 = vrot.slane %v2486, %v2490
        %2493 = vbcast.lane.c.b16.xlu0 %v2491, 256
        %v2494 = vpop.permute.xlu0 %2493
        %v2495 = vlaneseq
        %v2496 = vshrl.u32 %v2495, 7
        %v2497 = vsub.s32 1, %v2496
        %v2498 = vrot.slane %v2476, %v2497
        %2500 = vbcast.lane.c.b16.xlu0 %v2498, 256
        %v2501 = vpop.permute.xlu0 %2500
        %v2502 = vlaneseq
        %v2503 = vshrl.u32 %v2502, 7
        %v2504 = vsub.s32 1, %v2503
        %v2505 = vrot.slane %v2486, %v2504
        %2507 = vbcast.lane.c.b16.xlu0 %v2505, 256
        %v2508 = vpop.permute.xlu0 %2507
        %v2509 = vlaneseq
        %v2510 = vshrl.u32 %v2509, 7
        %v2511 = vsub.s32 2, %v2510
        %v2512 = vrot.slane %v2476, %v2511
        %2514 = vbcast.lane.c.b16.xlu0 %v2512, 256
        %v2515 = vpop.permute.xlu0 %2514
        %v2516 = vlaneseq
        %v2517 = vshrl.u32 %v2516, 7
        %v2518 = vsub.s32 2, %v2517
        %v2519 = vrot.slane %v2486, %v2518
        %2521 = vbcast.lane.c.b16.xlu0 %v2519, 256
        %v2522 = vpop.permute.xlu0 %2521
        %v2523 = vlaneseq
        %v2524 = vshrl.u32 %v2523, 7
        %v2525 = vsub.s32 3, %v2524
        %v2526 = vrot.slane %v2476, %v2525
        %2528 = vbcast.lane.c.b16.xlu0 %v2526, 256
        %v2529 = vpop.permute.xlu0 %2528
        %v2530 = vlaneseq
        %v2531 = vshrl.u32 %v2530, 7
        %v2532 = vsub.s32 3, %v2531
        %v2533 = vrot.slane %v2486, %v2532
        %2535 = vbcast.lane.c.b16.xlu0 %v2533, 256
        %v2536 = vpop.permute.xlu0 %2535
        %v2537 = vlaneseq
        %v2538 = vshrl.u32 %v2537, 7
        %v2539 = vsub.s32 4, %v2538
        %v2540 = vrot.slane %v2476, %v2539
        %2542 = vbcast.lane.c.b16.xlu0 %v2540, 256
        %v2543 = vpop.permute.xlu0 %2542
        %v2544 = vlaneseq
        %v2545 = vshrl.u32 %v2544, 7
        %v2546 = vsub.s32 4, %v2545
        %v2547 = vrot.slane %v2486, %v2546
        %2549 = vbcast.lane.c.b16.xlu0 %v2547, 256
        %v2550 = vpop.permute.xlu0 %2549
        %v2551 = vlaneseq
        %v2552 = vshrl.u32 %v2551, 7
        %v2553 = vsub.s32 5, %v2552
        %v2554 = vrot.slane %v2476, %v2553
        %2556 = vbcast.lane.c.b16.xlu0 %v2554, 256
        %v2557 = vpop.permute.xlu0 %2556
        %v2558 = vlaneseq
        %v2559 = vshrl.u32 %v2558, 7
        %v2560 = vsub.s32 5, %v2559
        %v2561 = vrot.slane %v2486, %v2560
        %2563 = vbcast.lane.c.b16.xlu0 %v2561, 256
        %v2564 = vpop.permute.xlu0 %2563
        %v2565 = vlaneseq
        %v2566 = vshrl.u32 %v2565, 7
        %v2567 = vsub.s32 6, %v2566
        %v2568 = vrot.slane %v2476, %v2567
        %2570 = vbcast.lane.c.b16.xlu0 %v2568, 256
        %v2571 = vpop.permute.xlu0 %2570
        %v2572 = vlaneseq
        %v2573 = vshrl.u32 %v2572, 7
        %v2574 = vsub.s32 6, %v2573
        %v2575 = vrot.slane %v2486, %v2574
        %2577 = vbcast.lane.c.b16.xlu0 %v2575, 256
        %v2578 = vpop.permute.xlu0 %2577
        %v2579 = vlaneseq
        %v2580 = vshrl.u32 %v2579, 7
        %v2581 = vsub.s32 7, %v2580
        %v2582 = vrot.slane %v2476, %v2581
        %2584 = vbcast.lane.c.b16.xlu0 %v2582, 256
        %v2585 = vpop.permute.xlu0 %2584
        %v2586 = vlaneseq
        %v2587 = vshrl.u32 %v2586, 7
        %v2588 = vsub.s32 7, %v2587
        %v2589 = vrot.slane %v2486, %v2588
        %2591 = vbcast.lane.c.b16.xlu0 %v2589, 256
        %v2592 = vpop.permute.xlu0 %2591
        %v2594 = vpack.i.b16 %v2474, %v2474
        %v2596 = vlaneseq
        %v2597 = vshrl.u32 %v2596, 7
        %v2598 = vsub.s32 0, %v2597
        %v2599 = vrot.slane %v2594, %v2598
        %2601 = vbcast.lane.c.b16.xlu0 %v2599, 256
        %v2602 = vpop.permute.xlu0 %2601
        %v2603 = vshrl.u32 %v2474, 16
        %v2604 = vpack.i.b16 %v2603, %v2603
        %v2606 = vlaneseq
        %v2607 = vshrl.u32 %v2606, 7
        %v2608 = vsub.s32 0, %v2607
        %v2609 = vrot.slane %v2604, %v2608
        %2611 = vbcast.lane.c.b16.xlu0 %v2609, 256
        %v2612 = vpop.permute.xlu0 %2611
        %v2613 = vlaneseq
        %v2614 = vshrl.u32 %v2613, 7
        %v2615 = vsub.s32 1, %v2614
        %v2616 = vrot.slane %v2594, %v2615
        %2618 = vbcast.lane.c.b16.xlu0 %v2616, 256
        %v2619 = vpop.permute.xlu0 %2618
        %v2620 = vlaneseq
        %v2621 = vshrl.u32 %v2620, 7
        %v2622 = vsub.s32 1, %v2621
        %v2623 = vrot.slane %v2604, %v2622
        %2625 = vbcast.lane.c.b16.xlu0 %v2623, 256
        %v2626 = vpop.permute.xlu0 %2625
        %v2627 = vlaneseq
        %v2628 = vshrl.u32 %v2627, 7
        %v2629 = vsub.s32 2, %v2628
        %v2630 = vrot.slane %v2594, %v2629
        %2632 = vbcast.lane.c.b16.xlu0 %v2630, 256
        %v2633 = vpop.permute.xlu0 %2632
        %v2634 = vlaneseq
        %v2635 = vshrl.u32 %v2634, 7
        %v2636 = vsub.s32 2, %v2635
        %v2637 = vrot.slane %v2604, %v2636
        %2639 = vbcast.lane.c.b16.xlu0 %v2637, 256
        %v2640 = vpop.permute.xlu0 %2639
        %v2641 = vlaneseq
        %v2642 = vshrl.u32 %v2641, 7
        %v2643 = vsub.s32 3, %v2642
        %v2644 = vrot.slane %v2594, %v2643
        %2646 = vbcast.lane.c.b16.xlu0 %v2644, 256
        %v2647 = vpop.permute.xlu0 %2646
        %v2648 = vlaneseq
        %v2649 = vshrl.u32 %v2648, 7
        %v2650 = vsub.s32 3, %v2649
        %v2651 = vrot.slane %v2604, %v2650
        %2653 = vbcast.lane.c.b16.xlu0 %v2651, 256
        %v2654 = vpop.permute.xlu0 %2653
        %v2655 = vlaneseq
        %v2656 = vshrl.u32 %v2655, 7
        %v2657 = vsub.s32 4, %v2656
        %v2658 = vrot.slane %v2594, %v2657
        %2660 = vbcast.lane.c.b16.xlu0 %v2658, 256
        %v2661 = vpop.permute.xlu0 %2660
        %v2662 = vlaneseq
        %v2663 = vshrl.u32 %v2662, 7
        %v2664 = vsub.s32 4, %v2663
        %v2665 = vrot.slane %v2604, %v2664
        %2667 = vbcast.lane.c.b16.xlu0 %v2665, 256
        %v2668 = vpop.permute.xlu0 %2667
        %v2669 = vlaneseq
        %v2670 = vshrl.u32 %v2669, 7
        %v2671 = vsub.s32 5, %v2670
        %v2672 = vrot.slane %v2594, %v2671
        %2674 = vbcast.lane.c.b16.xlu0 %v2672, 256
        %v2675 = vpop.permute.xlu0 %2674
        %v2676 = vlaneseq
        %v2677 = vshrl.u32 %v2676, 7
        %v2678 = vsub.s32 5, %v2677
        %v2679 = vrot.slane %v2604, %v2678
        %2681 = vbcast.lane.c.b16.xlu0 %v2679, 256
        %v2682 = vpop.permute.xlu0 %2681
        %v2683 = vlaneseq
        %v2684 = vshrl.u32 %v2683, 7
        %v2685 = vsub.s32 6, %v2684
        %v2686 = vrot.slane %v2594, %v2685
        %2688 = vbcast.lane.c.b16.xlu0 %v2686, 256
        %v2689 = vpop.permute.xlu0 %2688
        %v2690 = vlaneseq
        %v2691 = vshrl.u32 %v2690, 7
        %v2692 = vsub.s32 6, %v2691
        %v2693 = vrot.slane %v2604, %v2692
        %2695 = vbcast.lane.c.b16.xlu0 %v2693, 256
        %v2696 = vpop.permute.xlu0 %2695
        %v2697 = vlaneseq
        %v2698 = vshrl.u32 %v2697, 7
        %v2699 = vsub.s32 7, %v2698
        %v2700 = vrot.slane %v2594, %v2699
        %2702 = vbcast.lane.c.b16.xlu0 %v2700, 256
        %v2703 = vpop.permute.xlu0 %2702
        %v2704 = vlaneseq
        %v2705 = vshrl.u32 %v2704, 7
        %v2706 = vsub.s32 7, %v2705
        %v2707 = vrot.slane %v2604, %v2706
        %2709 = vbcast.lane.c.b16.xlu0 %v2707, 256
        %v2710 = vpop.permute.xlu0 %2709
        %v2711 = vmul.bf16 %v2484, %v868
        %v2712 = vmul.bf16 %v2494, %v869
        %v2713 = vmul.bf16 %v2501, %v870
        %v2714 = vmul.bf16 %v2508, %v871
        %v2715 = vmul.bf16 %v2515, %v872
        %v2716 = vmul.bf16 %v2522, %v873
        %v2717 = vmul.bf16 %v2529, %v874
        %v2718 = vmul.bf16 %v2536, %v875
        %v2719 = vmul.bf16 %v2543, %v876
        %v2720 = vmul.bf16 %v2550, %v877
        %v2721 = vmul.bf16 %v2557, %v878
        %v2722 = vmul.bf16 %v2564, %v879
        %v2723 = vmul.bf16 %v2571, %v880
        %v2724 = vmul.bf16 %v2578, %v881
        %v2725 = vmul.bf16 %v2585, %v882
        %v2726 = vmul.bf16 %v2592, %v883
        %v2727 = vmul.bf16 %v2602, %v884
        %v2728 = vmul.bf16 %v2612, %v885
        %v2729 = vmul.bf16 %v2619, %v886
        %v2730 = vmul.bf16 %v2626, %v887
        %v2731 = vmul.bf16 %v2633, %v888
        %v2732 = vmul.bf16 %v2640, %v889
        %v2733 = vmul.bf16 %v2647, %v890
        %v2734 = vmul.bf16 %v2654, %v891
        %v2735 = vmul.bf16 %v2661, %v892
        %v2736 = vmul.bf16 %v2668, %v893
        %v2737 = vmul.bf16 %v2675, %v894
        %v2738 = vmul.bf16 %v2682, %v895
        %v2739 = vmul.bf16 %v2689, %v896
        %v2740 = vmul.bf16 %v2696, %v897
        %v2741 = vmul.bf16 %v2703, %v898
        %v2742 = vmul.bf16 %v2710, %v899
        %v2743 = vunpack.c.l.bf16 %v2711
        %v2744 = vunpack.c.h.bf16 %v2711
        %v2745 = vunpack.c.l.bf16 %v2712
        %v2746 = vunpack.c.h.bf16 %v2712
        %v2747 = vunpack.c.l.bf16 %v2713
        %v2748 = vunpack.c.h.bf16 %v2713
        %v2749 = vunpack.c.l.bf16 %v2714
        %v2750 = vunpack.c.h.bf16 %v2714
        %v2751 = vunpack.c.l.bf16 %v2715
        %v2752 = vunpack.c.h.bf16 %v2715
        %v2753 = vunpack.c.l.bf16 %v2716
        %v2754 = vunpack.c.h.bf16 %v2716
        %v2755 = vunpack.c.l.bf16 %v2717
        %v2756 = vunpack.c.h.bf16 %v2717
        %v2757 = vunpack.c.l.bf16 %v2718
        %v2758 = vunpack.c.h.bf16 %v2718
        %v2759 = vunpack.c.l.bf16 %v2719
        %v2760 = vunpack.c.h.bf16 %v2719
        %v2761 = vunpack.c.l.bf16 %v2720
        %v2762 = vunpack.c.h.bf16 %v2720
        %v2763 = vunpack.c.l.bf16 %v2721
        %v2764 = vunpack.c.h.bf16 %v2721
        %v2765 = vunpack.c.l.bf16 %v2722
        %v2766 = vunpack.c.h.bf16 %v2722
        %v2767 = vunpack.c.l.bf16 %v2723
        %v2768 = vunpack.c.h.bf16 %v2723
        %v2769 = vunpack.c.l.bf16 %v2724
        %v2770 = vunpack.c.h.bf16 %v2724
        %v2771 = vunpack.c.l.bf16 %v2725
        %v2772 = vunpack.c.h.bf16 %v2725
        %v2773 = vunpack.c.l.bf16 %v2726
        %v2774 = vunpack.c.h.bf16 %v2726
        %v2775 = vunpack.c.l.bf16 %v2727
        %v2776 = vunpack.c.h.bf16 %v2727
        %v2777 = vunpack.c.l.bf16 %v2728
        %v2778 = vunpack.c.h.bf16 %v2728
        %v2779 = vunpack.c.l.bf16 %v2729
        %v2780 = vunpack.c.h.bf16 %v2729
        %v2781 = vunpack.c.l.bf16 %v2730
        %v2782 = vunpack.c.h.bf16 %v2730
        %v2783 = vunpack.c.l.bf16 %v2731
        %v2784 = vunpack.c.h.bf16 %v2731
        %v2785 = vunpack.c.l.bf16 %v2732
        %v2786 = vunpack.c.h.bf16 %v2732
        %v2787 = vunpack.c.l.bf16 %v2733
        %v2788 = vunpack.c.h.bf16 %v2733
        %v2789 = vunpack.c.l.bf16 %v2734
        %v2790 = vunpack.c.h.bf16 %v2734
        %v2791 = vunpack.c.l.bf16 %v2735
        %v2792 = vunpack.c.h.bf16 %v2735
        %v2793 = vunpack.c.l.bf16 %v2736
        %v2794 = vunpack.c.h.bf16 %v2736
        %v2795 = vunpack.c.l.bf16 %v2737
        %v2796 = vunpack.c.h.bf16 %v2737
        %v2797 = vunpack.c.l.bf16 %v2738
        %v2798 = vunpack.c.h.bf16 %v2738
        %v2799 = vunpack.c.l.bf16 %v2739
        %v2800 = vunpack.c.h.bf16 %v2739
        %v2801 = vunpack.c.l.bf16 %v2740
        %v2802 = vunpack.c.h.bf16 %v2740
        %v2803 = vunpack.c.l.bf16 %v2741
        %v2804 = vunpack.c.h.bf16 %v2741
        %v2805 = vunpack.c.l.bf16 %v2742
        %v2806 = vunpack.c.h.bf16 %v2742
        %v2807 = vsel %vm1028, %v2743, 0.0
        %v2808 = vsel %vm1028, %v2744, 0.0
        %v2809 = vadd.f32 %v2807, %v2808
        %v2810 = vrot.slane %v2809, 4
        %v2811 = vadd.f32 %v2809, %v2810
        %v2812 = vrot.slane %v2811, 2
        %v2813 = vadd.f32 %v2811, %v2812
        %v2814 = vrot.slane %v2813, 1
        %v2815 = vadd.f32 %v2813, %v2814
        %v2816 = vsel %vm1028, %v2745, 0.0
        %v2817 = vsel %vm1028, %v2746, 0.0
        %v2818 = vadd.f32 %v2816, %v2817
        %v2819 = vrot.slane %v2818, 4
        %v2820 = vadd.f32 %v2818, %v2819
        %v2821 = vrot.slane %v2820, 2
        %v2822 = vadd.f32 %v2820, %v2821
        %v2823 = vrot.slane %v2822, 1
        %v2824 = vadd.f32 %v2822, %v2823
        %v2825 = vsel %vm1028, %v2747, 0.0
        %v2826 = vsel %vm1028, %v2748, 0.0
        %v2827 = vadd.f32 %v2825, %v2826
        %v2828 = vrot.slane %v2827, 4
        %v2829 = vadd.f32 %v2827, %v2828
        %v2830 = vrot.slane %v2829, 2
        %v2831 = vadd.f32 %v2829, %v2830
        %v2832 = vrot.slane %v2831, 1
        %v2833 = vadd.f32 %v2831, %v2832
        %v2834 = vsel %vm1028, %v2749, 0.0
        %v2835 = vsel %vm1028, %v2750, 0.0
        %v2836 = vadd.f32 %v2834, %v2835
        %v2837 = vrot.slane %v2836, 4
        %v2838 = vadd.f32 %v2836, %v2837
        %v2839 = vrot.slane %v2838, 2
        %v2840 = vadd.f32 %v2838, %v2839
        %v2841 = vrot.slane %v2840, 1
        %v2842 = vadd.f32 %v2840, %v2841
        %v2843 = vsel %vm1028, %v2751, 0.0
        %v2844 = vsel %vm1028, %v2752, 0.0
        %v2845 = vadd.f32 %v2843, %v2844
        %v2846 = vrot.slane %v2845, 4
        %v2847 = vadd.f32 %v2845, %v2846
        %v2848 = vrot.slane %v2847, 2
        %v2849 = vadd.f32 %v2847, %v2848
        %v2850 = vrot.slane %v2849, 1
        %v2851 = vadd.f32 %v2849, %v2850
        %v2852 = vsel %vm1028, %v2753, 0.0
        %v2853 = vsel %vm1028, %v2754, 0.0
        %v2854 = vadd.f32 %v2852, %v2853
        %v2855 = vrot.slane %v2854, 4
        %v2856 = vadd.f32 %v2854, %v2855
        %v2857 = vrot.slane %v2856, 2
        %v2858 = vadd.f32 %v2856, %v2857
        %v2859 = vrot.slane %v2858, 1
        %v2860 = vadd.f32 %v2858, %v2859
        %v2861 = vsel %vm1028, %v2755, 0.0
        %v2862 = vsel %vm1028, %v2756, 0.0
        %v2863 = vadd.f32 %v2861, %v2862
        %v2864 = vrot.slane %v2863, 4
        %v2865 = vadd.f32 %v2863, %v2864
        %v2866 = vrot.slane %v2865, 2
        %v2867 = vadd.f32 %v2865, %v2866
        %v2868 = vrot.slane %v2867, 1
        %v2869 = vadd.f32 %v2867, %v2868
        %v2870 = vsel %vm1028, %v2757, 0.0
        %v2871 = vsel %vm1028, %v2758, 0.0
        %v2872 = vadd.f32 %v2870, %v2871
        %v2873 = vrot.slane %v2872, 4
        %v2874 = vadd.f32 %v2872, %v2873
        %v2875 = vrot.slane %v2874, 2
        %v2876 = vadd.f32 %v2874, %v2875
        %v2877 = vrot.slane %v2876, 1
        %v2878 = vadd.f32 %v2876, %v2877
        %v2879 = vsel %vm1028, %v2759, 0.0
        %v2880 = vsel %vm1028, %v2760, 0.0
        %v2881 = vadd.f32 %v2879, %v2880
        %v2882 = vrot.slane %v2881, 4
        %v2883 = vadd.f32 %v2881, %v2882
        %v2884 = vrot.slane %v2883, 2
        %v2885 = vadd.f32 %v2883, %v2884
        %v2886 = vrot.slane %v2885, 1
        %v2887 = vadd.f32 %v2885, %v2886
        %v2888 = vsel %vm1028, %v2761, 0.0
        %v2889 = vsel %vm1028, %v2762, 0.0
        %v2890 = vadd.f32 %v2888, %v2889
        %v2891 = vrot.slane %v2890, 4
        %v2892 = vadd.f32 %v2890, %v2891
        %v2893 = vrot.slane %v2892, 2
        %v2894 = vadd.f32 %v2892, %v2893
        %v2895 = vrot.slane %v2894, 1
        %v2896 = vadd.f32 %v2894, %v2895
        %v2897 = vsel %vm1028, %v2763, 0.0
        %v2898 = vsel %vm1028, %v2764, 0.0
        %v2899 = vadd.f32 %v2897, %v2898
        %v2900 = vrot.slane %v2899, 4
        %v2901 = vadd.f32 %v2899, %v2900
        %v2902 = vrot.slane %v2901, 2
        %v2903 = vadd.f32 %v2901, %v2902
        %v2904 = vrot.slane %v2903, 1
        %v2905 = vadd.f32 %v2903, %v2904
        %v2906 = vsel %vm1028, %v2765, 0.0
        %v2907 = vsel %vm1028, %v2766, 0.0
        %v2908 = vadd.f32 %v2906, %v2907
        %v2909 = vrot.slane %v2908, 4
        %v2910 = vadd.f32 %v2908, %v2909
        %v2911 = vrot.slane %v2910, 2
        %v2912 = vadd.f32 %v2910, %v2911
        %v2913 = vrot.slane %v2912, 1
        %v2914 = vadd.f32 %v2912, %v2913
        %v2915 = vsel %vm1028, %v2767, 0.0
        %v2916 = vsel %vm1028, %v2768, 0.0
        %v2917 = vadd.f32 %v2915, %v2916
        %v2918 = vrot.slane %v2917, 4
        %v2919 = vadd.f32 %v2917, %v2918
        %v2920 = vrot.slane %v2919, 2
        %v2921 = vadd.f32 %v2919, %v2920
        %v2922 = vrot.slane %v2921, 1
        %v2923 = vadd.f32 %v2921, %v2922
        %v2924 = vsel %vm1028, %v2769, 0.0
        %v2925 = vsel %vm1028, %v2770, 0.0
        %v2926 = vadd.f32 %v2924, %v2925
        %v2927 = vrot.slane %v2926, 4
        %v2928 = vadd.f32 %v2926, %v2927
        %v2929 = vrot.slane %v2928, 2
        %v2930 = vadd.f32 %v2928, %v2929
        %v2931 = vrot.slane %v2930, 1
        %v2932 = vadd.f32 %v2930, %v2931
        %v2933 = vsel %vm1028, %v2771, 0.0
        %v2934 = vsel %vm1028, %v2772, 0.0
        %v2935 = vadd.f32 %v2933, %v2934
        %v2936 = vrot.slane %v2935, 4
        %v2937 = vadd.f32 %v2935, %v2936
        %v2938 = vrot.slane %v2937, 2
        %v2939 = vadd.f32 %v2937, %v2938
        %v2940 = vrot.slane %v2939, 1
        %v2941 = vadd.f32 %v2939, %v2940
        %v2942 = vsel %vm1028, %v2773, 0.0
        %v2943 = vsel %vm1028, %v2774, 0.0
        %v2944 = vadd.f32 %v2942, %v2943
        %v2945 = vrot.slane %v2944, 4
        %v2946 = vadd.f32 %v2944, %v2945
        %v2947 = vrot.slane %v2946, 2
        %v2948 = vadd.f32 %v2946, %v2947
        %v2949 = vrot.slane %v2948, 1
        %v2950 = vadd.f32 %v2948, %v2949
        %v2951 = vsel %vm1028, %v2775, 0.0
        %v2952 = vsel %vm1028, %v2776, 0.0
        %v2953 = vadd.f32 %v2951, %v2952
        %v2954 = vrot.slane %v2953, 4
        %v2955 = vadd.f32 %v2953, %v2954
        %v2956 = vrot.slane %v2955, 2
        %v2957 = vadd.f32 %v2955, %v2956
        %v2958 = vrot.slane %v2957, 1
        %v2959 = vadd.f32 %v2957, %v2958
        %v2960 = vsel %vm1028, %v2777, 0.0
        %v2961 = vsel %vm1028, %v2778, 0.0
        %v2962 = vadd.f32 %v2960, %v2961
        %v2963 = vrot.slane %v2962, 4
        %v2964 = vadd.f32 %v2962, %v2963
        %v2965 = vrot.slane %v2964, 2
        %v2966 = vadd.f32 %v2964, %v2965
        %v2967 = vrot.slane %v2966, 1
        %v2968 = vadd.f32 %v2966, %v2967
        %v2969 = vsel %vm1028, %v2779, 0.0
        %v2970 = vsel %vm1028, %v2780, 0.0
        %v2971 = vadd.f32 %v2969, %v2970
        %v2972 = vrot.slane %v2971, 4
        %v2973 = vadd.f32 %v2971, %v2972
        %v2974 = vrot.slane %v2973, 2
        %v2975 = vadd.f32 %v2973, %v2974
        %v2976 = vrot.slane %v2975, 1
        %v2977 = vadd.f32 %v2975, %v2976
        %v2978 = vsel %vm1028, %v2781, 0.0
        %v2979 = vsel %vm1028, %v2782, 0.0
        %v2980 = vadd.f32 %v2978, %v2979
        %v2981 = vrot.slane %v2980, 4
        %v2982 = vadd.f32 %v2980, %v2981
        %v2983 = vrot.slane %v2982, 2
        %v2984 = vadd.f32 %v2982, %v2983
        %v2985 = vrot.slane %v2984, 1
        %v2986 = vadd.f32 %v2984, %v2985
        %v2987 = vsel %vm1028, %v2783, 0.0
        %v2988 = vsel %vm1028, %v2784, 0.0
        %v2989 = vadd.f32 %v2987, %v2988
        %v2990 = vrot.slane %v2989, 4
        %v2991 = vadd.f32 %v2989, %v2990
        %v2992 = vrot.slane %v2991, 2
        %v2993 = vadd.f32 %v2991, %v2992
        %v2994 = vrot.slane %v2993, 1
        %v2995 = vadd.f32 %v2993, %v2994
        %v2996 = vsel %vm1028, %v2785, 0.0
        %v2997 = vsel %vm1028, %v2786, 0.0
        %v2998 = vadd.f32 %v2996, %v2997
        %v2999 = vrot.slane %v2998, 4
        %v3000 = vadd.f32 %v2998, %v2999
        %v3001 = vrot.slane %v3000, 2
        %v3002 = vadd.f32 %v3000, %v3001
        %v3003 = vrot.slane %v3002, 1
        %v3004 = vadd.f32 %v3002, %v3003
        %v3005 = vsel %vm1028, %v2787, 0.0
        %v3006 = vsel %vm1028, %v2788, 0.0
        %v3007 = vadd.f32 %v3005, %v3006
        %v3008 = vrot.slane %v3007, 4
        %v3009 = vadd.f32 %v3007, %v3008
        %v3010 = vrot.slane %v3009, 2
        %v3011 = vadd.f32 %v3009, %v3010
        %v3012 = vrot.slane %v3011, 1
        %v3013 = vadd.f32 %v3011, %v3012
        %v3014 = vsel %vm1028, %v2789, 0.0
        %v3015 = vsel %vm1028, %v2790, 0.0
        %v3016 = vadd.f32 %v3014, %v3015
        %v3017 = vrot.slane %v3016, 4
        %v3018 = vadd.f32 %v3016, %v3017
        %v3019 = vrot.slane %v3018, 2
        %v3020 = vadd.f32 %v3018, %v3019
        %v3021 = vrot.slane %v3020, 1
        %v3022 = vadd.f32 %v3020, %v3021
        %v3023 = vsel %vm1028, %v2791, 0.0
        %v3024 = vsel %vm1028, %v2792, 0.0
        %v3025 = vadd.f32 %v3023, %v3024
        %v3026 = vrot.slane %v3025, 4
        %v3027 = vadd.f32 %v3025, %v3026
        %v3028 = vrot.slane %v3027, 2
        %v3029 = vadd.f32 %v3027, %v3028
        %v3030 = vrot.slane %v3029, 1
        %v3031 = vadd.f32 %v3029, %v3030
        %v3032 = vsel %vm1028, %v2793, 0.0
        %v3033 = vsel %vm1028, %v2794, 0.0
        %v3034 = vadd.f32 %v3032, %v3033
        %v3035 = vrot.slane %v3034, 4
        %v3036 = vadd.f32 %v3034, %v3035
        %v3037 = vrot.slane %v3036, 2
        %v3038 = vadd.f32 %v3036, %v3037
        %v3039 = vrot.slane %v3038, 1
        %v3040 = vadd.f32 %v3038, %v3039
        %v3041 = vsel %vm1028, %v2795, 0.0
        %v3042 = vsel %vm1028, %v2796, 0.0
        %v3043 = vadd.f32 %v3041, %v3042
        %v3044 = vrot.slane %v3043, 4
        %v3045 = vadd.f32 %v3043, %v3044
        %v3046 = vrot.slane %v3045, 2
        %v3047 = vadd.f32 %v3045, %v3046
        %v3048 = vrot.slane %v3047, 1
        %v3049 = vadd.f32 %v3047, %v3048
        %v3050 = vsel %vm1028, %v2797, 0.0
        %v3051 = vsel %vm1028, %v2798, 0.0
        %v3052 = vadd.f32 %v3050, %v3051
        %v3053 = vrot.slane %v3052, 4
        %v3054 = vadd.f32 %v3052, %v3053
        %v3055 = vrot.slane %v3054, 2
        %v3056 = vadd.f32 %v3054, %v3055
        %v3057 = vrot.slane %v3056, 1
        %v3058 = vadd.f32 %v3056, %v3057
        %v3059 = vsel %vm1028, %v2799, 0.0
        %v3060 = vsel %vm1028, %v2800, 0.0
        %v3061 = vadd.f32 %v3059, %v3060
        %v3062 = vrot.slane %v3061, 4
        %v3063 = vadd.f32 %v3061, %v3062
        %v3064 = vrot.slane %v3063, 2
        %v3065 = vadd.f32 %v3063, %v3064
        %v3066 = vrot.slane %v3065, 1
        %v3067 = vadd.f32 %v3065, %v3066
        %v3068 = vsel %vm1028, %v2801, 0.0
        %v3069 = vsel %vm1028, %v2802, 0.0
        %v3070 = vadd.f32 %v3068, %v3069
        %v3071 = vrot.slane %v3070, 4
        %v3072 = vadd.f32 %v3070, %v3071
        %v3073 = vrot.slane %v3072, 2
        %v3074 = vadd.f32 %v3072, %v3073
        %v3075 = vrot.slane %v3074, 1
        %v3076 = vadd.f32 %v3074, %v3075
        %v3077 = vsel %vm1028, %v2803, 0.0
        %v3078 = vsel %vm1028, %v2804, 0.0
        %v3079 = vadd.f32 %v3077, %v3078
        %v3080 = vrot.slane %v3079, 4
        %v3081 = vadd.f32 %v3079, %v3080
        %v3082 = vrot.slane %v3081, 2
        %v3083 = vadd.f32 %v3081, %v3082
        %v3084 = vrot.slane %v3083, 1
        %v3085 = vadd.f32 %v3083, %v3084
        %v3086 = vsel %vm1028, %v2805, 0.0
        %v3087 = vsel %vm1028, %v2806, 0.0
        %v3088 = vadd.f32 %v3086, %v3087
        %v3089 = vrot.slane %v3088, 4
        %v3090 = vadd.f32 %v3088, %v3089
        %v3091 = vrot.slane %v3090, 2
        %v3092 = vadd.f32 %v3090, %v3091
        %v3093 = vrot.slane %v3092, 1
        %v3094 = vadd.f32 %v3092, %v3093
        %v3095 = vpack.c.bf16 %v2815, %v2815
        %v3096 = vpack.c.bf16 %v2824, %v2824
        %v3097 = vpack.c.bf16 %v2833, %v2833
        %v3098 = vpack.c.bf16 %v2842, %v2842
        %v3099 = vpack.c.bf16 %v2851, %v2851
        %v3100 = vpack.c.bf16 %v2860, %v2860
        %v3101 = vpack.c.bf16 %v2869, %v2869
        %v3102 = vpack.c.bf16 %v2878, %v2878
        %v3103 = vpack.c.bf16 %v2887, %v2887
        %v3104 = vpack.c.bf16 %v2896, %v2896
        %v3105 = vpack.c.bf16 %v2905, %v2905
        %v3106 = vpack.c.bf16 %v2914, %v2914
        %v3107 = vpack.c.bf16 %v2923, %v2923
        %v3108 = vpack.c.bf16 %v2932, %v2932
        %v3109 = vpack.c.bf16 %v2941, %v2941
        %v3110 = vpack.c.bf16 %v2950, %v2950
        %v3111 = vpack.c.bf16 %v2959, %v2959
        %v3112 = vpack.c.bf16 %v2968, %v2968
        %v3113 = vpack.c.bf16 %v2977, %v2977
        %v3114 = vpack.c.bf16 %v2986, %v2986
        %v3115 = vpack.c.bf16 %v2995, %v2995
        %v3116 = vpack.c.bf16 %v3004, %v3004
        %v3117 = vpack.c.bf16 %v3013, %v3013
        %v3118 = vpack.c.bf16 %v3022, %v3022
        %v3119 = vpack.c.bf16 %v3031, %v3031
        %v3120 = vpack.c.bf16 %v3040, %v3040
        %v3121 = vpack.c.bf16 %v3049, %v3049
        %v3122 = vpack.c.bf16 %v3058, %v3058
        %v3123 = vpack.c.bf16 %v3067, %v3067
        %v3124 = vpack.c.bf16 %v3076, %v3076
        %v3125 = vpack.c.bf16 %v3085, %v3085
        %v3126 = vpack.c.bf16 %v3094, %v3094
        %v3127 = vld [vmem:[%s3 + $0x8] sm:$0xf]
        %v3160 = vunpack.c.l.b16 %v3095
        %v3161 = vunpack.c.l.b16 %v3096
        %v3162 = vunpack.c.l.b16 %v3097
        %v3163 = vunpack.c.l.b16 %v3098
        %v3164 = vunpack.c.l.b16 %v3099
        %v3165 = vunpack.c.l.b16 %v3100
        %v3166 = vunpack.c.l.b16 %v3101
        %v3167 = vunpack.c.l.b16 %v3102
        %v3168 = vunpack.c.l.b16 %v3103
        %v3169 = vunpack.c.l.b16 %v3104
        %v3170 = vunpack.c.l.b16 %v3105
        %v3171 = vunpack.c.l.b16 %v3106
        %v3172 = vunpack.c.l.b16 %v3107
        %v3173 = vunpack.c.l.b16 %v3108
        %v3174 = vunpack.c.l.b16 %v3109
        %v3175 = vunpack.c.l.b16 %v3110
        %v3176 = vunpack.c.l.b16 %v3111
        %v3177 = vunpack.c.l.b16 %v3112
        %v3178 = vunpack.c.l.b16 %v3113
        %v3179 = vunpack.c.l.b16 %v3114
        %v3180 = vunpack.c.l.b16 %v3115
        %v3181 = vunpack.c.l.b16 %v3116
        %v3182 = vunpack.c.l.b16 %v3117
        %v3183 = vunpack.c.l.b16 %v3118
        %v3184 = vunpack.c.l.b16 %v3119
        %v3185 = vunpack.c.l.b16 %v3120
        %v3186 = vunpack.c.l.b16 %v3121
        %v3187 = vunpack.c.l.b16 %v3122
        %v3188 = vunpack.c.l.b16 %v3123
        %v3189 = vunpack.c.l.b16 %v3124
        %v3190 = vunpack.c.l.b16 %v3125
        %v3191 = vunpack.c.l.b16 %v3126
        %v3192 = vsel %vm2147, %v3161, %v3160
        %v3193 = vsel %vm2149, %v3162, %v3192
        %v3194 = vsel %vm2151, %v3163, %v3193
        %v3195 = vsel %vm2153, %v3164, %v3194
        %v3196 = vsel %vm2155, %v3165, %v3195
        %v3197 = vsel %vm2157, %v3166, %v3196
        %v3198 = vsel %vm2159, %v3167, %v3197
        %v3199 = vsel %vm2147, %v3169, %v3168
        %v3200 = vsel %vm2149, %v3170, %v3199
        %v3201 = vsel %vm2151, %v3171, %v3200
        %v3202 = vsel %vm2153, %v3172, %v3201
        %v3203 = vsel %vm2155, %v3173, %v3202
        %v3204 = vsel %vm2157, %v3174, %v3203
        %v3205 = vsel %vm2159, %v3175, %v3204
        %v3206 = vsel %vm2147, %v3177, %v3176
        %v3207 = vsel %vm2149, %v3178, %v3206
        %v3208 = vsel %vm2151, %v3179, %v3207
        %v3209 = vsel %vm2153, %v3180, %v3208
        %v3210 = vsel %vm2155, %v3181, %v3209
        %v3211 = vsel %vm2157, %v3182, %v3210
        %v3212 = vsel %vm2159, %v3183, %v3211
        %v3213 = vsel %vm2147, %v3185, %v3184
        %v3214 = vsel %vm2149, %v3186, %v3213
        %v3215 = vsel %vm2151, %v3187, %v3214
        %v3216 = vsel %vm2153, %v3188, %v3215
        %v3217 = vsel %vm2155, %v3189, %v3216
        %v3218 = vsel %vm2157, %v3190, %v3217
        %v3219 = vsel %vm2159, %v3191, %v3218
        %v3220 = vpack.c.b16 %v3205, %v3198
        %v3221 = vpack.c.b16 %v3219, %v3212
        %v3223 = vsel %vm1028, %v3220, 0
        %v3226 = vsel %vm1028, %v3221, 0
        %v3229 = vsel %vm2190, %v3127, 0
        %3231 = vmatprep.subr.bf16.mxu0 0
        %3232 = vmatpush1.bf16.msra.mxu0 %v3229
        %3233 = vmatprep.subr.bf16.mxu0 0
        %3234 = vmatpush1.bf16.msra.mxu0 0
        %3235 = vmatprep.subr.bf16.mxu0 0
        %3236 = vmatpush1.bf16.msra.mxu0 0
        %3237 = vmatprep.subr.bf16.mxu0 0
        %3238 = vmatpush1.bf16.msra.mxu0 0
        %3239 = vmatprep.subr.bf16.mxu0 0
        %3240 = vmatpush1.bf16.msra.mxu0 0
        %3241 = vmatprep.subr.bf16.mxu0 0
        %3242 = vmatpush1.bf16.msra.mxu0 0
        %3243 = vmatprep.subr.bf16.mxu0 0
        %3244 = vmatpush1.bf16.msra.mxu0 0
        %3245 = vmatprep.subr.bf16.mxu0 0
        %3246 = vmatpush1.bf16.msra.mxu0 0
        %3247 = vmatprep.subr.bf16.mxu0 0
        %3248 = vmatpush1.bf16.msra.mxu0 0
        %3249 = vmatprep.subr.bf16.mxu0 0
        %3250 = vmatpush1.bf16.msra.mxu0 0
        %3251 = vmatprep.subr.bf16.mxu0 0
        %3252 = vmatpush1.bf16.msra.mxu0 0
        %3253 = vmatprep.subr.bf16.mxu0 0
        %3254 = vmatpush1.bf16.msra.mxu0 0
        %3255 = vmatprep.subr.bf16.mxu0 0
        %3256 = vmatpush1.bf16.msra.mxu0 0
        %3257 = vmatprep.subr.bf16.mxu0 0
        %3258 = vmatpush1.bf16.msra.mxu0 0
        %3259 = vmatprep.subr.bf16.mxu0 0
        %3260 = vmatpush1.bf16.msra.mxu0 0
        %3261 = vmatprep.subr.bf16.mxu0 0
        %3262 = vmatpush1.bf16.msra.mxu0 0
        %3263 = vmatprep.mubr.bf16.mxu0 0
        %3264 = vmatmul.mubr.bf16.gmra.mrb[0].mxu0 %v3223
        %v3265 = vpop.f32.mrb[0].mxu0
        %v3266 = vadd.f32 0.0, %v3265
        %v3267 = vpop.f32.mrb[0].mxu0
        %v3268 = vpop.f32.mrb[0].mxu0
        %v3269 = vadd.f32 0.0, %v3268
        %v3270 = vpop.f32.mrb[0].mxu0
        %3271 = vmatprep.mubr.bf16.mxu0 0
        %3272 = vmatmul.mubr.bf16.gmra.mrb[0].mxu0 %v3226
        %v3273 = vpop.f32.mrb[0].mxu0
        %v3274 = vadd.f32 0.0, %v3273
        %v3275 = vpop.f32.mrb[0].mxu0
        %v3276 = vpop.f32.mrb[0].mxu0
        %v3277 = vadd.f32 0.0, %v3276
        %v3278 = vpop.f32.mrb[0].mxu0
        %3279 = vdwg.mxu0
        %v3280 = vadd.f32 %v2381, %v3266
        %v3281 = vadd.f32 %v2384, %v3269
        %v3282 = vadd.f32 %v2389, %v3274
        %v3283 = vadd.f32 %v2392, %v3277
        %s3284 = sld [smem:[#allocation3 + $0x9]]
        %s3285 = sld [smem:[#allocation3 + $0xa]]
        %s3286 = sld [smem:[#allocation3 + $0xb]]
        %v3287 = vstv %s3284
        %v3288 = vsub.f32 %v346, %v3287
        %v3289 = vsub.f32 %v347, %v3287
        %v3290 = vsub.f32 %v348, %v3287
        %v3291 = vsub.f32 %v349, %v3287
        %v3292 = vstv %s3285
        %v3293 = vsub.f32 %v351, %v3292
        %v3294 = vsub.f32 %v352, %v3292
        %v3295 = vsub.f32 %v353, %v3292
        %v3296 = vsub.f32 %v354, %v3292
        %v3297 = vstv %s3286
        %v3298 = vsub.f32 %v356, %v3297
        %v3299 = vsub.f32 %v357, %v3297
        %v3300 = vsub.f32 %v358, %v3297
        %v3301 = vsub.f32 %v359, %v3297
        %v3302 = vmul.f32 %v3288, %v3288
        %v3303 = vmul.f32 %v3289, %v3289
        %v3304 = vmul.f32 %v3290, %v3290
        %v3305 = vmul.f32 %v3291, %v3291
        %v3306 = vmul.f32 %v3293, %v3293
        %v3307 = vmul.f32 %v3294, %v3294
        %v3308 = vmul.f32 %v3295, %v3295
        %v3309 = vmul.f32 %v3296, %v3296
        %v3310 = vadd.f32 %v3302, %v3306
        %v3311 = vadd.f32 %v3303, %v3307
        %v3312 = vadd.f32 %v3304, %v3308
        %v3313 = vadd.f32 %v3305, %v3309
        %v3314 = vmul.f32 %v3298, %v3298
        %v3315 = vmul.f32 %v3299, %v3299
        %v3316 = vmul.f32 %v3300, %v3300
        %v3317 = vmul.f32 %v3301, %v3301
        %v3318 = vadd.f32 %v3310, %v3314
        %v3319 = vadd.f32 %v3311, %v3315
        %v3320 = vadd.f32 %v3312, %v3316
        %v3321 = vadd.f32 %v3313, %v3317
        %v3322 = vrsqrt.pop %v3318
        %v3323 = vmul.f32 %v3318, %v3322
        %vm3324 = vcmp.eq.f32.partialorder %v3318, inf
        %v3325 = vsel %vm3324, %v3318, %v3323
        %vm3326 = vcmp.eq.f32.partialorder %v3318, 0.0
        %v3327 = vand.u32 %v3318, 2147483648
        %v3328 = vsel %vm3326, %v3327, %v3325
        %v3329 = vrsqrt.pop %v3319
        %v3330 = vmul.f32 %v3319, %v3329
        %vm3331 = vcmp.eq.f32.partialorder %v3319, inf
        %v3332 = vsel %vm3331, %v3319, %v3330
        %vm3333 = vcmp.eq.f32.partialorder %v3319, 0.0
        %v3334 = vand.u32 %v3319, 2147483648
        %v3335 = vsel %vm3333, %v3334, %v3332
        %v3336 = vrsqrt.pop %v3320
        %v3337 = vmul.f32 %v3320, %v3336
        %vm3338 = vcmp.eq.f32.partialorder %v3320, inf
        %v3339 = vsel %vm3338, %v3320, %v3337
        %vm3340 = vcmp.eq.f32.partialorder %v3320, 0.0
        %v3341 = vand.u32 %v3320, 2147483648
        %v3342 = vsel %vm3340, %v3341, %v3339
        %v3343 = vrsqrt.pop %v3321
        %v3344 = vmul.f32 %v3321, %v3343
        %vm3345 = vcmp.eq.f32.partialorder %v3321, inf
        %v3346 = vsel %vm3345, %v3321, %v3344
        %vm3347 = vcmp.eq.f32.partialorder %v3321, 0.0
        %v3348 = vand.u32 %v3321, 2147483648
        %v3349 = vsel %vm3347, %v3348, %v3346
        %v3350 = vmul.f32 %v3328, 16.666666
        %v3351 = vmul.f32 %v3335, 16.666666
        %v3352 = vmul.f32 %v3342, 16.666666
        %v3353 = vmul.f32 %v3349, 16.666666
        %v3354 = vsub.f32 1.0, %v3350
        %v3355 = vsub.f32 1.0, %v3351
        %v3356 = vsub.f32 1.0, %v3352
        %v3357 = vsub.f32 1.0, %v3353
        %v3358 = vmax.f32 %v3354, 0.0
        %v3359 = vmax.f32 %v3355, 0.0
        %v3360 = vmax.f32 %v3356, 0.0
        %v3361 = vmax.f32 %v3357, 0.0
        %v3362 = vpack.c.bf16 %v3359, %v3358
        %v3363 = vpack.c.bf16 %v3361, %v3360
        %v3365 = vpack.i.b16 %v3362, %v3362
        %v3367 = vlaneseq
        %v3368 = vshrl.u32 %v3367, 7
        %v3369 = vsub.s32 0, %v3368
        %v3370 = vrot.slane %v3365, %v3369
        %3372 = vbcast.lane.c.b16.xlu0 %v3370, 256
        %v3373 = vpop.permute.xlu0 %3372
        %v3374 = vshrl.u32 %v3362, 16
        %v3375 = vpack.i.b16 %v3374, %v3374
        %v3377 = vlaneseq
        %v3378 = vshrl.u32 %v3377, 7
        %v3379 = vsub.s32 0, %v3378
        %v3380 = vrot.slane %v3375, %v3379
        %3382 = vbcast.lane.c.b16.xlu0 %v3380, 256
        %v3383 = vpop.permute.xlu0 %3382
        %v3384 = vlaneseq
        %v3385 = vshrl.u32 %v3384, 7
        %v3386 = vsub.s32 1, %v3385
        %v3387 = vrot.slane %v3365, %v3386
        %3389 = vbcast.lane.c.b16.xlu0 %v3387, 256
        %v3390 = vpop.permute.xlu0 %3389
        %v3391 = vlaneseq
        %v3392 = vshrl.u32 %v3391, 7
        %v3393 = vsub.s32 1, %v3392
        %v3394 = vrot.slane %v3375, %v3393
        %3396 = vbcast.lane.c.b16.xlu0 %v3394, 256
        %v3397 = vpop.permute.xlu0 %3396
        %v3398 = vlaneseq
        %v3399 = vshrl.u32 %v3398, 7
        %v3400 = vsub.s32 2, %v3399
        %v3401 = vrot.slane %v3365, %v3400
        %3403 = vbcast.lane.c.b16.xlu0 %v3401, 256
        %v3404 = vpop.permute.xlu0 %3403
        %v3405 = vlaneseq
        %v3406 = vshrl.u32 %v3405, 7
        %v3407 = vsub.s32 2, %v3406
        %v3408 = vrot.slane %v3375, %v3407
        %3410 = vbcast.lane.c.b16.xlu0 %v3408, 256
        %v3411 = vpop.permute.xlu0 %3410
        %v3412 = vlaneseq
        %v3413 = vshrl.u32 %v3412, 7
        %v3414 = vsub.s32 3, %v3413
        %v3415 = vrot.slane %v3365, %v3414
        %3417 = vbcast.lane.c.b16.xlu0 %v3415, 256
        %v3418 = vpop.permute.xlu0 %3417
        %v3419 = vlaneseq
        %v3420 = vshrl.u32 %v3419, 7
        %v3421 = vsub.s32 3, %v3420
        %v3422 = vrot.slane %v3375, %v3421
        %3424 = vbcast.lane.c.b16.xlu0 %v3422, 256
        %v3425 = vpop.permute.xlu0 %3424
        %v3426 = vlaneseq
        %v3427 = vshrl.u32 %v3426, 7
        %v3428 = vsub.s32 4, %v3427
        %v3429 = vrot.slane %v3365, %v3428
        %3431 = vbcast.lane.c.b16.xlu0 %v3429, 256
        %v3432 = vpop.permute.xlu0 %3431
        %v3433 = vlaneseq
        %v3434 = vshrl.u32 %v3433, 7
        %v3435 = vsub.s32 4, %v3434
        %v3436 = vrot.slane %v3375, %v3435
        %3438 = vbcast.lane.c.b16.xlu0 %v3436, 256
        %v3439 = vpop.permute.xlu0 %3438
        %v3440 = vlaneseq
        %v3441 = vshrl.u32 %v3440, 7
        %v3442 = vsub.s32 5, %v3441
        %v3443 = vrot.slane %v3365, %v3442
        %3445 = vbcast.lane.c.b16.xlu0 %v3443, 256
        %v3446 = vpop.permute.xlu0 %3445
        %v3447 = vlaneseq
        %v3448 = vshrl.u32 %v3447, 7
        %v3449 = vsub.s32 5, %v3448
        %v3450 = vrot.slane %v3375, %v3449
        %3452 = vbcast.lane.c.b16.xlu0 %v3450, 256
        %v3453 = vpop.permute.xlu0 %3452
        %v3454 = vlaneseq
        %v3455 = vshrl.u32 %v3454, 7
        %v3456 = vsub.s32 6, %v3455
        %v3457 = vrot.slane %v3365, %v3456
        %3459 = vbcast.lane.c.b16.xlu0 %v3457, 256
        %v3460 = vpop.permute.xlu0 %3459
        %v3461 = vlaneseq
        %v3462 = vshrl.u32 %v3461, 7
        %v3463 = vsub.s32 6, %v3462
        %v3464 = vrot.slane %v3375, %v3463
        %3466 = vbcast.lane.c.b16.xlu0 %v3464, 256
        %v3467 = vpop.permute.xlu0 %3466
        %v3468 = vlaneseq
        %v3469 = vshrl.u32 %v3468, 7
        %v3470 = vsub.s32 7, %v3469
        %v3471 = vrot.slane %v3365, %v3470
        %3473 = vbcast.lane.c.b16.xlu0 %v3471, 256
        %v3474 = vpop.permute.xlu0 %3473
        %v3475 = vlaneseq
        %v3476 = vshrl.u32 %v3475, 7
        %v3477 = vsub.s32 7, %v3476
        %v3478 = vrot.slane %v3375, %v3477
        %3480 = vbcast.lane.c.b16.xlu0 %v3478, 256
        %v3481 = vpop.permute.xlu0 %3480
        %v3483 = vpack.i.b16 %v3363, %v3363
        %v3485 = vlaneseq
        %v3486 = vshrl.u32 %v3485, 7
        %v3487 = vsub.s32 0, %v3486
        %v3488 = vrot.slane %v3483, %v3487
        %3490 = vbcast.lane.c.b16.xlu0 %v3488, 256
        %v3491 = vpop.permute.xlu0 %3490
        %v3492 = vshrl.u32 %v3363, 16
        %v3493 = vpack.i.b16 %v3492, %v3492
        %v3495 = vlaneseq
        %v3496 = vshrl.u32 %v3495, 7
        %v3497 = vsub.s32 0, %v3496
        %v3498 = vrot.slane %v3493, %v3497
        %3500 = vbcast.lane.c.b16.xlu0 %v3498, 256
        %v3501 = vpop.permute.xlu0 %3500
        %v3502 = vlaneseq
        %v3503 = vshrl.u32 %v3502, 7
        %v3504 = vsub.s32 1, %v3503
        %v3505 = vrot.slane %v3483, %v3504
        %3507 = vbcast.lane.c.b16.xlu0 %v3505, 256
        %v3508 = vpop.permute.xlu0 %3507
        %v3509 = vlaneseq
        %v3510 = vshrl.u32 %v3509, 7
        %v3511 = vsub.s32 1, %v3510
        %v3512 = vrot.slane %v3493, %v3511
        %3514 = vbcast.lane.c.b16.xlu0 %v3512, 256
        %v3515 = vpop.permute.xlu0 %3514
        %v3516 = vlaneseq
        %v3517 = vshrl.u32 %v3516, 7
        %v3518 = vsub.s32 2, %v3517
        %v3519 = vrot.slane %v3483, %v3518
        %3521 = vbcast.lane.c.b16.xlu0 %v3519, 256
        %v3522 = vpop.permute.xlu0 %3521
        %v3523 = vlaneseq
        %v3524 = vshrl.u32 %v3523, 7
        %v3525 = vsub.s32 2, %v3524
        %v3526 = vrot.slane %v3493, %v3525
        %3528 = vbcast.lane.c.b16.xlu0 %v3526, 256
        %v3529 = vpop.permute.xlu0 %3528
        %v3530 = vlaneseq
        %v3531 = vshrl.u32 %v3530, 7
        %v3532 = vsub.s32 3, %v3531
        %v3533 = vrot.slane %v3483, %v3532
        %3535 = vbcast.lane.c.b16.xlu0 %v3533, 256
        %v3536 = vpop.permute.xlu0 %3535
        %v3537 = vlaneseq
        %v3538 = vshrl.u32 %v3537, 7
        %v3539 = vsub.s32 3, %v3538
        %v3540 = vrot.slane %v3493, %v3539
        %3542 = vbcast.lane.c.b16.xlu0 %v3540, 256
        %v3543 = vpop.permute.xlu0 %3542
        %v3544 = vlaneseq
        %v3545 = vshrl.u32 %v3544, 7
        %v3546 = vsub.s32 4, %v3545
        %v3547 = vrot.slane %v3483, %v3546
        %3549 = vbcast.lane.c.b16.xlu0 %v3547, 256
        %v3550 = vpop.permute.xlu0 %3549
        %v3551 = vlaneseq
        %v3552 = vshrl.u32 %v3551, 7
        %v3553 = vsub.s32 4, %v3552
        %v3554 = vrot.slane %v3493, %v3553
        %3556 = vbcast.lane.c.b16.xlu0 %v3554, 256
        %v3557 = vpop.permute.xlu0 %3556
        %v3558 = vlaneseq
        %v3559 = vshrl.u32 %v3558, 7
        %v3560 = vsub.s32 5, %v3559
        %v3561 = vrot.slane %v3483, %v3560
        %3563 = vbcast.lane.c.b16.xlu0 %v3561, 256
        %v3564 = vpop.permute.xlu0 %3563
        %v3565 = vlaneseq
        %v3566 = vshrl.u32 %v3565, 7
        %v3567 = vsub.s32 5, %v3566
        %v3568 = vrot.slane %v3493, %v3567
        %3570 = vbcast.lane.c.b16.xlu0 %v3568, 256
        %v3571 = vpop.permute.xlu0 %3570
        %v3572 = vlaneseq
        %v3573 = vshrl.u32 %v3572, 7
        %v3574 = vsub.s32 6, %v3573
        %v3575 = vrot.slane %v3483, %v3574
        %3577 = vbcast.lane.c.b16.xlu0 %v3575, 256
        %v3578 = vpop.permute.xlu0 %3577
        %v3579 = vlaneseq
        %v3580 = vshrl.u32 %v3579, 7
        %v3581 = vsub.s32 6, %v3580
        %v3582 = vrot.slane %v3493, %v3581
        %3584 = vbcast.lane.c.b16.xlu0 %v3582, 256
        %v3585 = vpop.permute.xlu0 %3584
        %v3586 = vlaneseq
        %v3587 = vshrl.u32 %v3586, 7
        %v3588 = vsub.s32 7, %v3587
        %v3589 = vrot.slane %v3483, %v3588
        %3591 = vbcast.lane.c.b16.xlu0 %v3589, 256
        %v3592 = vpop.permute.xlu0 %3591
        %v3593 = vlaneseq
        %v3594 = vshrl.u32 %v3593, 7
        %v3595 = vsub.s32 7, %v3594
        %v3596 = vrot.slane %v3493, %v3595
        %3598 = vbcast.lane.c.b16.xlu0 %v3596, 256
        %v3599 = vpop.permute.xlu0 %3598
        %v3600 = vmul.bf16 %v3373, %v868
        %v3601 = vmul.bf16 %v3383, %v869
        %v3602 = vmul.bf16 %v3390, %v870
        %v3603 = vmul.bf16 %v3397, %v871
        %v3604 = vmul.bf16 %v3404, %v872
        %v3605 = vmul.bf16 %v3411, %v873
        %v3606 = vmul.bf16 %v3418, %v874
        %v3607 = vmul.bf16 %v3425, %v875
        %v3608 = vmul.bf16 %v3432, %v876
        %v3609 = vmul.bf16 %v3439, %v877
        %v3610 = vmul.bf16 %v3446, %v878
        %v3611 = vmul.bf16 %v3453, %v879
        %v3612 = vmul.bf16 %v3460, %v880
        %v3613 = vmul.bf16 %v3467, %v881
        %v3614 = vmul.bf16 %v3474, %v882
        %v3615 = vmul.bf16 %v3481, %v883
        %v3616 = vmul.bf16 %v3491, %v884
        %v3617 = vmul.bf16 %v3501, %v885
        %v3618 = vmul.bf16 %v3508, %v886
        %v3619 = vmul.bf16 %v3515, %v887
        %v3620 = vmul.bf16 %v3522, %v888
        %v3621 = vmul.bf16 %v3529, %v889
        %v3622 = vmul.bf16 %v3536, %v890
        %v3623 = vmul.bf16 %v3543, %v891
        %v3624 = vmul.bf16 %v3550, %v892
        %v3625 = vmul.bf16 %v3557, %v893
        %v3626 = vmul.bf16 %v3564, %v894
        %v3627 = vmul.bf16 %v3571, %v895
        %v3628 = vmul.bf16 %v3578, %v896
        %v3629 = vmul.bf16 %v3585, %v897
        %v3630 = vmul.bf16 %v3592, %v898
        %v3631 = vmul.bf16 %v3599, %v899
        %v3632 = vunpack.c.l.bf16 %v3600
        %v3633 = vunpack.c.h.bf16 %v3600
        %v3634 = vunpack.c.l.bf16 %v3601
        %v3635 = vunpack.c.h.bf16 %v3601
        %v3636 = vunpack.c.l.bf16 %v3602
        %v3637 = vunpack.c.h.bf16 %v3602
        %v3638 = vunpack.c.l.bf16 %v3603
        %v3639 = vunpack.c.h.bf16 %v3603
        %v3640 = vunpack.c.l.bf16 %v3604
        %v3641 = vunpack.c.h.bf16 %v3604
        %v3642 = vunpack.c.l.bf16 %v3605
        %v3643 = vunpack.c.h.bf16 %v3605
        %v3644 = vunpack.c.l.bf16 %v3606
        %v3645 = vunpack.c.h.bf16 %v3606
        %v3646 = vunpack.c.l.bf16 %v3607
        %v3647 = vunpack.c.h.bf16 %v3607
        %v3648 = vunpack.c.l.bf16 %v3608
        %v3649 = vunpack.c.h.bf16 %v3608
        %v3650 = vunpack.c.l.bf16 %v3609
        %v3651 = vunpack.c.h.bf16 %v3609
        %v3652 = vunpack.c.l.bf16 %v3610
        %v3653 = vunpack.c.h.bf16 %v3610
        %v3654 = vunpack.c.l.bf16 %v3611
        %v3655 = vunpack.c.h.bf16 %v3611
        %v3656 = vunpack.c.l.bf16 %v3612
        %v3657 = vunpack.c.h.bf16 %v3612
        %v3658 = vunpack.c.l.bf16 %v3613
        %v3659 = vunpack.c.h.bf16 %v3613
        %v3660 = vunpack.c.l.bf16 %v3614
        %v3661 = vunpack.c.h.bf16 %v3614
        %v3662 = vunpack.c.l.bf16 %v3615
        %v3663 = vunpack.c.h.bf16 %v3615
        %v3664 = vunpack.c.l.bf16 %v3616
        %v3665 = vunpack.c.h.bf16 %v3616
        %v3666 = vunpack.c.l.bf16 %v3617
        %v3667 = vunpack.c.h.bf16 %v3617
        %v3668 = vunpack.c.l.bf16 %v3618
        %v3669 = vunpack.c.h.bf16 %v3618
        %v3670 = vunpack.c.l.bf16 %v3619
        %v3671 = vunpack.c.h.bf16 %v3619
        %v3672 = vunpack.c.l.bf16 %v3620
        %v3673 = vunpack.c.h.bf16 %v3620
        %v3674 = vunpack.c.l.bf16 %v3621
        %v3675 = vunpack.c.h.bf16 %v3621
        %v3676 = vunpack.c.l.bf16 %v3622
        %v3677 = vunpack.c.h.bf16 %v3622
        %v3678 = vunpack.c.l.bf16 %v3623
        %v3679 = vunpack.c.h.bf16 %v3623
        %v3680 = vunpack.c.l.bf16 %v3624
        %v3681 = vunpack.c.h.bf16 %v3624
        %v3682 = vunpack.c.l.bf16 %v3625
        %v3683 = vunpack.c.h.bf16 %v3625
        %v3684 = vunpack.c.l.bf16 %v3626
        %v3685 = vunpack.c.h.bf16 %v3626
        %v3686 = vunpack.c.l.bf16 %v3627
        %v3687 = vunpack.c.h.bf16 %v3627
        %v3688 = vunpack.c.l.bf16 %v3628
        %v3689 = vunpack.c.h.bf16 %v3628
        %v3690 = vunpack.c.l.bf16 %v3629
        %v3691 = vunpack.c.h.bf16 %v3629
        %v3692 = vunpack.c.l.bf16 %v3630
        %v3693 = vunpack.c.h.bf16 %v3630
        %v3694 = vunpack.c.l.bf16 %v3631
        %v3695 = vunpack.c.h.bf16 %v3631
        %v3696 = vsel %vm1028, %v3632, 0.0
        %v3697 = vsel %vm1028, %v3633, 0.0
        %v3698 = vadd.f32 %v3696, %v3697
        %v3699 = vrot.slane %v3698, 4
        %v3700 = vadd.f32 %v3698, %v3699
        %v3701 = vrot.slane %v3700, 2
        %v3702 = vadd.f32 %v3700, %v3701
        %v3703 = vrot.slane %v3702, 1
        %v3704 = vadd.f32 %v3702, %v3703
        %v3705 = vsel %vm1028, %v3634, 0.0
        %v3706 = vsel %vm1028, %v3635, 0.0
        %v3707 = vadd.f32 %v3705, %v3706
        %v3708 = vrot.slane %v3707, 4
        %v3709 = vadd.f32 %v3707, %v3708
        %v3710 = vrot.slane %v3709, 2
        %v3711 = vadd.f32 %v3709, %v3710
        %v3712 = vrot.slane %v3711, 1
        %v3713 = vadd.f32 %v3711, %v3712
        %v3714 = vsel %vm1028, %v3636, 0.0
        %v3715 = vsel %vm1028, %v3637, 0.0
        %v3716 = vadd.f32 %v3714, %v3715
        %v3717 = vrot.slane %v3716, 4
        %v3718 = vadd.f32 %v3716, %v3717
        %v3719 = vrot.slane %v3718, 2
        %v3720 = vadd.f32 %v3718, %v3719
        %v3721 = vrot.slane %v3720, 1
        %v3722 = vadd.f32 %v3720, %v3721
        %v3723 = vsel %vm1028, %v3638, 0.0
        %v3724 = vsel %vm1028, %v3639, 0.0
        %v3725 = vadd.f32 %v3723, %v3724
        %v3726 = vrot.slane %v3725, 4
        %v3727 = vadd.f32 %v3725, %v3726
        %v3728 = vrot.slane %v3727, 2
        %v3729 = vadd.f32 %v3727, %v3728
        %v3730 = vrot.slane %v3729, 1
        %v3731 = vadd.f32 %v3729, %v3730
        %v3732 = vsel %vm1028, %v3640, 0.0
        %v3733 = vsel %vm1028, %v3641, 0.0
        %v3734 = vadd.f32 %v3732, %v3733
        %v3735 = vrot.slane %v3734, 4
        %v3736 = vadd.f32 %v3734, %v3735
        %v3737 = vrot.slane %v3736, 2
        %v3738 = vadd.f32 %v3736, %v3737
        %v3739 = vrot.slane %v3738, 1
        %v3740 = vadd.f32 %v3738, %v3739
        %v3741 = vsel %vm1028, %v3642, 0.0
        %v3742 = vsel %vm1028, %v3643, 0.0
        %v3743 = vadd.f32 %v3741, %v3742
        %v3744 = vrot.slane %v3743, 4
        %v3745 = vadd.f32 %v3743, %v3744
        %v3746 = vrot.slane %v3745, 2
        %v3747 = vadd.f32 %v3745, %v3746
        %v3748 = vrot.slane %v3747, 1
        %v3749 = vadd.f32 %v3747, %v3748
        %v3750 = vsel %vm1028, %v3644, 0.0
        %v3751 = vsel %vm1028, %v3645, 0.0
        %v3752 = vadd.f32 %v3750, %v3751
        %v3753 = vrot.slane %v3752, 4
        %v3754 = vadd.f32 %v3752, %v3753
        %v3755 = vrot.slane %v3754, 2
        %v3756 = vadd.f32 %v3754, %v3755
        %v3757 = vrot.slane %v3756, 1
        %v3758 = vadd.f32 %v3756, %v3757
        %v3759 = vsel %vm1028, %v3646, 0.0
        %v3760 = vsel %vm1028, %v3647, 0.0
        %v3761 = vadd.f32 %v3759, %v3760
        %v3762 = vrot.slane %v3761, 4
        %v3763 = vadd.f32 %v3761, %v3762
        %v3764 = vrot.slane %v3763, 2
        %v3765 = vadd.f32 %v3763, %v3764
        %v3766 = vrot.slane %v3765, 1
        %v3767 = vadd.f32 %v3765, %v3766
        %v3768 = vsel %vm1028, %v3648, 0.0
        %v3769 = vsel %vm1028, %v3649, 0.0
        %v3770 = vadd.f32 %v3768, %v3769
        %v3771 = vrot.slane %v3770, 4
        %v3772 = vadd.f32 %v3770, %v3771
        %v3773 = vrot.slane %v3772, 2
        %v3774 = vadd.f32 %v3772, %v3773
        %v3775 = vrot.slane %v3774, 1
        %v3776 = vadd.f32 %v3774, %v3775
        %v3777 = vsel %vm1028, %v3650, 0.0
        %v3778 = vsel %vm1028, %v3651, 0.0
        %v3779 = vadd.f32 %v3777, %v3778
        %v3780 = vrot.slane %v3779, 4
        %v3781 = vadd.f32 %v3779, %v3780
        %v3782 = vrot.slane %v3781, 2
        %v3783 = vadd.f32 %v3781, %v3782
        %v3784 = vrot.slane %v3783, 1
        %v3785 = vadd.f32 %v3783, %v3784
        %v3786 = vsel %vm1028, %v3652, 0.0
        %v3787 = vsel %vm1028, %v3653, 0.0
        %v3788 = vadd.f32 %v3786, %v3787
        %v3789 = vrot.slane %v3788, 4
        %v3790 = vadd.f32 %v3788, %v3789
        %v3791 = vrot.slane %v3790, 2
        %v3792 = vadd.f32 %v3790, %v3791
        %v3793 = vrot.slane %v3792, 1
        %v3794 = vadd.f32 %v3792, %v3793
        %v3795 = vsel %vm1028, %v3654, 0.0
        %v3796 = vsel %vm1028, %v3655, 0.0
        %v3797 = vadd.f32 %v3795, %v3796
        %v3798 = vrot.slane %v3797, 4
        %v3799 = vadd.f32 %v3797, %v3798
        %v3800 = vrot.slane %v3799, 2
        %v3801 = vadd.f32 %v3799, %v3800
        %v3802 = vrot.slane %v3801, 1
        %v3803 = vadd.f32 %v3801, %v3802
        %v3804 = vsel %vm1028, %v3656, 0.0
        %v3805 = vsel %vm1028, %v3657, 0.0
        %v3806 = vadd.f32 %v3804, %v3805
        %v3807 = vrot.slane %v3806, 4
        %v3808 = vadd.f32 %v3806, %v3807
        %v3809 = vrot.slane %v3808, 2
        %v3810 = vadd.f32 %v3808, %v3809
        %v3811 = vrot.slane %v3810, 1
        %v3812 = vadd.f32 %v3810, %v3811
        %v3813 = vsel %vm1028, %v3658, 0.0
        %v3814 = vsel %vm1028, %v3659, 0.0
        %v3815 = vadd.f32 %v3813, %v3814
        %v3816 = vrot.slane %v3815, 4
        %v3817 = vadd.f32 %v3815, %v3816
        %v3818 = vrot.slane %v3817, 2
        %v3819 = vadd.f32 %v3817, %v3818
        %v3820 = vrot.slane %v3819, 1
        %v3821 = vadd.f32 %v3819, %v3820
        %v3822 = vsel %vm1028, %v3660, 0.0
        %v3823 = vsel %vm1028, %v3661, 0.0
        %v3824 = vadd.f32 %v3822, %v3823
        %v3825 = vrot.slane %v3824, 4
        %v3826 = vadd.f32 %v3824, %v3825
        %v3827 = vrot.slane %v3826, 2
        %v3828 = vadd.f32 %v3826, %v3827
        %v3829 = vrot.slane %v3828, 1
        %v3830 = vadd.f32 %v3828, %v3829
        %v3831 = vsel %vm1028, %v3662, 0.0
        %v3832 = vsel %vm1028, %v3663, 0.0
        %v3833 = vadd.f32 %v3831, %v3832
        %v3834 = vrot.slane %v3833, 4
        %v3835 = vadd.f32 %v3833, %v3834
        %v3836 = vrot.slane %v3835, 2
        %v3837 = vadd.f32 %v3835, %v3836
        %v3838 = vrot.slane %v3837, 1
        %v3839 = vadd.f32 %v3837, %v3838
        %v3840 = vsel %vm1028, %v3664, 0.0
        %v3841 = vsel %vm1028, %v3665, 0.0
        %v3842 = vadd.f32 %v3840, %v3841
        %v3843 = vrot.slane %v3842, 4
        %v3844 = vadd.f32 %v3842, %v3843
        %v3845 = vrot.slane %v3844, 2
        %v3846 = vadd.f32 %v3844, %v3845
        %v3847 = vrot.slane %v3846, 1
        %v3848 = vadd.f32 %v3846, %v3847
        %v3849 = vsel %vm1028, %v3666, 0.0
        %v3850 = vsel %vm1028, %v3667, 0.0
        %v3851 = vadd.f32 %v3849, %v3850
        %v3852 = vrot.slane %v3851, 4
        %v3853 = vadd.f32 %v3851, %v3852
        %v3854 = vrot.slane %v3853, 2
        %v3855 = vadd.f32 %v3853, %v3854
        %v3856 = vrot.slane %v3855, 1
        %v3857 = vadd.f32 %v3855, %v3856
        %v3858 = vsel %vm1028, %v3668, 0.0
        %v3859 = vsel %vm1028, %v3669, 0.0
        %v3860 = vadd.f32 %v3858, %v3859
        %v3861 = vrot.slane %v3860, 4
        %v3862 = vadd.f32 %v3860, %v3861
        %v3863 = vrot.slane %v3862, 2
        %v3864 = vadd.f32 %v3862, %v3863
        %v3865 = vrot.slane %v3864, 1
        %v3866 = vadd.f32 %v3864, %v3865
        %v3867 = vsel %vm1028, %v3670, 0.0
        %v3868 = vsel %vm1028, %v3671, 0.0
        %v3869 = vadd.f32 %v3867, %v3868
        %v3870 = vrot.slane %v3869, 4
        %v3871 = vadd.f32 %v3869, %v3870
        %v3872 = vrot.slane %v3871, 2
        %v3873 = vadd.f32 %v3871, %v3872
        %v3874 = vrot.slane %v3873, 1
        %v3875 = vadd.f32 %v3873, %v3874
        %v3876 = vsel %vm1028, %v3672, 0.0
        %v3877 = vsel %vm1028, %v3673, 0.0
        %v3878 = vadd.f32 %v3876, %v3877
        %v3879 = vrot.slane %v3878, 4
        %v3880 = vadd.f32 %v3878, %v3879
        %v3881 = vrot.slane %v3880, 2
        %v3882 = vadd.f32 %v3880, %v3881
        %v3883 = vrot.slane %v3882, 1
        %v3884 = vadd.f32 %v3882, %v3883
        %v3885 = vsel %vm1028, %v3674, 0.0
        %v3886 = vsel %vm1028, %v3675, 0.0
        %v3887 = vadd.f32 %v3885, %v3886
        %v3888 = vrot.slane %v3887, 4
        %v3889 = vadd.f32 %v3887, %v3888
        %v3890 = vrot.slane %v3889, 2
        %v3891 = vadd.f32 %v3889, %v3890
        %v3892 = vrot.slane %v3891, 1
        %v3893 = vadd.f32 %v3891, %v3892
        %v3894 = vsel %vm1028, %v3676, 0.0
        %v3895 = vsel %vm1028, %v3677, 0.0
        %v3896 = vadd.f32 %v3894, %v3895
        %v3897 = vrot.slane %v3896, 4
        %v3898 = vadd.f32 %v3896, %v3897
        %v3899 = vrot.slane %v3898, 2
        %v3900 = vadd.f32 %v3898, %v3899
        %v3901 = vrot.slane %v3900, 1
        %v3902 = vadd.f32 %v3900, %v3901
        %v3903 = vsel %vm1028, %v3678, 0.0
        %v3904 = vsel %vm1028, %v3679, 0.0
        %v3905 = vadd.f32 %v3903, %v3904
        %v3906 = vrot.slane %v3905, 4
        %v3907 = vadd.f32 %v3905, %v3906
        %v3908 = vrot.slane %v3907, 2
        %v3909 = vadd.f32 %v3907, %v3908
        %v3910 = vrot.slane %v3909, 1
        %v3911 = vadd.f32 %v3909, %v3910
        %v3912 = vsel %vm1028, %v3680, 0.0
        %v3913 = vsel %vm1028, %v3681, 0.0
        %v3914 = vadd.f32 %v3912, %v3913
        %v3915 = vrot.slane %v3914, 4
        %v3916 = vadd.f32 %v3914, %v3915
        %v3917 = vrot.slane %v3916, 2
        %v3918 = vadd.f32 %v3916, %v3917
        %v3919 = vrot.slane %v3918, 1
        %v3920 = vadd.f32 %v3918, %v3919
        %v3921 = vsel %vm1028, %v3682, 0.0
        %v3922 = vsel %vm1028, %v3683, 0.0
        %v3923 = vadd.f32 %v3921, %v3922
        %v3924 = vrot.slane %v3923, 4
        %v3925 = vadd.f32 %v3923, %v3924
        %v3926 = vrot.slane %v3925, 2
        %v3927 = vadd.f32 %v3925, %v3926
        %v3928 = vrot.slane %v3927, 1
        %v3929 = vadd.f32 %v3927, %v3928
        %v3930 = vsel %vm1028, %v3684, 0.0
        %v3931 = vsel %vm1028, %v3685, 0.0
        %v3932 = vadd.f32 %v3930, %v3931
        %v3933 = vrot.slane %v3932, 4
        %v3934 = vadd.f32 %v3932, %v3933
        %v3935 = vrot.slane %v3934, 2
        %v3936 = vadd.f32 %v3934, %v3935
        %v3937 = vrot.slane %v3936, 1
        %v3938 = vadd.f32 %v3936, %v3937
        %v3939 = vsel %vm1028, %v3686, 0.0
        %v3940 = vsel %vm1028, %v3687, 0.0
        %v3941 = vadd.f32 %v3939, %v3940
        %v3942 = vrot.slane %v3941, 4
        %v3943 = vadd.f32 %v3941, %v3942
        %v3944 = vrot.slane %v3943, 2
        %v3945 = vadd.f32 %v3943, %v3944
        %v3946 = vrot.slane %v3945, 1
        %v3947 = vadd.f32 %v3945, %v3946
        %v3948 = vsel %vm1028, %v3688, 0.0
        %v3949 = vsel %vm1028, %v3689, 0.0
        %v3950 = vadd.f32 %v3948, %v3949
        %v3951 = vrot.slane %v3950, 4
        %v3952 = vadd.f32 %v3950, %v3951
        %v3953 = vrot.slane %v3952, 2
        %v3954 = vadd.f32 %v3952, %v3953
        %v3955 = vrot.slane %v3954, 1
        %v3956 = vadd.f32 %v3954, %v3955
        %v3957 = vsel %vm1028, %v3690, 0.0
        %v3958 = vsel %vm1028, %v3691, 0.0
        %v3959 = vadd.f32 %v3957, %v3958
        %v3960 = vrot.slane %v3959, 4
        %v3961 = vadd.f32 %v3959, %v3960
        %v3962 = vrot.slane %v3961, 2
        %v3963 = vadd.f32 %v3961, %v3962
        %v3964 = vrot.slane %v3963, 1
        %v3965 = vadd.f32 %v3963, %v3964
        %v3966 = vsel %vm1028, %v3692, 0.0
        %v3967 = vsel %vm1028, %v3693, 0.0
        %v3968 = vadd.f32 %v3966, %v3967
        %v3969 = vrot.slane %v3968, 4
        %v3970 = vadd.f32 %v3968, %v3969
        %v3971 = vrot.slane %v3970, 2
        %v3972 = vadd.f32 %v3970, %v3971
        %v3973 = vrot.slane %v3972, 1
        %v3974 = vadd.f32 %v3972, %v3973
        %v3975 = vsel %vm1028, %v3694, 0.0
        %v3976 = vsel %vm1028, %v3695, 0.0
        %v3977 = vadd.f32 %v3975, %v3976
        %v3978 = vrot.slane %v3977, 4
        %v3979 = vadd.f32 %v3977, %v3978
        %v3980 = vrot.slane %v3979, 2
        %v3981 = vadd.f32 %v3979, %v3980
        %v3982 = vrot.slane %v3981, 1
        %v3983 = vadd.f32 %v3981, %v3982
        %v3984 = vpack.c.bf16 %v3704, %v3704
        %v3985 = vpack.c.bf16 %v3713, %v3713
        %v3986 = vpack.c.bf16 %v3722, %v3722
        %v3987 = vpack.c.bf16 %v3731, %v3731
        %v3988 = vpack.c.bf16 %v3740, %v3740
        %v3989 = vpack.c.bf16 %v3749, %v3749
        %v3990 = vpack.c.bf16 %v3758, %v3758
        %v3991 = vpack.c.bf16 %v3767, %v3767
        %v3992 = vpack.c.bf16 %v3776, %v3776
        %v3993 = vpack.c.bf16 %v3785, %v3785
        %v3994 = vpack.c.bf16 %v3794, %v3794
        %v3995 = vpack.c.bf16 %v3803, %v3803
        %v3996 = vpack.c.bf16 %v3812, %v3812
        %v3997 = vpack.c.bf16 %v3821, %v3821
        %v3998 = vpack.c.bf16 %v3830, %v3830
        %v3999 = vpack.c.bf16 %v3839, %v3839
        %v4000 = vpack.c.bf16 %v3848, %v3848
        %v4001 = vpack.c.bf16 %v3857, %v3857
        %v4002 = vpack.c.bf16 %v3866, %v3866
        %v4003 = vpack.c.bf16 %v3875, %v3875
        %v4004 = vpack.c.bf16 %v3884, %v3884
        %v4005 = vpack.c.bf16 %v3893, %v3893
        %v4006 = vpack.c.bf16 %v3902, %v3902
        %v4007 = vpack.c.bf16 %v3911, %v3911
        %v4008 = vpack.c.bf16 %v3920, %v3920
        %v4009 = vpack.c.bf16 %v3929, %v3929
        %v4010 = vpack.c.bf16 %v3938, %v3938
        %v4011 = vpack.c.bf16 %v3947, %v3947
        %v4012 = vpack.c.bf16 %v3956, %v3956
        %v4013 = vpack.c.bf16 %v3965, %v3965
        %v4014 = vpack.c.bf16 %v3974, %v3974
        %v4015 = vpack.c.bf16 %v3983, %v3983
        %v4016 = vld [vmem:[%s3 + $0xc] sm:$0xf]
        %v4049 = vunpack.c.l.b16 %v3984
        %v4050 = vunpack.c.l.b16 %v3985
        %v4051 = vunpack.c.l.b16 %v3986
        %v4052 = vunpack.c.l.b16 %v3987
        %v4053 = vunpack.c.l.b16 %v3988
        %v4054 = vunpack.c.l.b16 %v3989
        %v4055 = vunpack.c.l.b16 %v3990
        %v4056 = vunpack.c.l.b16 %v3991
        %v4057 = vunpack.c.l.b16 %v3992
        %v4058 = vunpack.c.l.b16 %v3993
        %v4059 = vunpack.c.l.b16 %v3994
        %v4060 = vunpack.c.l.b16 %v3995
        %v4061 = vunpack.c.l.b16 %v3996
        %v4062 = vunpack.c.l.b16 %v3997
        %v4063 = vunpack.c.l.b16 %v3998
        %v4064 = vunpack.c.l.b16 %v3999
        %v4065 = vunpack.c.l.b16 %v4000
        %v4066 = vunpack.c.l.b16 %v4001
        %v4067 = vunpack.c.l.b16 %v4002
        %v4068 = vunpack.c.l.b16 %v4003
        %v4069 = vunpack.c.l.b16 %v4004
        %v4070 = vunpack.c.l.b16 %v4005
        %v4071 = vunpack.c.l.b16 %v4006
        %v4072 = vunpack.c.l.b16 %v4007
        %v4073 = vunpack.c.l.b16 %v4008
        %v4074 = vunpack.c.l.b16 %v4009
        %v4075 = vunpack.c.l.b16 %v4010
        %v4076 = vunpack.c.l.b16 %v4011
        %v4077 = vunpack.c.l.b16 %v4012
        %v4078 = vunpack.c.l.b16 %v4013
        %v4079 = vunpack.c.l.b16 %v4014
        %v4080 = vunpack.c.l.b16 %v4015
        %v4081 = vsel %vm2147, %v4050, %v4049
        %v4082 = vsel %vm2149, %v4051, %v4081
        %v4083 = vsel %vm2151, %v4052, %v4082
        %v4084 = vsel %vm2153, %v4053, %v4083
        %v4085 = vsel %vm2155, %v4054, %v4084
        %v4086 = vsel %vm2157, %v4055, %v4085
        %v4087 = vsel %vm2159, %v4056, %v4086
        %v4088 = vsel %vm2147, %v4058, %v4057
        %v4089 = vsel %vm2149, %v4059, %v4088
        %v4090 = vsel %vm2151, %v4060, %v4089
        %v4091 = vsel %vm2153, %v4061, %v4090
        %v4092 = vsel %vm2155, %v4062, %v4091
        %v4093 = vsel %vm2157, %v4063, %v4092
        %v4094 = vsel %vm2159, %v4064, %v4093
        %v4095 = vsel %vm2147, %v4066, %v4065
        %v4096 = vsel %vm2149, %v4067, %v4095
        %v4097 = vsel %vm2151, %v4068, %v4096
        %v4098 = vsel %vm2153, %v4069, %v4097
        %v4099 = vsel %vm2155, %v4070, %v4098
        %v4100 = vsel %vm2157, %v4071, %v4099
        %v4101 = vsel %vm2159, %v4072, %v4100
        %v4102 = vsel %vm2147, %v4074, %v4073
        %v4103 = vsel %vm2149, %v4075, %v4102
        %v4104 = vsel %vm2151, %v4076, %v4103
        %v4105 = vsel %vm2153, %v4077, %v4104
        %v4106 = vsel %vm2155, %v4078, %v4105
        %v4107 = vsel %vm2157, %v4079, %v4106
        %v4108 = vsel %vm2159, %v4080, %v4107
        %v4109 = vpack.c.b16 %v4094, %v4087
        %v4110 = vpack.c.b16 %v4108, %v4101
        %v4112 = vsel %vm1028, %v4109, 0
        %v4115 = vsel %vm1028, %v4110, 0
        %v4118 = vsel %vm2190, %v4016, 0
        %4120 = vmatprep.subr.bf16.mxu0 0
        %4121 = vmatpush1.bf16.msra.mxu0 %v4118
        %4122 = vmatprep.subr.bf16.mxu0 0
        %4123 = vmatpush1.bf16.msra.mxu0 0
        %4124 = vmatprep.subr.bf16.mxu0 0
        %4125 = vmatpush1.bf16.msra.mxu0 0
        %4126 = vmatprep.subr.bf16.mxu0 0
        %4127 = vmatpush1.bf16.msra.mxu0 0
        %4128 = vmatprep.subr.bf16.mxu0 0
        %4129 = vmatpush1.bf16.msra.mxu0 0
        %4130 = vmatprep.subr.bf16.mxu0 0
        %4131 = vmatpush1.bf16.msra.mxu0 0
        %4132 = vmatprep.subr.bf16.mxu0 0
        %4133 = vmatpush1.bf16.msra.mxu0 0
        %4134 = vmatprep.subr.bf16.mxu0 0
        %4135 = vmatpush1.bf16.msra.mxu0 0
        %4136 = vmatprep.subr.bf16.mxu0 0
        %4137 = vmatpush1.bf16.msra.mxu0 0
        %4138 = vmatprep.subr.bf16.mxu0 0
        %4139 = vmatpush1.bf16.msra.mxu0 0
        %4140 = vmatprep.subr.bf16.mxu0 0
        %4141 = vmatpush1.bf16.msra.mxu0 0
        %4142 = vmatprep.subr.bf16.mxu0 0
        %4143 = vmatpush1.bf16.msra.mxu0 0
        %4144 = vmatprep.subr.bf16.mxu0 0
        %4145 = vmatpush1.bf16.msra.mxu0 0
        %4146 = vmatprep.subr.bf16.mxu0 0
        %4147 = vmatpush1.bf16.msra.mxu0 0
        %4148 = vmatprep.subr.bf16.mxu0 0
        %4149 = vmatpush1.bf16.msra.mxu0 0
        %4150 = vmatprep.subr.bf16.mxu0 0
        %4151 = vmatpush1.bf16.msra.mxu0 0
        %4152 = vmatprep.mubr.bf16.mxu0 0
        %4153 = vmatmul.mubr.bf16.gmra.mrb[0].mxu0 %v4112
        %v4154 = vpop.f32.mrb[0].mxu0
        %v4155 = vadd.f32 0.0, %v4154
        %v4156 = vpop.f32.mrb[0].mxu0
        %v4157 = vpop.f32.mrb[0].mxu0
        %v4158 = vadd.f32 0.0, %v4157
        %v4159 = vpop.f32.mrb[0].mxu0
        %4160 = vmatprep.mubr.bf16.mxu0 0
        %4161 = vmatmul.mubr.bf16.gmra.mrb[0].mxu0 %v4115
        %v4162 = vpop.f32.mrb[0].mxu0
        %v4163 = vadd.f32 0.0, %v4162
        %v4164 = vpop.f32.mrb[0].mxu0
        %v4165 = vpop.f32.mrb[0].mxu0
        %v4166 = vadd.f32 0.0, %v4165
        %v4167 = vpop.f32.mrb[0].mxu0
        %4168 = vdwg.mxu0
        %v4169 = vadd.f32 %v3280, %v4155
        %v4170 = vadd.f32 %v3281, %v4158
        %v4171 = vadd.f32 %v3282, %v4163
        %v4172 = vadd.f32 %v3283, %v4166
        %s4173 = sld [smem:[#allocation3 + $0xc]]
        %s4174 = sld [smem:[#allocation3 + $0xd]]
        %s4175 = sld [smem:[#allocation3 + $0xe]]
        %v4176 = vstv %s4173
        %v4177 = vsub.f32 %v346, %v4176
        %v4178 = vsub.f32 %v347, %v4176
        %v4179 = vsub.f32 %v348, %v4176
        %v4180 = vsub.f32 %v349, %v4176
        %v4181 = vstv %s4174
        %v4182 = vsub.f32 %v351, %v4181
        %v4183 = vsub.f32 %v352, %v4181
        %v4184 = vsub.f32 %v353, %v4181
        %v4185 = vsub.f32 %v354, %v4181
        %v4186 = vstv %s4175
        %v4187 = vsub.f32 %v356, %v4186
        %v4188 = vsub.f32 %v357, %v4186
        %v4189 = vsub.f32 %v358, %v4186
        %v4190 = vsub.f32 %v359, %v4186
        %v4191 = vmul.f32 %v4177, %v4177
        %v4192 = vmul.f32 %v4178, %v4178
        %v4193 = vmul.f32 %v4179, %v4179
        %v4194 = vmul.f32 %v4180, %v4180
        %v4195 = vmul.f32 %v4182, %v4182
        %v4196 = vmul.f32 %v4183, %v4183
        %v4197 = vmul.f32 %v4184, %v4184
        %v4198 = vmul.f32 %v4185, %v4185
        %v4199 = vadd.f32 %v4191, %v4195
        %v4200 = vadd.f32 %v4192, %v4196
        %v4201 = vadd.f32 %v4193, %v4197
        %v4202 = vadd.f32 %v4194, %v4198
        %v4203 = vmul.f32 %v4187, %v4187
        %v4204 = vmul.f32 %v4188, %v4188
        %v4205 = vmul.f32 %v4189, %v4189
        %v4206 = vmul.f32 %v4190, %v4190
        %v4207 = vadd.f32 %v4199, %v4203
        %v4208 = vadd.f32 %v4200, %v4204
        %v4209 = vadd.f32 %v4201, %v4205
        %v4210 = vadd.f32 %v4202, %v4206
        %v4211 = vrsqrt.pop %v4207
        %v4212 = vmul.f32 %v4207, %v4211
        %vm4213 = vcmp.eq.f32.partialorder %v4207, inf
        %v4214 = vsel %vm4213, %v4207, %v4212
        %vm4215 = vcmp.eq.f32.partialorder %v4207, 0.0
        %v4216 = vand.u32 %v4207, 2147483648
        %v4217 = vsel %vm4215, %v4216, %v4214
        %v4218 = vrsqrt.pop %v4208
        %v4219 = vmul.f32 %v4208, %v4218
        %vm4220 = vcmp.eq.f32.partialorder %v4208, inf
        %v4221 = vsel %vm4220, %v4208, %v4219
        %vm4222 = vcmp.eq.f32.partialorder %v4208, 0.0
        %v4223 = vand.u32 %v4208, 2147483648
        %v4224 = vsel %vm4222, %v4223, %v4221
        %v4225 = vrsqrt.pop %v4209
        %v4226 = vmul.f32 %v4209, %v4225
        %vm4227 = vcmp.eq.f32.partialorder %v4209, inf
        %v4228 = vsel %vm4227, %v4209, %v4226
        %vm4229 = vcmp.eq.f32.partialorder %v4209, 0.0
        %v4230 = vand.u32 %v4209, 2147483648
        %v4231 = vsel %vm4229, %v4230, %v4228
        %v4232 = vrsqrt.pop %v4210
        %v4233 = vmul.f32 %v4210, %v4232
        %vm4234 = vcmp.eq.f32.partialorder %v4210, inf
        %v4235 = vsel %vm4234, %v4210, %v4233
        %vm4236 = vcmp.eq.f32.partialorder %v4210, 0.0
        %v4237 = vand.u32 %v4210, 2147483648
        %v4238 = vsel %vm4236, %v4237, %v4235
        %v4239 = vmul.f32 %v4217, 16.666666
        %v4240 = vmul.f32 %v4224, 16.666666
        %v4241 = vmul.f32 %v4231, 16.666666
        %v4242 = vmul.f32 %v4238, 16.666666
        %v4243 = vsub.f32 1.0, %v4239
        %v4244 = vsub.f32 1.0, %v4240
        %v4245 = vsub.f32 1.0, %v4241
        %v4246 = vsub.f32 1.0, %v4242
        %v4247 = vmax.f32 %v4243, 0.0
        %v4248 = vmax.f32 %v4244, 0.0
        %v4249 = vmax.f32 %v4245, 0.0
        %v4250 = vmax.f32 %v4246, 0.0
        %v4251 = vpack.c.bf16 %v4248, %v4247
        %v4252 = vpack.c.bf16 %v4250, %v4249
        %v4254 = vpack.i.b16 %v4251, %v4251
        %v4256 = vlaneseq
        %v4257 = vshrl.u32 %v4256, 7
        %v4258 = vsub.s32 0, %v4257
        %v4259 = vrot.slane %v4254, %v4258
        %4261 = vbcast.lane.c.b16.xlu0 %v4259, 256
        %v4262 = vpop.permute.xlu0 %4261
        %v4263 = vshrl.u32 %v4251, 16
        %v4264 = vpack.i.b16 %v4263, %v4263
        %v4266 = vlaneseq
        %v4267 = vshrl.u32 %v4266, 7
        %v4268 = vsub.s32 0, %v4267
        %v4269 = vrot.slane %v4264, %v4268
        %4271 = vbcast.lane.c.b16.xlu0 %v4269, 256
        %v4272 = vpop.permute.xlu0 %4271
        %v4273 = vlaneseq
        %v4274 = vshrl.u32 %v4273, 7
        %v4275 = vsub.s32 1, %v4274
        %v4276 = vrot.slane %v4254, %v4275
        %4278 = vbcast.lane.c.b16.xlu0 %v4276, 256
        %v4279 = vpop.permute.xlu0 %4278
        %v4280 = vlaneseq
        %v4281 = vshrl.u32 %v4280, 7
        %v4282 = vsub.s32 1, %v4281
        %v4283 = vrot.slane %v4264, %v4282
        %4285 = vbcast.lane.c.b16.xlu0 %v4283, 256
        %v4286 = vpop.permute.xlu0 %4285
        %v4287 = vlaneseq
        %v4288 = vshrl.u32 %v4287, 7
        %v4289 = vsub.s32 2, %v4288
        %v4290 = vrot.slane %v4254, %v4289
        %4292 = vbcast.lane.c.b16.xlu0 %v4290, 256
        %v4293 = vpop.permute.xlu0 %4292
        %v4294 = vlaneseq
        %v4295 = vshrl.u32 %v4294, 7
        %v4296 = vsub.s32 2, %v4295
        %v4297 = vrot.slane %v4264, %v4296
        %4299 = vbcast.lane.c.b16.xlu0 %v4297, 256
        %v4300 = vpop.permute.xlu0 %4299
        %v4301 = vlaneseq
        %v4302 = vshrl.u32 %v4301, 7
        %v4303 = vsub.s32 3, %v4302
        %v4304 = vrot.slane %v4254, %v4303
        %4306 = vbcast.lane.c.b16.xlu0 %v4304, 256
        %v4307 = vpop.permute.xlu0 %4306
        %v4308 = vlaneseq
        %v4309 = vshrl.u32 %v4308, 7
        %v4310 = vsub.s32 3, %v4309
        %v4311 = vrot.slane %v4264, %v4310
        %4313 = vbcast.lane.c.b16.xlu0 %v4311, 256
        %v4314 = vpop.permute.xlu0 %4313
        %v4315 = vlaneseq
        %v4316 = vshrl.u32 %v4315, 7
        %v4317 = vsub.s32 4, %v4316
        %v4318 = vrot.slane %v4254, %v4317
        %4320 = vbcast.lane.c.b16.xlu0 %v4318, 256
        %v4321 = vpop.permute.xlu0 %4320
        %v4322 = vlaneseq
        %v4323 = vshrl.u32 %v4322, 7
        %v4324 = vsub.s32 4, %v4323
        %v4325 = vrot.slane %v4264, %v4324
        %4327 = vbcast.lane.c.b16.xlu0 %v4325, 256
        %v4328 = vpop.permute.xlu0 %4327
        %v4329 = vlaneseq
        %v4330 = vshrl.u32 %v4329, 7
        %v4331 = vsub.s32 5, %v4330
        %v4332 = vrot.slane %v4254, %v4331
        %4334 = vbcast.lane.c.b16.xlu0 %v4332, 256
        %v4335 = vpop.permute.xlu0 %4334
        %v4336 = vlaneseq
        %v4337 = vshrl.u32 %v4336, 7
        %v4338 = vsub.s32 5, %v4337
        %v4339 = vrot.slane %v4264, %v4338
        %4341 = vbcast.lane.c.b16.xlu0 %v4339, 256
        %v4342 = vpop.permute.xlu0 %4341
        %v4343 = vlaneseq
        %v4344 = vshrl.u32 %v4343, 7
        %v4345 = vsub.s32 6, %v4344
        %v4346 = vrot.slane %v4254, %v4345
        %4348 = vbcast.lane.c.b16.xlu0 %v4346, 256
        %v4349 = vpop.permute.xlu0 %4348
        %v4350 = vlaneseq
        %v4351 = vshrl.u32 %v4350, 7
        %v4352 = vsub.s32 6, %v4351
        %v4353 = vrot.slane %v4264, %v4352
        %4355 = vbcast.lane.c.b16.xlu0 %v4353, 256
        %v4356 = vpop.permute.xlu0 %4355
        %v4357 = vlaneseq
        %v4358 = vshrl.u32 %v4357, 7
        %v4359 = vsub.s32 7, %v4358
        %v4360 = vrot.slane %v4254, %v4359
        %4362 = vbcast.lane.c.b16.xlu0 %v4360, 256
        %v4363 = vpop.permute.xlu0 %4362
        %v4364 = vlaneseq
        %v4365 = vshrl.u32 %v4364, 7
        %v4366 = vsub.s32 7, %v4365
        %v4367 = vrot.slane %v4264, %v4366
        %4369 = vbcast.lane.c.b16.xlu0 %v4367, 256
        %v4370 = vpop.permute.xlu0 %4369
        %v4372 = vpack.i.b16 %v4252, %v4252
        %v4374 = vlaneseq
        %v4375 = vshrl.u32 %v4374, 7
        %v4376 = vsub.s32 0, %v4375
        %v4377 = vrot.slane %v4372, %v4376
        %4379 = vbcast.lane.c.b16.xlu0 %v4377, 256
        %v4380 = vpop.permute.xlu0 %4379
        %v4381 = vshrl.u32 %v4252, 16
        %v4382 = vpack.i.b16 %v4381, %v4381
        %v4384 = vlaneseq
        %v4385 = vshrl.u32 %v4384, 7
        %v4386 = vsub.s32 0, %v4385
        %v4387 = vrot.slane %v4382, %v4386
        %4389 = vbcast.lane.c.b16.xlu0 %v4387, 256
        %v4390 = vpop.permute.xlu0 %4389
        %v4391 = vlaneseq
        %v4392 = vshrl.u32 %v4391, 7
        %v4393 = vsub.s32 1, %v4392
        %v4394 = vrot.slane %v4372, %v4393
        %4396 = vbcast.lane.c.b16.xlu0 %v4394, 256
        %v4397 = vpop.permute.xlu0 %4396
        %v4398 = vlaneseq
        %v4399 = vshrl.u32 %v4398, 7
        %v4400 = vsub.s32 1, %v4399
        %v4401 = vrot.slane %v4382, %v4400
        %4403 = vbcast.lane.c.b16.xlu0 %v4401, 256
        %v4404 = vpop.permute.xlu0 %4403
        %v4405 = vlaneseq
        %v4406 = vshrl.u32 %v4405, 7
        %v4407 = vsub.s32 2, %v4406
        %v4408 = vrot.slane %v4372, %v4407
        %4410 = vbcast.lane.c.b16.xlu0 %v4408, 256
        %v4411 = vpop.permute.xlu0 %4410
        %v4412 = vlaneseq
        %v4413 = vshrl.u32 %v4412, 7
        %v4414 = vsub.s32 2, %v4413
        %v4415 = vrot.slane %v4382, %v4414
        %4417 = vbcast.lane.c.b16.xlu0 %v4415, 256
        %v4418 = vpop.permute.xlu0 %4417
        %v4419 = vlaneseq
        %v4420 = vshrl.u32 %v4419, 7
        %v4421 = vsub.s32 3, %v4420
        %v4422 = vrot.slane %v4372, %v4421
        %4424 = vbcast.lane.c.b16.xlu0 %v4422, 256
        %v4425 = vpop.permute.xlu0 %4424
        %v4426 = vlaneseq
        %v4427 = vshrl.u32 %v4426, 7
        %v4428 = vsub.s32 3, %v4427
        %v4429 = vrot.slane %v4382, %v4428
        %4431 = vbcast.lane.c.b16.xlu0 %v4429, 256
        %v4432 = vpop.permute.xlu0 %4431
        %v4433 = vlaneseq
        %v4434 = vshrl.u32 %v4433, 7
        %v4435 = vsub.s32 4, %v4434
        %v4436 = vrot.slane %v4372, %v4435
        %4438 = vbcast.lane.c.b16.xlu0 %v4436, 256
        %v4439 = vpop.permute.xlu0 %4438
        %v4440 = vlaneseq
        %v4441 = vshrl.u32 %v4440, 7
        %v4442 = vsub.s32 4, %v4441
        %v4443 = vrot.slane %v4382, %v4442
        %4445 = vbcast.lane.c.b16.xlu0 %v4443, 256
        %v4446 = vpop.permute.xlu0 %4445
        %v4447 = vlaneseq
        %v4448 = vshrl.u32 %v4447, 7
        %v4449 = vsub.s32 5, %v4448
        %v4450 = vrot.slane %v4372, %v4449
        %4452 = vbcast.lane.c.b16.xlu0 %v4450, 256
        %v4453 = vpop.permute.xlu0 %4452
        %v4454 = vlaneseq
        %v4455 = vshrl.u32 %v4454, 7
        %v4456 = vsub.s32 5, %v4455
        %v4457 = vrot.slane %v4382, %v4456
        %4459 = vbcast.lane.c.b16.xlu0 %v4457, 256
        %v4460 = vpop.permute.xlu0 %4459
        %v4461 = vlaneseq
        %v4462 = vshrl.u32 %v4461, 7
        %v4463 = vsub.s32 6, %v4462
        %v4464 = vrot.slane %v4372, %v4463
        %4466 = vbcast.lane.c.b16.xlu0 %v4464, 256
        %v4467 = vpop.permute.xlu0 %4466
        %v4468 = vlaneseq
        %v4469 = vshrl.u32 %v4468, 7
        %v4470 = vsub.s32 6, %v4469
        %v4471 = vrot.slane %v4382, %v4470
        %4473 = vbcast.lane.c.b16.xlu0 %v4471, 256
        %v4474 = vpop.permute.xlu0 %4473
        %v4475 = vlaneseq
        %v4476 = vshrl.u32 %v4475, 7
        %v4477 = vsub.s32 7, %v4476
        %v4478 = vrot.slane %v4372, %v4477
        %4480 = vbcast.lane.c.b16.xlu0 %v4478, 256
        %v4481 = vpop.permute.xlu0 %4480
        %v4482 = vlaneseq
        %v4483 = vshrl.u32 %v4482, 7
        %v4484 = vsub.s32 7, %v4483
        %v4485 = vrot.slane %v4382, %v4484
        %4487 = vbcast.lane.c.b16.xlu0 %v4485, 256
        %v4488 = vpop.permute.xlu0 %4487
        %v4489 = vmul.bf16 %v4262, %v868
        %v4490 = vmul.bf16 %v4272, %v869
        %v4491 = vmul.bf16 %v4279, %v870
        %v4492 = vmul.bf16 %v4286, %v871
        %v4493 = vmul.bf16 %v4293, %v872
        %v4494 = vmul.bf16 %v4300, %v873
        %v4495 = vmul.bf16 %v4307, %v874
        %v4496 = vmul.bf16 %v4314, %v875
        %v4497 = vmul.bf16 %v4321, %v876
        %v4498 = vmul.bf16 %v4328, %v877
        %v4499 = vmul.bf16 %v4335, %v878
        %v4500 = vmul.bf16 %v4342, %v879
        %v4501 = vmul.bf16 %v4349, %v880
        %v4502 = vmul.bf16 %v4356, %v881
        %v4503 = vmul.bf16 %v4363, %v882
        %v4504 = vmul.bf16 %v4370, %v883
        %v4505 = vmul.bf16 %v4380, %v884
        %v4506 = vmul.bf16 %v4390, %v885
        %v4507 = vmul.bf16 %v4397, %v886
        %v4508 = vmul.bf16 %v4404, %v887
        %v4509 = vmul.bf16 %v4411, %v888
        %v4510 = vmul.bf16 %v4418, %v889
        %v4511 = vmul.bf16 %v4425, %v890
        %v4512 = vmul.bf16 %v4432, %v891
        %v4513 = vmul.bf16 %v4439, %v892
        %v4514 = vmul.bf16 %v4446, %v893
        %v4515 = vmul.bf16 %v4453, %v894
        %v4516 = vmul.bf16 %v4460, %v895
        %v4517 = vmul.bf16 %v4467, %v896
        %v4518 = vmul.bf16 %v4474, %v897
        %v4519 = vmul.bf16 %v4481, %v898
        %v4520 = vmul.bf16 %v4488, %v899
        %v4521 = vunpack.c.l.bf16 %v4489
        %v4522 = vunpack.c.h.bf16 %v4489
        %v4523 = vunpack.c.l.bf16 %v4490
        %v4524 = vunpack.c.h.bf16 %v4490
        %v4525 = vunpack.c.l.bf16 %v4491
        %v4526 = vunpack.c.h.bf16 %v4491
        %v4527 = vunpack.c.l.bf16 %v4492
        %v4528 = vunpack.c.h.bf16 %v4492
        %v4529 = vunpack.c.l.bf16 %v4493
        %v4530 = vunpack.c.h.bf16 %v4493
        %v4531 = vunpack.c.l.bf16 %v4494
        %v4532 = vunpack.c.h.bf16 %v4494
        %v4533 = vunpack.c.l.bf16 %v4495
        %v4534 = vunpack.c.h.bf16 %v4495
        %v4535 = vunpack.c.l.bf16 %v4496
        %v4536 = vunpack.c.h.bf16 %v4496
        %v4537 = vunpack.c.l.bf16 %v4497
        %v4538 = vunpack.c.h.bf16 %v4497
        %v4539 = vunpack.c.l.bf16 %v4498
        %v4540 = vunpack.c.h.bf16 %v4498
        %v4541 = vunpack.c.l.bf16 %v4499
        %v4542 = vunpack.c.h.bf16 %v4499
        %v4543 = vunpack.c.l.bf16 %v4500
        %v4544 = vunpack.c.h.bf16 %v4500
        %v4545 = vunpack.c.l.bf16 %v4501
        %v4546 = vunpack.c.h.bf16 %v4501
        %v4547 = vunpack.c.l.bf16 %v4502
        %v4548 = vunpack.c.h.bf16 %v4502
        %v4549 = vunpack.c.l.bf16 %v4503
        %v4550 = vunpack.c.h.bf16 %v4503
        %v4551 = vunpack.c.l.bf16 %v4504
        %v4552 = vunpack.c.h.bf16 %v4504
        %v4553 = vunpack.c.l.bf16 %v4505
        %v4554 = vunpack.c.h.bf16 %v4505
        %v4555 = vunpack.c.l.bf16 %v4506
        %v4556 = vunpack.c.h.bf16 %v4506
        %v4557 = vunpack.c.l.bf16 %v4507
        %v4558 = vunpack.c.h.bf16 %v4507
        %v4559 = vunpack.c.l.bf16 %v4508
        %v4560 = vunpack.c.h.bf16 %v4508
        %v4561 = vunpack.c.l.bf16 %v4509
        %v4562 = vunpack.c.h.bf16 %v4509
        %v4563 = vunpack.c.l.bf16 %v4510
        %v4564 = vunpack.c.h.bf16 %v4510
        %v4565 = vunpack.c.l.bf16 %v4511
        %v4566 = vunpack.c.h.bf16 %v4511
        %v4567 = vunpack.c.l.bf16 %v4512
        %v4568 = vunpack.c.h.bf16 %v4512
        %v4569 = vunpack.c.l.bf16 %v4513
        %v4570 = vunpack.c.h.bf16 %v4513
        %v4571 = vunpack.c.l.bf16 %v4514
        %v4572 = vunpack.c.h.bf16 %v4514
        %v4573 = vunpack.c.l.bf16 %v4515
        %v4574 = vunpack.c.h.bf16 %v4515
        %v4575 = vunpack.c.l.bf16 %v4516
        %v4576 = vunpack.c.h.bf16 %v4516
        %v4577 = vunpack.c.l.bf16 %v4517
        %v4578 = vunpack.c.h.bf16 %v4517
        %v4579 = vunpack.c.l.bf16 %v4518
        %v4580 = vunpack.c.h.bf16 %v4518
        %v4581 = vunpack.c.l.bf16 %v4519
        %v4582 = vunpack.c.h.bf16 %v4519
        %v4583 = vunpack.c.l.bf16 %v4520
        %v4584 = vunpack.c.h.bf16 %v4520
        %v4585 = vsel %vm1028, %v4521, 0.0
        %v4586 = vsel %vm1028, %v4522, 0.0
        %v4587 = vadd.f32 %v4585, %v4586
        %v4588 = vrot.slane %v4587, 4
        %v4589 = vadd.f32 %v4587, %v4588
        %v4590 = vrot.slane %v4589, 2
        %v4591 = vadd.f32 %v4589, %v4590
        %v4592 = vrot.slane %v4591, 1
        %v4593 = vadd.f32 %v4591, %v4592
        %v4594 = vsel %vm1028, %v4523, 0.0
        %v4595 = vsel %vm1028, %v4524, 0.0
        %v4596 = vadd.f32 %v4594, %v4595
        %v4597 = vrot.slane %v4596, 4
        %v4598 = vadd.f32 %v4596, %v4597
        %v4599 = vrot.slane %v4598, 2
        %v4600 = vadd.f32 %v4598, %v4599
        %v4601 = vrot.slane %v4600, 1
        %v4602 = vadd.f32 %v4600, %v4601
        %v4603 = vsel %vm1028, %v4525, 0.0
        %v4604 = vsel %vm1028, %v4526, 0.0
        %v4605 = vadd.f32 %v4603, %v4604
        %v4606 = vrot.slane %v4605, 4
        %v4607 = vadd.f32 %v4605, %v4606
        %v4608 = vrot.slane %v4607, 2
        %v4609 = vadd.f32 %v4607, %v4608
        %v4610 = vrot.slane %v4609, 1
        %v4611 = vadd.f32 %v4609, %v4610
        %v4612 = vsel %vm1028, %v4527, 0.0
        %v4613 = vsel %vm1028, %v4528, 0.0
        %v4614 = vadd.f32 %v4612, %v4613
        %v4615 = vrot.slane %v4614, 4
        %v4616 = vadd.f32 %v4614, %v4615
        %v4617 = vrot.slane %v4616, 2
        %v4618 = vadd.f32 %v4616, %v4617
        %v4619 = vrot.slane %v4618, 1
        %v4620 = vadd.f32 %v4618, %v4619
        %v4621 = vsel %vm1028, %v4529, 0.0
        %v4622 = vsel %vm1028, %v4530, 0.0
        %v4623 = vadd.f32 %v4621, %v4622
        %v4624 = vrot.slane %v4623, 4
        %v4625 = vadd.f32 %v4623, %v4624
        %v4626 = vrot.slane %v4625, 2
        %v4627 = vadd.f32 %v4625, %v4626
        %v4628 = vrot.slane %v4627, 1
        %v4629 = vadd.f32 %v4627, %v4628
        %v4630 = vsel %vm1028, %v4531, 0.0
        %v4631 = vsel %vm1028, %v4532, 0.0
        %v4632 = vadd.f32 %v4630, %v4631
        %v4633 = vrot.slane %v4632, 4
        %v4634 = vadd.f32 %v4632, %v4633
        %v4635 = vrot.slane %v4634, 2
        %v4636 = vadd.f32 %v4634, %v4635
        %v4637 = vrot.slane %v4636, 1
        %v4638 = vadd.f32 %v4636, %v4637
        %v4639 = vsel %vm1028, %v4533, 0.0
        %v4640 = vsel %vm1028, %v4534, 0.0
        %v4641 = vadd.f32 %v4639, %v4640
        %v4642 = vrot.slane %v4641, 4
        %v4643 = vadd.f32 %v4641, %v4642
        %v4644 = vrot.slane %v4643, 2
        %v4645 = vadd.f32 %v4643, %v4644
        %v4646 = vrot.slane %v4645, 1
        %v4647 = vadd.f32 %v4645, %v4646
        %v4648 = vsel %vm1028, %v4535, 0.0
        %v4649 = vsel %vm1028, %v4536, 0.0
        %v4650 = vadd.f32 %v4648, %v4649
        %v4651 = vrot.slane %v4650, 4
        %v4652 = vadd.f32 %v4650, %v4651
        %v4653 = vrot.slane %v4652, 2
        %v4654 = vadd.f32 %v4652, %v4653
        %v4655 = vrot.slane %v4654, 1
        %v4656 = vadd.f32 %v4654, %v4655
        %v4657 = vsel %vm1028, %v4537, 0.0
        %v4658 = vsel %vm1028, %v4538, 0.0
        %v4659 = vadd.f32 %v4657, %v4658
        %v4660 = vrot.slane %v4659, 4
        %v4661 = vadd.f32 %v4659, %v4660
        %v4662 = vrot.slane %v4661, 2
        %v4663 = vadd.f32 %v4661, %v4662
        %v4664 = vrot.slane %v4663, 1
        %v4665 = vadd.f32 %v4663, %v4664
        %v4666 = vsel %vm1028, %v4539, 0.0
        %v4667 = vsel %vm1028, %v4540, 0.0
        %v4668 = vadd.f32 %v4666, %v4667
        %v4669 = vrot.slane %v4668, 4
        %v4670 = vadd.f32 %v4668, %v4669
        %v4671 = vrot.slane %v4670, 2
        %v4672 = vadd.f32 %v4670, %v4671
        %v4673 = vrot.slane %v4672, 1
        %v4674 = vadd.f32 %v4672, %v4673
        %v4675 = vsel %vm1028, %v4541, 0.0
        %v4676 = vsel %vm1028, %v4542, 0.0
        %v4677 = vadd.f32 %v4675, %v4676
        %v4678 = vrot.slane %v4677, 4
        %v4679 = vadd.f32 %v4677, %v4678
        %v4680 = vrot.slane %v4679, 2
        %v4681 = vadd.f32 %v4679, %v4680
        %v4682 = vrot.slane %v4681, 1
        %v4683 = vadd.f32 %v4681, %v4682
        %v4684 = vsel %vm1028, %v4543, 0.0
        %v4685 = vsel %vm1028, %v4544, 0.0
        %v4686 = vadd.f32 %v4684, %v4685
        %v4687 = vrot.slane %v4686, 4
        %v4688 = vadd.f32 %v4686, %v4687
        %v4689 = vrot.slane %v4688, 2
        %v4690 = vadd.f32 %v4688, %v4689
        %v4691 = vrot.slane %v4690, 1
        %v4692 = vadd.f32 %v4690, %v4691
        %v4693 = vsel %vm1028, %v4545, 0.0
        %v4694 = vsel %vm1028, %v4546, 0.0
        %v4695 = vadd.f32 %v4693, %v4694
        %v4696 = vrot.slane %v4695, 4
        %v4697 = vadd.f32 %v4695, %v4696
        %v4698 = vrot.slane %v4697, 2
        %v4699 = vadd.f32 %v4697, %v4698
        %v4700 = vrot.slane %v4699, 1
        %v4701 = vadd.f32 %v4699, %v4700
        %v4702 = vsel %vm1028, %v4547, 0.0
        %v4703 = vsel %vm1028, %v4548, 0.0
        %v4704 = vadd.f32 %v4702, %v4703
        %v4705 = vrot.slane %v4704, 4
        %v4706 = vadd.f32 %v4704, %v4705
        %v4707 = vrot.slane %v4706, 2
        %v4708 = vadd.f32 %v4706, %v4707
        %v4709 = vrot.slane %v4708, 1
        %v4710 = vadd.f32 %v4708, %v4709
        %v4711 = vsel %vm1028, %v4549, 0.0
        %v4712 = vsel %vm1028, %v4550, 0.0
        %v4713 = vadd.f32 %v4711, %v4712
        %v4714 = vrot.slane %v4713, 4
        %v4715 = vadd.f32 %v4713, %v4714
        %v4716 = vrot.slane %v4715, 2
        %v4717 = vadd.f32 %v4715, %v4716
        %v4718 = vrot.slane %v4717, 1
        %v4719 = vadd.f32 %v4717, %v4718
        %v4720 = vsel %vm1028, %v4551, 0.0
        %v4721 = vsel %vm1028, %v4552, 0.0
        %v4722 = vadd.f32 %v4720, %v4721
        %v4723 = vrot.slane %v4722, 4
        %v4724 = vadd.f32 %v4722, %v4723
        %v4725 = vrot.slane %v4724, 2
        %v4726 = vadd.f32 %v4724, %v4725
        %v4727 = vrot.slane %v4726, 1
        %v4728 = vadd.f32 %v4726, %v4727
        %v4729 = vsel %vm1028, %v4553, 0.0
        %v4730 = vsel %vm1028, %v4554, 0.0
        %v4731 = vadd.f32 %v4729, %v4730
        %v4732 = vrot.slane %v4731, 4
        %v4733 = vadd.f32 %v4731, %v4732
        %v4734 = vrot.slane %v4733, 2
        %v4735 = vadd.f32 %v4733, %v4734
        %v4736 = vrot.slane %v4735, 1
        %v4737 = vadd.f32 %v4735, %v4736
        %v4738 = vsel %vm1028, %v4555, 0.0
        %v4739 = vsel %vm1028, %v4556, 0.0
        %v4740 = vadd.f32 %v4738, %v4739
        %v4741 = vrot.slane %v4740, 4
        %v4742 = vadd.f32 %v4740, %v4741
        %v4743 = vrot.slane %v4742, 2
        %v4744 = vadd.f32 %v4742, %v4743
        %v4745 = vrot.slane %v4744, 1
        %v4746 = vadd.f32 %v4744, %v4745
        %v4747 = vsel %vm1028, %v4557, 0.0
        %v4748 = vsel %vm1028, %v4558, 0.0
        %v4749 = vadd.f32 %v4747, %v4748
        %v4750 = vrot.slane %v4749, 4
        %v4751 = vadd.f32 %v4749, %v4750
        %v4752 = vrot.slane %v4751, 2
        %v4753 = vadd.f32 %v4751, %v4752
        %v4754 = vrot.slane %v4753, 1
        %v4755 = vadd.f32 %v4753, %v4754
        %v4756 = vsel %vm1028, %v4559, 0.0
        %v4757 = vsel %vm1028, %v4560, 0.0
        %v4758 = vadd.f32 %v4756, %v4757
        %v4759 = vrot.slane %v4758, 4
        %v4760 = vadd.f32 %v4758, %v4759
        %v4761 = vrot.slane %v4760, 2
        %v4762 = vadd.f32 %v4760, %v4761
        %v4763 = vrot.slane %v4762, 1
        %v4764 = vadd.f32 %v4762, %v4763
        %v4765 = vsel %vm1028, %v4561, 0.0
        %v4766 = vsel %vm1028, %v4562, 0.0
        %v4767 = vadd.f32 %v4765, %v4766
        %v4768 = vrot.slane %v4767, 4
        %v4769 = vadd.f32 %v4767, %v4768
        %v4770 = vrot.slane %v4769, 2
        %v4771 = vadd.f32 %v4769, %v4770
        %v4772 = vrot.slane %v4771, 1
        %v4773 = vadd.f32 %v4771, %v4772
        %v4774 = vsel %vm1028, %v4563, 0.0
        %v4775 = vsel %vm1028, %v4564, 0.0
        %v4776 = vadd.f32 %v4774, %v4775
        %v4777 = vrot.slane %v4776, 4
        %v4778 = vadd.f32 %v4776, %v4777
        %v4779 = vrot.slane %v4778, 2
        %v4780 = vadd.f32 %v4778, %v4779
        %v4781 = vrot.slane %v4780, 1
        %v4782 = vadd.f32 %v4780, %v4781
        %v4783 = vsel %vm1028, %v4565, 0.0
        %v4784 = vsel %vm1028, %v4566, 0.0
        %v4785 = vadd.f32 %v4783, %v4784
        %v4786 = vrot.slane %v4785, 4
        %v4787 = vadd.f32 %v4785, %v4786
        %v4788 = vrot.slane %v4787, 2
        %v4789 = vadd.f32 %v4787, %v4788
        %v4790 = vrot.slane %v4789, 1
        %v4791 = vadd.f32 %v4789, %v4790
        %v4792 = vsel %vm1028, %v4567, 0.0
        %v4793 = vsel %vm1028, %v4568, 0.0
        %v4794 = vadd.f32 %v4792, %v4793
        %v4795 = vrot.slane %v4794, 4
        %v4796 = vadd.f32 %v4794, %v4795
        %v4797 = vrot.slane %v4796, 2
        %v4798 = vadd.f32 %v4796, %v4797
        %v4799 = vrot.slane %v4798, 1
        %v4800 = vadd.f32 %v4798, %v4799
        %v4801 = vsel %vm1028, %v4569, 0.0
        %v4802 = vsel %vm1028, %v4570, 0.0
        %v4803 = vadd.f32 %v4801, %v4802
        %v4804 = vrot.slane %v4803, 4
        %v4805 = vadd.f32 %v4803, %v4804
        %v4806 = vrot.slane %v4805, 2
        %v4807 = vadd.f32 %v4805, %v4806
        %v4808 = vrot.slane %v4807, 1
        %v4809 = vadd.f32 %v4807, %v4808
        %v4810 = vsel %vm1028, %v4571, 0.0
        %v4811 = vsel %vm1028, %v4572, 0.0
        %v4812 = vadd.f32 %v4810, %v4811
        %v4813 = vrot.slane %v4812, 4
        %v4814 = vadd.f32 %v4812, %v4813
        %v4815 = vrot.slane %v4814, 2
        %v4816 = vadd.f32 %v4814, %v4815
        %v4817 = vrot.slane %v4816, 1
        %v4818 = vadd.f32 %v4816, %v4817
        %v4819 = vsel %vm1028, %v4573, 0.0
        %v4820 = vsel %vm1028, %v4574, 0.0
        %v4821 = vadd.f32 %v4819, %v4820
        %v4822 = vrot.slane %v4821, 4
        %v4823 = vadd.f32 %v4821, %v4822
        %v4824 = vrot.slane %v4823, 2
        %v4825 = vadd.f32 %v4823, %v4824
        %v4826 = vrot.slane %v4825, 1
        %v4827 = vadd.f32 %v4825, %v4826
        %v4828 = vsel %vm1028, %v4575, 0.0
        %v4829 = vsel %vm1028, %v4576, 0.0
        %v4830 = vadd.f32 %v4828, %v4829
        %v4831 = vrot.slane %v4830, 4
        %v4832 = vadd.f32 %v4830, %v4831
        %v4833 = vrot.slane %v4832, 2
        %v4834 = vadd.f32 %v4832, %v4833
        %v4835 = vrot.slane %v4834, 1
        %v4836 = vadd.f32 %v4834, %v4835
        %v4837 = vsel %vm1028, %v4577, 0.0
        %v4838 = vsel %vm1028, %v4578, 0.0
        %v4839 = vadd.f32 %v4837, %v4838
        %v4840 = vrot.slane %v4839, 4
        %v4841 = vadd.f32 %v4839, %v4840
        %v4842 = vrot.slane %v4841, 2
        %v4843 = vadd.f32 %v4841, %v4842
        %v4844 = vrot.slane %v4843, 1
        %v4845 = vadd.f32 %v4843, %v4844
        %v4846 = vsel %vm1028, %v4579, 0.0
        %v4847 = vsel %vm1028, %v4580, 0.0
        %v4848 = vadd.f32 %v4846, %v4847
        %v4849 = vrot.slane %v4848, 4
        %v4850 = vadd.f32 %v4848, %v4849
        %v4851 = vrot.slane %v4850, 2
        %v4852 = vadd.f32 %v4850, %v4851
        %v4853 = vrot.slane %v4852, 1
        %v4854 = vadd.f32 %v4852, %v4853
        %v4855 = vsel %vm1028, %v4581, 0.0
        %v4856 = vsel %vm1028, %v4582, 0.0
        %v4857 = vadd.f32 %v4855, %v4856
        %v4858 = vrot.slane %v4857, 4
        %v4859 = vadd.f32 %v4857, %v4858
        %v4860 = vrot.slane %v4859, 2
        %v4861 = vadd.f32 %v4859, %v4860
        %v4862 = vrot.slane %v4861, 1
        %v4863 = vadd.f32 %v4861, %v4862
        %v4864 = vsel %vm1028, %v4583, 0.0
        %v4865 = vsel %vm1028, %v4584, 0.0
        %v4866 = vadd.f32 %v4864, %v4865
        %v4867 = vrot.slane %v4866, 4
        %v4868 = vadd.f32 %v4866, %v4867
        %v4869 = vrot.slane %v4868, 2
        %v4870 = vadd.f32 %v4868, %v4869
        %v4871 = vrot.slane %v4870, 1
        %v4872 = vadd.f32 %v4870, %v4871
        %v4873 = vpack.c.bf16 %v4593, %v4593
        %v4874 = vpack.c.bf16 %v4602, %v4602
        %v4875 = vpack.c.bf16 %v4611, %v4611
        %v4876 = vpack.c.bf16 %v4620, %v4620
        %v4877 = vpack.c.bf16 %v4629, %v4629
        %v4878 = vpack.c.bf16 %v4638, %v4638
        %v4879 = vpack.c.bf16 %v4647, %v4647
        %v4880 = vpack.c.bf16 %v4656, %v4656
        %v4881 = vpack.c.bf16 %v4665, %v4665
        %v4882 = vpack.c.bf16 %v4674, %v4674
        %v4883 = vpack.c.bf16 %v4683, %v4683
        %v4884 = vpack.c.bf16 %v4692, %v4692
        %v4885 = vpack.c.bf16 %v4701, %v4701
        %v4886 = vpack.c.bf16 %v4710, %v4710
        %v4887 = vpack.c.bf16 %v4719, %v4719
        %v4888 = vpack.c.bf16 %v4728, %v4728
        %v4889 = vpack.c.bf16 %v4737, %v4737
        %v4890 = vpack.c.bf16 %v4746, %v4746
        %v4891 = vpack.c.bf16 %v4755, %v4755
        %v4892 = vpack.c.bf16 %v4764, %v4764
        %v4893 = vpack.c.bf16 %v4773, %v4773
        %v4894 = vpack.c.bf16 %v4782, %v4782
        %v4895 = vpack.c.bf16 %v4791, %v4791
        %v4896 = vpack.c.bf16 %v4800, %v4800
        %v4897 = vpack.c.bf16 %v4809, %v4809
        %v4898 = vpack.c.bf16 %v4818, %v4818
        %v4899 = vpack.c.bf16 %v4827, %v4827
        %v4900 = vpack.c.bf16 %v4836, %v4836
        %v4901 = vpack.c.bf16 %v4845, %v4845
        %v4902 = vpack.c.bf16 %v4854, %v4854
        %v4903 = vpack.c.bf16 %v4863, %v4863
        %v4904 = vpack.c.bf16 %v4872, %v4872
        %v4905 = vld [vmem:[%s3 + $0x10] sm:$0xf]
        %v4938 = vunpack.c.l.b16 %v4873
        %v4939 = vunpack.c.l.b16 %v4874
        %v4940 = vunpack.c.l.b16 %v4875
        %v4941 = vunpack.c.l.b16 %v4876
        %v4942 = vunpack.c.l.b16 %v4877
        %v4943 = vunpack.c.l.b16 %v4878
        %v4944 = vunpack.c.l.b16 %v4879
        %v4945 = vunpack.c.l.b16 %v4880
        %v4946 = vunpack.c.l.b16 %v4881
        %v4947 = vunpack.c.l.b16 %v4882
        %v4948 = vunpack.c.l.b16 %v4883
        %v4949 = vunpack.c.l.b16 %v4884
        %v4950 = vunpack.c.l.b16 %v4885
        %v4951 = vunpack.c.l.b16 %v4886
        %v4952 = vunpack.c.l.b16 %v4887
        %v4953 = vunpack.c.l.b16 %v4888
        %v4954 = vunpack.c.l.b16 %v4889
        %v4955 = vunpack.c.l.b16 %v4890
        %v4956 = vunpack.c.l.b16 %v4891
        %v4957 = vunpack.c.l.b16 %v4892
        %v4958 = vunpack.c.l.b16 %v4893
        %v4959 = vunpack.c.l.b16 %v4894
        %v4960 = vunpack.c.l.b16 %v4895
        %v4961 = vunpack.c.l.b16 %v4896
        %v4962 = vunpack.c.l.b16 %v4897
        %v4963 = vunpack.c.l.b16 %v4898
        %v4964 = vunpack.c.l.b16 %v4899
        %v4965 = vunpack.c.l.b16 %v4900
        %v4966 = vunpack.c.l.b16 %v4901
        %v4967 = vunpack.c.l.b16 %v4902
        %v4968 = vunpack.c.l.b16 %v4903
        %v4969 = vunpack.c.l.b16 %v4904
        %v4970 = vsel %vm2147, %v4939, %v4938
        %v4971 = vsel %vm2149, %v4940, %v4970
        %v4972 = vsel %vm2151, %v4941, %v4971
        %v4973 = vsel %vm2153, %v4942, %v4972
        %v4974 = vsel %vm2155, %v4943, %v4973
        %v4975 = vsel %vm2157, %v4944, %v4974
        %v4976 = vsel %vm2159, %v4945, %v4975
        %v4977 = vsel %vm2147, %v4947, %v4946
        %v4978 = vsel %vm2149, %v4948, %v4977
        %v4979 = vsel %vm2151, %v4949, %v4978
        %v4980 = vsel %vm2153, %v4950, %v4979
        %v4981 = vsel %vm2155, %v4951, %v4980
        %v4982 = vsel %vm2157, %v4952, %v4981
        %v4983 = vsel %vm2159, %v4953, %v4982
        %v4984 = vsel %vm2147, %v4955, %v4954
        %v4985 = vsel %vm2149, %v4956, %v4984
        %v4986 = vsel %vm2151, %v4957, %v4985
        %v4987 = vsel %vm2153, %v4958, %v4986
        %v4988 = vsel %vm2155, %v4959, %v4987
        %v4989 = vsel %vm2157, %v4960, %v4988
        %v4990 = vsel %vm2159, %v4961, %v4989
        %v4991 = vsel %vm2147, %v4963, %v4962
        %v4992 = vsel %vm2149, %v4964, %v4991
        %v4993 = vsel %vm2151, %v4965, %v4992
        %v4994 = vsel %vm2153, %v4966, %v4993
        %v4995 = vsel %vm2155, %v4967, %v4994
        %v4996 = vsel %vm2157, %v4968, %v4995
        %v4997 = vsel %vm2159, %v4969, %v4996
        %v4998 = vpack.c.b16 %v4983, %v4976
        %v4999 = vpack.c.b16 %v4997, %v4990
        %v5001 = vsel %vm1028, %v4998, 0
        %v5004 = vsel %vm1028, %v4999, 0
        %v5007 = vsel %vm2190, %v4905, 0
        %5009 = vmatprep.subr.bf16.mxu0 0
        %5010 = vmatpush1.bf16.msra.mxu0 %v5007
        %5011 = vmatprep.subr.bf16.mxu0 0
        %5012 = vmatpush1.bf16.msra.mxu0 0
        %5013 = vmatprep.subr.bf16.mxu0 0
        %5014 = vmatpush1.bf16.msra.mxu0 0
        %5015 = vmatprep.subr.bf16.mxu0 0
        %5016 = vmatpush1.bf16.msra.mxu0 0
        %5017 = vmatprep.subr.bf16.mxu0 0
        %5018 = vmatpush1.bf16.msra.mxu0 0
        %5019 = vmatprep.subr.bf16.mxu0 0
        %5020 = vmatpush1.bf16.msra.mxu0 0
        %5021 = vmatprep.subr.bf16.mxu0 0
        %5022 = vmatpush1.bf16.msra.mxu0 0
        %5023 = vmatprep.subr.bf16.mxu0 0
        %5024 = vmatpush1.bf16.msra.mxu0 0
        %5025 = vmatprep.subr.bf16.mxu0 0
        %5026 = vmatpush1.bf16.msra.mxu0 0
        %5027 = vmatprep.subr.bf16.mxu0 0
        %5028 = vmatpush1.bf16.msra.mxu0 0
        %5029 = vmatprep.subr.bf16.mxu0 0
        %5030 = vmatpush1.bf16.msra.mxu0 0
        %5031 = vmatprep.subr.bf16.mxu0 0
        %5032 = vmatpush1.bf16.msra.mxu0 0
        %5033 = vmatprep.subr.bf16.mxu0 0
        %5034 = vmatpush1.bf16.msra.mxu0 0
        %5035 = vmatprep.subr.bf16.mxu0 0
        %5036 = vmatpush1.bf16.msra.mxu0 0
        %5037 = vmatprep.subr.bf16.mxu0 0
        %5038 = vmatpush1.bf16.msra.mxu0 0
        %5039 = vmatprep.subr.bf16.mxu0 0
        %5040 = vmatpush1.bf16.msra.mxu0 0
        %5041 = vmatprep.mubr.bf16.mxu0 0
        %5042 = vmatmul.mubr.bf16.gmra.mrb[0].mxu0 %v5001
        %v5043 = vpop.f32.mrb[0].mxu0
        %v5044 = vadd.f32 0.0, %v5043
        %v5045 = vpop.f32.mrb[0].mxu0
        %v5046 = vpop.f32.mrb[0].mxu0
        %v5047 = vadd.f32 0.0, %v5046
        %v5048 = vpop.f32.mrb[0].mxu0
        %5049 = vmatprep.mubr.bf16.mxu0 0
        %5050 = vmatmul.mubr.bf16.gmra.mrb[0].mxu0 %v5004
        %v5051 = vpop.f32.mrb[0].mxu0
        %v5052 = vadd.f32 0.0, %v5051
        %v5053 = vpop.f32.mrb[0].mxu0
        %v5054 = vpop.f32.mrb[0].mxu0
        %v5055 = vadd.f32 0.0, %v5054
        %v5056 = vpop.f32.mrb[0].mxu0
        %5057 = vdwg.mxu0
        %v5058 = vadd.f32 %v4169, %v5044
        %v5059 = vadd.f32 %v4170, %v5047
        %v5060 = vadd.f32 %v4171, %v5052
        %v5061 = vadd.f32 %v4172, %v5055
        %s5062 = sld [smem:[#allocation3 + $0xf]]
        %s5063 = sld [smem:[#allocation3 + $0x10]]
        %s5064 = sld [smem:[#allocation3 + $0x11]]
        %v5065 = vstv %s5062
        %v5066 = vsub.f32 %v346, %v5065
        %v5067 = vsub.f32 %v347, %v5065
        %v5068 = vsub.f32 %v348, %v5065
        %v5069 = vsub.f32 %v349, %v5065
        %v5070 = vstv %s5063
        %v5071 = vsub.f32 %v351, %v5070
        %v5072 = vsub.f32 %v352, %v5070
        %v5073 = vsub.f32 %v353, %v5070
        %v5074 = vsub.f32 %v354, %v5070
        %v5075 = vstv %s5064
        %v5076 = vsub.f32 %v356, %v5075
        %v5077 = vsub.f32 %v357, %v5075
        %v5078 = vsub.f32 %v358, %v5075
        %v5079 = vsub.f32 %v359, %v5075
        %v5080 = vmul.f32 %v5066, %v5066
        %v5081 = vmul.f32 %v5067, %v5067
        %v5082 = vmul.f32 %v5068, %v5068
        %v5083 = vmul.f32 %v5069, %v5069
        %v5084 = vmul.f32 %v5071, %v5071
        %v5085 = vmul.f32 %v5072, %v5072
        %v5086 = vmul.f32 %v5073, %v5073
        %v5087 = vmul.f32 %v5074, %v5074
        %v5088 = vadd.f32 %v5080, %v5084
        %v5089 = vadd.f32 %v5081, %v5085
        %v5090 = vadd.f32 %v5082, %v5086
        %v5091 = vadd.f32 %v5083, %v5087
        %v5092 = vmul.f32 %v5076, %v5076
        %v5093 = vmul.f32 %v5077, %v5077
        %v5094 = vmul.f32 %v5078, %v5078
        %v5095 = vmul.f32 %v5079, %v5079
        %v5096 = vadd.f32 %v5088, %v5092
        %v5097 = vadd.f32 %v5089, %v5093
        %v5098 = vadd.f32 %v5090, %v5094
        %v5099 = vadd.f32 %v5091, %v5095
        %v5100 = vrsqrt.pop %v5096
        %v5101 = vmul.f32 %v5096, %v5100
        %vm5102 = vcmp.eq.f32.partialorder %v5096, inf
        %v5103 = vsel %vm5102, %v5096, %v5101
        %vm5104 = vcmp.eq.f32.partialorder %v5096, 0.0
        %v5105 = vand.u32 %v5096, 2147483648
        %v5106 = vsel %vm5104, %v5105, %v5103
        %v5107 = vrsqrt.pop %v5097
        %v5108 = vmul.f32 %v5097, %v5107
        %vm5109 = vcmp.eq.f32.partialorder %v5097, inf
        %v5110 = vsel %vm5109, %v5097, %v5108
        %vm5111 = vcmp.eq.f32.partialorder %v5097, 0.0
        %v5112 = vand.u32 %v5097, 2147483648
        %v5113 = vsel %vm5111, %v5112, %v5110
        %v5114 = vrsqrt.pop %v5098
        %v5115 = vmul.f32 %v5098, %v5114
        %vm5116 = vcmp.eq.f32.partialorder %v5098, inf
        %v5117 = vsel %vm5116, %v5098, %v5115
        %vm5118 = vcmp.eq.f32.partialorder %v5098, 0.0
        %v5119 = vand.u32 %v5098, 2147483648
        %v5120 = vsel %vm5118, %v5119, %v5117
        %v5121 = vrsqrt.pop %v5099
        %v5122 = vmul.f32 %v5099, %v5121
        %vm5123 = vcmp.eq.f32.partialorder %v5099, inf
        %v5124 = vsel %vm5123, %v5099, %v5122
        %vm5125 = vcmp.eq.f32.partialorder %v5099, 0.0
        %v5126 = vand.u32 %v5099, 2147483648
        %v5127 = vsel %vm5125, %v5126, %v5124
        %v5128 = vmul.f32 %v5106, 16.666666
        %v5129 = vmul.f32 %v5113, 16.666666
        %v5130 = vmul.f32 %v5120, 16.666666
        %v5131 = vmul.f32 %v5127, 16.666666
        %v5132 = vsub.f32 1.0, %v5128
        %v5133 = vsub.f32 1.0, %v5129
        %v5134 = vsub.f32 1.0, %v5130
        %v5135 = vsub.f32 1.0, %v5131
        %v5136 = vmax.f32 %v5132, 0.0
        %v5137 = vmax.f32 %v5133, 0.0
        %v5138 = vmax.f32 %v5134, 0.0
        %v5139 = vmax.f32 %v5135, 0.0
        %v5140 = vpack.c.bf16 %v5137, %v5136
        %v5141 = vpack.c.bf16 %v5139, %v5138
        %v5143 = vpack.i.b16 %v5140, %v5140
        %v5145 = vlaneseq
        %v5146 = vshrl.u32 %v5145, 7
        %v5147 = vsub.s32 0, %v5146
        %v5148 = vrot.slane %v5143, %v5147
        %5150 = vbcast.lane.c.b16.xlu0 %v5148, 256
        %v5151 = vpop.permute.xlu0 %5150
        %v5152 = vshrl.u32 %v5140, 16
        %v5153 = vpack.i.b16 %v5152, %v5152
        %v5155 = vlaneseq
        %v5156 = vshrl.u32 %v5155, 7
        %v5157 = vsub.s32 0, %v5156
        %v5158 = vrot.slane %v5153, %v5157
        %5160 = vbcast.lane.c.b16.xlu0 %v5158, 256
        %v5161 = vpop.permute.xlu0 %5160
        %v5162 = vlaneseq
        %v5163 = vshrl.u32 %v5162, 7
        %v5164 = vsub.s32 1, %v5163
        %v5165 = vrot.slane %v5143, %v5164
        %5167 = vbcast.lane.c.b16.xlu0 %v5165, 256
        %v5168 = vpop.permute.xlu0 %5167
        %v5169 = vlaneseq
        %v5170 = vshrl.u32 %v5169, 7
        %v5171 = vsub.s32 1, %v5170
        %v5172 = vrot.slane %v5153, %v5171
        %5174 = vbcast.lane.c.b16.xlu0 %v5172, 256
        %v5175 = vpop.permute.xlu0 %5174
        %v5176 = vlaneseq
        %v5177 = vshrl.u32 %v5176, 7
        %v5178 = vsub.s32 2, %v5177
        %v5179 = vrot.slane %v5143, %v5178
        %5181 = vbcast.lane.c.b16.xlu0 %v5179, 256
        %v5182 = vpop.permute.xlu0 %5181
        %v5183 = vlaneseq
        %v5184 = vshrl.u32 %v5183, 7
        %v5185 = vsub.s32 2, %v5184
        %v5186 = vrot.slane %v5153, %v5185
        %5188 = vbcast.lane.c.b16.xlu0 %v5186, 256
        %v5189 = vpop.permute.xlu0 %5188
        %v5190 = vlaneseq
        %v5191 = vshrl.u32 %v5190, 7
        %v5192 = vsub.s32 3, %v5191
        %v5193 = vrot.slane %v5143, %v5192
        %5195 = vbcast.lane.c.b16.xlu0 %v5193, 256
        %v5196 = vpop.permute.xlu0 %5195
        %v5197 = vlaneseq
        %v5198 = vshrl.u32 %v5197, 7
        %v5199 = vsub.s32 3, %v5198
        %v5200 = vrot.slane %v5153, %v5199
        %5202 = vbcast.lane.c.b16.xlu0 %v5200, 256
        %v5203 = vpop.permute.xlu0 %5202
        %v5204 = vlaneseq
        %v5205 = vshrl.u32 %v5204, 7
        %v5206 = vsub.s32 4, %v5205
        %v5207 = vrot.slane %v5143, %v5206
        %5209 = vbcast.lane.c.b16.xlu0 %v5207, 256
        %v5210 = vpop.permute.xlu0 %5209
        %v5211 = vlaneseq
        %v5212 = vshrl.u32 %v5211, 7
        %v5213 = vsub.s32 4, %v5212
        %v5214 = vrot.slane %v5153, %v5213
        %5216 = vbcast.lane.c.b16.xlu0 %v5214, 256
        %v5217 = vpop.permute.xlu0 %5216
        %v5218 = vlaneseq
        %v5219 = vshrl.u32 %v5218, 7
        %v5220 = vsub.s32 5, %v5219
        %v5221 = vrot.slane %v5143, %v5220
        %5223 = vbcast.lane.c.b16.xlu0 %v5221, 256
        %v5224 = vpop.permute.xlu0 %5223
        %v5225 = vlaneseq
        %v5226 = vshrl.u32 %v5225, 7
        %v5227 = vsub.s32 5, %v5226
        %v5228 = vrot.slane %v5153, %v5227
        %5230 = vbcast.lane.c.b16.xlu0 %v5228, 256
        %v5231 = vpop.permute.xlu0 %5230
        %v5232 = vlaneseq
        %v5233 = vshrl.u32 %v5232, 7
        %v5234 = vsub.s32 6, %v5233
        %v5235 = vrot.slane %v5143, %v5234
        %5237 = vbcast.lane.c.b16.xlu0 %v5235, 256
        %v5238 = vpop.permute.xlu0 %5237
        %v5239 = vlaneseq
        %v5240 = vshrl.u32 %v5239, 7
        %v5241 = vsub.s32 6, %v5240
        %v5242 = vrot.slane %v5153, %v5241
        %5244 = vbcast.lane.c.b16.xlu0 %v5242, 256
        %v5245 = vpop.permute.xlu0 %5244
        %v5246 = vlaneseq
        %v5247 = vshrl.u32 %v5246, 7
        %v5248 = vsub.s32 7, %v5247
        %v5249 = vrot.slane %v5143, %v5248
        %5251 = vbcast.lane.c.b16.xlu0 %v5249, 256
        %v5252 = vpop.permute.xlu0 %5251
        %v5253 = vlaneseq
        %v5254 = vshrl.u32 %v5253, 7
        %v5255 = vsub.s32 7, %v5254
        %v5256 = vrot.slane %v5153, %v5255
        %5258 = vbcast.lane.c.b16.xlu0 %v5256, 256
        %v5259 = vpop.permute.xlu0 %5258
        %v5261 = vpack.i.b16 %v5141, %v5141
        %v5263 = vlaneseq
        %v5264 = vshrl.u32 %v5263, 7
        %v5265 = vsub.s32 0, %v5264
        %v5266 = vrot.slane %v5261, %v5265
        %5268 = vbcast.lane.c.b16.xlu0 %v5266, 256
        %v5269 = vpop.permute.xlu0 %5268
        %v5270 = vshrl.u32 %v5141, 16
        %v5271 = vpack.i.b16 %v5270, %v5270
        %v5273 = vlaneseq
        %v5274 = vshrl.u32 %v5273, 7
        %v5275 = vsub.s32 0, %v5274
        %v5276 = vrot.slane %v5271, %v5275
        %5278 = vbcast.lane.c.b16.xlu0 %v5276, 256
        %v5279 = vpop.permute.xlu0 %5278
        %v5280 = vlaneseq
        %v5281 = vshrl.u32 %v5280, 7
        %v5282 = vsub.s32 1, %v5281
        %v5283 = vrot.slane %v5261, %v5282
        %5285 = vbcast.lane.c.b16.xlu0 %v5283, 256
        %v5286 = vpop.permute.xlu0 %5285
        %v5287 = vlaneseq
        %v5288 = vshrl.u32 %v5287, 7
        %v5289 = vsub.s32 1, %v5288
        %v5290 = vrot.slane %v5271, %v5289
        %5292 = vbcast.lane.c.b16.xlu0 %v5290, 256
        %v5293 = vpop.permute.xlu0 %5292
        %v5294 = vlaneseq
        %v5295 = vshrl.u32 %v5294, 7
        %v5296 = vsub.s32 2, %v5295
        %v5297 = vrot.slane %v5261, %v5296
        %5299 = vbcast.lane.c.b16.xlu0 %v5297, 256
        %v5300 = vpop.permute.xlu0 %5299
        %v5301 = vlaneseq
        %v5302 = vshrl.u32 %v5301, 7
        %v5303 = vsub.s32 2, %v5302
        %v5304 = vrot.slane %v5271, %v5303
        %5306 = vbcast.lane.c.b16.xlu0 %v5304, 256
        %v5307 = vpop.permute.xlu0 %5306
        %v5308 = vlaneseq
        %v5309 = vshrl.u32 %v5308, 7
        %v5310 = vsub.s32 3, %v5309
        %v5311 = vrot.slane %v5261, %v5310
        %5313 = vbcast.lane.c.b16.xlu0 %v5311, 256
        %v5314 = vpop.permute.xlu0 %5313
        %v5315 = vlaneseq
        %v5316 = vshrl.u32 %v5315, 7
        %v5317 = vsub.s32 3, %v5316
        %v5318 = vrot.slane %v5271, %v5317
        %5320 = vbcast.lane.c.b16.xlu0 %v5318, 256
        %v5321 = vpop.permute.xlu0 %5320
        %v5322 = vlaneseq
        %v5323 = vshrl.u32 %v5322, 7
        %v5324 = vsub.s32 4, %v5323
        %v5325 = vrot.slane %v5261, %v5324
        %5327 = vbcast.lane.c.b16.xlu0 %v5325, 256
        %v5328 = vpop.permute.xlu0 %5327
        %v5329 = vlaneseq
        %v5330 = vshrl.u32 %v5329, 7
        %v5331 = vsub.s32 4, %v5330
        %v5332 = vrot.slane %v5271, %v5331
        %5334 = vbcast.lane.c.b16.xlu0 %v5332, 256
        %v5335 = vpop.permute.xlu0 %5334
        %v5336 = vlaneseq
        %v5337 = vshrl.u32 %v5336, 7
        %v5338 = vsub.s32 5, %v5337
        %v5339 = vrot.slane %v5261, %v5338
        %5341 = vbcast.lane.c.b16.xlu0 %v5339, 256
        %v5342 = vpop.permute.xlu0 %5341
        %v5343 = vlaneseq
        %v5344 = vshrl.u32 %v5343, 7
        %v5345 = vsub.s32 5, %v5344
        %v5346 = vrot.slane %v5271, %v5345
        %5348 = vbcast.lane.c.b16.xlu0 %v5346, 256
        %v5349 = vpop.permute.xlu0 %5348
        %v5350 = vlaneseq
        %v5351 = vshrl.u32 %v5350, 7
        %v5352 = vsub.s32 6, %v5351
        %v5353 = vrot.slane %v5261, %v5352
        %5355 = vbcast.lane.c.b16.xlu0 %v5353, 256
        %v5356 = vpop.permute.xlu0 %5355
        %v5357 = vlaneseq
        %v5358 = vshrl.u32 %v5357, 7
        %v5359 = vsub.s32 6, %v5358
        %v5360 = vrot.slane %v5271, %v5359
        %5362 = vbcast.lane.c.b16.xlu0 %v5360, 256
        %v5363 = vpop.permute.xlu0 %5362
        %v5364 = vlaneseq
        %v5365 = vshrl.u32 %v5364, 7
        %v5366 = vsub.s32 7, %v5365
        %v5367 = vrot.slane %v5261, %v5366
        %5369 = vbcast.lane.c.b16.xlu0 %v5367, 256
        %v5370 = vpop.permute.xlu0 %5369
        %v5371 = vlaneseq
        %v5372 = vshrl.u32 %v5371, 7
        %v5373 = vsub.s32 7, %v5372
        %v5374 = vrot.slane %v5271, %v5373
        %5376 = vbcast.lane.c.b16.xlu0 %v5374, 256
        %v5377 = vpop.permute.xlu0 %5376
        %v5378 = vmul.bf16 %v5151, %v868
        %v5379 = vmul.bf16 %v5161, %v869
        %v5380 = vmul.bf16 %v5168, %v870
        %v5381 = vmul.bf16 %v5175, %v871
        %v5382 = vmul.bf16 %v5182, %v872
        %v5383 = vmul.bf16 %v5189, %v873
        %v5384 = vmul.bf16 %v5196, %v874
        %v5385 = vmul.bf16 %v5203, %v875
        %v5386 = vmul.bf16 %v5210, %v876
        %v5387 = vmul.bf16 %v5217, %v877
        %v5388 = vmul.bf16 %v5224, %v878
        %v5389 = vmul.bf16 %v5231, %v879
        %v5390 = vmul.bf16 %v5238, %v880
        %v5391 = vmul.bf16 %v5245, %v881
        %v5392 = vmul.bf16 %v5252, %v882
        %v5393 = vmul.bf16 %v5259, %v883
        %v5394 = vmul.bf16 %v5269, %v884
        %v5395 = vmul.bf16 %v5279, %v885
        %v5396 = vmul.bf16 %v5286, %v886
        %v5397 = vmul.bf16 %v5293, %v887
        %v5398 = vmul.bf16 %v5300, %v888
        %v5399 = vmul.bf16 %v5307, %v889
        %v5400 = vmul.bf16 %v5314, %v890
        %v5401 = vmul.bf16 %v5321, %v891
        %v5402 = vmul.bf16 %v5328, %v892
        %v5403 = vmul.bf16 %v5335, %v893
        %v5404 = vmul.bf16 %v5342, %v894
        %v5405 = vmul.bf16 %v5349, %v895
        %v5406 = vmul.bf16 %v5356, %v896
        %v5407 = vmul.bf16 %v5363, %v897
        %v5408 = vmul.bf16 %v5370, %v898
        %v5409 = vmul.bf16 %v5377, %v899
        %v5410 = vunpack.c.l.bf16 %v5378
        %v5411 = vunpack.c.h.bf16 %v5378
        %v5412 = vunpack.c.l.bf16 %v5379
        %v5413 = vunpack.c.h.bf16 %v5379
        %v5414 = vunpack.c.l.bf16 %v5380
        %v5415 = vunpack.c.h.bf16 %v5380
        %v5416 = vunpack.c.l.bf16 %v5381
        %v5417 = vunpack.c.h.bf16 %v5381
        %v5418 = vunpack.c.l.bf16 %v5382
        %v5419 = vunpack.c.h.bf16 %v5382
        %v5420 = vunpack.c.l.bf16 %v5383
        %v5421 = vunpack.c.h.bf16 %v5383
        %v5422 = vunpack.c.l.bf16 %v5384
        %v5423 = vunpack.c.h.bf16 %v5384
        %v5424 = vunpack.c.l.bf16 %v5385
        %v5425 = vunpack.c.h.bf16 %v5385
        %v5426 = vunpack.c.l.bf16 %v5386
        %v5427 = vunpack.c.h.bf16 %v5386
        %v5428 = vunpack.c.l.bf16 %v5387
        %v5429 = vunpack.c.h.bf16 %v5387
        %v5430 = vunpack.c.l.bf16 %v5388
        %v5431 = vunpack.c.h.bf16 %v5388
        %v5432 = vunpack.c.l.bf16 %v5389
        %v5433 = vunpack.c.h.bf16 %v5389
        %v5434 = vunpack.c.l.bf16 %v5390
        %v5435 = vunpack.c.h.bf16 %v5390
        %v5436 = vunpack.c.l.bf16 %v5391
        %v5437 = vunpack.c.h.bf16 %v5391
        %v5438 = vunpack.c.l.bf16 %v5392
        %v5439 = vunpack.c.h.bf16 %v5392
        %v5440 = vunpack.c.l.bf16 %v5393
        %v5441 = vunpack.c.h.bf16 %v5393
        %v5442 = vunpack.c.l.bf16 %v5394
        %v5443 = vunpack.c.h.bf16 %v5394
        %v5444 = vunpack.c.l.bf16 %v5395
        %v5445 = vunpack.c.h.bf16 %v5395
        %v5446 = vunpack.c.l.bf16 %v5396
        %v5447 = vunpack.c.h.bf16 %v5396
        %v5448 = vunpack.c.l.bf16 %v5397
        %v5449 = vunpack.c.h.bf16 %v5397
        %v5450 = vunpack.c.l.bf16 %v5398
        %v5451 = vunpack.c.h.bf16 %v5398
        %v5452 = vunpack.c.l.bf16 %v5399
        %v5453 = vunpack.c.h.bf16 %v5399
        %v5454 = vunpack.c.l.bf16 %v5400
        %v5455 = vunpack.c.h.bf16 %v5400
        %v5456 = vunpack.c.l.bf16 %v5401
        %v5457 = vunpack.c.h.bf16 %v5401
        %v5458 = vunpack.c.l.bf16 %v5402
        %v5459 = vunpack.c.h.bf16 %v5402
        %v5460 = vunpack.c.l.bf16 %v5403
        %v5461 = vunpack.c.h.bf16 %v5403
        %v5462 = vunpack.c.l.bf16 %v5404
        %v5463 = vunpack.c.h.bf16 %v5404
        %v5464 = vunpack.c.l.bf16 %v5405
        %v5465 = vunpack.c.h.bf16 %v5405
        %v5466 = vunpack.c.l.bf16 %v5406
        %v5467 = vunpack.c.h.bf16 %v5406
        %v5468 = vunpack.c.l.bf16 %v5407
        %v5469 = vunpack.c.h.bf16 %v5407
        %v5470 = vunpack.c.l.bf16 %v5408
        %v5471 = vunpack.c.h.bf16 %v5408
        %v5472 = vunpack.c.l.bf16 %v5409
        %v5473 = vunpack.c.h.bf16 %v5409
        %v5474 = vsel %vm1028, %v5410, 0.0
        %v5475 = vsel %vm1028, %v5411, 0.0
        %v5476 = vadd.f32 %v5474, %v5475
        %v5477 = vrot.slane %v5476, 4
        %v5478 = vadd.f32 %v5476, %v5477
        %v5479 = vrot.slane %v5478, 2
        %v5480 = vadd.f32 %v5478, %v5479
        %v5481 = vrot.slane %v5480, 1
        %v5482 = vadd.f32 %v5480, %v5481
        %v5483 = vsel %vm1028, %v5412, 0.0
        %v5484 = vsel %vm1028, %v5413, 0.0
        %v5485 = vadd.f32 %v5483, %v5484
        %v5486 = vrot.slane %v5485, 4
        %v5487 = vadd.f32 %v5485, %v5486
        %v5488 = vrot.slane %v5487, 2
        %v5489 = vadd.f32 %v5487, %v5488
        %v5490 = vrot.slane %v5489, 1
        %v5491 = vadd.f32 %v5489, %v5490
        %v5492 = vsel %vm1028, %v5414, 0.0
        %v5493 = vsel %vm1028, %v5415, 0.0
        %v5494 = vadd.f32 %v5492, %v5493
        %v5495 = vrot.slane %v5494, 4
        %v5496 = vadd.f32 %v5494, %v5495
        %v5497 = vrot.slane %v5496, 2
        %v5498 = vadd.f32 %v5496, %v5497
        %v5499 = vrot.slane %v5498, 1
        %v5500 = vadd.f32 %v5498, %v5499
        %v5501 = vsel %vm1028, %v5416, 0.0
        %v5502 = vsel %vm1028, %v5417, 0.0
        %v5503 = vadd.f32 %v5501, %v5502
        %v5504 = vrot.slane %v5503, 4
        %v5505 = vadd.f32 %v5503, %v5504
        %v5506 = vrot.slane %v5505, 2
        %v5507 = vadd.f32 %v5505, %v5506
        %v5508 = vrot.slane %v5507, 1
        %v5509 = vadd.f32 %v5507, %v5508
        %v5510 = vsel %vm1028, %v5418, 0.0
        %v5511 = vsel %vm1028, %v5419, 0.0
        %v5512 = vadd.f32 %v5510, %v5511
        %v5513 = vrot.slane %v5512, 4
        %v5514 = vadd.f32 %v5512, %v5513
        %v5515 = vrot.slane %v5514, 2
        %v5516 = vadd.f32 %v5514, %v5515
        %v5517 = vrot.slane %v5516, 1
        %v5518 = vadd.f32 %v5516, %v5517
        %v5519 = vsel %vm1028, %v5420, 0.0
        %v5520 = vsel %vm1028, %v5421, 0.0
        %v5521 = vadd.f32 %v5519, %v5520
        %v5522 = vrot.slane %v5521, 4
        %v5523 = vadd.f32 %v5521, %v5522
        %v5524 = vrot.slane %v5523, 2
        %v5525 = vadd.f32 %v5523, %v5524
        %v5526 = vrot.slane %v5525, 1
        %v5527 = vadd.f32 %v5525, %v5526
        %v5528 = vsel %vm1028, %v5422, 0.0
        %v5529 = vsel %vm1028, %v5423, 0.0
        %v5530 = vadd.f32 %v5528, %v5529
        %v5531 = vrot.slane %v5530, 4
        %v5532 = vadd.f32 %v5530, %v5531
        %v5533 = vrot.slane %v5532, 2
        %v5534 = vadd.f32 %v5532, %v5533
        %v5535 = vrot.slane %v5534, 1
        %v5536 = vadd.f32 %v5534, %v5535
        %v5537 = vsel %vm1028, %v5424, 0.0
        %v5538 = vsel %vm1028, %v5425, 0.0
        %v5539 = vadd.f32 %v5537, %v5538
        %v5540 = vrot.slane %v5539, 4
        %v5541 = vadd.f32 %v5539, %v5540
        %v5542 = vrot.slane %v5541, 2
        %v5543 = vadd.f32 %v5541, %v5542
        %v5544 = vrot.slane %v5543, 1
        %v5545 = vadd.f32 %v5543, %v5544
        %v5546 = vsel %vm1028, %v5426, 0.0
        %v5547 = vsel %vm1028, %v5427, 0.0
        %v5548 = vadd.f32 %v5546, %v5547
        %v5549 = vrot.slane %v5548, 4
        %v5550 = vadd.f32 %v5548, %v5549
        %v5551 = vrot.slane %v5550, 2
        %v5552 = vadd.f32 %v5550, %v5551
        %v5553 = vrot.slane %v5552, 1
        %v5554 = vadd.f32 %v5552, %v5553
        %v5555 = vsel %vm1028, %v5428, 0.0
        %v5556 = vsel %vm1028, %v5429, 0.0
        %v5557 = vadd.f32 %v5555, %v5556
        %v5558 = vrot.slane %v5557, 4
        %v5559 = vadd.f32 %v5557, %v5558
        %v5560 = vrot.slane %v5559, 2
        %v5561 = vadd.f32 %v5559, %v5560
        %v5562 = vrot.slane %v5561, 1
        %v5563 = vadd.f32 %v5561, %v5562
        %v5564 = vsel %vm1028, %v5430, 0.0
        %v5565 = vsel %vm1028, %v5431, 0.0
        %v5566 = vadd.f32 %v5564, %v5565
        %v5567 = vrot.slane %v5566, 4
        %v5568 = vadd.f32 %v5566, %v5567
        %v5569 = vrot.slane %v5568, 2
        %v5570 = vadd.f32 %v5568, %v5569
        %v5571 = vrot.slane %v5570, 1
        %v5572 = vadd.f32 %v5570, %v5571
        %v5573 = vsel %vm1028, %v5432, 0.0
        %v5574 = vsel %vm1028, %v5433, 0.0
        %v5575 = vadd.f32 %v5573, %v5574
        %v5576 = vrot.slane %v5575, 4
        %v5577 = vadd.f32 %v5575, %v5576
        %v5578 = vrot.slane %v5577, 2
        %v5579 = vadd.f32 %v5577, %v5578
        %v5580 = vrot.slane %v5579, 1
        %v5581 = vadd.f32 %v5579, %v5580
        %v5582 = vsel %vm1028, %v5434, 0.0
        %v5583 = vsel %vm1028, %v5435, 0.0
        %v5584 = vadd.f32 %v5582, %v5583
        %v5585 = vrot.slane %v5584, 4
        %v5586 = vadd.f32 %v5584, %v5585
        %v5587 = vrot.slane %v5586, 2
        %v5588 = vadd.f32 %v5586, %v5587
        %v5589 = vrot.slane %v5588, 1
        %v5590 = vadd.f32 %v5588, %v5589
        %v5591 = vsel %vm1028, %v5436, 0.0
        %v5592 = vsel %vm1028, %v5437, 0.0
        %v5593 = vadd.f32 %v5591, %v5592
        %v5594 = vrot.slane %v5593, 4
        %v5595 = vadd.f32 %v5593, %v5594
        %v5596 = vrot.slane %v5595, 2
        %v5597 = vadd.f32 %v5595, %v5596
        %v5598 = vrot.slane %v5597, 1
        %v5599 = vadd.f32 %v5597, %v5598
        %v5600 = vsel %vm1028, %v5438, 0.0
        %v5601 = vsel %vm1028, %v5439, 0.0
        %v5602 = vadd.f32 %v5600, %v5601
        %v5603 = vrot.slane %v5602, 4
        %v5604 = vadd.f32 %v5602, %v5603
        %v5605 = vrot.slane %v5604, 2
        %v5606 = vadd.f32 %v5604, %v5605
        %v5607 = vrot.slane %v5606, 1
        %v5608 = vadd.f32 %v5606, %v5607
        %v5609 = vsel %vm1028, %v5440, 0.0
        %v5610 = vsel %vm1028, %v5441, 0.0
        %v5611 = vadd.f32 %v5609, %v5610
        %v5612 = vrot.slane %v5611, 4
        %v5613 = vadd.f32 %v5611, %v5612
        %v5614 = vrot.slane %v5613, 2
        %v5615 = vadd.f32 %v5613, %v5614
        %v5616 = vrot.slane %v5615, 1
        %v5617 = vadd.f32 %v5615, %v5616
        %v5618 = vsel %vm1028, %v5442, 0.0
        %v5619 = vsel %vm1028, %v5443, 0.0
        %v5620 = vadd.f32 %v5618, %v5619
        %v5621 = vrot.slane %v5620, 4
        %v5622 = vadd.f32 %v5620, %v5621
        %v5623 = vrot.slane %v5622, 2
        %v5624 = vadd.f32 %v5622, %v5623
        %v5625 = vrot.slane %v5624, 1
        %v5626 = vadd.f32 %v5624, %v5625
        %v5627 = vsel %vm1028, %v5444, 0.0
        %v5628 = vsel %vm1028, %v5445, 0.0
        %v5629 = vadd.f32 %v5627, %v5628
        %v5630 = vrot.slane %v5629, 4
        %v5631 = vadd.f32 %v5629, %v5630
        %v5632 = vrot.slane %v5631, 2
        %v5633 = vadd.f32 %v5631, %v5632
        %v5634 = vrot.slane %v5633, 1
        %v5635 = vadd.f32 %v5633, %v5634
        %v5636 = vsel %vm1028, %v5446, 0.0
        %v5637 = vsel %vm1028, %v5447, 0.0
        %v5638 = vadd.f32 %v5636, %v5637
        %v5639 = vrot.slane %v5638, 4
        %v5640 = vadd.f32 %v5638, %v5639
        %v5641 = vrot.slane %v5640, 2
        %v5642 = vadd.f32 %v5640, %v5641
        %v5643 = vrot.slane %v5642, 1
        %v5644 = vadd.f32 %v5642, %v5643
        %v5645 = vsel %vm1028, %v5448, 0.0
        %v5646 = vsel %vm1028, %v5449, 0.0
        %v5647 = vadd.f32 %v5645, %v5646
        %v5648 = vrot.slane %v5647, 4
        %v5649 = vadd.f32 %v5647, %v5648
        %v5650 = vrot.slane %v5649, 2
        %v5651 = vadd.f32 %v5649, %v5650
        %v5652 = vrot.slane %v5651, 1
        %v5653 = vadd.f32 %v5651, %v5652
        %v5654 = vsel %vm1028, %v5450, 0.0
        %v5655 = vsel %vm1028, %v5451, 0.0
        %v5656 = vadd.f32 %v5654, %v5655
        %v5657 = vrot.slane %v5656, 4
        %v5658 = vadd.f32 %v5656, %v5657
        %v5659 = vrot.slane %v5658, 2
        %v5660 = vadd.f32 %v5658, %v5659
        %v5661 = vrot.slane %v5660, 1
        %v5662 = vadd.f32 %v5660, %v5661
        %v5663 = vsel %vm1028, %v5452, 0.0
        %v5664 = vsel %vm1028, %v5453, 0.0
        %v5665 = vadd.f32 %v5663, %v5664
        %v5666 = vrot.slane %v5665, 4
        %v5667 = vadd.f32 %v5665, %v5666
        %v5668 = vrot.slane %v5667, 2
        %v5669 = vadd.f32 %v5667, %v5668
        %v5670 = vrot.slane %v5669, 1
        %v5671 = vadd.f32 %v5669, %v5670
        %v5672 = vsel %vm1028, %v5454, 0.0
        %v5673 = vsel %vm1028, %v5455, 0.0
        %v5674 = vadd.f32 %v5672, %v5673
        %v5675 = vrot.slane %v5674, 4
        %v5676 = vadd.f32 %v5674, %v5675
        %v5677 = vrot.slane %v5676, 2
        %v5678 = vadd.f32 %v5676, %v5677
        %v5679 = vrot.slane %v5678, 1
        %v5680 = vadd.f32 %v5678, %v5679
        %v5681 = vsel %vm1028, %v5456, 0.0
        %v5682 = vsel %vm1028, %v5457, 0.0
        %v5683 = vadd.f32 %v5681, %v5682
        %v5684 = vrot.slane %v5683, 4
        %v5685 = vadd.f32 %v5683, %v5684
        %v5686 = vrot.slane %v5685, 2
        %v5687 = vadd.f32 %v5685, %v5686
        %v5688 = vrot.slane %v5687, 1
        %v5689 = vadd.f32 %v5687, %v5688
        %v5690 = vsel %vm1028, %v5458, 0.0
        %v5691 = vsel %vm1028, %v5459, 0.0
        %v5692 = vadd.f32 %v5690, %v5691
        %v5693 = vrot.slane %v5692, 4
        %v5694 = vadd.f32 %v5692, %v5693
        %v5695 = vrot.slane %v5694, 2
        %v5696 = vadd.f32 %v5694, %v5695
        %v5697 = vrot.slane %v5696, 1
        %v5698 = vadd.f32 %v5696, %v5697
        %v5699 = vsel %vm1028, %v5460, 0.0
        %v5700 = vsel %vm1028, %v5461, 0.0
        %v5701 = vadd.f32 %v5699, %v5700
        %v5702 = vrot.slane %v5701, 4
        %v5703 = vadd.f32 %v5701, %v5702
        %v5704 = vrot.slane %v5703, 2
        %v5705 = vadd.f32 %v5703, %v5704
        %v5706 = vrot.slane %v5705, 1
        %v5707 = vadd.f32 %v5705, %v5706
        %v5708 = vsel %vm1028, %v5462, 0.0
        %v5709 = vsel %vm1028, %v5463, 0.0
        %v5710 = vadd.f32 %v5708, %v5709
        %v5711 = vrot.slane %v5710, 4
        %v5712 = vadd.f32 %v5710, %v5711
        %v5713 = vrot.slane %v5712, 2
        %v5714 = vadd.f32 %v5712, %v5713
        %v5715 = vrot.slane %v5714, 1
        %v5716 = vadd.f32 %v5714, %v5715
        %v5717 = vsel %vm1028, %v5464, 0.0
        %v5718 = vsel %vm1028, %v5465, 0.0
        %v5719 = vadd.f32 %v5717, %v5718
        %v5720 = vrot.slane %v5719, 4
        %v5721 = vadd.f32 %v5719, %v5720
        %v5722 = vrot.slane %v5721, 2
        %v5723 = vadd.f32 %v5721, %v5722
        %v5724 = vrot.slane %v5723, 1
        %v5725 = vadd.f32 %v5723, %v5724
        %v5726 = vsel %vm1028, %v5466, 0.0
        %v5727 = vsel %vm1028, %v5467, 0.0
        %v5728 = vadd.f32 %v5726, %v5727
        %v5729 = vrot.slane %v5728, 4
        %v5730 = vadd.f32 %v5728, %v5729
        %v5731 = vrot.slane %v5730, 2
        %v5732 = vadd.f32 %v5730, %v5731
        %v5733 = vrot.slane %v5732, 1
        %v5734 = vadd.f32 %v5732, %v5733
        %v5735 = vsel %vm1028, %v5468, 0.0
        %v5736 = vsel %vm1028, %v5469, 0.0
        %v5737 = vadd.f32 %v5735, %v5736
        %v5738 = vrot.slane %v5737, 4
        %v5739 = vadd.f32 %v5737, %v5738
        %v5740 = vrot.slane %v5739, 2
        %v5741 = vadd.f32 %v5739, %v5740
        %v5742 = vrot.slane %v5741, 1
        %v5743 = vadd.f32 %v5741, %v5742
        %v5744 = vsel %vm1028, %v5470, 0.0
        %v5745 = vsel %vm1028, %v5471, 0.0
        %v5746 = vadd.f32 %v5744, %v5745
        %v5747 = vrot.slane %v5746, 4
        %v5748 = vadd.f32 %v5746, %v5747
        %v5749 = vrot.slane %v5748, 2
        %v5750 = vadd.f32 %v5748, %v5749
        %v5751 = vrot.slane %v5750, 1
        %v5752 = vadd.f32 %v5750, %v5751
        %v5753 = vsel %vm1028, %v5472, 0.0
        %v5754 = vsel %vm1028, %v5473, 0.0
        %v5755 = vadd.f32 %v5753, %v5754
        %v5756 = vrot.slane %v5755, 4
        %v5757 = vadd.f32 %v5755, %v5756
        %v5758 = vrot.slane %v5757, 2
        %v5759 = vadd.f32 %v5757, %v5758
        %v5760 = vrot.slane %v5759, 1
        %v5761 = vadd.f32 %v5759, %v5760
        %v5762 = vpack.c.bf16 %v5482, %v5482
        %v5763 = vpack.c.bf16 %v5491, %v5491
        %v5764 = vpack.c.bf16 %v5500, %v5500
        %v5765 = vpack.c.bf16 %v5509, %v5509
        %v5766 = vpack.c.bf16 %v5518, %v5518
        %v5767 = vpack.c.bf16 %v5527, %v5527
        %v5768 = vpack.c.bf16 %v5536, %v5536
        %v5769 = vpack.c.bf16 %v5545, %v5545
        %v5770 = vpack.c.bf16 %v5554, %v5554
        %v5771 = vpack.c.bf16 %v5563, %v5563
        %v5772 = vpack.c.bf16 %v5572, %v5572
        %v5773 = vpack.c.bf16 %v5581, %v5581
        %v5774 = vpack.c.bf16 %v5590, %v5590
        %v5775 = vpack.c.bf16 %v5599, %v5599
        %v5776 = vpack.c.bf16 %v5608, %v5608
        %v5777 = vpack.c.bf16 %v5617, %v5617
        %v5778 = vpack.c.bf16 %v5626, %v5626
        %v5779 = vpack.c.bf16 %v5635, %v5635
        %v5780 = vpack.c.bf16 %v5644, %v5644
        %v5781 = vpack.c.bf16 %v5653, %v5653
        %v5782 = vpack.c.bf16 %v5662, %v5662
        %v5783 = vpack.c.bf16 %v5671, %v5671
        %v5784 = vpack.c.bf16 %v5680, %v5680
        %v5785 = vpack.c.bf16 %v5689, %v5689
        %v5786 = vpack.c.bf16 %v5698, %v5698
        %v5787 = vpack.c.bf16 %v5707, %v5707
        %v5788 = vpack.c.bf16 %v5716, %v5716
        %v5789 = vpack.c.bf16 %v5725, %v5725
        %v5790 = vpack.c.bf16 %v5734, %v5734
        %v5791 = vpack.c.bf16 %v5743, %v5743
        %v5792 = vpack.c.bf16 %v5752, %v5752
        %v5793 = vpack.c.bf16 %v5761, %v5761
        %v5794 = vld [vmem:[%s3 + $0x14] sm:$0xf]
        %v5827 = vunpack.c.l.b16 %v5762
        %v5828 = vunpack.c.l.b16 %v5763
        %v5829 = vunpack.c.l.b16 %v5764
        %v5830 = vunpack.c.l.b16 %v5765
        %v5831 = vunpack.c.l.b16 %v5766
        %v5832 = vunpack.c.l.b16 %v5767
        %v5833 = vunpack.c.l.b16 %v5768
        %v5834 = vunpack.c.l.b16 %v5769
        %v5835 = vunpack.c.l.b16 %v5770
        %v5836 = vunpack.c.l.b16 %v5771
        %v5837 = vunpack.c.l.b16 %v5772
        %v5838 = vunpack.c.l.b16 %v5773
        %v5839 = vunpack.c.l.b16 %v5774
        %v5840 = vunpack.c.l.b16 %v5775
        %v5841 = vunpack.c.l.b16 %v5776
        %v5842 = vunpack.c.l.b16 %v5777
        %v5843 = vunpack.c.l.b16 %v5778
        %v5844 = vunpack.c.l.b16 %v5779
        %v5845 = vunpack.c.l.b16 %v5780
        %v5846 = vunpack.c.l.b16 %v5781
        %v5847 = vunpack.c.l.b16 %v5782
        %v5848 = vunpack.c.l.b16 %v5783
        %v5849 = vunpack.c.l.b16 %v5784
        %v5850 = vunpack.c.l.b16 %v5785
        %v5851 = vunpack.c.l.b16 %v5786
        %v5852 = vunpack.c.l.b16 %v5787
        %v5853 = vunpack.c.l.b16 %v5788
        %v5854 = vunpack.c.l.b16 %v5789
        %v5855 = vunpack.c.l.b16 %v5790
        %v5856 = vunpack.c.l.b16 %v5791
        %v5857 = vunpack.c.l.b16 %v5792
        %v5858 = vunpack.c.l.b16 %v5793
        %v5859 = vsel %vm2147, %v5828, %v5827
        %v5860 = vsel %vm2149, %v5829, %v5859
        %v5861 = vsel %vm2151, %v5830, %v5860
        %v5862 = vsel %vm2153, %v5831, %v5861
        %v5863 = vsel %vm2155, %v5832, %v5862
        %v5864 = vsel %vm2157, %v5833, %v5863
        %v5865 = vsel %vm2159, %v5834, %v5864
        %v5866 = vsel %vm2147, %v5836, %v5835
        %v5867 = vsel %vm2149, %v5837, %v5866
        %v5868 = vsel %vm2151, %v5838, %v5867
        %v5869 = vsel %vm2153, %v5839, %v5868
        %v5870 = vsel %vm2155, %v5840, %v5869
        %v5871 = vsel %vm2157, %v5841, %v5870
        %v5872 = vsel %vm2159, %v5842, %v5871
        %v5873 = vsel %vm2147, %v5844, %v5843
        %v5874 = vsel %vm2149, %v5845, %v5873
        %v5875 = vsel %vm2151, %v5846, %v5874
        %v5876 = vsel %vm2153, %v5847, %v5875
        %v5877 = vsel %vm2155, %v5848, %v5876
        %v5878 = vsel %vm2157, %v5849, %v5877
        %v5879 = vsel %vm2159, %v5850, %v5878
        %v5880 = vsel %vm2147, %v5852, %v5851
        %v5881 = vsel %vm2149, %v5853, %v5880
        %v5882 = vsel %vm2151, %v5854, %v5881
        %v5883 = vsel %vm2153, %v5855, %v5882
        %v5884 = vsel %vm2155, %v5856, %v5883
        %v5885 = vsel %vm2157, %v5857, %v5884
        %v5886 = vsel %vm2159, %v5858, %v5885
        %v5887 = vpack.c.b16 %v5872, %v5865
        %v5888 = vpack.c.b16 %v5886, %v5879
        %v5890 = vsel %vm1028, %v5887, 0
        %v5893 = vsel %vm1028, %v5888, 0
        %v5896 = vsel %vm2190, %v5794, 0
        %5898 = vmatprep.subr.bf16.mxu0 0
        %5899 = vmatpush1.bf16.msra.mxu0 %v5896
        %5900 = vmatprep.subr.bf16.mxu0 0
        %5901 = vmatpush1.bf16.msra.mxu0 0
        %5902 = vmatprep.subr.bf16.mxu0 0
        %5903 = vmatpush1.bf16.msra.mxu0 0
        %5904 = vmatprep.subr.bf16.mxu0 0
        %5905 = vmatpush1.bf16.msra.mxu0 0
        %5906 = vmatprep.subr.bf16.mxu0 0
        %5907 = vmatpush1.bf16.msra.mxu0 0
        %5908 = vmatprep.subr.bf16.mxu0 0
        %5909 = vmatpush1.bf16.msra.mxu0 0
        %5910 = vmatprep.subr.bf16.mxu0 0
        %5911 = vmatpush1.bf16.msra.mxu0 0
        %5912 = vmatprep.subr.bf16.mxu0 0
        %5913 = vmatpush1.bf16.msra.mxu0 0
        %5914 = vmatprep.subr.bf16.mxu0 0
        %5915 = vmatpush1.bf16.msra.mxu0 0
        %5916 = vmatprep.subr.bf16.mxu0 0
        %5917 = vmatpush1.bf16.msra.mxu0 0
        %5918 = vmatprep.subr.bf16.mxu0 0
        %5919 = vmatpush1.bf16.msra.mxu0 0
        %5920 = vmatprep.subr.bf16.mxu0 0
        %5921 = vmatpush1.bf16.msra.mxu0 0
        %5922 = vmatprep.subr.bf16.mxu0 0
        %5923 = vmatpush1.bf16.msra.mxu0 0
        %5924 = vmatprep.subr.bf16.mxu0 0
        %5925 = vmatpush1.bf16.msra.mxu0 0
        %5926 = vmatprep.subr.bf16.mxu0 0
        %5927 = vmatpush1.bf16.msra.mxu0 0
        %5928 = vmatprep.subr.bf16.mxu0 0
        %5929 = vmatpush1.bf16.msra.mxu0 0
        %5930 = vmatprep.mubr.bf16.mxu0 0
        %5931 = vmatmul.mubr.bf16.gmra.mrb[0].mxu0 %v5890
        %v5932 = vpop.f32.mrb[0].mxu0
        %v5933 = vadd.f32 0.0, %v5932
        %v5934 = vpop.f32.mrb[0].mxu0
        %v5935 = vpop.f32.mrb[0].mxu0
        %v5936 = vadd.f32 0.0, %v5935
        %v5937 = vpop.f32.mrb[0].mxu0
        %5938 = vmatprep.mubr.bf16.mxu0 0
        %5939 = vmatmul.mubr.bf16.gmra.mrb[0].mxu0 %v5893
        %v5940 = vpop.f32.mrb[0].mxu0
        %v5941 = vadd.f32 0.0, %v5940
        %v5942 = vpop.f32.mrb[0].mxu0
        %v5943 = vpop.f32.mrb[0].mxu0
        %v5944 = vadd.f32 0.0, %v5943
        %v5945 = vpop.f32.mrb[0].mxu0
        %5946 = vdwg.mxu0
        %v5947 = vadd.f32 %v5058, %v5933
        %v5948 = vadd.f32 %v5059, %v5936
        %v5949 = vadd.f32 %v5060, %v5941
        %v5950 = vadd.f32 %v5061, %v5944
        %s5951 = sld [smem:[#allocation3 + $0x12]]
        %s5952 = sld [smem:[#allocation3 + $0x13]]
        %s5953 = sld [smem:[#allocation3 + $0x14]]
        %v5954 = vstv %s5951
        %v5955 = vsub.f32 %v346, %v5954
        %v5956 = vsub.f32 %v347, %v5954
        %v5957 = vsub.f32 %v348, %v5954
        %v5958 = vsub.f32 %v349, %v5954
        %v5959 = vstv %s5952
        %v5960 = vsub.f32 %v351, %v5959
        %v5961 = vsub.f32 %v352, %v5959
        %v5962 = vsub.f32 %v353, %v5959
        %v5963 = vsub.f32 %v354, %v5959
        %v5964 = vstv %s5953
        %v5965 = vsub.f32 %v356, %v5964
        %v5966 = vsub.f32 %v357, %v5964
        %v5967 = vsub.f32 %v358, %v5964
        %v5968 = vsub.f32 %v359, %v5964
        %v5969 = vmul.f32 %v5955, %v5955
        %v5970 = vmul.f32 %v5956, %v5956
        %v5971 = vmul.f32 %v5957, %v5957
        %v5972 = vmul.f32 %v5958, %v5958
        %v5973 = vmul.f32 %v5960, %v5960
        %v5974 = vmul.f32 %v5961, %v5961
        %v5975 = vmul.f32 %v5962, %v5962
        %v5976 = vmul.f32 %v5963, %v5963
        %v5977 = vadd.f32 %v5969, %v5973
        %v5978 = vadd.f32 %v5970, %v5974
        %v5979 = vadd.f32 %v5971, %v5975
        %v5980 = vadd.f32 %v5972, %v5976
        %v5981 = vmul.f32 %v5965, %v5965
        %v5982 = vmul.f32 %v5966, %v5966
        %v5983 = vmul.f32 %v5967, %v5967
        %v5984 = vmul.f32 %v5968, %v5968
        %v5985 = vadd.f32 %v5977, %v5981
        %v5986 = vadd.f32 %v5978, %v5982
        %v5987 = vadd.f32 %v5979, %v5983
        %v5988 = vadd.f32 %v5980, %v5984
        %v5989 = vrsqrt.pop %v5985
        %v5990 = vmul.f32 %v5985, %v5989
        %vm5991 = vcmp.eq.f32.partialorder %v5985, inf
        %v5992 = vsel %vm5991, %v5985, %v5990
        %vm5993 = vcmp.eq.f32.partialorder %v5985, 0.0
        %v5994 = vand.u32 %v5985, 2147483648
        %v5995 = vsel %vm5993, %v5994, %v5992
        %v5996 = vrsqrt.pop %v5986
        %v5997 = vmul.f32 %v5986, %v5996
        %vm5998 = vcmp.eq.f32.partialorder %v5986, inf
        %v5999 = vsel %vm5998, %v5986, %v5997
        %vm6000 = vcmp.eq.f32.partialorder %v5986, 0.0
        %v6001 = vand.u32 %v5986, 2147483648
        %v6002 = vsel %vm6000, %v6001, %v5999
        %v6003 = vrsqrt.pop %v5987
        %v6004 = vmul.f32 %v5987, %v6003
        %vm6005 = vcmp.eq.f32.partialorder %v5987, inf
        %v6006 = vsel %vm6005, %v5987, %v6004
        %vm6007 = vcmp.eq.f32.partialorder %v5987, 0.0
        %v6008 = vand.u32 %v5987, 2147483648
        %v6009 = vsel %vm6007, %v6008, %v6006
        %v6010 = vrsqrt.pop %v5988
        %v6011 = vmul.f32 %v5988, %v6010
        %vm6012 = vcmp.eq.f32.partialorder %v5988, inf
        %v6013 = vsel %vm6012, %v5988, %v6011
        %vm6014 = vcmp.eq.f32.partialorder %v5988, 0.0
        %v6015 = vand.u32 %v5988, 2147483648
        %v6016 = vsel %vm6014, %v6015, %v6013
        %v6017 = vmul.f32 %v5995, 16.666666
        %v6018 = vmul.f32 %v6002, 16.666666
        %v6019 = vmul.f32 %v6009, 16.666666
        %v6020 = vmul.f32 %v6016, 16.666666
        %v6021 = vsub.f32 1.0, %v6017
        %v6022 = vsub.f32 1.0, %v6018
        %v6023 = vsub.f32 1.0, %v6019
        %v6024 = vsub.f32 1.0, %v6020
        %v6025 = vmax.f32 %v6021, 0.0
        %v6026 = vmax.f32 %v6022, 0.0
        %v6027 = vmax.f32 %v6023, 0.0
        %v6028 = vmax.f32 %v6024, 0.0
        %v6029 = vpack.c.bf16 %v6026, %v6025
        %v6030 = vpack.c.bf16 %v6028, %v6027
        %v6032 = vpack.i.b16 %v6029, %v6029
        %v6034 = vlaneseq
        %v6035 = vshrl.u32 %v6034, 7
        %v6036 = vsub.s32 0, %v6035
        %v6037 = vrot.slane %v6032, %v6036
        %6039 = vbcast.lane.c.b16.xlu0 %v6037, 256
        %v6040 = vpop.permute.xlu0 %6039
        %v6041 = vshrl.u32 %v6029, 16
        %v6042 = vpack.i.b16 %v6041, %v6041
        %v6044 = vlaneseq
        %v6045 = vshrl.u32 %v6044, 7
        %v6046 = vsub.s32 0, %v6045
        %v6047 = vrot.slane %v6042, %v6046
        %6049 = vbcast.lane.c.b16.xlu0 %v6047, 256
        %v6050 = vpop.permute.xlu0 %6049
        %v6051 = vlaneseq
        %v6052 = vshrl.u32 %v6051, 7
        %v6053 = vsub.s32 1, %v6052
        %v6054 = vrot.slane %v6032, %v6053
        %6056 = vbcast.lane.c.b16.xlu0 %v6054, 256
        %v6057 = vpop.permute.xlu0 %6056
        %v6058 = vlaneseq
        %v6059 = vshrl.u32 %v6058, 7
        %v6060 = vsub.s32 1, %v6059
        %v6061 = vrot.slane %v6042, %v6060
        %6063 = vbcast.lane.c.b16.xlu0 %v6061, 256
        %v6064 = vpop.permute.xlu0 %6063
        %v6065 = vlaneseq
        %v6066 = vshrl.u32 %v6065, 7
        %v6067 = vsub.s32 2, %v6066
        %v6068 = vrot.slane %v6032, %v6067
        %6070 = vbcast.lane.c.b16.xlu0 %v6068, 256
        %v6071 = vpop.permute.xlu0 %6070
        %v6072 = vlaneseq
        %v6073 = vshrl.u32 %v6072, 7
        %v6074 = vsub.s32 2, %v6073
        %v6075 = vrot.slane %v6042, %v6074
        %6077 = vbcast.lane.c.b16.xlu0 %v6075, 256
        %v6078 = vpop.permute.xlu0 %6077
        %v6079 = vlaneseq
        %v6080 = vshrl.u32 %v6079, 7
        %v6081 = vsub.s32 3, %v6080
        %v6082 = vrot.slane %v6032, %v6081
        %6084 = vbcast.lane.c.b16.xlu0 %v6082, 256
        %v6085 = vpop.permute.xlu0 %6084
        %v6086 = vlaneseq
        %v6087 = vshrl.u32 %v6086, 7
        %v6088 = vsub.s32 3, %v6087
        %v6089 = vrot.slane %v6042, %v6088
        %6091 = vbcast.lane.c.b16.xlu0 %v6089, 256
        %v6092 = vpop.permute.xlu0 %6091
        %v6093 = vlaneseq
        %v6094 = vshrl.u32 %v6093, 7
        %v6095 = vsub.s32 4, %v6094
        %v6096 = vrot.slane %v6032, %v6095
        %6098 = vbcast.lane.c.b16.xlu0 %v6096, 256
        %v6099 = vpop.permute.xlu0 %6098
        %v6100 = vlaneseq
        %v6101 = vshrl.u32 %v6100, 7
        %v6102 = vsub.s32 4, %v6101
        %v6103 = vrot.slane %v6042, %v6102
        %6105 = vbcast.lane.c.b16.xlu0 %v6103, 256
        %v6106 = vpop.permute.xlu0 %6105
        %v6107 = vlaneseq
        %v6108 = vshrl.u32 %v6107, 7
        %v6109 = vsub.s32 5, %v6108
        %v6110 = vrot.slane %v6032, %v6109
        %6112 = vbcast.lane.c.b16.xlu0 %v6110, 256
        %v6113 = vpop.permute.xlu0 %6112
        %v6114 = vlaneseq
        %v6115 = vshrl.u32 %v6114, 7
        %v6116 = vsub.s32 5, %v6115
        %v6117 = vrot.slane %v6042, %v6116
        %6119 = vbcast.lane.c.b16.xlu0 %v6117, 256
        %v6120 = vpop.permute.xlu0 %6119
        %v6121 = vlaneseq
        %v6122 = vshrl.u32 %v6121, 7
        %v6123 = vsub.s32 6, %v6122
        %v6124 = vrot.slane %v6032, %v6123
        %6126 = vbcast.lane.c.b16.xlu0 %v6124, 256
        %v6127 = vpop.permute.xlu0 %6126
        %v6128 = vlaneseq
        %v6129 = vshrl.u32 %v6128, 7
        %v6130 = vsub.s32 6, %v6129
        %v6131 = vrot.slane %v6042, %v6130
        %6133 = vbcast.lane.c.b16.xlu0 %v6131, 256
        %v6134 = vpop.permute.xlu0 %6133
        %v6135 = vlaneseq
        %v6136 = vshrl.u32 %v6135, 7
        %v6137 = vsub.s32 7, %v6136
        %v6138 = vrot.slane %v6032, %v6137
        %6140 = vbcast.lane.c.b16.xlu0 %v6138, 256
        %v6141 = vpop.permute.xlu0 %6140
        %v6142 = vlaneseq
        %v6143 = vshrl.u32 %v6142, 7
        %v6144 = vsub.s32 7, %v6143
        %v6145 = vrot.slane %v6042, %v6144
        %6147 = vbcast.lane.c.b16.xlu0 %v6145, 256
        %v6148 = vpop.permute.xlu0 %6147
        %v6150 = vpack.i.b16 %v6030, %v6030
        %v6152 = vlaneseq
        %v6153 = vshrl.u32 %v6152, 7
        %v6154 = vsub.s32 0, %v6153
        %v6155 = vrot.slane %v6150, %v6154
        %6157 = vbcast.lane.c.b16.xlu0 %v6155, 256
        %v6158 = vpop.permute.xlu0 %6157
        %v6159 = vshrl.u32 %v6030, 16
        %v6160 = vpack.i.b16 %v6159, %v6159
        %v6162 = vlaneseq
        %v6163 = vshrl.u32 %v6162, 7
        %v6164 = vsub.s32 0, %v6163
        %v6165 = vrot.slane %v6160, %v6164
        %6167 = vbcast.lane.c.b16.xlu0 %v6165, 256
        %v6168 = vpop.permute.xlu0 %6167
        %v6169 = vlaneseq
        %v6170 = vshrl.u32 %v6169, 7
        %v6171 = vsub.s32 1, %v6170
        %v6172 = vrot.slane %v6150, %v6171
        %6174 = vbcast.lane.c.b16.xlu0 %v6172, 256
        %v6175 = vpop.permute.xlu0 %6174
        %v6176 = vlaneseq
        %v6177 = vshrl.u32 %v6176, 7
        %v6178 = vsub.s32 1, %v6177
        %v6179 = vrot.slane %v6160, %v6178
        %6181 = vbcast.lane.c.b16.xlu0 %v6179, 256
        %v6182 = vpop.permute.xlu0 %6181
        %v6183 = vlaneseq
        %v6184 = vshrl.u32 %v6183, 7
        %v6185 = vsub.s32 2, %v6184
        %v6186 = vrot.slane %v6150, %v6185
        %6188 = vbcast.lane.c.b16.xlu0 %v6186, 256
        %v6189 = vpop.permute.xlu0 %6188
        %v6190 = vlaneseq
        %v6191 = vshrl.u32 %v6190, 7
        %v6192 = vsub.s32 2, %v6191
        %v6193 = vrot.slane %v6160, %v6192
        %6195 = vbcast.lane.c.b16.xlu0 %v6193, 256
        %v6196 = vpop.permute.xlu0 %6195
        %v6197 = vlaneseq
        %v6198 = vshrl.u32 %v6197, 7
        %v6199 = vsub.s32 3, %v6198
        %v6200 = vrot.slane %v6150, %v6199
        %6202 = vbcast.lane.c.b16.xlu0 %v6200, 256
        %v6203 = vpop.permute.xlu0 %6202
        %v6204 = vlaneseq
        %v6205 = vshrl.u32 %v6204, 7
        %v6206 = vsub.s32 3, %v6205
        %v6207 = vrot.slane %v6160, %v6206
        %6209 = vbcast.lane.c.b16.xlu0 %v6207, 256
        %v6210 = vpop.permute.xlu0 %6209
        %v6211 = vlaneseq
        %v6212 = vshrl.u32 %v6211, 7
        %v6213 = vsub.s32 4, %v6212
        %v6214 = vrot.slane %v6150, %v6213
        %6216 = vbcast.lane.c.b16.xlu0 %v6214, 256
        %v6217 = vpop.permute.xlu0 %6216
        %v6218 = vlaneseq
        %v6219 = vshrl.u32 %v6218, 7
        %v6220 = vsub.s32 4, %v6219
        %v6221 = vrot.slane %v6160, %v6220
        %6223 = vbcast.lane.c.b16.xlu0 %v6221, 256
        %v6224 = vpop.permute.xlu0 %6223
        %v6225 = vlaneseq
        %v6226 = vshrl.u32 %v6225, 7
        %v6227 = vsub.s32 5, %v6226
        %v6228 = vrot.slane %v6150, %v6227
        %6230 = vbcast.lane.c.b16.xlu0 %v6228, 256
        %v6231 = vpop.permute.xlu0 %6230
        %v6232 = vlaneseq
        %v6233 = vshrl.u32 %v6232, 7
        %v6234 = vsub.s32 5, %v6233
        %v6235 = vrot.slane %v6160, %v6234
        %6237 = vbcast.lane.c.b16.xlu0 %v6235, 256
        %v6238 = vpop.permute.xlu0 %6237
        %v6239 = vlaneseq
        %v6240 = vshrl.u32 %v6239, 7
        %v6241 = vsub.s32 6, %v6240
        %v6242 = vrot.slane %v6150, %v6241
        %6244 = vbcast.lane.c.b16.xlu0 %v6242, 256
        %v6245 = vpop.permute.xlu0 %6244
        %v6246 = vlaneseq
        %v6247 = vshrl.u32 %v6246, 7
        %v6248 = vsub.s32 6, %v6247
        %v6249 = vrot.slane %v6160, %v6248
        %6251 = vbcast.lane.c.b16.xlu0 %v6249, 256
        %v6252 = vpop.permute.xlu0 %6251
        %v6253 = vlaneseq
        %v6254 = vshrl.u32 %v6253, 7
        %v6255 = vsub.s32 7, %v6254
        %v6256 = vrot.slane %v6150, %v6255
        %6258 = vbcast.lane.c.b16.xlu0 %v6256, 256
        %v6259 = vpop.permute.xlu0 %6258
        %v6260 = vlaneseq
        %v6261 = vshrl.u32 %v6260, 7
        %v6262 = vsub.s32 7, %v6261
        %v6263 = vrot.slane %v6160, %v6262
        %6265 = vbcast.lane.c.b16.xlu0 %v6263, 256
        %v6266 = vpop.permute.xlu0 %6265
        %v6267 = vmul.bf16 %v6040, %v868
        %v6268 = vmul.bf16 %v6050, %v869
        %v6269 = vmul.bf16 %v6057, %v870
        %v6270 = vmul.bf16 %v6064, %v871
        %v6271 = vmul.bf16 %v6071, %v872
        %v6272 = vmul.bf16 %v6078, %v873
        %v6273 = vmul.bf16 %v6085, %v874
        %v6274 = vmul.bf16 %v6092, %v875
        %v6275 = vmul.bf16 %v6099, %v876
        %v6276 = vmul.bf16 %v6106, %v877
        %v6277 = vmul.bf16 %v6113, %v878
        %v6278 = vmul.bf16 %v6120, %v879
        %v6279 = vmul.bf16 %v6127, %v880
        %v6280 = vmul.bf16 %v6134, %v881
        %v6281 = vmul.bf16 %v6141, %v882
        %v6282 = vmul.bf16 %v6148, %v883
        %v6283 = vmul.bf16 %v6158, %v884
        %v6284 = vmul.bf16 %v6168, %v885
        %v6285 = vmul.bf16 %v6175, %v886
        %v6286 = vmul.bf16 %v6182, %v887
        %v6287 = vmul.bf16 %v6189, %v888
        %v6288 = vmul.bf16 %v6196, %v889
        %v6289 = vmul.bf16 %v6203, %v890
        %v6290 = vmul.bf16 %v6210, %v891
        %v6291 = vmul.bf16 %v6217, %v892
        %v6292 = vmul.bf16 %v6224, %v893
        %v6293 = vmul.bf16 %v6231, %v894
        %v6294 = vmul.bf16 %v6238, %v895
        %v6295 = vmul.bf16 %v6245, %v896
        %v6296 = vmul.bf16 %v6252, %v897
        %v6297 = vmul.bf16 %v6259, %v898
        %v6298 = vmul.bf16 %v6266, %v899
        %v6299 = vunpack.c.l.bf16 %v6267
        %v6300 = vunpack.c.h.bf16 %v6267
        %v6301 = vunpack.c.l.bf16 %v6268
        %v6302 = vunpack.c.h.bf16 %v6268
        %v6303 = vunpack.c.l.bf16 %v6269
        %v6304 = vunpack.c.h.bf16 %v6269
        %v6305 = vunpack.c.l.bf16 %v6270
        %v6306 = vunpack.c.h.bf16 %v6270
        %v6307 = vunpack.c.l.bf16 %v6271
        %v6308 = vunpack.c.h.bf16 %v6271
        %v6309 = vunpack.c.l.bf16 %v6272
        %v6310 = vunpack.c.h.bf16 %v6272
        %v6311 = vunpack.c.l.bf16 %v6273
        %v6312 = vunpack.c.h.bf16 %v6273
        %v6313 = vunpack.c.l.bf16 %v6274
        %v6314 = vunpack.c.h.bf16 %v6274
        %v6315 = vunpack.c.l.bf16 %v6275
        %v6316 = vunpack.c.h.bf16 %v6275
        %v6317 = vunpack.c.l.bf16 %v6276
        %v6318 = vunpack.c.h.bf16 %v6276
        %v6319 = vunpack.c.l.bf16 %v6277
        %v6320 = vunpack.c.h.bf16 %v6277
        %v6321 = vunpack.c.l.bf16 %v6278
        %v6322 = vunpack.c.h.bf16 %v6278
        %v6323 = vunpack.c.l.bf16 %v6279
        %v6324 = vunpack.c.h.bf16 %v6279
        %v6325 = vunpack.c.l.bf16 %v6280
        %v6326 = vunpack.c.h.bf16 %v6280
        %v6327 = vunpack.c.l.bf16 %v6281
        %v6328 = vunpack.c.h.bf16 %v6281
        %v6329 = vunpack.c.l.bf16 %v6282
        %v6330 = vunpack.c.h.bf16 %v6282
        %v6331 = vunpack.c.l.bf16 %v6283
        %v6332 = vunpack.c.h.bf16 %v6283
        %v6333 = vunpack.c.l.bf16 %v6284
        %v6334 = vunpack.c.h.bf16 %v6284
        %v6335 = vunpack.c.l.bf16 %v6285
        %v6336 = vunpack.c.h.bf16 %v6285
        %v6337 = vunpack.c.l.bf16 %v6286
        %v6338 = vunpack.c.h.bf16 %v6286
        %v6339 = vunpack.c.l.bf16 %v6287
        %v6340 = vunpack.c.h.bf16 %v6287
        %v6341 = vunpack.c.l.bf16 %v6288
        %v6342 = vunpack.c.h.bf16 %v6288
        %v6343 = vunpack.c.l.bf16 %v6289
        %v6344 = vunpack.c.h.bf16 %v6289
        %v6345 = vunpack.c.l.bf16 %v6290
        %v6346 = vunpack.c.h.bf16 %v6290
        %v6347 = vunpack.c.l.bf16 %v6291
        %v6348 = vunpack.c.h.bf16 %v6291
        %v6349 = vunpack.c.l.bf16 %v6292
        %v6350 = vunpack.c.h.bf16 %v6292
        %v6351 = vunpack.c.l.bf16 %v6293
        %v6352 = vunpack.c.h.bf16 %v6293
        %v6353 = vunpack.c.l.bf16 %v6294
        %v6354 = vunpack.c.h.bf16 %v6294
        %v6355 = vunpack.c.l.bf16 %v6295
        %v6356 = vunpack.c.h.bf16 %v6295
        %v6357 = vunpack.c.l.bf16 %v6296
        %v6358 = vunpack.c.h.bf16 %v6296
        %v6359 = vunpack.c.l.bf16 %v6297
        %v6360 = vunpack.c.h.bf16 %v6297
        %v6361 = vunpack.c.l.bf16 %v6298
        %v6362 = vunpack.c.h.bf16 %v6298
        %v6363 = vsel %vm1028, %v6299, 0.0
        %v6364 = vsel %vm1028, %v6300, 0.0
        %v6365 = vadd.f32 %v6363, %v6364
        %v6366 = vrot.slane %v6365, 4
        %v6367 = vadd.f32 %v6365, %v6366
        %v6368 = vrot.slane %v6367, 2
        %v6369 = vadd.f32 %v6367, %v6368
        %v6370 = vrot.slane %v6369, 1
        %v6371 = vadd.f32 %v6369, %v6370
        %v6372 = vsel %vm1028, %v6301, 0.0
        %v6373 = vsel %vm1028, %v6302, 0.0
        %v6374 = vadd.f32 %v6372, %v6373
        %v6375 = vrot.slane %v6374, 4
        %v6376 = vadd.f32 %v6374, %v6375
        %v6377 = vrot.slane %v6376, 2
        %v6378 = vadd.f32 %v6376, %v6377
        %v6379 = vrot.slane %v6378, 1
        %v6380 = vadd.f32 %v6378, %v6379
        %v6381 = vsel %vm1028, %v6303, 0.0
        %v6382 = vsel %vm1028, %v6304, 0.0
        %v6383 = vadd.f32 %v6381, %v6382
        %v6384 = vrot.slane %v6383, 4
        %v6385 = vadd.f32 %v6383, %v6384
        %v6386 = vrot.slane %v6385, 2
        %v6387 = vadd.f32 %v6385, %v6386
        %v6388 = vrot.slane %v6387, 1
        %v6389 = vadd.f32 %v6387, %v6388
        %v6390 = vsel %vm1028, %v6305, 0.0
        %v6391 = vsel %vm1028, %v6306, 0.0
        %v6392 = vadd.f32 %v6390, %v6391
        %v6393 = vrot.slane %v6392, 4
        %v6394 = vadd.f32 %v6392, %v6393
        %v6395 = vrot.slane %v6394, 2
        %v6396 = vadd.f32 %v6394, %v6395
        %v6397 = vrot.slane %v6396, 1
        %v6398 = vadd.f32 %v6396, %v6397
        %v6399 = vsel %vm1028, %v6307, 0.0
        %v6400 = vsel %vm1028, %v6308, 0.0
        %v6401 = vadd.f32 %v6399, %v6400
        %v6402 = vrot.slane %v6401, 4
        %v6403 = vadd.f32 %v6401, %v6402
        %v6404 = vrot.slane %v6403, 2
        %v6405 = vadd.f32 %v6403, %v6404
        %v6406 = vrot.slane %v6405, 1
        %v6407 = vadd.f32 %v6405, %v6406
        %v6408 = vsel %vm1028, %v6309, 0.0
        %v6409 = vsel %vm1028, %v6310, 0.0
        %v6410 = vadd.f32 %v6408, %v6409
        %v6411 = vrot.slane %v6410, 4
        %v6412 = vadd.f32 %v6410, %v6411
        %v6413 = vrot.slane %v6412, 2
        %v6414 = vadd.f32 %v6412, %v6413
        %v6415 = vrot.slane %v6414, 1
        %v6416 = vadd.f32 %v6414, %v6415
        %v6417 = vsel %vm1028, %v6311, 0.0
        %v6418 = vsel %vm1028, %v6312, 0.0
        %v6419 = vadd.f32 %v6417, %v6418
        %v6420 = vrot.slane %v6419, 4
        %v6421 = vadd.f32 %v6419, %v6420
        %v6422 = vrot.slane %v6421, 2
        %v6423 = vadd.f32 %v6421, %v6422
        %v6424 = vrot.slane %v6423, 1
        %v6425 = vadd.f32 %v6423, %v6424
        %v6426 = vsel %vm1028, %v6313, 0.0
        %v6427 = vsel %vm1028, %v6314, 0.0
        %v6428 = vadd.f32 %v6426, %v6427
        %v6429 = vrot.slane %v6428, 4
        %v6430 = vadd.f32 %v6428, %v6429
        %v6431 = vrot.slane %v6430, 2
        %v6432 = vadd.f32 %v6430, %v6431
        %v6433 = vrot.slane %v6432, 1
        %v6434 = vadd.f32 %v6432, %v6433
        %v6435 = vsel %vm1028, %v6315, 0.0
        %v6436 = vsel %vm1028, %v6316, 0.0
        %v6437 = vadd.f32 %v6435, %v6436
        %v6438 = vrot.slane %v6437, 4
        %v6439 = vadd.f32 %v6437, %v6438
        %v6440 = vrot.slane %v6439, 2
        %v6441 = vadd.f32 %v6439, %v6440
        %v6442 = vrot.slane %v6441, 1
        %v6443 = vadd.f32 %v6441, %v6442
        %v6444 = vsel %vm1028, %v6317, 0.0
        %v6445 = vsel %vm1028, %v6318, 0.0
        %v6446 = vadd.f32 %v6444, %v6445
        %v6447 = vrot.slane %v6446, 4
        %v6448 = vadd.f32 %v6446, %v6447
        %v6449 = vrot.slane %v6448, 2
        %v6450 = vadd.f32 %v6448, %v6449
        %v6451 = vrot.slane %v6450, 1
        %v6452 = vadd.f32 %v6450, %v6451
        %v6453 = vsel %vm1028, %v6319, 0.0
        %v6454 = vsel %vm1028, %v6320, 0.0
        %v6455 = vadd.f32 %v6453, %v6454
        %v6456 = vrot.slane %v6455, 4
        %v6457 = vadd.f32 %v6455, %v6456
        %v6458 = vrot.slane %v6457, 2
        %v6459 = vadd.f32 %v6457, %v6458
        %v6460 = vrot.slane %v6459, 1
        %v6461 = vadd.f32 %v6459, %v6460
        %v6462 = vsel %vm1028, %v6321, 0.0
        %v6463 = vsel %vm1028, %v6322, 0.0
        %v6464 = vadd.f32 %v6462, %v6463
        %v6465 = vrot.slane %v6464, 4
        %v6466 = vadd.f32 %v6464, %v6465
        %v6467 = vrot.slane %v6466, 2
        %v6468 = vadd.f32 %v6466, %v6467
        %v6469 = vrot.slane %v6468, 1
        %v6470 = vadd.f32 %v6468, %v6469
        %v6471 = vsel %vm1028, %v6323, 0.0
        %v6472 = vsel %vm1028, %v6324, 0.0
        %v6473 = vadd.f32 %v6471, %v6472
        %v6474 = vrot.slane %v6473, 4
        %v6475 = vadd.f32 %v6473, %v6474
        %v6476 = vrot.slane %v6475, 2
        %v6477 = vadd.f32 %v6475, %v6476
        %v6478 = vrot.slane %v6477, 1
        %v6479 = vadd.f32 %v6477, %v6478
        %v6480 = vsel %vm1028, %v6325, 0.0
        %v6481 = vsel %vm1028, %v6326, 0.0
        %v6482 = vadd.f32 %v6480, %v6481
        %v6483 = vrot.slane %v6482, 4
        %v6484 = vadd.f32 %v6482, %v6483
        %v6485 = vrot.slane %v6484, 2
        %v6486 = vadd.f32 %v6484, %v6485
        %v6487 = vrot.slane %v6486, 1
        %v6488 = vadd.f32 %v6486, %v6487
        %v6489 = vsel %vm1028, %v6327, 0.0
        %v6490 = vsel %vm1028, %v6328, 0.0
        %v6491 = vadd.f32 %v6489, %v6490
        %v6492 = vrot.slane %v6491, 4
        %v6493 = vadd.f32 %v6491, %v6492
        %v6494 = vrot.slane %v6493, 2
        %v6495 = vadd.f32 %v6493, %v6494
        %v6496 = vrot.slane %v6495, 1
        %v6497 = vadd.f32 %v6495, %v6496
        %v6498 = vsel %vm1028, %v6329, 0.0
        %v6499 = vsel %vm1028, %v6330, 0.0
        %v6500 = vadd.f32 %v6498, %v6499
        %v6501 = vrot.slane %v6500, 4
        %v6502 = vadd.f32 %v6500, %v6501
        %v6503 = vrot.slane %v6502, 2
        %v6504 = vadd.f32 %v6502, %v6503
        %v6505 = vrot.slane %v6504, 1
        %v6506 = vadd.f32 %v6504, %v6505
        %v6507 = vsel %vm1028, %v6331, 0.0
        %v6508 = vsel %vm1028, %v6332, 0.0
        %v6509 = vadd.f32 %v6507, %v6508
        %v6510 = vrot.slane %v6509, 4
        %v6511 = vadd.f32 %v6509, %v6510
        %v6512 = vrot.slane %v6511, 2
        %v6513 = vadd.f32 %v6511, %v6512
        %v6514 = vrot.slane %v6513, 1
        %v6515 = vadd.f32 %v6513, %v6514
        %v6516 = vsel %vm1028, %v6333, 0.0
        %v6517 = vsel %vm1028, %v6334, 0.0
        %v6518 = vadd.f32 %v6516, %v6517
        %v6519 = vrot.slane %v6518, 4
        %v6520 = vadd.f32 %v6518, %v6519
        %v6521 = vrot.slane %v6520, 2
        %v6522 = vadd.f32 %v6520, %v6521
        %v6523 = vrot.slane %v6522, 1
        %v6524 = vadd.f32 %v6522, %v6523
        %v6525 = vsel %vm1028, %v6335, 0.0
        %v6526 = vsel %vm1028, %v6336, 0.0
        %v6527 = vadd.f32 %v6525, %v6526
        %v6528 = vrot.slane %v6527, 4
        %v6529 = vadd.f32 %v6527, %v6528
        %v6530 = vrot.slane %v6529, 2
        %v6531 = vadd.f32 %v6529, %v6530
        %v6532 = vrot.slane %v6531, 1
        %v6533 = vadd.f32 %v6531, %v6532
        %v6534 = vsel %vm1028, %v6337, 0.0
        %v6535 = vsel %vm1028, %v6338, 0.0
        %v6536 = vadd.f32 %v6534, %v6535
        %v6537 = vrot.slane %v6536, 4
        %v6538 = vadd.f32 %v6536, %v6537
        %v6539 = vrot.slane %v6538, 2
        %v6540 = vadd.f32 %v6538, %v6539
        %v6541 = vrot.slane %v6540, 1
        %v6542 = vadd.f32 %v6540, %v6541
        %v6543 = vsel %vm1028, %v6339, 0.0
        %v6544 = vsel %vm1028, %v6340, 0.0
        %v6545 = vadd.f32 %v6543, %v6544
        %v6546 = vrot.slane %v6545, 4
        %v6547 = vadd.f32 %v6545, %v6546
        %v6548 = vrot.slane %v6547, 2
        %v6549 = vadd.f32 %v6547, %v6548
        %v6550 = vrot.slane %v6549, 1
        %v6551 = vadd.f32 %v6549, %v6550
        %v6552 = vsel %vm1028, %v6341, 0.0
        %v6553 = vsel %vm1028, %v6342, 0.0
        %v6554 = vadd.f32 %v6552, %v6553
        %v6555 = vrot.slane %v6554, 4
        %v6556 = vadd.f32 %v6554, %v6555
        %v6557 = vrot.slane %v6556, 2
        %v6558 = vadd.f32 %v6556, %v6557
        %v6559 = vrot.slane %v6558, 1
        %v6560 = vadd.f32 %v6558, %v6559
        %v6561 = vsel %vm1028, %v6343, 0.0
        %v6562 = vsel %vm1028, %v6344, 0.0
        %v6563 = vadd.f32 %v6561, %v6562
        %v6564 = vrot.slane %v6563, 4
        %v6565 = vadd.f32 %v6563, %v6564
        %v6566 = vrot.slane %v6565, 2
        %v6567 = vadd.f32 %v6565, %v6566
        %v6568 = vrot.slane %v6567, 1
        %v6569 = vadd.f32 %v6567, %v6568
        %v6570 = vsel %vm1028, %v6345, 0.0
        %v6571 = vsel %vm1028, %v6346, 0.0
        %v6572 = vadd.f32 %v6570, %v6571
        %v6573 = vrot.slane %v6572, 4
        %v6574 = vadd.f32 %v6572, %v6573
        %v6575 = vrot.slane %v6574, 2
        %v6576 = vadd.f32 %v6574, %v6575
        %v6577 = vrot.slane %v6576, 1
        %v6578 = vadd.f32 %v6576, %v6577
        %v6579 = vsel %vm1028, %v6347, 0.0
        %v6580 = vsel %vm1028, %v6348, 0.0
        %v6581 = vadd.f32 %v6579, %v6580
        %v6582 = vrot.slane %v6581, 4
        %v6583 = vadd.f32 %v6581, %v6582
        %v6584 = vrot.slane %v6583, 2
        %v6585 = vadd.f32 %v6583, %v6584
        %v6586 = vrot.slane %v6585, 1
        %v6587 = vadd.f32 %v6585, %v6586
        %v6588 = vsel %vm1028, %v6349, 0.0
        %v6589 = vsel %vm1028, %v6350, 0.0
        %v6590 = vadd.f32 %v6588, %v6589
        %v6591 = vrot.slane %v6590, 4
        %v6592 = vadd.f32 %v6590, %v6591
        %v6593 = vrot.slane %v6592, 2
        %v6594 = vadd.f32 %v6592, %v6593
        %v6595 = vrot.slane %v6594, 1
        %v6596 = vadd.f32 %v6594, %v6595
        %v6597 = vsel %vm1028, %v6351, 0.0
        %v6598 = vsel %vm1028, %v6352, 0.0
        %v6599 = vadd.f32 %v6597, %v6598
        %v6600 = vrot.slane %v6599, 4
        %v6601 = vadd.f32 %v6599, %v6600
        %v6602 = vrot.slane %v6601, 2
        %v6603 = vadd.f32 %v6601, %v6602
        %v6604 = vrot.slane %v6603, 1
        %v6605 = vadd.f32 %v6603, %v6604
        %v6606 = vsel %vm1028, %v6353, 0.0
        %v6607 = vsel %vm1028, %v6354, 0.0
        %v6608 = vadd.f32 %v6606, %v6607
        %v6609 = vrot.slane %v6608, 4
        %v6610 = vadd.f32 %v6608, %v6609
        %v6611 = vrot.slane %v6610, 2
        %v6612 = vadd.f32 %v6610, %v6611
        %v6613 = vrot.slane %v6612, 1
        %v6614 = vadd.f32 %v6612, %v6613
        %v6615 = vsel %vm1028, %v6355, 0.0
        %v6616 = vsel %vm1028, %v6356, 0.0
        %v6617 = vadd.f32 %v6615, %v6616
        %v6618 = vrot.slane %v6617, 4
        %v6619 = vadd.f32 %v6617, %v6618
        %v6620 = vrot.slane %v6619, 2
        %v6621 = vadd.f32 %v6619, %v6620
        %v6622 = vrot.slane %v6621, 1
        %v6623 = vadd.f32 %v6621, %v6622
        %v6624 = vsel %vm1028, %v6357, 0.0
        %v6625 = vsel %vm1028, %v6358, 0.0
        %v6626 = vadd.f32 %v6624, %v6625
        %v6627 = vrot.slane %v6626, 4
        %v6628 = vadd.f32 %v6626, %v6627
        %v6629 = vrot.slane %v6628, 2
        %v6630 = vadd.f32 %v6628, %v6629
        %v6631 = vrot.slane %v6630, 1
        %v6632 = vadd.f32 %v6630, %v6631
        %v6633 = vsel %vm1028, %v6359, 0.0
        %v6634 = vsel %vm1028, %v6360, 0.0
        %v6635 = vadd.f32 %v6633, %v6634
        %v6636 = vrot.slane %v6635, 4
        %v6637 = vadd.f32 %v6635, %v6636
        %v6638 = vrot.slane %v6637, 2
        %v6639 = vadd.f32 %v6637, %v6638
        %v6640 = vrot.slane %v6639, 1
        %v6641 = vadd.f32 %v6639, %v6640
        %v6642 = vsel %vm1028, %v6361, 0.0
        %v6643 = vsel %vm1028, %v6362, 0.0
        %v6644 = vadd.f32 %v6642, %v6643
        %v6645 = vrot.slane %v6644, 4
        %v6646 = vadd.f32 %v6644, %v6645
        %v6647 = vrot.slane %v6646, 2
        %v6648 = vadd.f32 %v6646, %v6647
        %v6649 = vrot.slane %v6648, 1
        %v6650 = vadd.f32 %v6648, %v6649
        %v6651 = vpack.c.bf16 %v6371, %v6371
        %v6652 = vpack.c.bf16 %v6380, %v6380
        %v6653 = vpack.c.bf16 %v6389, %v6389
        %v6654 = vpack.c.bf16 %v6398, %v6398
        %v6655 = vpack.c.bf16 %v6407, %v6407
        %v6656 = vpack.c.bf16 %v6416, %v6416
        %v6657 = vpack.c.bf16 %v6425, %v6425
        %v6658 = vpack.c.bf16 %v6434, %v6434
        %v6659 = vpack.c.bf16 %v6443, %v6443
        %v6660 = vpack.c.bf16 %v6452, %v6452
        %v6661 = vpack.c.bf16 %v6461, %v6461
        %v6662 = vpack.c.bf16 %v6470, %v6470
        %v6663 = vpack.c.bf16 %v6479, %v6479
        %v6664 = vpack.c.bf16 %v6488, %v6488
        %v6665 = vpack.c.bf16 %v6497, %v6497
        %v6666 = vpack.c.bf16 %v6506, %v6506
        %v6667 = vpack.c.bf16 %v6515, %v6515
        %v6668 = vpack.c.bf16 %v6524, %v6524
        %v6669 = vpack.c.bf16 %v6533, %v6533
        %v6670 = vpack.c.bf16 %v6542, %v6542
        %v6671 = vpack.c.bf16 %v6551, %v6551
        %v6672 = vpack.c.bf16 %v6560, %v6560
        %v6673 = vpack.c.bf16 %v6569, %v6569
        %v6674 = vpack.c.bf16 %v6578, %v6578
        %v6675 = vpack.c.bf16 %v6587, %v6587
        %v6676 = vpack.c.bf16 %v6596, %v6596
        %v6677 = vpack.c.bf16 %v6605, %v6605
        %v6678 = vpack.c.bf16 %v6614, %v6614
        %v6679 = vpack.c.bf16 %v6623, %v6623
        %v6680 = vpack.c.bf16 %v6632, %v6632
        %v6681 = vpack.c.bf16 %v6641, %v6641
        %v6682 = vpack.c.bf16 %v6650, %v6650
        %v6683 = vld [vmem:[%s3 + $0x18] sm:$0xf]
        %v6716 = vunpack.c.l.b16 %v6651
        %v6717 = vunpack.c.l.b16 %v6652
        %v6718 = vunpack.c.l.b16 %v6653
        %v6719 = vunpack.c.l.b16 %v6654
        %v6720 = vunpack.c.l.b16 %v6655
        %v6721 = vunpack.c.l.b16 %v6656
        %v6722 = vunpack.c.l.b16 %v6657
        %v6723 = vunpack.c.l.b16 %v6658
        %v6724 = vunpack.c.l.b16 %v6659
        %v6725 = vunpack.c.l.b16 %v6660
        %v6726 = vunpack.c.l.b16 %v6661
        %v6727 = vunpack.c.l.b16 %v6662
        %v6728 = vunpack.c.l.b16 %v6663
        %v6729 = vunpack.c.l.b16 %v6664
        %v6730 = vunpack.c.l.b16 %v6665
        %v6731 = vunpack.c.l.b16 %v6666
        %v6732 = vunpack.c.l.b16 %v6667
        %v6733 = vunpack.c.l.b16 %v6668
        %v6734 = vunpack.c.l.b16 %v6669
        %v6735 = vunpack.c.l.b16 %v6670
        %v6736 = vunpack.c.l.b16 %v6671
        %v6737 = vunpack.c.l.b16 %v6672
        %v6738 = vunpack.c.l.b16 %v6673
        %v6739 = vunpack.c.l.b16 %v6674
        %v6740 = vunpack.c.l.b16 %v6675
        %v6741 = vunpack.c.l.b16 %v6676
        %v6742 = vunpack.c.l.b16 %v6677
        %v6743 = vunpack.c.l.b16 %v6678
        %v6744 = vunpack.c.l.b16 %v6679
        %v6745 = vunpack.c.l.b16 %v6680
        %v6746 = vunpack.c.l.b16 %v6681
        %v6747 = vunpack.c.l.b16 %v6682
        %v6748 = vsel %vm2147, %v6717, %v6716
        %v6749 = vsel %vm2149, %v6718, %v6748
        %v6750 = vsel %vm2151, %v6719, %v6749
        %v6751 = vsel %vm2153, %v6720, %v6750
        %v6752 = vsel %vm2155, %v6721, %v6751
        %v6753 = vsel %vm2157, %v6722, %v6752
        %v6754 = vsel %vm2159, %v6723, %v6753
        %v6755 = vsel %vm2147, %v6725, %v6724
        %v6756 = vsel %vm2149, %v6726, %v6755
        %v6757 = vsel %vm2151, %v6727, %v6756
        %v6758 = vsel %vm2153, %v6728, %v6757
        %v6759 = vsel %vm2155, %v6729, %v6758
        %v6760 = vsel %vm2157, %v6730, %v6759
        %v6761 = vsel %vm2159, %v6731, %v6760
        %v6762 = vsel %vm2147, %v6733, %v6732
        %v6763 = vsel %vm2149, %v6734, %v6762
        %v6764 = vsel %vm2151, %v6735, %v6763
        %v6765 = vsel %vm2153, %v6736, %v6764
        %v6766 = vsel %vm2155, %v6737, %v6765
        %v6767 = vsel %vm2157, %v6738, %v6766
        %v6768 = vsel %vm2159, %v6739, %v6767
        %v6769 = vsel %vm2147, %v6741, %v6740
        %v6770 = vsel %vm2149, %v6742, %v6769
        %v6771 = vsel %vm2151, %v6743, %v6770
        %v6772 = vsel %vm2153, %v6744, %v6771
        %v6773 = vsel %vm2155, %v6745, %v6772
        %v6774 = vsel %vm2157, %v6746, %v6773
        %v6775 = vsel %vm2159, %v6747, %v6774
        %v6776 = vpack.c.b16 %v6761, %v6754
        %v6777 = vpack.c.b16 %v6775, %v6768
        %v6779 = vsel %vm1028, %v6776, 0
        %v6782 = vsel %vm1028, %v6777, 0
        %v6785 = vsel %vm2190, %v6683, 0
        %6787 = vmatprep.subr.bf16.mxu0 0
        %6788 = vmatpush1.bf16.msra.mxu0 %v6785
        %6789 = vmatprep.subr.bf16.mxu0 0
        %6790 = vmatpush1.bf16.msra.mxu0 0
        %6791 = vmatprep.subr.bf16.mxu0 0
        %6792 = vmatpush1.bf16.msra.mxu0 0
        %6793 = vmatprep.subr.bf16.mxu0 0
        %6794 = vmatpush1.bf16.msra.mxu0 0
        %6795 = vmatprep.subr.bf16.mxu0 0
        %6796 = vmatpush1.bf16.msra.mxu0 0
        %6797 = vmatprep.subr.bf16.mxu0 0
        %6798 = vmatpush1.bf16.msra.mxu0 0
        %6799 = vmatprep.subr.bf16.mxu0 0
        %6800 = vmatpush1.bf16.msra.mxu0 0
        %6801 = vmatprep.subr.bf16.mxu0 0
        %6802 = vmatpush1.bf16.msra.mxu0 0
        %6803 = vmatprep.subr.bf16.mxu0 0
        %6804 = vmatpush1.bf16.msra.mxu0 0
        %6805 = vmatprep.subr.bf16.mxu0 0
        %6806 = vmatpush1.bf16.msra.mxu0 0
        %6807 = vmatprep.subr.bf16.mxu0 0
        %6808 = vmatpush1.bf16.msra.mxu0 0
        %6809 = vmatprep.subr.bf16.mxu0 0
        %6810 = vmatpush1.bf16.msra.mxu0 0
        %6811 = vmatprep.subr.bf16.mxu0 0
        %6812 = vmatpush1.bf16.msra.mxu0 0
        %6813 = vmatprep.subr.bf16.mxu0 0
        %6814 = vmatpush1.bf16.msra.mxu0 0
        %6815 = vmatprep.subr.bf16.mxu0 0
        %6816 = vmatpush1.bf16.msra.mxu0 0
        %6817 = vmatprep.subr.bf16.mxu0 0
        %6818 = vmatpush1.bf16.msra.mxu0 0
        %6819 = vmatprep.mubr.bf16.mxu0 0
        %6820 = vmatmul.mubr.bf16.gmra.mrb[0].mxu0 %v6779
        %v6821 = vpop.f32.mrb[0].mxu0
        %v6822 = vadd.f32 0.0, %v6821
        %v6823 = vpop.f32.mrb[0].mxu0
        %v6824 = vpop.f32.mrb[0].mxu0
        %v6825 = vadd.f32 0.0, %v6824
        %v6826 = vpop.f32.mrb[0].mxu0
        %6827 = vmatprep.mubr.bf16.mxu0 0
        %6828 = vmatmul.mubr.bf16.gmra.mrb[0].mxu0 %v6782
        %v6829 = vpop.f32.mrb[0].mxu0
        %v6830 = vadd.f32 0.0, %v6829
        %v6831 = vpop.f32.mrb[0].mxu0
        %v6832 = vpop.f32.mrb[0].mxu0
        %v6833 = vadd.f32 0.0, %v6832
        %v6834 = vpop.f32.mrb[0].mxu0
        %6835 = vdwg.mxu0
        %v6836 = vadd.f32 %v5947, %v6822
        %v6837 = vadd.f32 %v5948, %v6825
        %v6838 = vadd.f32 %v5949, %v6830
        %v6839 = vadd.f32 %v5950, %v6833
        %s6840 = sld [smem:[#allocation3 + $0x15]]
        %s6841 = sld [smem:[#allocation3 + $0x16]]
        %s6842 = sld [smem:[#allocation3 + $0x17]]
        %v6843 = vstv %s6840
        %v6844 = vsub.f32 %v346, %v6843
        %v6845 = vsub.f32 %v347, %v6843
        %v6846 = vsub.f32 %v348, %v6843
        %v6847 = vsub.f32 %v349, %v6843
        %v6848 = vstv %s6841
        %v6849 = vsub.f32 %v351, %v6848
        %v6850 = vsub.f32 %v352, %v6848
        %v6851 = vsub.f32 %v353, %v6848
        %v6852 = vsub.f32 %v354, %v6848
        %v6853 = vstv %s6842
        %v6854 = vsub.f32 %v356, %v6853
        %v6855 = vsub.f32 %v357, %v6853
        %v6856 = vsub.f32 %v358, %v6853
        %v6857 = vsub.f32 %v359, %v6853
        %v6858 = vmul.f32 %v6844, %v6844
        %v6859 = vmul.f32 %v6845, %v6845
        %v6860 = vmul.f32 %v6846, %v6846
        %v6861 = vmul.f32 %v6847, %v6847
        %v6862 = vmul.f32 %v6849, %v6849
        %v6863 = vmul.f32 %v6850, %v6850
        %v6864 = vmul.f32 %v6851, %v6851
        %v6865 = vmul.f32 %v6852, %v6852
        %v6866 = vadd.f32 %v6858, %v6862
        %v6867 = vadd.f32 %v6859, %v6863
        %v6868 = vadd.f32 %v6860, %v6864
        %v6869 = vadd.f32 %v6861, %v6865
        %v6870 = vmul.f32 %v6854, %v6854
        %v6871 = vmul.f32 %v6855, %v6855
        %v6872 = vmul.f32 %v6856, %v6856
        %v6873 = vmul.f32 %v6857, %v6857
        %v6874 = vadd.f32 %v6866, %v6870
        %v6875 = vadd.f32 %v6867, %v6871
        %v6876 = vadd.f32 %v6868, %v6872
        %v6877 = vadd.f32 %v6869, %v6873
        %v6878 = vrsqrt.pop %v6874
        %v6879 = vmul.f32 %v6874, %v6878
        %vm6880 = vcmp.eq.f32.partialorder %v6874, inf
        %v6881 = vsel %vm6880, %v6874, %v6879
        %vm6882 = vcmp.eq.f32.partialorder %v6874, 0.0
        %v6883 = vand.u32 %v6874, 2147483648
        %v6884 = vsel %vm6882, %v6883, %v6881
        %v6885 = vrsqrt.pop %v6875
        %v6886 = vmul.f32 %v6875, %v6885
        %vm6887 = vcmp.eq.f32.partialorder %v6875, inf
        %v6888 = vsel %vm6887, %v6875, %v6886
        %vm6889 = vcmp.eq.f32.partialorder %v6875, 0.0
        %v6890 = vand.u32 %v6875, 2147483648
        %v6891 = vsel %vm6889, %v6890, %v6888
        %v6892 = vrsqrt.pop %v6876
        %v6893 = vmul.f32 %v6876, %v6892
        %vm6894 = vcmp.eq.f32.partialorder %v6876, inf
        %v6895 = vsel %vm6894, %v6876, %v6893
        %vm6896 = vcmp.eq.f32.partialorder %v6876, 0.0
        %v6897 = vand.u32 %v6876, 2147483648
        %v6898 = vsel %vm6896, %v6897, %v6895
        %v6899 = vrsqrt.pop %v6877
        %v6900 = vmul.f32 %v6877, %v6899
        %vm6901 = vcmp.eq.f32.partialorder %v6877, inf
        %v6902 = vsel %vm6901, %v6877, %v6900
        %vm6903 = vcmp.eq.f32.partialorder %v6877, 0.0
        %v6904 = vand.u32 %v6877, 2147483648
        %v6905 = vsel %vm6903, %v6904, %v6902
        %v6906 = vmul.f32 %v6884, 16.666666
        %v6907 = vmul.f32 %v6891, 16.666666
        %v6908 = vmul.f32 %v6898, 16.666666
        %v6909 = vmul.f32 %v6905, 16.666666
        %v6910 = vsub.f32 1.0, %v6906
        %v6911 = vsub.f32 1.0, %v6907
        %v6912 = vsub.f32 1.0, %v6908
        %v6913 = vsub.f32 1.0, %v6909
        %v6914 = vmax.f32 %v6910, 0.0
        %v6915 = vmax.f32 %v6911, 0.0
        %v6916 = vmax.f32 %v6912, 0.0
        %v6917 = vmax.f32 %v6913, 0.0
        %v6918 = vpack.c.bf16 %v6915, %v6914
        %v6919 = vpack.c.bf16 %v6917, %v6916
        %v6921 = vpack.i.b16 %v6918, %v6918
        %v6923 = vlaneseq
        %v6924 = vshrl.u32 %v6923, 7
        %v6925 = vsub.s32 0, %v6924
        %v6926 = vrot.slane %v6921, %v6925
        %6928 = vbcast.lane.c.b16.xlu0 %v6926, 256
        %v6929 = vpop.permute.xlu0 %6928
        %v6930 = vshrl.u32 %v6918, 16
        %v6931 = vpack.i.b16 %v6930, %v6930
        %v6933 = vlaneseq
        %v6934 = vshrl.u32 %v6933, 7
        %v6935 = vsub.s32 0, %v6934
        %v6936 = vrot.slane %v6931, %v6935
        %6938 = vbcast.lane.c.b16.xlu0 %v6936, 256
        %v6939 = vpop.permute.xlu0 %6938
        %v6940 = vlaneseq
        %v6941 = vshrl.u32 %v6940, 7
        %v6942 = vsub.s32 1, %v6941
        %v6943 = vrot.slane %v6921, %v6942
        %6945 = vbcast.lane.c.b16.xlu0 %v6943, 256
        %v6946 = vpop.permute.xlu0 %6945
        %v6947 = vlaneseq
        %v6948 = vshrl.u32 %v6947, 7
        %v6949 = vsub.s32 1, %v6948
        %v6950 = vrot.slane %v6931, %v6949
        %6952 = vbcast.lane.c.b16.xlu0 %v6950, 256
        %v6953 = vpop.permute.xlu0 %6952
        %v6954 = vlaneseq
        %v6955 = vshrl.u32 %v6954, 7
        %v6956 = vsub.s32 2, %v6955
        %v6957 = vrot.slane %v6921, %v6956
        %6959 = vbcast.lane.c.b16.xlu0 %v6957, 256
        %v6960 = vpop.permute.xlu0 %6959
        %v6961 = vlaneseq
        %v6962 = vshrl.u32 %v6961, 7
        %v6963 = vsub.s32 2, %v6962
        %v6964 = vrot.slane %v6931, %v6963
        %6966 = vbcast.lane.c.b16.xlu0 %v6964, 256
        %v6967 = vpop.permute.xlu0 %6966
        %v6968 = vlaneseq
        %v6969 = vshrl.u32 %v6968, 7
        %v6970 = vsub.s32 3, %v6969
        %v6971 = vrot.slane %v6921, %v6970
        %6973 = vbcast.lane.c.b16.xlu0 %v6971, 256
        %v6974 = vpop.permute.xlu0 %6973
        %v6975 = vlaneseq
        %v6976 = vshrl.u32 %v6975, 7
        %v6977 = vsub.s32 3, %v6976
        %v6978 = vrot.slane %v6931, %v6977
        %6980 = vbcast.lane.c.b16.xlu0 %v6978, 256
        %v6981 = vpop.permute.xlu0 %6980
        %v6982 = vlaneseq
        %v6983 = vshrl.u32 %v6982, 7
        %v6984 = vsub.s32 4, %v6983
        %v6985 = vrot.slane %v6921, %v6984
        %6987 = vbcast.lane.c.b16.xlu0 %v6985, 256
        %v6988 = vpop.permute.xlu0 %6987
        %v6989 = vlaneseq
        %v6990 = vshrl.u32 %v6989, 7
        %v6991 = vsub.s32 4, %v6990
        %v6992 = vrot.slane %v6931, %v6991
        %6994 = vbcast.lane.c.b16.xlu0 %v6992, 256
        %v6995 = vpop.permute.xlu0 %6994
        %v6996 = vlaneseq
        %v6997 = vshrl.u32 %v6996, 7
        %v6998 = vsub.s32 5, %v6997
        %v6999 = vrot.slane %v6921, %v6998
        %7001 = vbcast.lane.c.b16.xlu0 %v6999, 256
        %v7002 = vpop.permute.xlu0 %7001
        %v7003 = vlaneseq
        %v7004 = vshrl.u32 %v7003, 7
        %v7005 = vsub.s32 5, %v7004
        %v7006 = vrot.slane %v6931, %v7005
        %7008 = vbcast.lane.c.b16.xlu0 %v7006, 256
        %v7009 = vpop.permute.xlu0 %7008
        %v7010 = vlaneseq
        %v7011 = vshrl.u32 %v7010, 7
        %v7012 = vsub.s32 6, %v7011
        %v7013 = vrot.slane %v6921, %v7012
        %7015 = vbcast.lane.c.b16.xlu0 %v7013, 256
        %v7016 = vpop.permute.xlu0 %7015
        %v7017 = vlaneseq
        %v7018 = vshrl.u32 %v7017, 7
        %v7019 = vsub.s32 6, %v7018
        %v7020 = vrot.slane %v6931, %v7019
        %7022 = vbcast.lane.c.b16.xlu0 %v7020, 256
        %v7023 = vpop.permute.xlu0 %7022
        %v7024 = vlaneseq
        %v7025 = vshrl.u32 %v7024, 7
        %v7026 = vsub.s32 7, %v7025
        %v7027 = vrot.slane %v6921, %v7026
        %7029 = vbcast.lane.c.b16.xlu0 %v7027, 256
        %v7030 = vpop.permute.xlu0 %7029
        %v7031 = vlaneseq
        %v7032 = vshrl.u32 %v7031, 7
        %v7033 = vsub.s32 7, %v7032
        %v7034 = vrot.slane %v6931, %v7033
        %7036 = vbcast.lane.c.b16.xlu0 %v7034, 256
        %v7037 = vpop.permute.xlu0 %7036
        %v7039 = vpack.i.b16 %v6919, %v6919
        %v7041 = vlaneseq
        %v7042 = vshrl.u32 %v7041, 7
        %v7043 = vsub.s32 0, %v7042
        %v7044 = vrot.slane %v7039, %v7043
        %7046 = vbcast.lane.c.b16.xlu0 %v7044, 256
        %v7047 = vpop.permute.xlu0 %7046
        %v7048 = vshrl.u32 %v6919, 16
        %v7049 = vpack.i.b16 %v7048, %v7048
        %v7051 = vlaneseq
        %v7052 = vshrl.u32 %v7051, 7
        %v7053 = vsub.s32 0, %v7052
        %v7054 = vrot.slane %v7049, %v7053
        %7056 = vbcast.lane.c.b16.xlu0 %v7054, 256
        %v7057 = vpop.permute.xlu0 %7056
        %v7058 = vlaneseq
        %v7059 = vshrl.u32 %v7058, 7
        %v7060 = vsub.s32 1, %v7059
        %v7061 = vrot.slane %v7039, %v7060
        %7063 = vbcast.lane.c.b16.xlu0 %v7061, 256
        %v7064 = vpop.permute.xlu0 %7063
        %v7065 = vlaneseq
        %v7066 = vshrl.u32 %v7065, 7
        %v7067 = vsub.s32 1, %v7066
        %v7068 = vrot.slane %v7049, %v7067
        %7070 = vbcast.lane.c.b16.xlu0 %v7068, 256
        %v7071 = vpop.permute.xlu0 %7070
        %v7072 = vlaneseq
        %v7073 = vshrl.u32 %v7072, 7
        %v7074 = vsub.s32 2, %v7073
        %v7075 = vrot.slane %v7039, %v7074
        %7077 = vbcast.lane.c.b16.xlu0 %v7075, 256
        %v7078 = vpop.permute.xlu0 %7077
        %v7079 = vlaneseq
        %v7080 = vshrl.u32 %v7079, 7
        %v7081 = vsub.s32 2, %v7080
        %v7082 = vrot.slane %v7049, %v7081
        %7084 = vbcast.lane.c.b16.xlu0 %v7082, 256
        %v7085 = vpop.permute.xlu0 %7084
        %v7086 = vlaneseq
        %v7087 = vshrl.u32 %v7086, 7
        %v7088 = vsub.s32 3, %v7087
        %v7089 = vrot.slane %v7039, %v7088
        %7091 = vbcast.lane.c.b16.xlu0 %v7089, 256
        %v7092 = vpop.permute.xlu0 %7091
        %v7093 = vlaneseq
        %v7094 = vshrl.u32 %v7093, 7
        %v7095 = vsub.s32 3, %v7094
        %v7096 = vrot.slane %v7049, %v7095
        %7098 = vbcast.lane.c.b16.xlu0 %v7096, 256
        %v7099 = vpop.permute.xlu0 %7098
        %v7100 = vlaneseq
        %v7101 = vshrl.u32 %v7100, 7
        %v7102 = vsub.s32 4, %v7101
        %v7103 = vrot.slane %v7039, %v7102
        %7105 = vbcast.lane.c.b16.xlu0 %v7103, 256
        %v7106 = vpop.permute.xlu0 %7105
        %v7107 = vlaneseq
        %v7108 = vshrl.u32 %v7107, 7
        %v7109 = vsub.s32 4, %v7108
        %v7110 = vrot.slane %v7049, %v7109
        %7112 = vbcast.lane.c.b16.xlu0 %v7110, 256
        %v7113 = vpop.permute.xlu0 %7112
        %v7114 = vlaneseq
        %v7115 = vshrl.u32 %v7114, 7
        %v7116 = vsub.s32 5, %v7115
        %v7117 = vrot.slane %v7039, %v7116
        %7119 = vbcast.lane.c.b16.xlu0 %v7117, 256
        %v7120 = vpop.permute.xlu0 %7119
        %v7121 = vlaneseq
        %v7122 = vshrl.u32 %v7121, 7
        %v7123 = vsub.s32 5, %v7122
        %v7124 = vrot.slane %v7049, %v7123
        %7126 = vbcast.lane.c.b16.xlu0 %v7124, 256
        %v7127 = vpop.permute.xlu0 %7126
        %v7128 = vlaneseq
        %v7129 = vshrl.u32 %v7128, 7
        %v7130 = vsub.s32 6, %v7129
        %v7131 = vrot.slane %v7039, %v7130
        %7133 = vbcast.lane.c.b16.xlu0 %v7131, 256
        %v7134 = vpop.permute.xlu0 %7133
        %v7135 = vlaneseq
        %v7136 = vshrl.u32 %v7135, 7
        %v7137 = vsub.s32 6, %v7136
        %v7138 = vrot.slane %v7049, %v7137
        %7140 = vbcast.lane.c.b16.xlu0 %v7138, 256
        %v7141 = vpop.permute.xlu0 %7140
        %v7142 = vlaneseq
        %v7143 = vshrl.u32 %v7142, 7
        %v7144 = vsub.s32 7, %v7143
        %v7145 = vrot.slane %v7039, %v7144
        %7147 = vbcast.lane.c.b16.xlu0 %v7145, 256
        %v7148 = vpop.permute.xlu0 %7147
        %v7149 = vlaneseq
        %v7150 = vshrl.u32 %v7149, 7
        %v7151 = vsub.s32 7, %v7150
        %v7152 = vrot.slane %v7049, %v7151
        %7154 = vbcast.lane.c.b16.xlu0 %v7152, 256
        %v7155 = vpop.permute.xlu0 %7154
        %v7156 = vmul.bf16 %v6929, %v868
        %v7157 = vmul.bf16 %v6939, %v869
        %v7158 = vmul.bf16 %v6946, %v870
        %v7159 = vmul.bf16 %v6953, %v871
        %v7160 = vmul.bf16 %v6960, %v872
        %v7161 = vmul.bf16 %v6967, %v873
        %v7162 = vmul.bf16 %v6974, %v874
        %v7163 = vmul.bf16 %v6981, %v875
        %v7164 = vmul.bf16 %v6988, %v876
        %v7165 = vmul.bf16 %v6995, %v877
        %v7166 = vmul.bf16 %v7002, %v878
        %v7167 = vmul.bf16 %v7009, %v879
        %v7168 = vmul.bf16 %v7016, %v880
        %v7169 = vmul.bf16 %v7023, %v881
        %v7170 = vmul.bf16 %v7030, %v882
        %v7171 = vmul.bf16 %v7037, %v883
        %v7172 = vmul.bf16 %v7047, %v884
        %v7173 = vmul.bf16 %v7057, %v885
        %v7174 = vmul.bf16 %v7064, %v886
        %v7175 = vmul.bf16 %v7071, %v887
        %v7176 = vmul.bf16 %v7078, %v888
        %v7177 = vmul.bf16 %v7085, %v889
        %v7178 = vmul.bf16 %v7092, %v890
        %v7179 = vmul.bf16 %v7099, %v891
        %v7180 = vmul.bf16 %v7106, %v892
        %v7181 = vmul.bf16 %v7113, %v893
        %v7182 = vmul.bf16 %v7120, %v894
        %v7183 = vmul.bf16 %v7127, %v895
        %v7184 = vmul.bf16 %v7134, %v896
        %v7185 = vmul.bf16 %v7141, %v897
        %v7186 = vmul.bf16 %v7148, %v898
        %v7187 = vmul.bf16 %v7155, %v899
        %v7188 = vunpack.c.l.bf16 %v7156
        %v7189 = vunpack.c.h.bf16 %v7156
        %v7190 = vunpack.c.l.bf16 %v7157
        %v7191 = vunpack.c.h.bf16 %v7157
        %v7192 = vunpack.c.l.bf16 %v7158
        %v7193 = vunpack.c.h.bf16 %v7158
        %v7194 = vunpack.c.l.bf16 %v7159
        %v7195 = vunpack.c.h.bf16 %v7159
        %v7196 = vunpack.c.l.bf16 %v7160
        %v7197 = vunpack.c.h.bf16 %v7160
        %v7198 = vunpack.c.l.bf16 %v7161
        %v7199 = vunpack.c.h.bf16 %v7161
        %v7200 = vunpack.c.l.bf16 %v7162
        %v7201 = vunpack.c.h.bf16 %v7162
        %v7202 = vunpack.c.l.bf16 %v7163
        %v7203 = vunpack.c.h.bf16 %v7163
        %v7204 = vunpack.c.l.bf16 %v7164
        %v7205 = vunpack.c.h.bf16 %v7164
        %v7206 = vunpack.c.l.bf16 %v7165
        %v7207 = vunpack.c.h.bf16 %v7165
        %v7208 = vunpack.c.l.bf16 %v7166
        %v7209 = vunpack.c.h.bf16 %v7166
        %v7210 = vunpack.c.l.bf16 %v7167
        %v7211 = vunpack.c.h.bf16 %v7167
        %v7212 = vunpack.c.l.bf16 %v7168
        %v7213 = vunpack.c.h.bf16 %v7168
        %v7214 = vunpack.c.l.bf16 %v7169
        %v7215 = vunpack.c.h.bf16 %v7169
        %v7216 = vunpack.c.l.bf16 %v7170
        %v7217 = vunpack.c.h.bf16 %v7170
        %v7218 = vunpack.c.l.bf16 %v7171
        %v7219 = vunpack.c.h.bf16 %v7171
        %v7220 = vunpack.c.l.bf16 %v7172
        %v7221 = vunpack.c.h.bf16 %v7172
        %v7222 = vunpack.c.l.bf16 %v7173
        %v7223 = vunpack.c.h.bf16 %v7173
        %v7224 = vunpack.c.l.bf16 %v7174
        %v7225 = vunpack.c.h.bf16 %v7174
        %v7226 = vunpack.c.l.bf16 %v7175
        %v7227 = vunpack.c.h.bf16 %v7175
        %v7228 = vunpack.c.l.bf16 %v7176
        %v7229 = vunpack.c.h.bf16 %v7176
        %v7230 = vunpack.c.l.bf16 %v7177
        %v7231 = vunpack.c.h.bf16 %v7177
        %v7232 = vunpack.c.l.bf16 %v7178
        %v7233 = vunpack.c.h.bf16 %v7178
        %v7234 = vunpack.c.l.bf16 %v7179
        %v7235 = vunpack.c.h.bf16 %v7179
        %v7236 = vunpack.c.l.bf16 %v7180
        %v7237 = vunpack.c.h.bf16 %v7180
        %v7238 = vunpack.c.l.bf16 %v7181
        %v7239 = vunpack.c.h.bf16 %v7181
        %v7240 = vunpack.c.l.bf16 %v7182
        %v7241 = vunpack.c.h.bf16 %v7182
        %v7242 = vunpack.c.l.bf16 %v7183
        %v7243 = vunpack.c.h.bf16 %v7183
        %v7244 = vunpack.c.l.bf16 %v7184
        %v7245 = vunpack.c.h.bf16 %v7184
        %v7246 = vunpack.c.l.bf16 %v7185
        %v7247 = vunpack.c.h.bf16 %v7185
        %v7248 = vunpack.c.l.bf16 %v7186
        %v7249 = vunpack.c.h.bf16 %v7186
        %v7250 = vunpack.c.l.bf16 %v7187
        %v7251 = vunpack.c.h.bf16 %v7187
        %v7252 = vsel %vm1028, %v7188, 0.0
        %v7253 = vsel %vm1028, %v7189, 0.0
        %v7254 = vadd.f32 %v7252, %v7253
        %v7255 = vrot.slane %v7254, 4
        %v7256 = vadd.f32 %v7254, %v7255
        %v7257 = vrot.slane %v7256, 2
        %v7258 = vadd.f32 %v7256, %v7257
        %v7259 = vrot.slane %v7258, 1
        %v7260 = vadd.f32 %v7258, %v7259
        %v7261 = vsel %vm1028, %v7190, 0.0
        %v7262 = vsel %vm1028, %v7191, 0.0
        %v7263 = vadd.f32 %v7261, %v7262
        %v7264 = vrot.slane %v7263, 4
        %v7265 = vadd.f32 %v7263, %v7264
        %v7266 = vrot.slane %v7265, 2
        %v7267 = vadd.f32 %v7265, %v7266
        %v7268 = vrot.slane %v7267, 1
        %v7269 = vadd.f32 %v7267, %v7268
        %v7270 = vsel %vm1028, %v7192, 0.0
        %v7271 = vsel %vm1028, %v7193, 0.0
        %v7272 = vadd.f32 %v7270, %v7271
        %v7273 = vrot.slane %v7272, 4
        %v7274 = vadd.f32 %v7272, %v7273
        %v7275 = vrot.slane %v7274, 2
        %v7276 = vadd.f32 %v7274, %v7275
        %v7277 = vrot.slane %v7276, 1
        %v7278 = vadd.f32 %v7276, %v7277
        %v7279 = vsel %vm1028, %v7194, 0.0
        %v7280 = vsel %vm1028, %v7195, 0.0
        %v7281 = vadd.f32 %v7279, %v7280
        %v7282 = vrot.slane %v7281, 4
        %v7283 = vadd.f32 %v7281, %v7282
        %v7284 = vrot.slane %v7283, 2
        %v7285 = vadd.f32 %v7283, %v7284
        %v7286 = vrot.slane %v7285, 1
        %v7287 = vadd.f32 %v7285, %v7286
        %v7288 = vsel %vm1028, %v7196, 0.0
        %v7289 = vsel %vm1028, %v7197, 0.0
        %v7290 = vadd.f32 %v7288, %v7289
        %v7291 = vrot.slane %v7290, 4
        %v7292 = vadd.f32 %v7290, %v7291
        %v7293 = vrot.slane %v7292, 2
        %v7294 = vadd.f32 %v7292, %v7293
        %v7295 = vrot.slane %v7294, 1
        %v7296 = vadd.f32 %v7294, %v7295
        %v7297 = vsel %vm1028, %v7198, 0.0
        %v7298 = vsel %vm1028, %v7199, 0.0
        %v7299 = vadd.f32 %v7297, %v7298
        %v7300 = vrot.slane %v7299, 4
        %v7301 = vadd.f32 %v7299, %v7300
        %v7302 = vrot.slane %v7301, 2
        %v7303 = vadd.f32 %v7301, %v7302
        %v7304 = vrot.slane %v7303, 1
        %v7305 = vadd.f32 %v7303, %v7304
        %v7306 = vsel %vm1028, %v7200, 0.0
        %v7307 = vsel %vm1028, %v7201, 0.0
        %v7308 = vadd.f32 %v7306, %v7307
        %v7309 = vrot.slane %v7308, 4
        %v7310 = vadd.f32 %v7308, %v7309
        %v7311 = vrot.slane %v7310, 2
        %v7312 = vadd.f32 %v7310, %v7311
        %v7313 = vrot.slane %v7312, 1
        %v7314 = vadd.f32 %v7312, %v7313
        %v7315 = vsel %vm1028, %v7202, 0.0
        %v7316 = vsel %vm1028, %v7203, 0.0
        %v7317 = vadd.f32 %v7315, %v7316
        %v7318 = vrot.slane %v7317, 4
        %v7319 = vadd.f32 %v7317, %v7318
        %v7320 = vrot.slane %v7319, 2
        %v7321 = vadd.f32 %v7319, %v7320
        %v7322 = vrot.slane %v7321, 1
        %v7323 = vadd.f32 %v7321, %v7322
        %v7324 = vsel %vm1028, %v7204, 0.0
        %v7325 = vsel %vm1028, %v7205, 0.0
        %v7326 = vadd.f32 %v7324, %v7325
        %v7327 = vrot.slane %v7326, 4
        %v7328 = vadd.f32 %v7326, %v7327
        %v7329 = vrot.slane %v7328, 2
        %v7330 = vadd.f32 %v7328, %v7329
        %v7331 = vrot.slane %v7330, 1
        %v7332 = vadd.f32 %v7330, %v7331
        %v7333 = vsel %vm1028, %v7206, 0.0
        %v7334 = vsel %vm1028, %v7207, 0.0
        %v7335 = vadd.f32 %v7333, %v7334
        %v7336 = vrot.slane %v7335, 4
        %v7337 = vadd.f32 %v7335, %v7336
        %v7338 = vrot.slane %v7337, 2
        %v7339 = vadd.f32 %v7337, %v7338
        %v7340 = vrot.slane %v7339, 1
        %v7341 = vadd.f32 %v7339, %v7340
        %v7342 = vsel %vm1028, %v7208, 0.0
        %v7343 = vsel %vm1028, %v7209, 0.0
        %v7344 = vadd.f32 %v7342, %v7343
        %v7345 = vrot.slane %v7344, 4
        %v7346 = vadd.f32 %v7344, %v7345
        %v7347 = vrot.slane %v7346, 2
        %v7348 = vadd.f32 %v7346, %v7347
        %v7349 = vrot.slane %v7348, 1
        %v7350 = vadd.f32 %v7348, %v7349
        %v7351 = vsel %vm1028, %v7210, 0.0
        %v7352 = vsel %vm1028, %v7211, 0.0
        %v7353 = vadd.f32 %v7351, %v7352
        %v7354 = vrot.slane %v7353, 4
        %v7355 = vadd.f32 %v7353, %v7354
        %v7356 = vrot.slane %v7355, 2
        %v7357 = vadd.f32 %v7355, %v7356
        %v7358 = vrot.slane %v7357, 1
        %v7359 = vadd.f32 %v7357, %v7358
        %v7360 = vsel %vm1028, %v7212, 0.0
        %v7361 = vsel %vm1028, %v7213, 0.0
        %v7362 = vadd.f32 %v7360, %v7361
        %v7363 = vrot.slane %v7362, 4
        %v7364 = vadd.f32 %v7362, %v7363
        %v7365 = vrot.slane %v7364, 2
        %v7366 = vadd.f32 %v7364, %v7365
        %v7367 = vrot.slane %v7366, 1
        %v7368 = vadd.f32 %v7366, %v7367
        %v7369 = vsel %vm1028, %v7214, 0.0
        %v7370 = vsel %vm1028, %v7215, 0.0
        %v7371 = vadd.f32 %v7369, %v7370
        %v7372 = vrot.slane %v7371, 4
        %v7373 = vadd.f32 %v7371, %v7372
        %v7374 = vrot.slane %v7373, 2
        %v7375 = vadd.f32 %v7373, %v7374
        %v7376 = vrot.slane %v7375, 1
        %v7377 = vadd.f32 %v7375, %v7376
        %v7378 = vsel %vm1028, %v7216, 0.0
        %v7379 = vsel %vm1028, %v7217, 0.0
        %v7380 = vadd.f32 %v7378, %v7379
        %v7381 = vrot.slane %v7380, 4
        %v7382 = vadd.f32 %v7380, %v7381
        %v7383 = vrot.slane %v7382, 2
        %v7384 = vadd.f32 %v7382, %v7383
        %v7385 = vrot.slane %v7384, 1
        %v7386 = vadd.f32 %v7384, %v7385
        %v7387 = vsel %vm1028, %v7218, 0.0
        %v7388 = vsel %vm1028, %v7219, 0.0
        %v7389 = vadd.f32 %v7387, %v7388
        %v7390 = vrot.slane %v7389, 4
        %v7391 = vadd.f32 %v7389, %v7390
        %v7392 = vrot.slane %v7391, 2
        %v7393 = vadd.f32 %v7391, %v7392
        %v7394 = vrot.slane %v7393, 1
        %v7395 = vadd.f32 %v7393, %v7394
        %v7396 = vsel %vm1028, %v7220, 0.0
        %v7397 = vsel %vm1028, %v7221, 0.0
        %v7398 = vadd.f32 %v7396, %v7397
        %v7399 = vrot.slane %v7398, 4
        %v7400 = vadd.f32 %v7398, %v7399
        %v7401 = vrot.slane %v7400, 2
        %v7402 = vadd.f32 %v7400, %v7401
        %v7403 = vrot.slane %v7402, 1
        %v7404 = vadd.f32 %v7402, %v7403
        %v7405 = vsel %vm1028, %v7222, 0.0
        %v7406 = vsel %vm1028, %v7223, 0.0
        %v7407 = vadd.f32 %v7405, %v7406
        %v7408 = vrot.slane %v7407, 4
        %v7409 = vadd.f32 %v7407, %v7408
        %v7410 = vrot.slane %v7409, 2
        %v7411 = vadd.f32 %v7409, %v7410
        %v7412 = vrot.slane %v7411, 1
        %v7413 = vadd.f32 %v7411, %v7412
        %v7414 = vsel %vm1028, %v7224, 0.0
        %v7415 = vsel %vm1028, %v7225, 0.0
        %v7416 = vadd.f32 %v7414, %v7415
        %v7417 = vrot.slane %v7416, 4
        %v7418 = vadd.f32 %v7416, %v7417
        %v7419 = vrot.slane %v7418, 2
        %v7420 = vadd.f32 %v7418, %v7419
        %v7421 = vrot.slane %v7420, 1
        %v7422 = vadd.f32 %v7420, %v7421
        %v7423 = vsel %vm1028, %v7226, 0.0
        %v7424 = vsel %vm1028, %v7227, 0.0
        %v7425 = vadd.f32 %v7423, %v7424
        %v7426 = vrot.slane %v7425, 4
        %v7427 = vadd.f32 %v7425, %v7426
        %v7428 = vrot.slane %v7427, 2
        %v7429 = vadd.f32 %v7427, %v7428
        %v7430 = vrot.slane %v7429, 1
        %v7431 = vadd.f32 %v7429, %v7430
        %v7432 = vsel %vm1028, %v7228, 0.0
        %v7433 = vsel %vm1028, %v7229, 0.0
        %v7434 = vadd.f32 %v7432, %v7433
        %v7435 = vrot.slane %v7434, 4
        %v7436 = vadd.f32 %v7434, %v7435
        %v7437 = vrot.slane %v7436, 2
        %v7438 = vadd.f32 %v7436, %v7437
        %v7439 = vrot.slane %v7438, 1
        %v7440 = vadd.f32 %v7438, %v7439
        %v7441 = vsel %vm1028, %v7230, 0.0
        %v7442 = vsel %vm1028, %v7231, 0.0
        %v7443 = vadd.f32 %v7441, %v7442
        %v7444 = vrot.slane %v7443, 4
        %v7445 = vadd.f32 %v7443, %v7444
        %v7446 = vrot.slane %v7445, 2
        %v7447 = vadd.f32 %v7445, %v7446
        %v7448 = vrot.slane %v7447, 1
        %v7449 = vadd.f32 %v7447, %v7448
        %v7450 = vsel %vm1028, %v7232, 0.0
        %v7451 = vsel %vm1028, %v7233, 0.0
        %v7452 = vadd.f32 %v7450, %v7451
        %v7453 = vrot.slane %v7452, 4
        %v7454 = vadd.f32 %v7452, %v7453
        %v7455 = vrot.slane %v7454, 2
        %v7456 = vadd.f32 %v7454, %v7455
        %v7457 = vrot.slane %v7456, 1
        %v7458 = vadd.f32 %v7456, %v7457
        %v7459 = vsel %vm1028, %v7234, 0.0
        %v7460 = vsel %vm1028, %v7235, 0.0
        %v7461 = vadd.f32 %v7459, %v7460
        %v7462 = vrot.slane %v7461, 4
        %v7463 = vadd.f32 %v7461, %v7462
        %v7464 = vrot.slane %v7463, 2
        %v7465 = vadd.f32 %v7463, %v7464
        %v7466 = vrot.slane %v7465, 1
        %v7467 = vadd.f32 %v7465, %v7466
        %v7468 = vsel %vm1028, %v7236, 0.0
        %v7469 = vsel %vm1028, %v7237, 0.0
        %v7470 = vadd.f32 %v7468, %v7469
        %v7471 = vrot.slane %v7470, 4
        %v7472 = vadd.f32 %v7470, %v7471
        %v7473 = vrot.slane %v7472, 2
        %v7474 = vadd.f32 %v7472, %v7473
        %v7475 = vrot.slane %v7474, 1
        %v7476 = vadd.f32 %v7474, %v7475
        %v7477 = vsel %vm1028, %v7238, 0.0
        %v7478 = vsel %vm1028, %v7239, 0.0
        %v7479 = vadd.f32 %v7477, %v7478
        %v7480 = vrot.slane %v7479, 4
        %v7481 = vadd.f32 %v7479, %v7480
        %v7482 = vrot.slane %v7481, 2
        %v7483 = vadd.f32 %v7481, %v7482
        %v7484 = vrot.slane %v7483, 1
        %v7485 = vadd.f32 %v7483, %v7484
        %v7486 = vsel %vm1028, %v7240, 0.0
        %v7487 = vsel %vm1028, %v7241, 0.0
        %v7488 = vadd.f32 %v7486, %v7487
        %v7489 = vrot.slane %v7488, 4
        %v7490 = vadd.f32 %v7488, %v7489
        %v7491 = vrot.slane %v7490, 2
        %v7492 = vadd.f32 %v7490, %v7491
        %v7493 = vrot.slane %v7492, 1
        %v7494 = vadd.f32 %v7492, %v7493
        %v7495 = vsel %vm1028, %v7242, 0.0
        %v7496 = vsel %vm1028, %v7243, 0.0
        %v7497 = vadd.f32 %v7495, %v7496
        %v7498 = vrot.slane %v7497, 4
        %v7499 = vadd.f32 %v7497, %v7498
        %v7500 = vrot.slane %v7499, 2
        %v7501 = vadd.f32 %v7499, %v7500
        %v7502 = vrot.slane %v7501, 1
        %v7503 = vadd.f32 %v7501, %v7502
        %v7504 = vsel %vm1028, %v7244, 0.0
        %v7505 = vsel %vm1028, %v7245, 0.0
        %v7506 = vadd.f32 %v7504, %v7505
        %v7507 = vrot.slane %v7506, 4
        %v7508 = vadd.f32 %v7506, %v7507
        %v7509 = vrot.slane %v7508, 2
        %v7510 = vadd.f32 %v7508, %v7509
        %v7511 = vrot.slane %v7510, 1
        %v7512 = vadd.f32 %v7510, %v7511
        %v7513 = vsel %vm1028, %v7246, 0.0
        %v7514 = vsel %vm1028, %v7247, 0.0
        %v7515 = vadd.f32 %v7513, %v7514
        %v7516 = vrot.slane %v7515, 4
        %v7517 = vadd.f32 %v7515, %v7516
        %v7518 = vrot.slane %v7517, 2
        %v7519 = vadd.f32 %v7517, %v7518
        %v7520 = vrot.slane %v7519, 1
        %v7521 = vadd.f32 %v7519, %v7520
        %v7522 = vsel %vm1028, %v7248, 0.0
        %v7523 = vsel %vm1028, %v7249, 0.0
        %v7524 = vadd.f32 %v7522, %v7523
        %v7525 = vrot.slane %v7524, 4
        %v7526 = vadd.f32 %v7524, %v7525
        %v7527 = vrot.slane %v7526, 2
        %v7528 = vadd.f32 %v7526, %v7527
        %v7529 = vrot.slane %v7528, 1
        %v7530 = vadd.f32 %v7528, %v7529
        %v7531 = vsel %vm1028, %v7250, 0.0
        %v7532 = vsel %vm1028, %v7251, 0.0
        %v7533 = vadd.f32 %v7531, %v7532
        %v7534 = vrot.slane %v7533, 4
        %v7535 = vadd.f32 %v7533, %v7534
        %v7536 = vrot.slane %v7535, 2
        %v7537 = vadd.f32 %v7535, %v7536
        %v7538 = vrot.slane %v7537, 1
        %v7539 = vadd.f32 %v7537, %v7538
        %v7540 = vpack.c.bf16 %v7260, %v7260
        %v7541 = vpack.c.bf16 %v7269, %v7269
        %v7542 = vpack.c.bf16 %v7278, %v7278
        %v7543 = vpack.c.bf16 %v7287, %v7287
        %v7544 = vpack.c.bf16 %v7296, %v7296
        %v7545 = vpack.c.bf16 %v7305, %v7305
        %v7546 = vpack.c.bf16 %v7314, %v7314
        %v7547 = vpack.c.bf16 %v7323, %v7323
        %v7548 = vpack.c.bf16 %v7332, %v7332
        %v7549 = vpack.c.bf16 %v7341, %v7341
        %v7550 = vpack.c.bf16 %v7350, %v7350
        %v7551 = vpack.c.bf16 %v7359, %v7359
        %v7552 = vpack.c.bf16 %v7368, %v7368
        %v7553 = vpack.c.bf16 %v7377, %v7377
        %v7554 = vpack.c.bf16 %v7386, %v7386
        %v7555 = vpack.c.bf16 %v7395, %v7395
        %v7556 = vpack.c.bf16 %v7404, %v7404
        %v7557 = vpack.c.bf16 %v7413, %v7413
        %v7558 = vpack.c.bf16 %v7422, %v7422
        %v7559 = vpack.c.bf16 %v7431, %v7431
        %v7560 = vpack.c.bf16 %v7440, %v7440
        %v7561 = vpack.c.bf16 %v7449, %v7449
        %v7562 = vpack.c.bf16 %v7458, %v7458
        %v7563 = vpack.c.bf16 %v7467, %v7467
        %v7564 = vpack.c.bf16 %v7476, %v7476
        %v7565 = vpack.c.bf16 %v7485, %v7485
        %v7566 = vpack.c.bf16 %v7494, %v7494
        %v7567 = vpack.c.bf16 %v7503, %v7503
        %v7568 = vpack.c.bf16 %v7512, %v7512
        %v7569 = vpack.c.bf16 %v7521, %v7521
        %v7570 = vpack.c.bf16 %v7530, %v7530
        %v7571 = vpack.c.bf16 %v7539, %v7539
        %v7572 = vld [vmem:[%s3 + $0x1c] sm:$0xf]
        %v7605 = vunpack.c.l.b16 %v7540
        %v7606 = vunpack.c.l.b16 %v7541
        %v7607 = vunpack.c.l.b16 %v7542
        %v7608 = vunpack.c.l.b16 %v7543
        %v7609 = vunpack.c.l.b16 %v7544
        %v7610 = vunpack.c.l.b16 %v7545
        %v7611 = vunpack.c.l.b16 %v7546
        %v7612 = vunpack.c.l.b16 %v7547
        %v7613 = vunpack.c.l.b16 %v7548
        %v7614 = vunpack.c.l.b16 %v7549
        %v7615 = vunpack.c.l.b16 %v7550
        %v7616 = vunpack.c.l.b16 %v7551
        %v7617 = vunpack.c.l.b16 %v7552
        %v7618 = vunpack.c.l.b16 %v7553
        %v7619 = vunpack.c.l.b16 %v7554
        %v7620 = vunpack.c.l.b16 %v7555
        %v7621 = vunpack.c.l.b16 %v7556
        %v7622 = vunpack.c.l.b16 %v7557
        %v7623 = vunpack.c.l.b16 %v7558
        %v7624 = vunpack.c.l.b16 %v7559
        %v7625 = vunpack.c.l.b16 %v7560
        %v7626 = vunpack.c.l.b16 %v7561
        %v7627 = vunpack.c.l.b16 %v7562
        %v7628 = vunpack.c.l.b16 %v7563
        %v7629 = vunpack.c.l.b16 %v7564
        %v7630 = vunpack.c.l.b16 %v7565
        %v7631 = vunpack.c.l.b16 %v7566
        %v7632 = vunpack.c.l.b16 %v7567
        %v7633 = vunpack.c.l.b16 %v7568
        %v7634 = vunpack.c.l.b16 %v7569
        %v7635 = vunpack.c.l.b16 %v7570
        %v7636 = vunpack.c.l.b16 %v7571
        %v7637 = vsel %vm2147, %v7606, %v7605
        %v7638 = vsel %vm2149, %v7607, %v7637
        %v7639 = vsel %vm2151, %v7608, %v7638
        %v7640 = vsel %vm2153, %v7609, %v7639
        %v7641 = vsel %vm2155, %v7610, %v7640
        %v7642 = vsel %vm2157, %v7611, %v7641
        %v7643 = vsel %vm2159, %v7612, %v7642
        %v7644 = vsel %vm2147, %v7614, %v7613
        %v7645 = vsel %vm2149, %v7615, %v7644
        %v7646 = vsel %vm2151, %v7616, %v7645
        %v7647 = vsel %vm2153, %v7617, %v7646
        %v7648 = vsel %vm2155, %v7618, %v7647
        %v7649 = vsel %vm2157, %v7619, %v7648
        %v7650 = vsel %vm2159, %v7620, %v7649
        %v7651 = vsel %vm2147, %v7622, %v7621
        %v7652 = vsel %vm2149, %v7623, %v7651
        %v7653 = vsel %vm2151, %v7624, %v7652
        %v7654 = vsel %vm2153, %v7625, %v7653
        %v7655 = vsel %vm2155, %v7626, %v7654
        %v7656 = vsel %vm2157, %v7627, %v7655
        %v7657 = vsel %vm2159, %v7628, %v7656
        %v7658 = vsel %vm2147, %v7630, %v7629
        %v7659 = vsel %vm2149, %v7631, %v7658
        %v7660 = vsel %vm2151, %v7632, %v7659
        %v7661 = vsel %vm2153, %v7633, %v7660
        %v7662 = vsel %vm2155, %v7634, %v7661
        %v7663 = vsel %vm2157, %v7635, %v7662
        %v7664 = vsel %vm2159, %v7636, %v7663
        %v7665 = vpack.c.b16 %v7650, %v7643
        %v7666 = vpack.c.b16 %v7664, %v7657
        %v7668 = vsel %vm1028, %v7665, 0
        %v7671 = vsel %vm1028, %v7666, 0
        %v7674 = vsel %vm2190, %v7572, 0
        %7676 = vmatprep.subr.bf16.mxu0 0
        %7677 = vmatpush1.bf16.msra.mxu0 %v7674
        %7678 = vmatprep.subr.bf16.mxu0 0
        %7679 = vmatpush1.bf16.msra.mxu0 0
        %7680 = vmatprep.subr.bf16.mxu0 0
        %7681 = vmatpush1.bf16.msra.mxu0 0
        %7682 = vmatprep.subr.bf16.mxu0 0
        %7683 = vmatpush1.bf16.msra.mxu0 0
        %7684 = vmatprep.subr.bf16.mxu0 0
        %7685 = vmatpush1.bf16.msra.mxu0 0
        %7686 = vmatprep.subr.bf16.mxu0 0
        %7687 = vmatpush1.bf16.msra.mxu0 0
        %7688 = vmatprep.subr.bf16.mxu0 0
        %7689 = vmatpush1.bf16.msra.mxu0 0
        %7690 = vmatprep.subr.bf16.mxu0 0
        %7691 = vmatpush1.bf16.msra.mxu0 0
        %7692 = vmatprep.subr.bf16.mxu0 0
        %7693 = vmatpush1.bf16.msra.mxu0 0
        %7694 = vmatprep.subr.bf16.mxu0 0
        %7695 = vmatpush1.bf16.msra.mxu0 0
        %7696 = vmatprep.subr.bf16.mxu0 0
        %7697 = vmatpush1.bf16.msra.mxu0 0
        %7698 = vmatprep.subr.bf16.mxu0 0
        %7699 = vmatpush1.bf16.msra.mxu0 0
        %7700 = vmatprep.subr.bf16.mxu0 0
        %7701 = vmatpush1.bf16.msra.mxu0 0
        %7702 = vmatprep.subr.bf16.mxu0 0
        %7703 = vmatpush1.bf16.msra.mxu0 0
        %7704 = vmatprep.subr.bf16.mxu0 0
        %7705 = vmatpush1.bf16.msra.mxu0 0
        %7706 = vmatprep.subr.bf16.mxu0 0
        %7707 = vmatpush1.bf16.msra.mxu0 0
        %7708 = vmatprep.mubr.bf16.mxu0 0
        %7709 = vmatmul.mubr.bf16.gmra.mrb[0].mxu0 %v7668
        %v7710 = vpop.f32.mrb[0].mxu0
        %v7711 = vadd.f32 0.0, %v7710
        %v7712 = vpop.f32.mrb[0].mxu0
        %v7713 = vpop.f32.mrb[0].mxu0
        %v7714 = vadd.f32 0.0, %v7713
        %v7715 = vpop.f32.mrb[0].mxu0
        %7716 = vmatprep.mubr.bf16.mxu0 0
        %7717 = vmatmul.mubr.bf16.gmra.mrb[0].mxu0 %v7671
        %v7718 = vpop.f32.mrb[0].mxu0
        %v7719 = vadd.f32 0.0, %v7718
        %v7720 = vpop.f32.mrb[0].mxu0
        %v7721 = vpop.f32.mrb[0].mxu0
        %v7722 = vadd.f32 0.0, %v7721
        %v7723 = vpop.f32.mrb[0].mxu0
        %7724 = vdwg.mxu0
        %v7725 = vadd.f32 %v6836, %v7711
        %v7726 = vadd.f32 %v6837, %v7714
        %v7727 = vadd.f32 %v6838, %v7719
        %v7728 = vadd.f32 %v6839, %v7722
        %v7729 = vld [vmem:[%s4] sm:$0x1]
        %v7731 = vlaneseq
        %v7732 = vshrl.u32 %v7731, 7
        %v7733 = vsub.s32 0, %v7732
        %v7734 = vrot.slane %v7729, %v7733
        %v7736 = vadd.f32 %v7725, %v7734
        %v7737 = vadd.f32 %v7726, %v7734
        %v7738 = vadd.f32 %v7727, %v7734
        %v7739 = vadd.f32 %v7728, %v7734
        %vm7740 = vcmp.ge.f32.partialorder %v7736, 0.0
        %vm7741 = vcmp.ge.f32.partialorder %v7737, 0.0
        %vm7742 = vcmp.ge.f32.partialorder %v7738, 0.0
        %vm7743 = vcmp.ge.f32.partialorder %v7739, 0.0
        %v7744 = vmul.f32 %v7736, 0.1
        %v7745 = vmul.f32 %v7737, 0.1
        %v7746 = vmul.f32 %v7738, 0.1
        %v7747 = vmul.f32 %v7739, 0.1
        %v7748 = vsel %vm7740, %v7736, %v7744
        %v7749 = vsel %vm7741, %v7737, %v7745
        %v7750 = vsel %vm7742, %v7738, %v7746
        %v7751 = vsel %vm7743, %v7739, %v7747
        %v7752 = vpack.c.bf16 %v7749, %v7748
        %v7753 = vpack.c.bf16 %v7751, %v7750
        %v7756 = vunpack.c.l.b16 %v7752
        %v7757 = vunpack.c.h.b16 %v7752
        %v7758 = vunpack.c.l.b16 %v7753
        %v7759 = vunpack.c.h.b16 %v7753
        %v7760 = vpack.c.b16 %v7756, %v7756
        %v7761 = vpack.c.b16 %v7757, %v7757
        %v7762 = vpack.c.b16 %v7758, %v7758
        %v7763 = vpack.c.b16 %v7759, %v7759
        %vm7768 = vcmask 125952
        %7769 = vst.msk [vmem:[%s343] sm:$0xf] %vm7768, %v7760
        %7770 = vst.msk [vmem:[%s343 + $0x4] sm:$0xf] %vm7768, %v7761
        %7771 = vst.msk [vmem:[%s343 + $0x8] sm:$0xf] %vm7768, %v7762
        %7772 = vst.msk [vmem:[%s343 + $0xc] sm:$0xf] %vm7768, %v7763
        %s7773 = smul.u32 4, %s17
        %p7774 = scmp.lt.s32.totalorder %s7773, 7
        %s7775 = scalar_select %p7774, %s7773, 7
        %s7776 = smul.addr %s7775, 4
        %s7777 = scalar_lea.vmem %s5, %s7776
        // Predicated region
        $region83: #{tpu_custom_call.1} parent=73 // pred_check
          %p7778 = pneg %p150
        $region84: #{tpu_custom_call.1} parent=73 // pred_check_branch
          %7780 = sbr.rel (%p7778) target = $region86
        $region85: #{tpu_custom_call.1} parent=73 // pred_region
          %s7781 = smul.u32 4, %s17
        $region86: #{tpu_custom_call.1} parent=73 // pred_fallthru
          _
      $region74: #{tpu_custom_call.1} parent=5 // pred_fallthru
        _
      %p7782 = scmp.le.s32.totalorder 2, %s12
      // Predicated region
      $region87: #{tpu_custom_call.1} parent=5 // pred_check
        %p7783 = pneg %p7782
      $region88: #{tpu_custom_call.1} parent=5 // pred_check_branch
        %7785 = sbr.rel (%p7783) target = $region90
      $region89: #{tpu_custom_call.1} parent=5 // pred_region
        %s7786 = ssub.s32 %s12, 2
        // Predicated region
        $region91: #{tpu_custom_call.1} parent=89 // pred_check
          %p7787 = pneg %p156
        $region92: #{tpu_custom_call.1} parent=89 // pred_check_branch
          %7789 = sbr.rel (%p7787) target = $region94
        $region93: #{tpu_custom_call.1} parent=89 // pred_region
          %s7790 = smul.u32 4, %s18
          %p7791 = scmp.lt.s32.totalorder %s7790, 7
          %s7792 = scalar_select %p7791, %s7790, 7
          %s7793 = smul.addr %s7792, 4
          %s7794 = scalar_lea.vmem %s5, %s7793
        $region94: #{tpu_custom_call.1} parent=89 // pred_fallthru
          _
      $region90: #{tpu_custom_call.1} parent=5 // pred_fallthru
        _
    $region6: #{tpu_custom_call.1} parent=1 // loop_footer
      %s16 = sadd.s32 1, %s12
    $region7: #{tpu_custom_call.1} parent=1 // loop_footer_branch
      %11 = sbr.rel target = $region3
    $region8: #{tpu_custom_call.1} parent=1 // loop_exit
      _
    %7795 = vsyncpa [#allocation4], 1
    %s7796 = scalar_lea.sflag [#allocation4], 1
    %7797 = vsyncpa %s7796, 1

</llo_original>
